<compile_context>
chip_gen: v6e
topology: v6e:2x2x1
jax: 0.10.0
libtpu: 0.0.40
codegen_flags: <defaults>
</compile_context>

<pallas_src>
import math
from functools import partial

import jax
import jax.numpy as jnp
from jax.experimental import pallas as pl
from jax.experimental.pallas import tpu as pltpu

_VMEM_LIMIT = 64 * 1024 * 1024


# ----------------------------------------------------------------------------- #
# small helpers
# ----------------------------------------------------------------------------- #
def _round_up(x, m):
    return (x + m - 1) // m * m


def _pad2d(a, rows, cols):
    r, c = a.shape
    if r == rows and c == cols:
        return a
    return jnp.pad(a, ((0, rows - r), (0, cols - c)))


def _activate(y, act):
    if act == "gelu":
        # TODO(synk): PyTorch nn.GELU default is exact erf; tanh approximation is used
        # for guaranteed Mosaic lowering.
        return jax.nn.gelu(y, approximate=True)
    if act == "silu":
        return y * jax.nn.sigmoid(y)
    return y


def _ln_stats(x, c_real):
    """Row-wise LayerNorm on a channel-zero-padded block (real width = c_real)."""
    inv_c = 1.0 / c_real
    mean = jnp.sum(x, axis=-1, keepdims=True) * inv_c
    diff = x - mean
    n_pad = x.shape[-1] - c_real                      # padded lanes contribute mean^2
    var = (jnp.sum(diff * diff, axis=-1, keepdims=True) - n_pad * mean * mean) * inv_c
    var = jnp.maximum(var, 0.0)
    return diff * jax.lax.rsqrt(var + 1e-5)


# ----------------------------------------------------------------------------- #
# Kernel 1: tiled matmul with fused bias + activation + residual epilogue
# ----------------------------------------------------------------------------- #
def _matmul_kernel(*refs, act, has_res):
    if has_res:
        x_ref, w_ref, b_ref, r_ref, o_ref, acc_ref = refs
    else:
        x_ref, w_ref, b_ref, o_ref, acc_ref = refs
        r_ref = None

    @pl.when(pl.program_id(2) == 0)
    def _init():
        acc_ref[...] = jnp.zeros_like(acc_ref)

    acc_ref[...] += jnp.dot(x_ref[...], w_ref[...],
                            preferred_element_type=jnp.float32)

    @pl.when(pl.program_id(2) == pl.num_programs(2) - 1)
    def _finalize():
        y = acc_ref[...] + b_ref[...]
        y = _activate(y, act)
        if r_ref is not None:
            y = y + r_ref[...]
        o_ref[...] = y.astype(o_ref.dtype)


def pallas_matmul(x, w, b, act="none", residual=None, tm=256, tn=256, tk=512):
    """y = act(x @ w + b) [+ residual]; x:(M,K) w:(K',N) b:(N,) residual:(M,N).

    K' may be smaller than K (w is zero-row-padded); the extra x columns must be zero.
    """
    M, K = x.shape
    N = w.shape[1]
    TM = min(tm, _round_up(M, 16))          # bf16 sublane packing
    TN = min(tn, _round_up(N, 128))         # lane-dense output stores
    TK = min(tk, _round_up(K, 128))
    Mp, Kp, Np = _round_up(M, TM), _round_up(K, TK), _round_up(N, TN)

    xp = _pad2d(x.astype(jnp.float32), Mp, Kp).astype(jnp.bfloat16)
    wp = _pad2d(w.astype(jnp.float32), Kp, Np).astype(jnp.bfloat16)
    bp = _pad2d(b.reshape(1, -1).astype(jnp.float32), 1, Np)

    operands = [xp, wp, bp]
    in_specs = [
        pl.BlockSpec((TM, TK), lambda i, j, kk: (i, kk)),
        pl.BlockSpec((TK, TN), lambda i, j, kk: (kk, j)),
        pl.BlockSpec((1, TN), lambda i, j, kk: (0, j)),
    ]
    if residual is not None:
        operands.append(_pad2d(residual.astype(jnp.float32), Mp, Np))
        in_specs.append(pl.BlockSpec((TM, TN), lambda i, j, kk: (i, j)))

    out = pl.pallas_call(
        partial(_matmul_kernel, act=act, has_res=residual is not None),
        grid=(Mp // TM, Np // TN, Kp // TK),
        in_specs=in_specs,
        out_specs=pl.BlockSpec((TM, TN), lambda i, j, kk: (i, j)),
        out_shape=jax.ShapeDtypeStruct((Mp, Np), jnp.float32),
        scratch_shapes=[pltpu.VMEM((TM, TN), jnp.float32)],
        compiler_params=pltpu.CompilerParams(
            dimension_semantics=("parallel", "parallel", "arbitrary"),
            vmem_limit_bytes=_VMEM_LIMIT),
    )(*operands)
    return out[:M, :N]


# ----------------------------------------------------------------------------- #
# Kernel 2: fused LayerNorm -> matmul (used for the qkv projection)
# ----------------------------------------------------------------------------- #
def _ln_matmul_kernel(x_ref, g_ref, bln_ref, w_ref, bw_ref, o_ref, *, c_real):
    xn = _ln_stats(x_ref[...].astype(jnp.float32), c_real)
    y = xn * g_ref[...] + bln_ref[...]
    z = jnp.dot(y.astype(jnp.bfloat16), w_ref[...],
                preferred_element_type=jnp.float32) + bw_ref[...]
    o_ref[...] = z.astype(o_ref.dtype)


def pallas_ln_matmul(x, gamma_p, beta_p, w_p, b_p, c_real, tm=256):
    """x:(M,C); gamma/beta:(1,Cp), w:(Cp,Np), b:(1,Np) pre-padded. Returns (M,Np)."""
    M, _ = x.shape
    Cp = gamma_p.shape[-1]
    Np = w_p.shape[-1]
    TM = min(tm, _round_up(M, 8))
    Mp = _round_up(M, TM)
    TN = Np if Np <= 256 else 128
    xp = _pad2d(x.astype(jnp.float32), Mp, Cp)

    out = pl.pallas_call(
        partial(_ln_matmul_kernel, c_real=c_real),
        grid=(Mp // TM, Np // TN),
        in_specs=[
            pl.BlockSpec((TM, Cp), lambda i, j: (i, 0)),
            pl.BlockSpec((1, Cp), lambda i, j: (0, 0)),
            pl.BlockSpec((1, Cp), lambda i, j: (0, 0)),
            pl.BlockSpec((Cp, TN), lambda i, j: (0, j)),
            pl.BlockSpec((1, TN), lambda i, j: (0, j)),
        ],
        out_specs=pl.BlockSpec((TM, TN), lambda i, j: (i, j)),
        out_shape=jax.ShapeDtypeStruct((Mp, Np), jnp.float32),
        compiler_params=pltpu.CompilerParams(
            dimension_semantics=("parallel", "parallel"),
            vmem_limit_bytes=_VMEM_LIMIT),
    )(xp, gamma_p, beta_p, w_p, b_p)
    return out[:M]


# ----------------------------------------------------------------------------- #
# Kernel 3: fused LayerNorm -> fc1 -> GELU -> fc2 -> +residual (MLP block)
# ----------------------------------------------------------------------------- #
def _ln_mlp_kernel(x_ref, g_ref, bln_ref, w1_ref, b1_ref, w2_ref, b2_ref, o_ref,
                   *, c_real):
    x = x_ref[...].astype(jnp.float32)
    xn = _ln_stats(x, c_real)
    y = xn * g_ref[...] + bln_ref[...]
    h = jnp.dot(y.astype(jnp.bfloat16), w1_ref[...],
                preferred_element_type=jnp.float32) + b1_ref[...]
    h = jax.nn.gelu(h, approximate=True)
    z = jnp.dot(h.astype(jnp.bfloat16), w2_ref[...],
                preferred_element_type=jnp.float32) + b2_ref[...]
    o_ref[...] = (z + x).astype(o_ref.dtype)      # residual with the pre-norm input


def pallas_ln_mlp(x, gamma_p, beta_p, w1_p, b1_p, w2_p, b2_p, c_real, tm=256):
    M, C = x.shape
    Cp = gamma_p.shape[-1]
    Hp = w1_p.shape[-1]
    TM = min(tm, _round_up(M, 8))
    Mp = _round_up(M, TM)
    xp = _pad2d(x.astype(jnp.float32), Mp, Cp)

    out = pl.pallas_call(
        partial(_ln_mlp_kernel, c_real=c_real),
        grid=(Mp // TM,),
        in_specs=[
            pl.BlockSpec((TM, Cp), lambda i: (i, 0)),
            pl.BlockSpec((1, Cp), lambda i: (0, 0)),
            pl.BlockSpec((1, Cp), lambda i: (0, 0)),
            pl.BlockSpec((Cp, Hp), lambda i: (0, 0)),
            pl.BlockSpec((1, Hp), lambda i: (0, 0)),
            pl.BlockSpec((Hp, Cp), lambda i: (0, 0)),
            pl.BlockSpec((1, Cp), lambda i: (0, 0)),
        ],
        out_specs=pl.BlockSpec((TM, Cp), lambda i: (i, 0)),
        out_shape=jax.ShapeDtypeStruct((Mp, Cp), jnp.float32),
        compiler_params=pltpu.CompilerParams(
            dimension_semantics=("parallel",),
            vmem_limit_bytes=_VMEM_LIMIT),
    )(xp, gamma_p, beta_p, w1_p, b1_p, w2_p, b2_p)
    return out[:M, :C]


# ----------------------------------------------------------------------------- #
# Kernel 4: multi-head attention core (q tiled, heads split in-kernel, lane-dense out)
# ----------------------------------------------------------------------------- #
def _mhsa_kernel(q_ref, kv_ref, o_ref, *, heads, head_dim, t_total, t_pad, scale):
    q = q_ref[0].astype(jnp.float32)        # (TQ, CQ) — fused qkv row block
    kv = kv_ref[0].astype(jnp.bfloat16)     # (N,  CQ) — full sequence for keys/values
    outs = []
    for h in range(heads):
        o0 = h * head_dim
        qh = (q[:, o0:o0 + head_dim] * scale).astype(jnp.bfloat16)
        kh = kv[:, t_total + o0:t_total + o0 + head_dim]
        vh = kv[:, 2 * t_total + o0:2 * t_total + o0 + head_dim]
        s = jax.lax.dot_general(qh, kh, (((1,), (1,)), ((), ())),
                                preferred_element_type=jnp.float32)
        s = s - jnp.max(s, axis=-1, keepdims=True)
        p = jnp.exp(s)
        p = p * pl.reciprocal(jnp.sum(p, axis=-1, keepdims=True), approx=True)
        outs.append(jnp.dot(p.astype(jnp.bfloat16), vh,
                            preferred_element_type=jnp.float32))
    if t_pad > t_total:
        # lane-dense output: pad to a multiple of 128 so stores are unmasked vst.
        outs.append(jnp.zeros((q.shape[0], t_pad - t_total), jnp.float32))
    o = outs[0] if len(outs) == 1 else jnp.concatenate(outs, axis=-1)
    o_ref[0] = o.astype(o_ref.dtype)


def pallas_mhsa(qkv, heads, head_dim, scale, t_total):
    """qkv: (B, N, CQ>=3*t_total), columns in PyTorch [3][heads][D] order.

    Returns (B, N, t_pad) with t_pad = round_up(t_total, 128); padded columns are zero
    so the result can feed a zero-row-padded projection matmul without slicing.
    """
    B, N, CQ = qkv.shape
    t_pad = _round_up(t_total, 128)
    TQ = min(128, N)
    if N % TQ:
        TQ = N
    # TODO(synk): for very long sequences also tile the KV axis with online-softmax
    # (flash) scratch; here the score matrix is already bounded to (TQ, N).
    out = pl.pallas_call(
        partial(_mhsa_kernel, heads=heads, head_dim=head_dim,
                t_total=t_total, t_pad=t_pad, scale=scale),
        grid=(B, N // TQ),
        in_specs=[
            pl.BlockSpec((1, TQ, CQ), lambda b, qi: (b, qi, 0)),
            pl.BlockSpec((1, N, CQ), lambda b, qi: (b, 0, 0)),
        ],
        out_specs=pl.BlockSpec((1, TQ, t_pad), lambda b, qi: (b, qi, 0)),
        out_shape=jax.ShapeDtypeStruct((B, N, t_pad), jnp.float32),
        compiler_params=pltpu.CompilerParams(
            dimension_semantics=("parallel", "parallel"),
            vmem_limit_bytes=_VMEM_LIMIT),
    )(qkv, qkv)
    return out


# ----------------------------------------------------------------------------- #
# Convolution = im2col (XLA glue) + fused Pallas matmul
# ----------------------------------------------------------------------------- #
def _im2col_multi(x_nhwc, k, stride, pads_dils):
    """Patch extraction for one or several (padding, dilation) variants; the variants
    are concatenated along the feature axis so they can feed a single fused matmul."""
    # TODO(synk): patch extraction still materializes k*k shifted copies in HBM; a
    # halo-BlockSpec in-kernel im2col would reduce this to a single input read.
    B, H, W, C = x_nhwc.shape
    all_cols = []
    H_out = W_out = None
    for pad, dil in pads_dils:
        xp = jnp.pad(x_nhwc, ((0, 0), (pad, pad), (pad, pad), (0, 0)))
        ho = (H + 2 * pad - dil * (k - 1) - 1) // stride + 1
        wo = (W + 2 * pad - dil * (k - 1) - 1) // stride + 1
        H_out, W_out = ho, wo
        for i in range(k):
            for j in range(k):
                hs, ws = i * dil, j * dil
                patch = jax.lax.slice(
                    xp,
                    (0, hs, ws, 0),
                    (B, hs + (ho - 1) * stride + 1, ws + (wo - 1) * stride + 1, C),
                    (1, stride, stride, 1),
                )
                all_cols.append(patch)
    patches = jnp.stack(all_cols, axis=3).reshape(B, H_out, W_out, len(all_cols) * C)
    return patches, H_out, W_out


def conv2d_tokens(x_nhwc, cp, stride, padding, k, dilation=1, act="none", residual=None):
    """Conv2d via im2col + fused Pallas matmul; returns row-major tokens (B*Ho*Wo, O)."""
    B = x_nhwc.shape[0]
    patches, Ho, Wo = _im2col_multi(x_nhwc, k, stride, [(padding, dilation)])
    y = pallas_matmul(patches.reshape(B * Ho * Wo, -1), cp["w"], cp["b"],
                      act=act, residual=residual)
    return y, Ho, Wo


def fold_bn(w, b, bn, eps=1e-5):
    scale = bn["gamma"] / jnp.sqrt(bn["var"] + eps)
    shift = bn["beta"] - bn["mean"] * scale
    return w * scale[:, None, None, None], b * scale + shift


# ----------------------------------------------------------------------------- #
# Cells
# ----------------------------------------------------------------------------- #
def reduction_cell(x_nchw, p, cfg):
    B = x_nchw.shape[0]
    s, k = cfg["downsample_ratios"], cfg["kernel_size"]
    T, E = cfg["token_dims"], cfg["embed_dims"]
    C_prm = len(cfg["dilations"]) * E
    x_nhwc = jnp.transpose(x_nchw, (0, 2, 3, 1)).astype(jnp.float32)

    # PRM: all dilated 7x7 stride-4 convs fused into ONE lane-dense matmul (+ GELU)
    pads_dils = [(math.ceil(((k - 1) * d + 1 - s) / 2), d) for d in cfg["dilations"]]
    patches, Ho, Wo = _im2col_multi(x_nhwc, k, s, pads_dils)
    N = Ho * Wo
    M = B * N
    prm_tok = pallas_matmul(patches.reshape(M, -1), p["prm_w"], p["prm_b"], act="gelu")

    # attention branch: fused LN1 + qkv, head split in-kernel, T2T v-skip
    qkv = pallas_ln_matmul(prm_tok, p["ln1_g"], p["ln1_b"],
                           p["qkv_w"], p["qkv_b"], c_real=C_prm)
    head_dim = T // cfg["RC_heads"]
    attn = pallas_mhsa(qkv.reshape(B, N, -1), cfg["RC_heads"], head_dim,
                       head_dim ** -0.5, T)                       # (B, N, t_pad)
    v_tok = qkv[:, 2 * T:3 * T]

    # PCM branch: Conv3x3(s2)+BN+SiLU, Conv3x3(s2)+BN+SiLU, Conv3x3(s1)
    c, h1, w1 = conv2d_tokens(x_nhwc, p["pcm"][0], stride=2, padding=1, k=3, act="silu")
    c, h2, w2 = conv2d_tokens(c.reshape(B, h1, w1, -1), p["pcm"][1],
                              stride=2, padding=1, k=3, act="silu")
    pcm_tok, _, _ = conv2d_tokens(c.reshape(B, h2, w2, -1), p["pcm"][2],
                                  stride=1, padding=1, k=3)

    # proj with fused residual (v-skip + PCM), then fused LN2 + MLP(+residual).
    # attn is lane-padded; proj_w's extra zero rows make the padded columns free.
    x = pallas_matmul(attn.reshape(M, attn.shape[-1]), p["proj_w"], p["proj_b"],
                      residual=v_tok + pcm_tok)
    x = pallas_ln_mlp(x, p["ln2_g"], p["ln2_b"], p["mlp_w1"], p["mlp_b1"],
                      p["mlp_w2"], p["mlp_b2"], c_real=T)
    return x.reshape(B, N, T), (Ho, Wo)


def normal_cell(x, H, W, p, cfg):
    B, N, C = x.shape
    M = B * N
    heads = cfg["NC_heads"]
    hd = C // heads
    x_tok = x.reshape(M, C)
    x2d = x.reshape(B, H, W, C)

    # attention branch: LN1+qkv fused, attention core, proj with +x residual
    qkv = pallas_ln_matmul(x_tok, p["ln1_g"], p["ln1_b"],
                           p["qkv_w"], p["qkv_b"], c_real=C)
    attn = pallas_mhsa(qkv.reshape(B, N, -1), heads, hd, hd ** -0.5, C)
    x1 = pallas_matmul(attn.reshape(M, attn.shape[-1]), p["proj_w"], p["proj_b"],
                       residual=x_tok)

    # PCM branch on the original tokens-as-image; 3rd conv fuses SiLU + residual add
    c, _, _ = conv2d_tokens(x2d, p["pcm"][0], stride=1, padding=1, k=3, act="silu")
    c, _, _ = conv2d_tokens(c.reshape(B, H, W, -1), p["pcm"][1],
                            stride=1, padding=1, k=3, act="silu")
    x2, _, _ = conv2d_tokens(c.reshape(B, H, W, -1), p["pcm"][2],
                             stride=1, padding=1, k=3, act="silu", residual=x1)

    # fused LN2 + MLP + residual
    x3 = pallas_ln_mlp(x2, p["ln2_g"], p["ln2_b"], p["mlp_w1"], p["mlp_b1"],
                       p["mlp_w2"], p["mlp_b2"], c_real=C)
    return x3.reshape(B, N, C)


def basic_layer_forward(x_nchw, size, params, cfg):
    x, (h, w) = reduction_cell(x_nchw, params["RC"], cfg)
    for ncp in params["NC"]:
        x = normal_cell(x, h, w, ncp, cfg)
    return x, (h, w)


# ----------------------------------------------------------------------------- #
# Parameter init (raw, PyTorch-shaped) and one-time preparation (hoisted work)
# ----------------------------------------------------------------------------- #
def init_params(key, cfg):
    ks = iter(jax.random.split(key, 64))
    E, T, I = cfg["embed_dims"], cfg["token_dims"], cfg["in_chans"]
    K = cfg["kernel_size"]
    C_prm = len(cfg["dilations"]) * E
    hid_nc = int(T * cfg["mlp_ratio"])

    def w(shape, std=0.02):
        return jax.random.normal(next(ks), shape, jnp.float32) * std

    zeros = lambda s: jnp.zeros(s, jnp.float32)
    ones = lambda s: jnp.ones(s, jnp.float32)
    bn = lambda c: dict(gamma=ones((c,)), beta=zeros((c,)), mean=zeros((c,)), var=ones((c,)))

    rc = dict(
        prm=[dict(w=w((E, I, K, K)), b=zeros((E,))) for _ in cfg["dilations"]],
        pcm=[dict(w=w((E, I, 3, 3)), b=zeros((E,)), bn=bn(E)),
             dict(w=w((E, E, 3, 3)), b=zeros((E,)), bn=bn(E)),
             dict(w=w((T, E, 3, 3)), b=zeros((T,)))],
        norm1_g=ones((C_prm,)), norm1_b=zeros((C_prm,)),
        attn=dict(qkv_w=w((3 * T, C_prm)), qkv_b=zeros((3 * T,)),
                  proj_w=w((T, T)), proj_b=zeros((T,))),
        norm2_g=ones((T,)), norm2_b=zeros((T,)),
        mlp=dict(fc1_w=w((T, T)), fc1_b=zeros((T,)),          # RC mlp_ratio = 1.0
                 fc2_w=w((T, T)), fc2_b=zeros((T,))),
    )

    def make_nc():
        return dict(
            norm1_g=ones((T,)), norm1_b=zeros((T,)),
            attn=dict(qkv_w=w((3 * T, T)), qkv_b=zeros((3 * T,)),
                      proj_w=w((T, T)), proj_b=zeros((T,))),
            pcm=[dict(w=w((hid_nc, T, 3, 3)), b=zeros((hid_nc,)), bn=bn(hid_nc)),
                 dict(w=w((T, hid_nc, 3, 3)), b=zeros((T,)), bn=bn(T)),
                 dict(w=w((T, T, 3, 3)), b=zeros((T,)))],
            norm2_g=ones((T,)), norm2_b=zeros((T,)),
            mlp=dict(fc1_w=w((hid_nc, T)), fc1_b=zeros((hid_nc,)),
                     fc2_w=w((T, hid_nc)), fc2_b=zeros((T,))),
        )

    return dict(RC=rc, NC=[make_nc() for _ in range(cfg["NC_depth"])])


def _conv_w_mat(w_oikk):
    O, I, kh, kw = w_oikk.shape
    return jnp.transpose(w_oikk, (2, 3, 1, 0)).reshape(kh * kw * I, O)


def prepare_params(params, cfg):
    """One-time (outside jit) weight prep: BN folding, conv->matmul reshape, fused
    block-diagonal PRM weight, transposed & lane-padded linear / LN parameters."""
    E, T, I = cfg["embed_dims"], cfg["token_dims"], cfg["in_chans"]
    k = cfg["kernel_size"]
    nd = len(cfg["dilations"])
    C_prm = nd * E
    rc = params["RC"]

    # PRM: block-diagonal fused weight (all dilations -> single lane-dense matmul)
    Keach = k * k * I
    prm_w = jnp.zeros((nd * Keach, nd * E), jnp.float32)
    prm_b = []
    for i, cp in enumerate(rc["prm"]):
        prm_w = prm_w.at[i * Keach:(i + 1) * Keach, i * E:(i + 1) * E].set(_conv_w_mat(cp["w"]))
        prm_b.append(cp["b"])
    prm_b = jnp.concatenate(prm_b)

    def prep_pcm(pcm):
        out = []
        for c in pcm:
            w_, b_ = c["w"], c["b"]
            if "bn" in c:
                w_, b_ = fold_bn(w_, b_, c["bn"])
            out.append(dict(w=_conv_w_mat(w_), b=b_))
        return out

    def prep_attn_mlp(src, c_in, hidden):
        Cp = _round_up(c_in, 128)
        Qp = _round_up(3 * T, 128)
        Tp = _round_up(T, 128)
        Hp = _round_up(hidden, 128)
        return dict(
            ln1_g=_pad2d(src["norm1_g"].reshape(1, -1), 1, Cp),
            ln1_b=_pad2d(src["norm1_b"].reshape(1, -1), 1, Cp),
            qkv_w=_pad2d(src["attn"]["qkv_w"].T, Cp, Qp).astype(jnp.bfloat16),
            qkv_b=_pad2d(src["attn"]["qkv_b"].reshape(1, -1), 1, Qp),
            proj_w=src["attn"]["proj_w"].T, proj_b=src["attn"]["proj_b"],
            ln2_g=_pad2d(src["norm2_g"].reshape(1, -1), 1, Tp),
            ln2_b=_pad2d(src["norm2_b"].reshape(1, -1), 1, Tp),
            mlp_w1=_pad2d(src["mlp"]["fc1_w"].T, Tp, Hp).astype(jnp.bfloat16),
            mlp_b1=_pad2d(src["mlp"]["fc1_b"].reshape(1, -1), 1, Hp),
            mlp_w2=_pad2d(src["mlp"]["fc2_w"].T, Hp, Tp).astype(jnp.bfloat16),
            mlp_b2=_pad2d(src["mlp"]["fc2_b"].reshape(1, -1), 1, Tp),
        )

    rc_prep = dict(prm_w=prm_w, prm_b=prm_b, pcm=prep_pcm(rc["pcm"]),
                   **prep_attn_mlp(rc, C_prm, T))                    # RC mlp hidden = T

    hid_nc = int(T * cfg["mlp_ratio"])
    nc_prep = [dict(pcm=prep_pcm(nc["pcm"]), **prep_attn_mlp(nc, T, hid_nc))
               for nc in params["NC"]]
    return dict(RC=rc_prep, NC=nc_prep)


# ----------------------------------------------------------------------------- #
if __name__ == "__main__":
    cfg = dict(
        img_size=16, in_chans=4, embed_dims=16, token_dims=32,
        downsample_ratios=4, kernel_size=7, RC_heads=1, NC_heads=4,
        dilations=[1, 2], NC_depth=2, mlp_ratio=4.0,
    )
    params = init_params(jax.random.PRNGKey(42), cfg)
    prep = prepare_params(params, cfg)          # hoisted constant work (BN fold, etc.)

    x = jax.random.normal(
        jax.random.PRNGKey(0),
        (2, cfg["in_chans"], cfg["img_size"], cfg["img_size"]),
        jnp.float32,
    )

    fwd = jax.jit(lambda xx, pp: basic_layer_forward(
        xx, (cfg["img_size"], cfg["img_size"]), pp, cfg))
    out, (h, w) = fwd(x, prep)
    out = jax.block_until_ready(out)
    h, w = int(h), int(w)

    expected_tokens = (cfg["img_size"] // cfg["downsample_ratios"]) ** 2
    assert out.shape == (2, expected_tokens, cfg["token_dims"]), out.shape
    assert (h, w) == (4, 4)
    assert bool(jnp.all(jnp.isfinite(out)))
    print("KERNEL_OK")
</pallas_src>

<mosaic_0001>
module attributes {stable_mosaic.version = 11 : i64} {
  func.func @_matmul_kernel(%arg0: i32, %arg1: i32, %arg2: i32, %arg3: memref<32x512xbf16, #tpu.memory_space<vmem>>, %arg4: memref<512x128xbf16, #tpu.memory_space<vmem>>, %arg5: memref<1x128xf32, #tpu.memory_space<vmem>>, %arg6: memref<32x128xf32, #tpu.memory_space<vmem>>, %arg7: memref<32x128xf32, #tpu.memory_space<vmem>>) attributes {dimension_semantics = [#tpu.dimension_semantics<parallel>, #tpu.dimension_semantics<parallel>, #tpu.dimension_semantics<arbitrary>], iteration_bounds = array<i64: 1, 1, 1>, scalar_prefetch = 0 : i64, scratch_operands = 1 : i64, tpu.core_type = #tpu.core_type<tc>, window_params = [{transform_indices = @transform_0, window_bounds = array<i64: 32, 512>}, {transform_indices = @transform_1, window_bounds = array<i64: 512, 128>}, {transform_indices = @transform_2, window_bounds = array<i64: 1, 128>}, {transform_indices = @transform_3, window_bounds = array<i64: 32, 128>}]} {
    %c0_i32 = arith.constant 0 : i32
    %0 = arith.cmpi eq, %arg2, %c0_i32 : i32
    %1 = arith.extui %0 : i1 to i32
    %c0_i32_0 = arith.constant 0 : i32
    %2 = arith.cmpi ne, %1, %c0_i32_0 : i32
    scf.if %2 {
      %cst_10 = arith.constant 0.000000e+00 : f32
      %12 = vector.broadcast %cst_10 : f32 to vector<32x128xf32>
      %c0_11 = arith.constant 0 : index
      %c0_12 = arith.constant 0 : index
      %13 = vector.load %arg7[%c0_11, %c0_12] : memref<32x128xf32, #tpu.memory_space<vmem>>, vector<32x128xf32>
      tpu.vector_store %arg7[%c0_11, %c0_12], %12 {strides = array<i32>} : memref<32x128xf32, #tpu.memory_space<vmem>>, vector<32x128xf32>,
    } else {
    }
    %c0 = arith.constant 0 : index
    %c0_1 = arith.constant 0 : index
    %3 = vector.load %arg7[%c0, %c0_1] : memref<32x128xf32, #tpu.memory_space<vmem>>, vector<32x128xf32>
    %c0_2 = arith.constant 0 : index
    %c0_3 = arith.constant 0 : index
    %4 = vector.load %arg3[%c0_2, %c0_3] : memref<32x512xbf16, #tpu.memory_space<vmem>>, vector<32x512xbf16>
    %c0_4 = arith.constant 0 : index
    %c0_5 = arith.constant 0 : index
    %5 = vector.load %arg4[%c0_4, %c0_5] : memref<512x128xbf16, #tpu.memory_space<vmem>>, vector<512x128xbf16>
    %cst = arith.constant dense<0.000000e+00> : vector<32x128xf32>
    %6 = tpu.matmul %4, %5, %cst {dimension_numbers = #tpu.dot_dimension_numbers<[1], [0], [0], [1], [0, 0, 1, 1], [], []>} : vector<32x512xbf16>, vector<512x128xbf16>, vector<32x128xf32> -> vector<32x128xf32>
    %7 = arith.addf %3, %6 : vector<32x128xf32>
    %c0_6 = arith.constant 0 : index
    %c0_7 = arith.constant 0 : index
    %8 = vector.load %arg7[%c0_6, %c0_7] : memref<32x128xf32, #tpu.memory_space<vmem>>, vector<32x128xf32>
    tpu.vector_store %arg7[%c0_6, %c0_7], %7 {strides = array<i32>} : memref<32x128xf32, #tpu.memory_space<vmem>>, vector<32x128xf32>,
    %c0_i32_8 = arith.constant 0 : i32
    %9 = arith.cmpi eq, %arg2, %c0_i32_8 : i32
    %10 = arith.extui %9 : i1 to i32
    %c0_i32_9 = arith.constant 0 : i32
    %11 = arith.cmpi ne, %10, %c0_i32_9 : i32
    scf.if %11 {
      %c0_10 = arith.constant 0 : index
      %c0_11 = arith.constant 0 : index
      %12 = vector.load %arg7[%c0_10, %c0_11] : memref<32x128xf32, #tpu.memory_space<vmem>>, vector<32x128xf32>
      %c0_12 = arith.constant 0 : index
      %c0_13 = arith.constant 0 : index
      %13 = vector.load %arg5[%c0_12, %c0_13] : memref<1x128xf32, #tpu.memory_space<vmem>>, vector<1x128xf32>
      %14 = vector.broadcast %13 : vector<1x128xf32> to vector<32x128xf32>
      %15 = arith.addf %12, %14 : vector<32x128xf32>
      %16 = arith.mulf %15, %15 : vector<32x128xf32>
      %17 = arith.mulf %15, %16 : vector<32x128xf32>
      %cst_14 = arith.constant 4.471500e-02 : f32
      %18 = vector.broadcast %cst_14 : f32 to vector<32x128xf32>
      %19 = arith.mulf %18, %17 : vector<32x128xf32>
      %20 = arith.addf %15, %19 : vector<32x128xf32>
      %cst_15 = arith.constant 0.797884583 : f32
      %21 = vector.broadcast %cst_15 : f32 to vector<32x128xf32>
      %22 = arith.mulf %21, %20 : vector<32x128xf32>
      %23 = math.tanh %22 : vector<32x128xf32>
      %cst_16 = arith.constant 1.000000e+00 : f32
      %24 = vector.broadcast %cst_16 : f32 to vector<32x128xf32>
      %25 = arith.addf %24, %23 : vector<32x128xf32>
      %cst_17 = arith.constant 5.000000e-01 : f32
      %26 = vector.broadcast %cst_17 : f32 to vector<32x128xf32>
      %27 = arith.mulf %26, %25 : vector<32x128xf32>
      %28 = arith.mulf %15, %27 : vector<32x128xf32>
      %c0_18 = arith.constant 0 : index
      %c0_19 = arith.constant 0 : index
      %29 = vector.load %arg6[%c0_18, %c0_19] : memref<32x128xf32, #tpu.memory_space<vmem>>, vector<32x128xf32>
      tpu.vector_store %arg6[%c0_18, %c0_19], %28 {strides = array<i32>} : memref<32x128xf32, #tpu.memory_space<vmem>>, vector<32x128xf32>,
    } else {
    }
    return
  }
  func.func @transform_0(%arg0: i32, %arg1: i32, %arg2: i32) -> (i32, i32) {
    %c0_i32 = arith.constant 0 : i32
    return %arg0, %arg2 : i32, i32
  }
  func.func @transform_1(%arg0: i32, %arg1: i32, %arg2: i32) -> (i32, i32) {
    %c0_i32 = arith.constant 0 : i32
    return %arg2, %arg1 : i32, i32
  }
  func.func @transform_2(%arg0: i32, %arg1: i32, %arg2: i32) -> (i32, i32) {
    %c0_i32 = arith.constant 0 : i32
    %c0_i32_0 = arith.constant 0 : i32
    return %c0_i32, %arg1 : i32, i32
  }
  func.func @transform_3(%arg0: i32, %arg1: i32, %arg2: i32) -> (i32, i32) {
    %c0_i32 = arith.constant 0 : i32
    return %arg0, %arg1 : i32, i32
  }
}

module attributes {stable_mosaic.version = 11 : i64} {
  func.func @_ln_matmul_kernel(%arg0: i32, %arg1: i32, %arg2: memref<32x128xf32, #tpu.memory_space<vmem>>, %arg3: memref<1x128xf32, #tpu.memory_space<vmem>>, %arg4: memref<1x128xf32, #tpu.memory_space<vmem>>, %arg5: memref<128x128xbf16, #tpu.memory_space<vmem>>, %arg6: memref<1x128xf32, #tpu.memory_space<vmem>>, %arg7: memref<32x128xf32, #tpu.memory_space<vmem>>) attributes {dimension_semantics = [#tpu.dimension_semantics<parallel>, #tpu.dimension_semantics<parallel>], iteration_bounds = array<i64: 1, 1>, scalar_prefetch = 0 : i64, scratch_operands = 0 : i64, tpu.core_type = #tpu.core_type<tc>, window_params = [{transform_indices = @transform_0, window_bounds = array<i64: 32, 128>}, {pipeline_mode = #tpu.pipeline_mode<synchronous>, transform_indices = @transform_1, window_bounds = array<i64: 1, 128>}, {pipeline_mode = #tpu.pipeline_mode<synchronous>, transform_indices = @transform_2, window_bounds = array<i64: 1, 128>}, {transform_indices = @transform_3, window_bounds = array<i64: 128, 128>}, {transform_indices = @transform_4, window_bounds = array<i64: 1, 128>}, {transform_indices = @transform_5, window_bounds = array<i64: 32, 128>}]} {
    %c0 = arith.constant 0 : index
    %c0_0 = arith.constant 0 : index
    %0 = vector.load %arg2[%c0, %c0_0] : memref<32x128xf32, #tpu.memory_space<vmem>>, vector<32x128xf32>
    %cst = arith.constant dense<0.000000e+00> : vector<32xf32>
    %1 = vector.multi_reduction <add>, %0, %cst [1] : vector<32x128xf32> to vector<32xf32>
    %2 = vector.shape_cast %1 : vector<32xf32> to vector<32x1xf32>
    %cst_1 = arith.constant 3.125000e-02 : f32
    %3 = vector.broadcast %cst_1 : f32 to vector<32x1xf32>
    %4 = arith.mulf %2, %3 : vector<32x1xf32>
    %5 = vector.broadcast %4 : vector<32x1xf32> to vector<32x128xf32>
    %6 = arith.subf %0, %5 : vector<32x128xf32>
    %7 = arith.mulf %6, %6 : vector<32x128xf32>
    %cst_2 = arith.constant dense<0.000000e+00> : vector<32xf32>
    %8 = vector.multi_reduction <add>, %7, %cst_2 [1] : vector<32x128xf32> to vector<32xf32>
    %9 = vector.shape_cast %8 : vector<32xf32> to vector<32x1xf32>
    %cst_3 = arith.constant 9.600000e+01 : f32
    %10 = vector.broadcast %cst_3 : f32 to vector<32x1xf32>
    %11 = arith.mulf %10, %4 : vector<32x1xf32>
    %12 = arith.mulf %11, %4 : vector<32x1xf32>
    %13 = arith.subf %9, %12 : vector<32x1xf32>
    %cst_4 = arith.constant 3.125000e-02 : f32
    %14 = vector.broadcast %cst_4 : f32 to vector<32x1xf32>
    %15 = arith.mulf %13, %14 : vector<32x1xf32>
    %cst_5 = arith.constant 0.000000e+00 : f32
    %16 = vector.broadcast %cst_5 : f32 to vector<32x1xf32>
    %17 = arith.maximumf %15, %16 : vector<32x1xf32>
    %cst_6 = arith.constant 9.99999974E-6 : f32
    %18 = vector.broadcast %cst_6 : f32 to vector<32x1xf32>
    %19 = arith.addf %17, %18 : vector<32x1xf32>
    %20 = math.rsqrt %19 : vector<32x1xf32>
    %21 = vector.broadcast %20 : vector<32x1xf32> to vector<32x128xf32>
    %22 = arith.mulf %6, %21 : vector<32x128xf32>
    %c0_7 = arith.constant 0 : index
    %c0_8 = arith.constant 0 : index
    %23 = vector.load %arg3[%c0_7, %c0_8] : memref<1x128xf32, #tpu.memory_space<vmem>>, vector<1x128xf32>
    %24 = vector.broadcast %23 : vector<1x128xf32> to vector<32x128xf32>
    %25 = arith.mulf %22, %24 : vector<32x128xf32>
    %c0_9 = arith.constant 0 : index
    %c0_10 = arith.constant 0 : index
    %26 = vector.load %arg4[%c0_9, %c0_10] : memref<1x128xf32, #tpu.memory_space<vmem>>, vector<1x128xf32>
    %27 = vector.broadcast %26 : vector<1x128xf32> to vector<32x128xf32>
    %28 = arith.addf %25, %27 : vector<32x128xf32>
    %29 = arith.truncf %28 : vector<32x128xf32> to vector<32x128xbf16>
    %c0_11 = arith.constant 0 : index
    %c0_12 = arith.constant 0 : index
    %30 = vector.load %arg5[%c0_11, %c0_12] : memref<128x128xbf16, #tpu.memory_space<vmem>>, vector<128x128xbf16>
    %cst_13 = arith.constant dense<0.000000e+00> : vector<32x128xf32>
    %31 = tpu.matmul %29, %30, %cst_13 {dimension_numbers = #tpu.dot_dimension_numbers<[1], [0], [0], [1], [0, 0, 1, 1], [], []>} : vector<32x128xbf16>, vector<128x128xbf16>, vector<32x128xf32> -> vector<32x128xf32>
    %c0_14 = arith.constant 0 : index
    %c0_15 = arith.constant 0 : index
    %32 = vector.load %arg6[%c0_14, %c0_15] : memref<1x128xf32, #tpu.memory_space<vmem>>, vector<1x128xf32>
    %33 = vector.broadcast %32 : vector<1x128xf32> to vector<32x128xf32>
    %34 = arith.addf %31, %33 : vector<32x128xf32>
    %c0_16 = arith.constant 0 : index
    %c0_17 = arith.constant 0 : index
    %35 = vector.load %arg7[%c0_16, %c0_17] : memref<32x128xf32, #tpu.memory_space<vmem>>, vector<32x128xf32>
    tpu.vector_store %arg7[%c0_16, %c0_17], %34 {strides = array<i32>} : memref<32x128xf32, #tpu.memory_space<vmem>>, vector<32x128xf32>,
    return
  }
  func.func @transform_0(%arg0: i32, %arg1: i32) -> (i32, i32) {
    %c0_i32 = arith.constant 0 : i32
    %c0_i32_0 = arith.constant 0 : i32
    return %arg0, %c0_i32 : i32, i32
  }
  func.func @transform_1(%arg0: i32, %arg1: i32) -> (i32, i32) {
    %c0_i32 = arith.constant 0 : i32
    %c0_i32_0 = arith.constant 0 : i32
    %c0_i32_1 = arith.constant 0 : i32
    return %c0_i32, %c0_i32_0 : i32, i32
  }
  func.func @transform_2(%arg0: i32, %arg1: i32) -> (i32, i32) {
    %c0_i32 = arith.constant 0 : i32
    %c0_i32_0 = arith.constant 0 : i32
    %c0_i32_1 = arith.constant 0 : i32
    return %c0_i32, %c0_i32_0 : i32, i32
  }
  func.func @transform_3(%arg0: i32, %arg1: i32) -> (i32, i32) {
    %c0_i32 = arith.constant 0 : i32
    %c0_i32_0 = arith.constant 0 : i32
    return %c0_i32, %arg1 : i32, i32
  }
  func.func @transform_4(%arg0: i32, %arg1: i32) -> (i32, i32) {
    %c0_i32 = arith.constant 0 : i32
    %c0_i32_0 = arith.constant 0 : i32
    return %c0_i32, %arg1 : i32, i32
  }
  func.func @transform_5(%arg0: i32, %arg1: i32) -> (i32, i32) {
    %c0_i32 = arith.constant 0 : i32
    return %arg0, %arg1 : i32, i32
  }
}

module attributes {stable_mosaic.version = 11 : i64} {
  func.func @_mhsa_kernel(%arg0: i32, %arg1: i32, %arg2: memref<1x16x128xf32, #tpu.memory_space<vmem>>, %arg3: memref<1x16x128xf32, #tpu.memory_space<vmem>>, %arg4: memref<1x16x128xf32, #tpu.memory_space<vmem>>) attributes {dimension_semantics = [#tpu.dimension_semantics<parallel>, #tpu.dimension_semantics<parallel>], iteration_bounds = array<i64: 2, 1>, scalar_prefetch = 0 : i64, scratch_operands = 0 : i64, tpu.core_type = #tpu.core_type<tc>, window_params = [{transform_indices = @transform_0, window_bounds = array<i64: 1, 16, 128>}, {transform_indices = @transform_1, window_bounds = array<i64: 1, 16, 128>}, {transform_indices = @transform_2, window_bounds = array<i64: 1, 16, 128>}]} {
    %c0 = arith.constant 0 : index
    %c0_0 = arith.constant 0 : index
    %c0_1 = arith.constant 0 : index
    %0 = vector.load %arg2[%c0, %c0_0, %c0_1] : memref<1x16x128xf32, #tpu.memory_space<vmem>>, vector<1x16x128xf32>
    %1 = vector.shape_cast %0 : vector<1x16x128xf32> to vector<16x128xf32>
    %c0_2 = arith.constant 0 : index
    %c0_3 = arith.constant 0 : index
    %c0_4 = arith.constant 0 : index
    %2 = vector.load %arg3[%c0_2, %c0_3, %c0_4] : memref<1x16x128xf32, #tpu.memory_space<vmem>>, vector<1x16x128xf32>
    %3 = vector.shape_cast %2 : vector<1x16x128xf32> to vector<16x128xf32>
    %4 = arith.truncf %3 : vector<16x128xf32> to vector<16x128xbf16>
    %5 = vector.extract_strided_slice %1 {offsets = [0, 0], sizes = [16, 32], strides = [1, 1]} : vector<16x128xf32> to vector<16x32xf32>
    %cst = arith.constant 0.176776692 : f32
    %6 = vector.broadcast %cst : f32 to vector<16x32xf32>
    %7 = arith.mulf %5, %6 : vector<16x32xf32>
    %8 = arith.truncf %7 : vector<16x32xf32> to vector<16x32xbf16>
    %9 = vector.extract_strided_slice %4 {offsets = [0, 32], sizes = [16, 32], strides = [1, 1]} : vector<16x128xbf16> to vector<16x32xbf16>
    %10 = vector.extract_strided_slice %4 {offsets = [0, 64], sizes = [16, 32], strides = [1, 1]} : vector<16x128xbf16> to vector<16x32xbf16>
    %cst_5 = arith.constant dense<0.000000e+00> : vector<16x16xf32>
    %11 = tpu.matmul %8, %9, %cst_5 {dimension_numbers = #tpu.dot_dimension_numbers<[1], [1], [0], [0], [0, 0, 1, 0], [], []>} : vector<16x32xbf16>, vector<16x32xbf16>, vector<16x16xf32> -> vector<16x16xf32>
    %cst_6 = arith.constant dense<0xFF800000> : vector<16xf32>
    %12 = vector.multi_reduction <maximumf>, %11, %cst_6 [1] : vector<16x16xf32> to vector<16xf32>
    %13 = vector.shape_cast %12 : vector<16xf32> to vector<16x1xf32>
    %14 = vector.broadcast %13 : vector<16x1xf32> to vector<16x16xf32>
    %15 = arith.subf %11, %14 : vector<16x16xf32>
    %16 = math.exp %15 : vector<16x16xf32>
    %cst_7 = arith.constant dense<0.000000e+00> : vector<16xf32>
    %17 = vector.multi_reduction <add>, %16, %cst_7 [1] : vector<16x16xf32> to vector<16xf32>
    %18 = vector.shape_cast %17 : vector<16xf32> to vector<16x1xf32>
    %19 = tpu.reciprocal %18 {approx = true} : vector<16x1xf32> -> vector<16x1xf32>
    %20 = vector.broadcast %19 : vector<16x1xf32> to vector<16x16xf32>
    %21 = arith.mulf %16, %20 : vector<16x16xf32>
    %22 = arith.truncf %21 : vector<16x16xf32> to vector<16x16xbf16>
    %cst_8 = arith.constant dense<0.000000e+00> : vector<16x32xf32>
    %23 = tpu.matmul %22, %10, %cst_8 {dimension_numbers = #tpu.dot_dimension_numbers<[1], [0], [0], [1], [0, 0, 1, 1], [], []>} : vector<16x16xbf16>, vector<16x32xbf16>, vector<16x32xf32> -> vector<16x32xf32>
    %cst_9 = arith.constant 0.000000e+00 : f32
    %24 = vector.broadcast %cst_9 : f32 to vector<16x96xf32>
    %25 = tpu.concatenate %23, %24 in 1 : vector<16x32xf32>, vector<16x96xf32> -> vector<16x128xf32>
    %c0_10 = arith.constant 0 : index
    %c0_11 = arith.constant 0 : index
    %c0_12 = arith.constant 0 : index
    %26 = vector.load %arg4[%c0_10, %c0_11, %c0_12] : memref<1x16x128xf32, #tpu.memory_space<vmem>>, vector<1x16x128xf32>
    %27 = vector.shape_cast %26 : vector<1x16x128xf32> to vector<16x128xf32>
    %28 = vector.shape_cast %25 : vector<16x128xf32> to vector<1x16x128xf32>
    tpu.vector_store %arg4[%c0_10, %c0_11, %c0_12], %28 {strides = array<i32>} : memref<1x16x128xf32, #tpu.memory_space<vmem>>, vector<1x16x128xf32>,
    return
  }
  func.func @transform_0(%arg0: i32, %arg1: i32) -> (i32, i32, i32) {
    %c0_i32 = arith.constant 0 : i32
    %c0_i32_0 = arith.constant 0 : i32
    return %arg0, %arg1, %c0_i32 : i32, i32, i32
  }
  func.func @transform_1(%arg0: i32, %arg1: i32) -> (i32, i32, i32) {
    %c0_i32 = arith.constant 0 : i32
    %c0_i32_0 = arith.constant 0 : i32
    %c0_i32_1 = arith.constant 0 : i32
    return %arg0, %c0_i32, %c0_i32_0 : i32, i32, i32
  }
  func.func @transform_2(%arg0: i32, %arg1: i32) -> (i32, i32, i32) {
    %c0_i32 = arith.constant 0 : i32
    %c0_i32_0 = arith.constant 0 : i32
    return %arg0, %arg1, %c0_i32 : i32, i32, i32
  }
}

module attributes {stable_mosaic.version = 11 : i64} {
  func.func @_matmul_kernel(%arg0: i32, %arg1: i32, %arg2: i32, %arg3: memref<128x128xbf16, #tpu.memory_space<vmem>>, %arg4: memref<128x128xbf16, #tpu.memory_space<vmem>>, %arg5: memref<1x128xf32, #tpu.memory_space<vmem>>, %arg6: memref<128x128xf32, #tpu.memory_space<vmem>>, %arg7: memref<128x128xf32, #tpu.memory_space<vmem>>) attributes {dimension_semantics = [#tpu.dimension_semantics<parallel>, #tpu.dimension_semantics<parallel>, #tpu.dimension_semantics<arbitrary>], iteration_bounds = array<i64: 1, 1, 1>, scalar_prefetch = 0 : i64, scratch_operands = 1 : i64, tpu.core_type = #tpu.core_type<tc>, window_params = [{transform_indices = @transform_0, window_bounds = array<i64: 128, 128>}, {transform_indices = @transform_1, window_bounds = array<i64: 128, 128>}, {transform_indices = @transform_2, window_bounds = array<i64: 1, 128>}, {transform_indices = @transform_3, window_bounds = array<i64: 128, 128>}]} {
    %c0_i32 = arith.constant 0 : i32
    %0 = arith.cmpi eq, %arg2, %c0_i32 : i32
    %1 = arith.extui %0 : i1 to i32
    %c0_i32_0 = arith.constant 0 : i32
    %2 = arith.cmpi ne, %1, %c0_i32_0 : i32
    scf.if %2 {
      %cst_10 = arith.constant 0.000000e+00 : f32
      %12 = vector.broadcast %cst_10 : f32 to vector<128x128xf32>
      %c0_11 = arith.constant 0 : index
      %c0_12 = arith.constant 0 : index
      %13 = vector.load %arg7[%c0_11, %c0_12] : memref<128x128xf32, #tpu.memory_space<vmem>>, vector<128x128xf32>
      tpu.vector_store %arg7[%c0_11, %c0_12], %12 {strides = array<i32>} : memref<128x128xf32, #tpu.memory_space<vmem>>, vector<128x128xf32>,
    } else {
    }
    %c0 = arith.constant 0 : index
    %c0_1 = arith.constant 0 : index
    %3 = vector.load %arg7[%c0, %c0_1] : memref<128x128xf32, #tpu.memory_space<vmem>>, vector<128x128xf32>
    %c0_2 = arith.constant 0 : index
    %c0_3 = arith.constant 0 : index
    %4 = vector.load %arg3[%c0_2, %c0_3] : memref<128x128xbf16, #tpu.memory_space<vmem>>, vector<128x128xbf16>
    %c0_4 = arith.constant 0 : index
    %c0_5 = arith.constant 0 : index
    %5 = vector.load %arg4[%c0_4, %c0_5] : memref<128x128xbf16, #tpu.memory_space<vmem>>, vector<128x128xbf16>
    %cst = arith.constant dense<0.000000e+00> : vector<128x128xf32>
    %6 = tpu.matmul %4, %5, %cst {dimension_numbers = #tpu.dot_dimension_numbers<[1], [0], [0], [1], [0, 0, 1, 1], [], []>} : vector<128x128xbf16>, vector<128x128xbf16>, vector<128x128xf32> -> vector<128x128xf32>
    %7 = arith.addf %3, %6 : vector<128x128xf32>
    %c0_6 = arith.constant 0 : index
    %c0_7 = arith.constant 0 : index
    %8 = vector.load %arg7[%c0_6, %c0_7] : memref<128x128xf32, #tpu.memory_space<vmem>>, vector<128x128xf32>
    tpu.vector_store %arg7[%c0_6, %c0_7], %7 {strides = array<i32>} : memref<128x128xf32, #tpu.memory_space<vmem>>, vector<128x128xf32>,
    %c0_i32_8 = arith.constant 0 : i32
    %9 = arith.cmpi eq, %arg2, %c0_i32_8 : i32
    %10 = arith.extui %9 : i1 to i32
    %c0_i32_9 = arith.constant 0 : i32
    %11 = arith.cmpi ne, %10, %c0_i32_9 : i32
    scf.if %11 {
      %c0_10 = arith.constant 0 : index
      %c0_11 = arith.constant 0 : index
      %12 = vector.load %arg7[%c0_10, %c0_11] : memref<128x128xf32, #tpu.memory_space<vmem>>, vector<128x128xf32>
      %c0_12 = arith.constant 0 : index
      %c0_13 = arith.constant 0 : index
      %13 = vector.load %arg5[%c0_12, %c0_13] : memref<1x128xf32, #tpu.memory_space<vmem>>, vector<1x128xf32>
      %14 = vector.broadcast %13 : vector<1x128xf32> to vector<128x128xf32>
      %15 = arith.addf %12, %14 : vector<128x128xf32>
      %16 = arith.negf %15 : vector<128x128xf32>
      %17 = math.exp %16 : vector<128x128xf32>
      %cst_14 = arith.constant 1.000000e+00 : f32
      %18 = vector.broadcast %cst_14 : f32 to vector<128x128xf32>
      %19 = arith.addf %18, %17 : vector<128x128xf32>
      %20 = arith.divf %18, %19 : vector<128x128xf32>
      %21 = arith.mulf %15, %20 : vector<128x128xf32>
      %c0_15 = arith.constant 0 : index
      %c0_16 = arith.constant 0 : index
      %22 = vector.load %arg6[%c0_15, %c0_16] : memref<128x128xf32, #tpu.memory_space<vmem>>, vector<128x128xf32>
      tpu.vector_store %arg6[%c0_15, %c0_16], %21 {strides = array<i32>} : memref<128x128xf32, #tpu.memory_space<vmem>>, vector<128x128xf32>,
    } else {
    }
    return
  }
  func.func @transform_0(%arg0: i32, %arg1: i32, %arg2: i32) -> (i32, i32) {
    %c0_i32 = arith.constant 0 : i32
    return %arg0, %arg2 : i32, i32
  }
  func.func @transform_1(%arg0: i32, %arg1: i32, %arg2: i32) -> (i32, i32) {
    %c0_i32 = arith.constant 0 : i32
    return %arg2, %arg1 : i32, i32
  }
  func.func @transform_2(%arg0: i32, %arg1: i32, %arg2: i32) -> (i32, i32) {
    %c0_i32 = arith.constant 0 : i32
    %c0_i32_0 = arith.constant 0 : i32
    return %c0_i32, %arg1 : i32, i32
  }
  func.func @transform_3(%arg0: i32, %arg1: i32, %arg2: i32) -> (i32, i32) {
    %c0_i32 = arith.constant 0 : i32
    return %arg0, %arg1 : i32, i32
  }
}

module attributes {stable_mosaic.version = 11 : i64} {
  func.func @_matmul_kernel(%arg0: i32, %arg1: i32, %arg2: i32, %arg3: memref<32x256xbf16, #tpu.memory_space<vmem>>, %arg4: memref<256x128xbf16, #tpu.memory_space<vmem>>, %arg5: memref<1x128xf32, #tpu.memory_space<vmem>>, %arg6: memref<32x128xf32, #tpu.memory_space<vmem>>, %arg7: memref<32x128xf32, #tpu.memory_space<vmem>>) attributes {dimension_semantics = [#tpu.dimension_semantics<parallel>, #tpu.dimension_semantics<parallel>, #tpu.dimension_semantics<arbitrary>], iteration_bounds = array<i64: 1, 1, 1>, scalar_prefetch = 0 : i64, scratch_operands = 1 : i64, tpu.core_type = #tpu.core_type<tc>, window_params = [{transform_indices = @transform_0, window_bounds = array<i64: 32, 256>}, {transform_indices = @transform_1, window_bounds = array<i64: 256, 128>}, {transform_indices = @transform_2, window_bounds = array<i64: 1, 128>}, {transform_indices = @transform_3, window_bounds = array<i64: 32, 128>}]} {
    %c0_i32 = arith.constant 0 : i32
    %0 = arith.cmpi eq, %arg2, %c0_i32 : i32
    %1 = arith.extui %0 : i1 to i32
    %c0_i32_0 = arith.constant 0 : i32
    %2 = arith.cmpi ne, %1, %c0_i32_0 : i32
    scf.if %2 {
      %cst_10 = arith.constant 0.000000e+00 : f32
      %12 = vector.broadcast %cst_10 : f32 to vector<32x128xf32>
      %c0_11 = arith.constant 0 : index
      %c0_12 = arith.constant 0 : index
      %13 = vector.load %arg7[%c0_11, %c0_12] : memref<32x128xf32, #tpu.memory_space<vmem>>, vector<32x128xf32>
      tpu.vector_store %arg7[%c0_11, %c0_12], %12 {strides = array<i32>} : memref<32x128xf32, #tpu.memory_space<vmem>>, vector<32x128xf32>,
    } else {
    }
    %c0 = arith.constant 0 : index
    %c0_1 = arith.constant 0 : index
    %3 = vector.load %arg7[%c0, %c0_1] : memref<32x128xf32, #tpu.memory_space<vmem>>, vector<32x128xf32>
    %c0_2 = arith.constant 0 : index
    %c0_3 = arith.constant 0 : index
    %4 = vector.load %arg3[%c0_2, %c0_3] : memref<32x256xbf16, #tpu.memory_space<vmem>>, vector<32x256xbf16>
    %c0_4 = arith.constant 0 : index
    %c0_5 = arith.constant 0 : index
    %5 = vector.load %arg4[%c0_4, %c0_5] : memref<256x128xbf16, #tpu.memory_space<vmem>>, vector<256x128xbf16>
    %cst = arith.constant dense<0.000000e+00> : vector<32x128xf32>
    %6 = tpu.matmul %4, %5, %cst {dimension_numbers = #tpu.dot_dimension_numbers<[1], [0], [0], [1], [0, 0, 1, 1], [], []>} : vector<32x256xbf16>, vector<256x128xbf16>, vector<32x128xf32> -> vector<32x128xf32>
    %7 = arith.addf %3, %6 : vector<32x128xf32>
    %c0_6 = arith.constant 0 : index
    %c0_7 = arith.constant 0 : index
    %8 = vector.load %arg7[%c0_6, %c0_7] : memref<32x128xf32, #tpu.memory_space<vmem>>, vector<32x128xf32>
    tpu.vector_store %arg7[%c0_6, %c0_7], %7 {strides = array<i32>} : memref<32x128xf32, #tpu.memory_space<vmem>>, vector<32x128xf32>,
    %c0_i32_8 = arith.constant 0 : i32
    %9 = arith.cmpi eq, %arg2, %c0_i32_8 : i32
    %10 = arith.extui %9 : i1 to i32
    %c0_i32_9 = arith.constant 0 : i32
    %11 = arith.cmpi ne, %10, %c0_i32_9 : i32
    scf.if %11 {
      %c0_10 = arith.constant 0 : index
      %c0_11 = arith.constant 0 : index
      %12 = vector.load %arg7[%c0_10, %c0_11] : memref<32x128xf32, #tpu.memory_space<vmem>>, vector<32x128xf32>
      %c0_12 = arith.constant 0 : index
      %c0_13 = arith.constant 0 : index
      %13 = vector.load %arg5[%c0_12, %c0_13] : memref<1x128xf32, #tpu.memory_space<vmem>>, vector<1x128xf32>
      %14 = vector.broadcast %13 : vector<1x128xf32> to vector<32x128xf32>
      %15 = arith.addf %12, %14 : vector<32x128xf32>
      %16 = arith.negf %15 : vector<32x128xf32>
      %17 = math.exp %16 : vector<32x128xf32>
      %cst_14 = arith.constant 1.000000e+00 : f32
      %18 = vector.broadcast %cst_14 : f32 to vector<32x128xf32>
      %19 = arith.addf %18, %17 : vector<32x128xf32>
      %20 = arith.divf %18, %19 : vector<32x128xf32>
      %21 = arith.mulf %15, %20 : vector<32x128xf32>
      %c0_15 = arith.constant 0 : index
      %c0_16 = arith.constant 0 : index
      %22 = vector.load %arg6[%c0_15, %c0_16] : memref<32x128xf32, #tpu.memory_space<vmem>>, vector<32x128xf32>
      tpu.vector_store %arg6[%c0_15, %c0_16], %21 {strides = array<i32>} : memref<32x128xf32, #tpu.memory_space<vmem>>, vector<32x128xf32>,
    } else {
    }
    return
  }
  func.func @transform_0(%arg0: i32, %arg1: i32, %arg2: i32) -> (i32, i32) {
    %c0_i32 = arith.constant 0 : i32
    return %arg0, %arg2 : i32, i32
  }
  func.func @transform_1(%arg0: i32, %arg1: i32, %arg2: i32) -> (i32, i32) {
    %c0_i32 = arith.constant 0 : i32
    return %arg2, %arg1 : i32, i32
  }
  func.func @transform_2(%arg0: i32, %arg1: i32, %arg2: i32) -> (i32, i32) {
    %c0_i32 = arith.constant 0 : i32
    %c0_i32_0 = arith.constant 0 : i32
    return %c0_i32, %arg1 : i32, i32
  }
  func.func @transform_3(%arg0: i32, %arg1: i32, %arg2: i32) -> (i32, i32) {
    %c0_i32 = arith.constant 0 : i32
    return %arg0, %arg1 : i32, i32
  }
}

module attributes {stable_mosaic.version = 11 : i64} {
  func.func @_matmul_kernel(%arg0: i32, %arg1: i32, %arg2: i32, %arg3: memref<32x256xbf16, #tpu.memory_space<vmem>>, %arg4: memref<256x128xbf16, #tpu.memory_space<vmem>>, %arg5: memref<1x128xf32, #tpu.memory_space<vmem>>, %arg6: memref<32x128xf32, #tpu.memory_space<vmem>>, %arg7: memref<32x128xf32, #tpu.memory_space<vmem>>) attributes {dimension_semantics = [#tpu.dimension_semantics<parallel>, #tpu.dimension_semantics<parallel>, #tpu.dimension_semantics<arbitrary>], iteration_bounds = array<i64: 1, 1, 1>, scalar_prefetch = 0 : i64, scratch_operands = 1 : i64, tpu.core_type = #tpu.core_type<tc>, window_params = [{transform_indices = @transform_0, window_bounds = array<i64: 32, 256>}, {transform_indices = @transform_1, window_bounds = array<i64: 256, 128>}, {transform_indices = @transform_2, window_bounds = array<i64: 1, 128>}, {transform_indices = @transform_3, window_bounds = array<i64: 32, 128>}]} {
    %c0_i32 = arith.constant 0 : i32
    %0 = arith.cmpi eq, %arg2, %c0_i32 : i32
    %1 = arith.extui %0 : i1 to i32
    %c0_i32_0 = arith.constant 0 : i32
    %2 = arith.cmpi ne, %1, %c0_i32_0 : i32
    scf.if %2 {
      %cst_10 = arith.constant 0.000000e+00 : f32
      %12 = vector.broadcast %cst_10 : f32 to vector<32x128xf32>
      %c0_11 = arith.constant 0 : index
      %c0_12 = arith.constant 0 : index
      %13 = vector.load %arg7[%c0_11, %c0_12] : memref<32x128xf32, #tpu.memory_space<vmem>>, vector<32x128xf32>
      tpu.vector_store %arg7[%c0_11, %c0_12], %12 {strides = array<i32>} : memref<32x128xf32, #tpu.memory_space<vmem>>, vector<32x128xf32>,
    } else {
    }
    %c0 = arith.constant 0 : index
    %c0_1 = arith.constant 0 : index
    %3 = vector.load %arg7[%c0, %c0_1] : memref<32x128xf32, #tpu.memory_space<vmem>>, vector<32x128xf32>
    %c0_2 = arith.constant 0 : index
    %c0_3 = arith.constant 0 : index
    %4 = vector.load %arg3[%c0_2, %c0_3] : memref<32x256xbf16, #tpu.memory_space<vmem>>, vector<32x256xbf16>
    %c0_4 = arith.constant 0 : index
    %c0_5 = arith.constant 0 : index
    %5 = vector.load %arg4[%c0_4, %c0_5] : memref<256x128xbf16, #tpu.memory_space<vmem>>, vector<256x128xbf16>
    %cst = arith.constant dense<0.000000e+00> : vector<32x128xf32>
    %6 = tpu.matmul %4, %5, %cst {dimension_numbers = #tpu.dot_dimension_numbers<[1], [0], [0], [1], [0, 0, 1, 1], [], []>} : vector<32x256xbf16>, vector<256x128xbf16>, vector<32x128xf32> -> vector<32x128xf32>
    %7 = arith.addf %3, %6 : vector<32x128xf32>
    %c0_6 = arith.constant 0 : index
    %c0_7 = arith.constant 0 : index
    %8 = vector.load %arg7[%c0_6, %c0_7] : memref<32x128xf32, #tpu.memory_space<vmem>>, vector<32x128xf32>
    tpu.vector_store %arg7[%c0_6, %c0_7], %7 {strides = array<i32>} : memref<32x128xf32, #tpu.memory_space<vmem>>, vector<32x128xf32>,
    %c0_i32_8 = arith.constant 0 : i32
    %9 = arith.cmpi eq, %arg2, %c0_i32_8 : i32
    %10 = arith.extui %9 : i1 to i32
    %c0_i32_9 = arith.constant 0 : i32
    %11 = arith.cmpi ne, %10, %c0_i32_9 : i32
    scf.if %11 {
      %c0_10 = arith.constant 0 : index
      %c0_11 = arith.constant 0 : index
      %12 = vector.load %arg7[%c0_10, %c0_11] : memref<32x128xf32, #tpu.memory_space<vmem>>, vector<32x128xf32>
      %c0_12 = arith.constant 0 : index
      %c0_13 = arith.constant 0 : index
      %13 = vector.load %arg5[%c0_12, %c0_13] : memref<1x128xf32, #tpu.memory_space<vmem>>, vector<1x128xf32>
      %14 = vector.broadcast %13 : vector<1x128xf32> to vector<32x128xf32>
      %15 = arith.addf %12, %14 : vector<32x128xf32>
      %c0_14 = arith.constant 0 : index
      %c0_15 = arith.constant 0 : index
      %16 = vector.load %arg6[%c0_14, %c0_15] : memref<32x128xf32, #tpu.memory_space<vmem>>, vector<32x128xf32>
      tpu.vector_store %arg6[%c0_14, %c0_15], %15 {strides = array<i32>} : memref<32x128xf32, #tpu.memory_space<vmem>>, vector<32x128xf32>,
    } else {
    }
    return
  }
  func.func @transform_0(%arg0: i32, %arg1: i32, %arg2: i32) -> (i32, i32) {
    %c0_i32 = arith.constant 0 : i32
    return %arg0, %arg2 : i32, i32
  }
  func.func @transform_1(%arg0: i32, %arg1: i32, %arg2: i32) -> (i32, i32) {
    %c0_i32 = arith.constant 0 : i32
    return %arg2, %arg1 : i32, i32
  }
  func.func @transform_2(%arg0: i32, %arg1: i32, %arg2: i32) -> (i32, i32) {
    %c0_i32 = arith.constant 0 : i32
    %c0_i32_0 = arith.constant 0 : i32
    return %c0_i32, %arg1 : i32, i32
  }
  func.func @transform_3(%arg0: i32, %arg1: i32, %arg2: i32) -> (i32, i32) {
    %c0_i32 = arith.constant 0 : i32
    return %arg0, %arg1 : i32, i32
  }
}

module attributes {stable_mosaic.version = 11 : i64} {
  func.func @_ln_mlp_kernel(%arg0: i32, %arg1: memref<32x128xf32, #tpu.memory_space<vmem>>, %arg2: memref<1x128xf32, #tpu.memory_space<vmem>>, %arg3: memref<1x128xf32, #tpu.memory_space<vmem>>, %arg4: memref<128x128xbf16, #tpu.memory_space<vmem>>, %arg5: memref<1x128xf32, #tpu.memory_space<vmem>>, %arg6: memref<128x128xbf16, #tpu.memory_space<vmem>>, %arg7: memref<1x128xf32, #tpu.memory_space<vmem>>, %arg8: memref<32x128xf32, #tpu.memory_space<vmem>>) attributes {dimension_semantics = [#tpu.dimension_semantics<parallel>], iteration_bounds = array<i64: 1>, scalar_prefetch = 0 : i64, scratch_operands = 0 : i64, tpu.core_type = #tpu.core_type<tc>, window_params = [{transform_indices = @transform_0, window_bounds = array<i64: 32, 128>}, {pipeline_mode = #tpu.pipeline_mode<synchronous>, transform_indices = @transform_1, window_bounds = array<i64: 1, 128>}, {pipeline_mode = #tpu.pipeline_mode<synchronous>, transform_indices = @transform_2, window_bounds = array<i64: 1, 128>}, {pipeline_mode = #tpu.pipeline_mode<synchronous>, transform_indices = @transform_3, window_bounds = array<i64: 128, 128>}, {pipeline_mode = #tpu.pipeline_mode<synchronous>, transform_indices = @transform_4, window_bounds = array<i64: 1, 128>}, {pipeline_mode = #tpu.pipeline_mode<synchronous>, transform_indices = @transform_5, window_bounds = array<i64: 128, 128>}, {pipeline_mode = #tpu.pipeline_mode<synchronous>, transform_indices = @transform_6, window_bounds = array<i64: 1, 128>}, {transform_indices = @transform_7, window_bounds = array<i64: 32, 128>}]} {
    %c0 = arith.constant 0 : index
    %c0_0 = arith.constant 0 : index
    %0 = vector.load %arg1[%c0, %c0_0] : memref<32x128xf32, #tpu.memory_space<vmem>>, vector<32x128xf32>
    %cst = arith.constant dense<0.000000e+00> : vector<32xf32>
    %1 = vector.multi_reduction <add>, %0, %cst [1] : vector<32x128xf32> to vector<32xf32>
    %2 = vector.shape_cast %1 : vector<32xf32> to vector<32x1xf32>
    %cst_1 = arith.constant 3.125000e-02 : f32
    %3 = vector.broadcast %cst_1 : f32 to vector<32x1xf32>
    %4 = arith.mulf %2, %3 : vector<32x1xf32>
    %5 = vector.broadcast %4 : vector<32x1xf32> to vector<32x128xf32>
    %6 = arith.subf %0, %5 : vector<32x128xf32>
    %7 = arith.mulf %6, %6 : vector<32x128xf32>
    %cst_2 = arith.constant dense<0.000000e+00> : vector<32xf32>
    %8 = vector.multi_reduction <add>, %7, %cst_2 [1] : vector<32x128xf32> to vector<32xf32>
    %9 = vector.shape_cast %8 : vector<32xf32> to vector<32x1xf32>
    %cst_3 = arith.constant 9.600000e+01 : f32
    %10 = vector.broadcast %cst_3 : f32 to vector<32x1xf32>
    %11 = arith.mulf %10, %4 : vector<32x1xf32>
    %12 = arith.mulf %11, %4 : vector<32x1xf32>
    %13 = arith.subf %9, %12 : vector<32x1xf32>
    %cst_4 = arith.constant 3.125000e-02 : f32
    %14 = vector.broadcast %cst_4 : f32 to vector<32x1xf32>
    %15 = arith.mulf %13, %14 : vector<32x1xf32>
    %cst_5 = arith.constant 0.000000e+00 : f32
    %16 = vector.broadcast %cst_5 : f32 to vector<32x1xf32>
    %17 = arith.maximumf %15, %16 : vector<32x1xf32>
    %cst_6 = arith.constant 9.99999974E-6 : f32
    %18 = vector.broadcast %cst_6 : f32 to vector<32x1xf32>
    %19 = arith.addf %17, %18 : vector<32x1xf32>
    %20 = math.rsqrt %19 : vector<32x1xf32>
    %21 = vector.broadcast %20 : vector<32x1xf32> to vector<32x128xf32>
    %22 = arith.mulf %6, %21 : vector<32x128xf32>
    %c0_7 = arith.constant 0 : index
    %c0_8 = arith.constant 0 : index
    %23 = vector.load %arg2[%c0_7, %c0_8] : memref<1x128xf32, #tpu.memory_space<vmem>>, vector<1x128xf32>
    %24 = vector.broadcast %23 : vector<1x128xf32> to vector<32x128xf32>
    %25 = arith.mulf %22, %24 : vector<32x128xf32>
    %c0_9 = arith.constant 0 : index
    %c0_10 = arith.constant 0 : index
    %26 = vector.load %arg3[%c0_9, %c0_10] : memref<1x128xf32, #tpu.memory_space<vmem>>, vector<1x128xf32>
    %27 = vector.broadcast %26 : vector<1x128xf32> to vector<32x128xf32>
    %28 = arith.addf %25, %27 : vector<32x128xf32>
    %29 = arith.truncf %28 : vector<32x128xf32> to vector<32x128xbf16>
    %c0_11 = arith.constant 0 : index
    %c0_12 = arith.constant 0 : index
    %30 = vector.load %arg4[%c0_11, %c0_12] : memref<128x128xbf16, #tpu.memory_space<vmem>>, vector<128x128xbf16>
    %cst_13 = arith.constant dense<0.000000e+00> : vector<32x128xf32>
    %31 = tpu.matmul %29, %30, %cst_13 {dimension_numbers = #tpu.dot_dimension_numbers<[1], [0], [0], [1], [0, 0, 1, 1], [], []>} : vector<32x128xbf16>, vector<128x128xbf16>, vector<32x128xf32> -> vector<32x128xf32>
    %c0_14 = arith.constant 0 : index
    %c0_15 = arith.constant 0 : index
    %32 = vector.load %arg5[%c0_14, %c0_15] : memref<1x128xf32, #tpu.memory_space<vmem>>, vector<1x128xf32>
    %33 = vector.broadcast %32 : vector<1x128xf32> to vector<32x128xf32>
    %34 = arith.addf %31, %33 : vector<32x128xf32>
    %35 = arith.mulf %34, %34 : vector<32x128xf32>
    %36 = arith.mulf %34, %35 : vector<32x128xf32>
    %cst_16 = arith.constant 4.471500e-02 : f32
    %37 = vector.broadcast %cst_16 : f32 to vector<32x128xf32>
    %38 = arith.mulf %37, %36 : vector<32x128xf32>
    %39 = arith.addf %34, %38 : vector<32x128xf32>
    %cst_17 = arith.constant 0.797884583 : f32
    %40 = vector.broadcast %cst_17 : f32 to vector<32x128xf32>
    %41 = arith.mulf %40, %39 : vector<32x128xf32>
    %42 = math.tanh %41 : vector<32x128xf32>
    %cst_18 = arith.constant 1.000000e+00 : f32
    %43 = vector.broadcast %cst_18 : f32 to vector<32x128xf32>
    %44 = arith.addf %43, %42 : vector<32x128xf32>
    %cst_19 = arith.constant 5.000000e-01 : f32
    %45 = vector.broadcast %cst_19 : f32 to vector<32x128xf32>
    %46 = arith.mulf %45, %44 : vector<32x128xf32>
    %47 = arith.mulf %34, %46 : vector<32x128xf32>
    %48 = arith.truncf %47 : vector<32x128xf32> to vector<32x128xbf16>
    %c0_20 = arith.constant 0 : index
    %c0_21 = arith.constant 0 : index
    %49 = vector.load %arg6[%c0_20, %c0_21] : memref<128x128xbf16, #tpu.memory_space<vmem>>, vector<128x128xbf16>
    %cst_22 = arith.constant dense<0.000000e+00> : vector<32x128xf32>
    %50 = tpu.matmul %48, %49, %cst_22 {dimension_numbers = #tpu.dot_dimension_numbers<[1], [0], [0], [1], [0, 0, 1, 1], [], []>} : vector<32x128xbf16>, vector<128x128xbf16>, vector<32x128xf32> -> vector<32x128xf32>
    %c0_23 = arith.constant 0 : index
    %c0_24 = arith.constant 0 : index
    %51 = vector.load %arg7[%c0_23, %c0_24] : memref<1x128xf32, #tpu.memory_space<vmem>>, vector<1x128xf32>
    %52 = vector.broadcast %51 : vector<1x128xf32> to vector<32x128xf32>
    %53 = arith.addf %50, %52 : vector<32x128xf32>
    %54 = arith.addf %53, %0 : vector<32x128xf32>
    %c0_25 = arith.constant 0 : index
    %c0_26 = arith.constant 0 : index
    %55 = vector.load %arg8[%c0_25, %c0_26] : memref<32x128xf32, #tpu.memory_space<vmem>>, vector<32x128xf32>
    tpu.vector_store %arg8[%c0_25, %c0_26], %54 {strides = array<i32>} : memref<32x128xf32, #tpu.memory_space<vmem>>, vector<32x128xf32>,
    return
  }
  func.func @transform_0(%arg0: i32) -> (i32, i32) {
    %c0_i32 = arith.constant 0 : i32
    %c0_i32_0 = arith.constant 0 : i32
    return %arg0, %c0_i32 : i32, i32
  }
  func.func @transform_1(%arg0: i32) -> (i32, i32) {
    %c0_i32 = arith.constant 0 : i32
    %c0_i32_0 = arith.constant 0 : i32
    %c0_i32_1 = arith.constant 0 : i32
    return %c0_i32, %c0_i32_0 : i32, i32
  }
  func.func @transform_2(%arg0: i32) -> (i32, i32) {
    %c0_i32 = arith.constant 0 : i32
    %c0_i32_0 = arith.constant 0 : i32
    %c0_i32_1 = arith.constant 0 : i32
    return %c0_i32, %c0_i32_0 : i32, i32
  }
  func.func @transform_3(%arg0: i32) -> (i32, i32) {
    %c0_i32 = arith.constant 0 : i32
    %c0_i32_0 = arith.constant 0 : i32
    %c0_i32_1 = arith.constant 0 : i32
    return %c0_i32, %c0_i32_0 : i32, i32
  }
  func.func @transform_4(%arg0: i32) -> (i32, i32) {
    %c0_i32 = arith.constant 0 : i32
    %c0_i32_0 = arith.constant 0 : i32
    %c0_i32_1 = arith.constant 0 : i32
    return %c0_i32, %c0_i32_0 : i32, i32
  }
  func.func @transform_5(%arg0: i32) -> (i32, i32) {
    %c0_i32 = arith.constant 0 : i32
    %c0_i32_0 = arith.constant 0 : i32
    %c0_i32_1 = arith.constant 0 : i32
    return %c0_i32, %c0_i32_0 : i32, i32
  }
  func.func @transform_6(%arg0: i32) -> (i32, i32) {
    %c0_i32 = arith.constant 0 : i32
    %c0_i32_0 = arith.constant 0 : i32
    %c0_i32_1 = arith.constant 0 : i32
    return %c0_i32, %c0_i32_0 : i32, i32
  }
  func.func @transform_7(%arg0: i32) -> (i32, i32) {
    %c0_i32 = arith.constant 0 : i32
    %c0_i32_0 = arith.constant 0 : i32
    return %arg0, %c0_i32 : i32, i32
  }
}

module attributes {stable_mosaic.version = 11 : i64} {
  func.func @_matmul_kernel(%arg0: i32, %arg1: i32, %arg2: i32, %arg3: memref<32x128xbf16, #tpu.memory_space<vmem>>, %arg4: memref<128x128xbf16, #tpu.memory_space<vmem>>, %arg5: memref<1x128xf32, #tpu.memory_space<vmem>>, %arg6: memref<32x128xf32, #tpu.memory_space<vmem>>, %arg7: memref<32x128xf32, #tpu.memory_space<vmem>>, %arg8: memref<32x128xf32, #tpu.memory_space<vmem>>) attributes {dimension_semantics = [#tpu.dimension_semantics<parallel>, #tpu.dimension_semantics<parallel>, #tpu.dimension_semantics<arbitrary>], iteration_bounds = array<i64: 1, 1, 1>, scalar_prefetch = 0 : i64, scratch_operands = 1 : i64, tpu.core_type = #tpu.core_type<tc>, window_params = [{transform_indices = @transform_0, window_bounds = array<i64: 32, 128>}, {transform_indices = @transform_1, window_bounds = array<i64: 128, 128>}, {transform_indices = @transform_2, window_bounds = array<i64: 1, 128>}, {transform_indices = @transform_3, window_bounds = array<i64: 32, 128>}, {transform_indices = @transform_4, window_bounds = array<i64: 32, 128>}]} {
    %c0_i32 = arith.constant 0 : i32
    %0 = arith.cmpi eq, %arg2, %c0_i32 : i32
    %1 = arith.extui %0 : i1 to i32
    %c0_i32_0 = arith.constant 0 : i32
    %2 = arith.cmpi ne, %1, %c0_i32_0 : i32
    scf.if %2 {
      %cst_10 = arith.constant 0.000000e+00 : f32
      %12 = vector.broadcast %cst_10 : f32 to vector<32x128xf32>
      %c0_11 = arith.constant 0 : index
      %c0_12 = arith.constant 0 : index
      %13 = vector.load %arg8[%c0_11, %c0_12] : memref<32x128xf32, #tpu.memory_space<vmem>>, vector<32x128xf32>
      tpu.vector_store %arg8[%c0_11, %c0_12], %12 {strides = array<i32>} : memref<32x128xf32, #tpu.memory_space<vmem>>, vector<32x128xf32>,
    } else {
    }
    %c0 = arith.constant 0 : index
    %c0_1 = arith.constant 0 : index
    %3 = vector.load %arg8[%c0, %c0_1] : memref<32x128xf32, #tpu.memory_space<vmem>>, vector<32x128xf32>
    %c0_2 = arith.constant 0 : index
    %c0_3 = arith.constant 0 : index
    %4 = vector.load %arg3[%c0_2, %c0_3] : memref<32x128xbf16, #tpu.memory_space<vmem>>, vector<32x128xbf16>
    %c0_4 = arith.constant 0 : index
    %c0_5 = arith.constant 0 : index
    %5 = vector.load %arg4[%c0_4, %c0_5] : memref<128x128xbf16, #tpu.memory_space<vmem>>, vector<128x128xbf16>
    %cst = arith.constant dense<0.000000e+00> : vector<32x128xf32>
    %6 = tpu.matmul %4, %5, %cst {dimension_numbers = #tpu.dot_dimension_numbers<[1], [0], [0], [1], [0, 0, 1, 1], [], []>} : vector<32x128xbf16>, vector<128x128xbf16>, vector<32x128xf32> -> vector<32x128xf32>
    %7 = arith.addf %3, %6 : vector<32x128xf32>
    %c0_6 = arith.constant 0 : index
    %c0_7 = arith.constant 0 : index
    %8 = vector.load %arg8[%c0_6, %c0_7] : memref<32x128xf32, #tpu.memory_space<vmem>>, vector<32x128xf32>
    tpu.vector_store %arg8[%c0_6, %c0_7], %7 {strides = array<i32>} : memref<32x128xf32, #tpu.memory_space<vmem>>, vector<32x128xf32>,
    %c0_i32_8 = arith.constant 0 : i32
    %9 = arith.cmpi eq, %arg2, %c0_i32_8 : i32
    %10 = arith.extui %9 : i1 to i32
    %c0_i32_9 = arith.constant 0 : i32
    %11 = arith.cmpi ne, %10, %c0_i32_9 : i32
    scf.if %11 {
      %c0_10 = arith.constant 0 : index
      %c0_11 = arith.constant 0 : index
      %12 = vector.load %arg8[%c0_10, %c0_11] : memref<32x128xf32, #tpu.memory_space<vmem>>, vector<32x128xf32>
      %c0_12 = arith.constant 0 : index
      %c0_13 = arith.constant 0 : index
      %13 = vector.load %arg5[%c0_12, %c0_13] : memref<1x128xf32, #tpu.memory_space<vmem>>, vector<1x128xf32>
      %14 = vector.broadcast %13 : vector<1x128xf32> to vector<32x128xf32>
      %15 = arith.addf %12, %14 : vector<32x128xf32>
      %c0_14 = arith.constant 0 : index
      %c0_15 = arith.constant 0 : index
      %16 = vector.load %arg6[%c0_14, %c0_15] : memref<32x128xf32, #tpu.memory_space<vmem>>, vector<32x128xf32>
      %17 = arith.addf %15, %16 : vector<32x128xf32>
      %c0_16 = arith.constant 0 : index
      %c0_17 = arith.constant 0 : index
      %18 = vector.load %arg7[%c0_16, %c0_17] : memref<32x128xf32, #tpu.memory_space<vmem>>, vector<32x128xf32>
      tpu.vector_store %arg7[%c0_16, %c0_17], %17 {strides = array<i32>} : memref<32x128xf32, #tpu.memory_space<vmem>>, vector<32x128xf32>,
    } else {
    }
    return
  }
  func.func @transform_0(%arg0: i32, %arg1: i32, %arg2: i32) -> (i32, i32) {
    %c0_i32 = arith.constant 0 : i32
    return %arg0, %arg2 : i32, i32
  }
  func.func @transform_1(%arg0: i32, %arg1: i32, %arg2: i32) -> (i32, i32) {
    %c0_i32 = arith.constant 0 : i32
    return %arg2, %arg1 : i32, i32
  }
  func.func @transform_2(%arg0: i32, %arg1: i32, %arg2: i32) -> (i32, i32) {
    %c0_i32 = arith.constant 0 : i32
    %c0_i32_0 = arith.constant 0 : i32
    return %c0_i32, %arg1 : i32, i32
  }
  func.func @transform_3(%arg0: i32, %arg1: i32, %arg2: i32) -> (i32, i32) {
    %c0_i32 = arith.constant 0 : i32
    return %arg0, %arg1 : i32, i32
  }
  func.func @transform_4(%arg0: i32, %arg1: i32, %arg2: i32) -> (i32, i32) {
    %c0_i32 = arith.constant 0 : i32
    return %arg0, %arg1 : i32, i32
  }
}

module attributes {stable_mosaic.version = 11 : i64} {
  func.func @_matmul_kernel(%arg0: i32, %arg1: i32, %arg2: i32, %arg3: memref<32x384xbf16, #tpu.memory_space<vmem>>, %arg4: memref<384x128xbf16, #tpu.memory_space<vmem>>, %arg5: memref<1x128xf32, #tpu.memory_space<vmem>>, %arg6: memref<32x128xf32, #tpu.memory_space<vmem>>, %arg7: memref<32x128xf32, #tpu.memory_space<vmem>>) attributes {dimension_semantics = [#tpu.dimension_semantics<parallel>, #tpu.dimension_semantics<parallel>, #tpu.dimension_semantics<arbitrary>], iteration_bounds = array<i64: 1, 1, 1>, scalar_prefetch = 0 : i64, scratch_operands = 1 : i64, tpu.core_type = #tpu.core_type<tc>, window_params = [{transform_indices = @transform_0, window_bounds = array<i64: 32, 384>}, {transform_indices = @transform_1, window_bounds = array<i64: 384, 128>}, {transform_indices = @transform_2, window_bounds = array<i64: 1, 128>}, {transform_indices = @transform_3, window_bounds = array<i64: 32, 128>}]} {
    %c0_i32 = arith.constant 0 : i32
    %0 = arith.cmpi eq, %arg2, %c0_i32 : i32
    %1 = arith.extui %0 : i1 to i32
    %c0_i32_0 = arith.constant 0 : i32
    %2 = arith.cmpi ne, %1, %c0_i32_0 : i32
    scf.if %2 {
      %cst_10 = arith.constant 0.000000e+00 : f32
      %12 = vector.broadcast %cst_10 : f32 to vector<32x128xf32>
      %c0_11 = arith.constant 0 : index
      %c0_12 = arith.constant 0 : index
      %13 = vector.load %arg7[%c0_11, %c0_12] : memref<32x128xf32, #tpu.memory_space<vmem>>, vector<32x128xf32>
      tpu.vector_store %arg7[%c0_11, %c0_12], %12 {strides = array<i32>} : memref<32x128xf32, #tpu.memory_space<vmem>>, vector<32x128xf32>,
    } else {
    }
    %c0 = arith.constant 0 : index
    %c0_1 = arith.constant 0 : index
    %3 = vector.load %arg7[%c0, %c0_1] : memref<32x128xf32, #tpu.memory_space<vmem>>, vector<32x128xf32>
    %c0_2 = arith.constant 0 : index
    %c0_3 = arith.constant 0 : index
    %4 = vector.load %arg3[%c0_2, %c0_3] : memref<32x384xbf16, #tpu.memory_space<vmem>>, vector<32x384xbf16>
    %c0_4 = arith.constant 0 : index
    %c0_5 = arith.constant 0 : index
    %5 = vector.load %arg4[%c0_4, %c0_5] : memref<384x128xbf16, #tpu.memory_space<vmem>>, vector<384x128xbf16>
    %cst = arith.constant dense<0.000000e+00> : vector<32x128xf32>
    %6 = tpu.matmul %4, %5, %cst {dimension_numbers = #tpu.dot_dimension_numbers<[1], [0], [0], [1], [0, 0, 1, 1], [], []>} : vector<32x384xbf16>, vector<384x128xbf16>, vector<32x128xf32> -> vector<32x128xf32>
    %7 = arith.addf %3, %6 : vector<32x128xf32>
    %c0_6 = arith.constant 0 : index
    %c0_7 = arith.constant 0 : index
    %8 = vector.load %arg7[%c0_6, %c0_7] : memref<32x128xf32, #tpu.memory_space<vmem>>, vector<32x128xf32>
    tpu.vector_store %arg7[%c0_6, %c0_7], %7 {strides = array<i32>} : memref<32x128xf32, #tpu.memory_space<vmem>>, vector<32x128xf32>,
    %c0_i32_8 = arith.constant 0 : i32
    %9 = arith.cmpi eq, %arg2, %c0_i32_8 : i32
    %10 = arith.extui %9 : i1 to i32
    %c0_i32_9 = arith.constant 0 : i32
    %11 = arith.cmpi ne, %10, %c0_i32_9 : i32
    scf.if %11 {
      %c0_10 = arith.constant 0 : index
      %c0_11 = arith.constant 0 : index
      %12 = vector.load %arg7[%c0_10, %c0_11] : memref<32x128xf32, #tpu.memory_space<vmem>>, vector<32x128xf32>
      %c0_12 = arith.constant 0 : index
      %c0_13 = arith.constant 0 : index
      %13 = vector.load %arg5[%c0_12, %c0_13] : memref<1x128xf32, #tpu.memory_space<vmem>>, vector<1x128xf32>
      %14 = vector.broadcast %13 : vector<1x128xf32> to vector<32x128xf32>
      %15 = arith.addf %12, %14 : vector<32x128xf32>
      %16 = arith.negf %15 : vector<32x128xf32>
      %17 = math.exp %16 : vector<32x128xf32>
      %cst_14 = arith.constant 1.000000e+00 : f32
      %18 = vector.broadcast %cst_14 : f32 to vector<32x128xf32>
      %19 = arith.addf %18, %17 : vector<32x128xf32>
      %20 = arith.divf %18, %19 : vector<32x128xf32>
      %21 = arith.mulf %15, %20 : vector<32x128xf32>
      %c0_15 = arith.constant 0 : index
      %c0_16 = arith.constant 0 : index
      %22 = vector.load %arg6[%c0_15, %c0_16] : memref<32x128xf32, #tpu.memory_space<vmem>>, vector<32x128xf32>
      tpu.vector_store %arg6[%c0_15, %c0_16], %21 {strides = array<i32>} : memref<32x128xf32, #tpu.memory_space<vmem>>, vector<32x128xf32>,
    } else {
    }
    return
  }
  func.func @transform_0(%arg0: i32, %arg1: i32, %arg2: i32) -> (i32, i32) {
    %c0_i32 = arith.constant 0 : i32
    return %arg0, %arg2 : i32, i32
  }
  func.func @transform_1(%arg0: i32, %arg1: i32, %arg2: i32) -> (i32, i32) {
    %c0_i32 = arith.constant 0 : i32
    return %arg2, %arg1 : i32, i32
  }
  func.func @transform_2(%arg0: i32, %arg1: i32, %arg2: i32) -> (i32, i32) {
    %c0_i32 = arith.constant 0 : i32
    %c0_i32_0 = arith.constant 0 : i32
    return %c0_i32, %arg1 : i32, i32
  }
  func.func @transform_3(%arg0: i32, %arg1: i32, %arg2: i32) -> (i32, i32) {
    %c0_i32 = arith.constant 0 : i32
    return %arg0, %arg1 : i32, i32
  }
}

module attributes {stable_mosaic.version = 11 : i64} {
  func.func @_matmul_kernel(%arg0: i32, %arg1: i32, %arg2: i32, %arg3: memref<32x512xbf16, #tpu.memory_space<vmem>>, %arg4: memref<512x128xbf16, #tpu.memory_space<vmem>>, %arg5: memref<1x128xf32, #tpu.memory_space<vmem>>, %arg6: memref<32x128xf32, #tpu.memory_space<vmem>>, %arg7: memref<32x128xf32, #tpu.memory_space<vmem>>) attributes {dimension_semantics = [#tpu.dimension_semantics<parallel>, #tpu.dimension_semantics<parallel>, #tpu.dimension_semantics<arbitrary>], iteration_bounds = array<i64: 1, 1, 3>, scalar_prefetch = 0 : i64, scratch_operands = 1 : i64, tpu.core_type = #tpu.core_type<tc>, window_params = [{transform_indices = @transform_0, window_bounds = array<i64: 32, 512>}, {transform_indices = @transform_1, window_bounds = array<i64: 512, 128>}, {transform_indices = @transform_2, window_bounds = array<i64: 1, 128>}, {transform_indices = @transform_3, window_bounds = array<i64: 32, 128>}]} {
    %c0_i32 = arith.constant 0 : i32
    %0 = arith.cmpi eq, %arg2, %c0_i32 : i32
    %1 = arith.extui %0 : i1 to i32
    %c0_i32_0 = arith.constant 0 : i32
    %2 = arith.cmpi ne, %1, %c0_i32_0 : i32
    scf.if %2 {
      %cst_9 = arith.constant 0.000000e+00 : f32
      %12 = vector.broadcast %cst_9 : f32 to vector<32x128xf32>
      %c0_10 = arith.constant 0 : index
      %c0_11 = arith.constant 0 : index
      %13 = vector.load %arg7[%c0_10, %c0_11] : memref<32x128xf32, #tpu.memory_space<vmem>>, vector<32x128xf32>
      tpu.vector_store %arg7[%c0_10, %c0_11], %12 {strides = array<i32>} : memref<32x128xf32, #tpu.memory_space<vmem>>, vector<32x128xf32>,
    } else {
    }
    %c0 = arith.constant 0 : index
    %c0_1 = arith.constant 0 : index
    %3 = vector.load %arg7[%c0, %c0_1] : memref<32x128xf32, #tpu.memory_space<vmem>>, vector<32x128xf32>
    %c0_2 = arith.constant 0 : index
    %c0_3 = arith.constant 0 : index
    %4 = vector.load %arg3[%c0_2, %c0_3] : memref<32x512xbf16, #tpu.memory_space<vmem>>, vector<32x512xbf16>
    %c0_4 = arith.constant 0 : index
    %c0_5 = arith.constant 0 : index
    %5 = vector.load %arg4[%c0_4, %c0_5] : memref<512x128xbf16, #tpu.memory_space<vmem>>, vector<512x128xbf16>
    %cst = arith.constant dense<0.000000e+00> : vector<32x128xf32>
    %6 = tpu.matmul %4, %5, %cst {dimension_numbers = #tpu.dot_dimension_numbers<[1], [0], [0], [1], [0, 0, 1, 1], [], []>} : vector<32x512xbf16>, vector<512x128xbf16>, vector<32x128xf32> -> vector<32x128xf32>
    %7 = arith.addf %3, %6 : vector<32x128xf32>
    %c0_6 = arith.constant 0 : index
    %c0_7 = arith.constant 0 : index
    %8 = vector.load %arg7[%c0_6, %c0_7] : memref<32x128xf32, #tpu.memory_space<vmem>>, vector<32x128xf32>
    tpu.vector_store %arg7[%c0_6, %c0_7], %7 {strides = array<i32>} : memref<32x128xf32, #tpu.memory_space<vmem>>, vector<32x128xf32>,
    %c2_i32 = arith.constant 2 : i32
    %9 = arith.cmpi eq, %arg2, %c2_i32 : i32
    %10 = arith.extui %9 : i1 to i32
    %c0_i32_8 = arith.constant 0 : i32
    %11 = arith.cmpi ne, %10, %c0_i32_8 : i32
    scf.if %11 {
      %c0_9 = arith.constant 0 : index
      %c0_10 = arith.constant 0 : index
      %12 = vector.load %arg7[%c0_9, %c0_10] : memref<32x128xf32, #tpu.memory_space<vmem>>, vector<32x128xf32>
      %c0_11 = arith.constant 0 : index
      %c0_12 = arith.constant 0 : index
      %13 = vector.load %arg5[%c0_11, %c0_12] : memref<1x128xf32, #tpu.memory_space<vmem>>, vector<1x128xf32>
      %14 = vector.broadcast %13 : vector<1x128xf32> to vector<32x128xf32>
      %15 = arith.addf %12, %14 : vector<32x128xf32>
      %16 = arith.negf %15 : vector<32x128xf32>
      %17 = math.exp %16 : vector<32x128xf32>
      %cst_13 = arith.constant 1.000000e+00 : f32
      %18 = vector.broadcast %cst_13 : f32 to vector<32x128xf32>
      %19 = arith.addf %18, %17 : vector<32x128xf32>
      %20 = arith.divf %18, %19 : vector<32x128xf32>
      %21 = arith.mulf %15, %20 : vector<32x128xf32>
      %c0_14 = arith.constant 0 : index
      %c0_15 = arith.constant 0 : index
      %22 = vector.load %arg6[%c0_14, %c0_15] : memref<32x128xf32, #tpu.memory_space<vmem>>, vector<32x128xf32>
      tpu.vector_store %arg6[%c0_14, %c0_15], %21 {strides = array<i32>} : memref<32x128xf32, #tpu.memory_space<vmem>>, vector<32x128xf32>,
    } else {
    }
    return
  }
  func.func @transform_0(%arg0: i32, %arg1: i32, %arg2: i32) -> (i32, i32) {
    %c0_i32 = arith.constant 0 : i32
    return %arg0, %arg2 : i32, i32
  }
  func.func @transform_1(%arg0: i32, %arg1: i32, %arg2: i32) -> (i32, i32) {
    %c0_i32 = arith.constant 0 : i32
    return %arg2, %arg1 : i32, i32
  }
  func.func @transform_2(%arg0: i32, %arg1: i32, %arg2: i32) -> (i32, i32) {
    %c0_i32 = arith.constant 0 : i32
    %c0_i32_0 = arith.constant 0 : i32
    return %c0_i32, %arg1 : i32, i32
  }
  func.func @transform_3(%arg0: i32, %arg1: i32, %arg2: i32) -> (i32, i32) {
    %c0_i32 = arith.constant 0 : i32
    return %arg0, %arg1 : i32, i32
  }
}

module attributes {stable_mosaic.version = 11 : i64} {
  func.func @_mhsa_kernel(%arg0: i32, %arg1: i32, %arg2: memref<1x16x128xf32, #tpu.memory_space<vmem>>, %arg3: memref<1x16x128xf32, #tpu.memory_space<vmem>>, %arg4: memref<1x16x128xf32, #tpu.memory_space<vmem>>) attributes {dimension_semantics = [#tpu.dimension_semantics<parallel>, #tpu.dimension_semantics<parallel>], iteration_bounds = array<i64: 2, 1>, scalar_prefetch = 0 : i64, scratch_operands = 0 : i64, tpu.core_type = #tpu.core_type<tc>, window_params = [{transform_indices = @transform_0, window_bounds = array<i64: 1, 16, 128>}, {transform_indices = @transform_1, window_bounds = array<i64: 1, 16, 128>}, {transform_indices = @transform_2, window_bounds = array<i64: 1, 16, 128>}]} {
    %c0 = arith.constant 0 : index
    %c0_0 = arith.constant 0 : index
    %c0_1 = arith.constant 0 : index
    %0 = vector.load %arg2[%c0, %c0_0, %c0_1] : memref<1x16x128xf32, #tpu.memory_space<vmem>>, vector<1x16x128xf32>
    %1 = vector.shape_cast %0 : vector<1x16x128xf32> to vector<16x128xf32>
    %c0_2 = arith.constant 0 : index
    %c0_3 = arith.constant 0 : index
    %c0_4 = arith.constant 0 : index
    %2 = vector.load %arg3[%c0_2, %c0_3, %c0_4] : memref<1x16x128xf32, #tpu.memory_space<vmem>>, vector<1x16x128xf32>
    %3 = vector.shape_cast %2 : vector<1x16x128xf32> to vector<16x128xf32>
    %4 = arith.truncf %3 : vector<16x128xf32> to vector<16x128xbf16>
    %5 = vector.extract_strided_slice %1 {offsets = [0, 0], sizes = [16, 8], strides = [1, 1]} : vector<16x128xf32> to vector<16x8xf32>
    %cst = arith.constant 0.353553385 : f32
    %6 = vector.broadcast %cst : f32 to vector<16x8xf32>
    %7 = arith.mulf %5, %6 : vector<16x8xf32>
    %8 = arith.truncf %7 : vector<16x8xf32> to vector<16x8xbf16>
    %9 = vector.extract_strided_slice %4 {offsets = [0, 32], sizes = [16, 8], strides = [1, 1]} : vector<16x128xbf16> to vector<16x8xbf16>
    %10 = vector.extract_strided_slice %4 {offsets = [0, 64], sizes = [16, 8], strides = [1, 1]} : vector<16x128xbf16> to vector<16x8xbf16>
    %cst_5 = arith.constant dense<0.000000e+00> : vector<16x16xf32>
    %11 = tpu.matmul %8, %9, %cst_5 {dimension_numbers = #tpu.dot_dimension_numbers<[1], [1], [0], [0], [0, 0, 1, 0], [], []>} : vector<16x8xbf16>, vector<16x8xbf16>, vector<16x16xf32> -> vector<16x16xf32>
    %cst_6 = arith.constant dense<0xFF800000> : vector<16xf32>
    %12 = vector.multi_reduction <maximumf>, %11, %cst_6 [1] : vector<16x16xf32> to vector<16xf32>
    %13 = vector.shape_cast %12 : vector<16xf32> to vector<16x1xf32>
    %14 = vector.broadcast %13 : vector<16x1xf32> to vector<16x16xf32>
    %15 = arith.subf %11, %14 : vector<16x16xf32>
    %16 = math.exp %15 : vector<16x16xf32>
    %cst_7 = arith.constant dense<0.000000e+00> : vector<16xf32>
    %17 = vector.multi_reduction <add>, %16, %cst_7 [1] : vector<16x16xf32> to vector<16xf32>
    %18 = vector.shape_cast %17 : vector<16xf32> to vector<16x1xf32>
    %19 = tpu.reciprocal %18 {approx = true} : vector<16x1xf32> -> vector<16x1xf32>
    %20 = vector.broadcast %19 : vector<16x1xf32> to vector<16x16xf32>
    %21 = arith.mulf %16, %20 : vector<16x16xf32>
    %22 = arith.truncf %21 : vector<16x16xf32> to vector<16x16xbf16>
    %cst_8 = arith.constant dense<0.000000e+00> : vector<16x8xf32>
    %23 = tpu.matmul %22, %10, %cst_8 {dimension_numbers = #tpu.dot_dimension_numbers<[1], [0], [0], [1], [0, 0, 1, 1], [], []>} : vector<16x16xbf16>, vector<16x8xbf16>, vector<16x8xf32> -> vector<16x8xf32>
    %24 = vector.extract_strided_slice %1 {offsets = [0, 8], sizes = [16, 8], strides = [1, 1]} : vector<16x128xf32> to vector<16x8xf32>
    %cst_9 = arith.constant 0.353553385 : f32
    %25 = vector.broadcast %cst_9 : f32 to vector<16x8xf32>
    %26 = arith.mulf %24, %25 : vector<16x8xf32>
    %27 = arith.truncf %26 : vector<16x8xf32> to vector<16x8xbf16>
    %28 = vector.extract_strided_slice %4 {offsets = [0, 40], sizes = [16, 8], strides = [1, 1]} : vector<16x128xbf16> to vector<16x8xbf16>
    %29 = vector.extract_strided_slice %4 {offsets = [0, 72], sizes = [16, 8], strides = [1, 1]} : vector<16x128xbf16> to vector<16x8xbf16>
    %cst_10 = arith.constant dense<0.000000e+00> : vector<16x16xf32>
    %30 = tpu.matmul %27, %28, %cst_10 {dimension_numbers = #tpu.dot_dimension_numbers<[1], [1], [0], [0], [0, 0, 1, 0], [], []>} : vector<16x8xbf16>, vector<16x8xbf16>, vector<16x16xf32> -> vector<16x16xf32>
    %cst_11 = arith.constant dense<0xFF800000> : vector<16xf32>
    %31 = vector.multi_reduction <maximumf>, %30, %cst_11 [1] : vector<16x16xf32> to vector<16xf32>
    %32 = vector.shape_cast %31 : vector<16xf32> to vector<16x1xf32>
    %33 = vector.broadcast %32 : vector<16x1xf32> to vector<16x16xf32>
    %34 = arith.subf %30, %33 : vector<16x16xf32>
    %35 = math.exp %34 : vector<16x16xf32>
    %cst_12 = arith.constant dense<0.000000e+00> : vector<16xf32>
    %36 = vector.multi_reduction <add>, %35, %cst_12 [1] : vector<16x16xf32> to vector<16xf32>
    %37 = vector.shape_cast %36 : vector<16xf32> to vector<16x1xf32>
    %38 = tpu.reciprocal %37 {approx = true} : vector<16x1xf32> -> vector<16x1xf32>
    %39 = vector.broadcast %38 : vector<16x1xf32> to vector<16x16xf32>
    %40 = arith.mulf %35, %39 : vector<16x16xf32>
    %41 = arith.truncf %40 : vector<16x16xf32> to vector<16x16xbf16>
    %cst_13 = arith.constant dense<0.000000e+00> : vector<16x8xf32>
    %42 = tpu.matmul %41, %29, %cst_13 {dimension_numbers = #tpu.dot_dimension_numbers<[1], [0], [0], [1], [0, 0, 1, 1], [], []>} : vector<16x16xbf16>, vector<16x8xbf16>, vector<16x8xf32> -> vector<16x8xf32>
    %43 = vector.extract_strided_slice %1 {offsets = [0, 16], sizes = [16, 8], strides = [1, 1]} : vector<16x128xf32> to vector<16x8xf32>
    %cst_14 = arith.constant 0.353553385 : f32
    %44 = vector.broadcast %cst_14 : f32 to vector<16x8xf32>
    %45 = arith.mulf %43, %44 : vector<16x8xf32>
    %46 = arith.truncf %45 : vector<16x8xf32> to vector<16x8xbf16>
    %47 = vector.extract_strided_slice %4 {offsets = [0, 48], sizes = [16, 8], strides = [1, 1]} : vector<16x128xbf16> to vector<16x8xbf16>
    %48 = vector.extract_strided_slice %4 {offsets = [0, 80], sizes = [16, 8], strides = [1, 1]} : vector<16x128xbf16> to vector<16x8xbf16>
    %cst_15 = arith.constant dense<0.000000e+00> : vector<16x16xf32>
    %49 = tpu.matmul %46, %47, %cst_15 {dimension_numbers = #tpu.dot_dimension_numbers<[1], [1], [0], [0], [0, 0, 1, 0], [], []>} : vector<16x8xbf16>, vector<16x8xbf16>, vector<16x16xf32> -> vector<16x16xf32>
    %cst_16 = arith.constant dense<0xFF800000> : vector<16xf32>
    %50 = vector.multi_reduction <maximumf>, %49, %cst_16 [1] : vector<16x16xf32> to vector<16xf32>
    %51 = vector.shape_cast %50 : vector<16xf32> to vector<16x1xf32>
    %52 = vector.broadcast %51 : vector<16x1xf32> to vector<16x16xf32>
    %53 = arith.subf %49, %52 : vector<16x16xf32>
    %54 = math.exp %53 : vector<16x16xf32>
    %cst_17 = arith.constant dense<0.000000e+00> : vector<16xf32>
    %55 = vector.multi_reduction <add>, %54, %cst_17 [1] : vector<16x16xf32> to vector<16xf32>
    %56 = vector.shape_cast %55 : vector<16xf32> to vector<16x1xf32>
    %57 = tpu.reciprocal %56 {approx = true} : vector<16x1xf32> -> vector<16x1xf32>
    %58 = vector.broadcast %57 : vector<16x1xf32> to vector<16x16xf32>
    %59 = arith.mulf %54, %58 : vector<16x16xf32>
    %60 = arith.truncf %59 : vector<16x16xf32> to vector<16x16xbf16>
    %cst_18 = arith.constant dense<0.000000e+00> : vector<16x8xf32>
    %61 = tpu.matmul %60, %48, %cst_18 {dimension_numbers = #tpu.dot_dimension_numbers<[1], [0], [0], [1], [0, 0, 1, 1], [], []>} : vector<16x16xbf16>, vector<16x8xbf16>, vector<16x8xf32> -> vector<16x8xf32>
    %62 = vector.extract_strided_slice %1 {offsets = [0, 24], sizes = [16, 8], strides = [1, 1]} : vector<16x128xf32> to vector<16x8xf32>
    %cst_19 = arith.constant 0.353553385 : f32
    %63 = vector.broadcast %cst_19 : f32 to vector<16x8xf32>
    %64 = arith.mulf %62, %63 : vector<16x8xf32>
    %65 = arith.truncf %64 : vector<16x8xf32> to vector<16x8xbf16>
    %66 = vector.extract_strided_slice %4 {offsets = [0, 56], sizes = [16, 8], strides = [1, 1]} : vector<16x128xbf16> to vector<16x8xbf16>
    %67 = vector.extract_strided_slice %4 {offsets = [0, 88], sizes = [16, 8], strides = [1, 1]} : vector<16x128xbf16> to vector<16x8xbf16>
    %cst_20 = arith.constant dense<0.000000e+00> : vector<16x16xf32>
    %68 = tpu.matmul %65, %66, %cst_20 {dimension_numbers = #tpu.dot_dimension_numbers<[1], [1], [0], [0], [0, 0, 1, 0], [], []>} : vector<16x8xbf16>, vector<16x8xbf16>, vector<16x16xf32> -> vector<16x16xf32>
    %cst_21 = arith.constant dense<0xFF800000> : vector<16xf32>
    %69 = vector.multi_reduction <maximumf>, %68, %cst_21 [1] : vector<16x16xf32> to vector<16xf32>
    %70 = vector.shape_cast %69 : vector<16xf32> to vector<16x1xf32>
    %71 = vector.broadcast %70 : vector<16x1xf32> to vector<16x16xf32>
    %72 = arith.subf %68, %71 : vector<16x16xf32>
    %73 = math.exp %72 : vector<16x16xf32>
    %cst_22 = arith.constant dense<0.000000e+00> : vector<16xf32>
    %74 = vector.multi_reduction <add>, %73, %cst_22 [1] : vector<16x16xf32> to vector<16xf32>
    %75 = vector.shape_cast %74 : vector<16xf32> to vector<16x1xf32>
    %76 = tpu.reciprocal %75 {approx = true} : vector<16x1xf32> -> vector<16x1xf32>
    %77 = vector.broadcast %76 : vector<16x1xf32> to vector<16x16xf32>
    %78 = arith.mulf %73, %77 : vector<16x16xf32>
    %79 = arith.truncf %78 : vector<16x16xf32> to vector<16x16xbf16>
    %cst_23 = arith.constant dense<0.000000e+00> : vector<16x8xf32>
    %80 = tpu.matmul %79, %67, %cst_23 {dimension_numbers = #tpu.dot_dimension_numbers<[1], [0], [0], [1], [0, 0, 1, 1], [], []>} : vector<16x16xbf16>, vector<16x8xbf16>, vector<16x8xf32> -> vector<16x8xf32>
    %cst_24 = arith.constant 0.000000e+00 : f32
    %81 = vector.broadcast %cst_24 : f32 to vector<16x96xf32>
    %82 = tpu.concatenate %23, %42, %61, %80, %81 in 1 : vector<16x8xf32>, vector<16x8xf32>, vector<16x8xf32>, vector<16x8xf32>, vector<16x96xf32> -> vector<16x128xf32>
    %c0_25 = arith.constant 0 : index
    %c0_26 = arith.constant 0 : index
    %c0_27 = arith.constant 0 : index
    %83 = vector.load %arg4[%c0_25, %c0_26, %c0_27] : memref<1x16x128xf32, #tpu.memory_space<vmem>>, vector<1x16x128xf32>
    %84 = vector.shape_cast %83 : vector<1x16x128xf32> to vector<16x128xf32>
    %85 = vector.shape_cast %82 : vector<16x128xf32> to vector<1x16x128xf32>
    tpu.vector_store %arg4[%c0_25, %c0_26, %c0_27], %85 {strides = array<i32>} : memref<1x16x128xf32, #tpu.memory_space<vmem>>, vector<1x16x128xf32>,
    return
  }
  func.func @transform_0(%arg0: i32, %arg1: i32) -> (i32, i32, i32) {
    %c0_i32 = arith.constant 0 : i32
    %c0_i32_0 = arith.constant 0 : i32
    return %arg0, %arg1, %c0_i32 : i32, i32, i32
  }
  func.func @transform_1(%arg0: i32, %arg1: i32) -> (i32, i32, i32) {
    %c0_i32 = arith.constant 0 : i32
    %c0_i32_0 = arith.constant 0 : i32
    %c0_i32_1 = arith.constant 0 : i32
    return %arg0, %c0_i32, %c0_i32_0 : i32, i32, i32
  }
  func.func @transform_2(%arg0: i32, %arg1: i32) -> (i32, i32, i32) {
    %c0_i32 = arith.constant 0 : i32
    %c0_i32_0 = arith.constant 0 : i32
    return %arg0, %arg1, %c0_i32 : i32, i32, i32
  }
}

module attributes {stable_mosaic.version = 11 : i64} {
  func.func @_matmul_kernel(%arg0: i32, %arg1: i32, %arg2: i32, %arg3: memref<32x384xbf16, #tpu.memory_space<vmem>>, %arg4: memref<384x128xbf16, #tpu.memory_space<vmem>>, %arg5: memref<1x128xf32, #tpu.memory_space<vmem>>, %arg6: memref<32x128xf32, #tpu.memory_space<vmem>>, %arg7: memref<32x128xf32, #tpu.memory_space<vmem>>, %arg8: memref<32x128xf32, #tpu.memory_space<vmem>>) attributes {dimension_semantics = [#tpu.dimension_semantics<parallel>, #tpu.dimension_semantics<parallel>, #tpu.dimension_semantics<arbitrary>], iteration_bounds = array<i64: 1, 1, 1>, scalar_prefetch = 0 : i64, scratch_operands = 1 : i64, tpu.core_type = #tpu.core_type<tc>, window_params = [{transform_indices = @transform_0, window_bounds = array<i64: 32, 384>}, {transform_indices = @transform_1, window_bounds = array<i64: 384, 128>}, {transform_indices = @transform_2, window_bounds = array<i64: 1, 128>}, {transform_indices = @transform_3, window_bounds = array<i64: 32, 128>}, {transform_indices = @transform_4, window_bounds = array<i64: 32, 128>}]} {
    %c0_i32 = arith.constant 0 : i32
    %0 = arith.cmpi eq, %arg2, %c0_i32 : i32
    %1 = arith.extui %0 : i1 to i32
    %c0_i32_0 = arith.constant 0 : i32
    %2 = arith.cmpi ne, %1, %c0_i32_0 : i32
    scf.if %2 {
      %cst_10 = arith.constant 0.000000e+00 : f32
      %12 = vector.broadcast %cst_10 : f32 to vector<32x128xf32>
      %c0_11 = arith.constant 0 : index
      %c0_12 = arith.constant 0 : index
      %13 = vector.load %arg8[%c0_11, %c0_12] : memref<32x128xf32, #tpu.memory_space<vmem>>, vector<32x128xf32>
      tpu.vector_store %arg8[%c0_11, %c0_12], %12 {strides = array<i32>} : memref<32x128xf32, #tpu.memory_space<vmem>>, vector<32x128xf32>,
    } else {
    }
    %c0 = arith.constant 0 : index
    %c0_1 = arith.constant 0 : index
    %3 = vector.load %arg8[%c0, %c0_1] : memref<32x128xf32, #tpu.memory_space<vmem>>, vector<32x128xf32>
    %c0_2 = arith.constant 0 : index
    %c0_3 = arith.constant 0 : index
    %4 = vector.load %arg3[%c0_2, %c0_3] : memref<32x384xbf16, #tpu.memory_space<vmem>>, vector<32x384xbf16>
    %c0_4 = arith.constant 0 : index
    %c0_5 = arith.constant 0 : index
    %5 = vector.load %arg4[%c0_4, %c0_5] : memref<384x128xbf16, #tpu.memory_space<vmem>>, vector<384x128xbf16>
    %cst = arith.constant dense<0.000000e+00> : vector<32x128xf32>
    %6 = tpu.matmul %4, %5, %cst {dimension_numbers = #tpu.dot_dimension_numbers<[1], [0], [0], [1], [0, 0, 1, 1], [], []>} : vector<32x384xbf16>, vector<384x128xbf16>, vector<32x128xf32> -> vector<32x128xf32>
    %7 = arith.addf %3, %6 : vector<32x128xf32>
    %c0_6 = arith.constant 0 : index
    %c0_7 = arith.constant 0 : index
    %8 = vector.load %arg8[%c0_6, %c0_7] : memref<32x128xf32, #tpu.memory_space<vmem>>, vector<32x128xf32>
    tpu.vector_store %arg8[%c0_6, %c0_7], %7 {strides = array<i32>} : memref<32x128xf32, #tpu.memory_space<vmem>>, vector<32x128xf32>,
    %c0_i32_8 = arith.constant 0 : i32
    %9 = arith.cmpi eq, %arg2, %c0_i32_8 : i32
    %10 = arith.extui %9 : i1 to i32
    %c0_i32_9 = arith.constant 0 : i32
    %11 = arith.cmpi ne, %10, %c0_i32_9 : i32
    scf.if %11 {
      %c0_10 = arith.constant 0 : index
      %c0_11 = arith.constant 0 : index
      %12 = vector.load %arg8[%c0_10, %c0_11] : memref<32x128xf32, #tpu.memory_space<vmem>>, vector<32x128xf32>
      %c0_12 = arith.constant 0 : index
      %c0_13 = arith.constant 0 : index
      %13 = vector.load %arg5[%c0_12, %c0_13] : memref<1x128xf32, #tpu.memory_space<vmem>>, vector<1x128xf32>
      %14 = vector.broadcast %13 : vector<1x128xf32> to vector<32x128xf32>
      %15 = arith.addf %12, %14 : vector<32x128xf32>
      %16 = arith.negf %15 : vector<32x128xf32>
      %17 = math.exp %16 : vector<32x128xf32>
      %cst_14 = arith.constant 1.000000e+00 : f32
      %18 = vector.broadcast %cst_14 : f32 to vector<32x128xf32>
      %19 = arith.addf %18, %17 : vector<32x128xf32>
      %20 = arith.divf %18, %19 : vector<32x128xf32>
      %21 = arith.mulf %15, %20 : vector<32x128xf32>
      %c0_15 = arith.constant 0 : index
      %c0_16 = arith.constant 0 : index
      %22 = vector.load %arg6[%c0_15, %c0_16] : memref<32x128xf32, #tpu.memory_space<vmem>>, vector<32x128xf32>
      %23 = arith.addf %21, %22 : vector<32x128xf32>
      %c0_17 = arith.constant 0 : index
      %c0_18 = arith.constant 0 : index
      %24 = vector.load %arg7[%c0_17, %c0_18] : memref<32x128xf32, #tpu.memory_space<vmem>>, vector<32x128xf32>
      tpu.vector_store %arg7[%c0_17, %c0_18], %23 {strides = array<i32>} : memref<32x128xf32, #tpu.memory_space<vmem>>, vector<32x128xf32>,
    } else {
    }
    return
  }
  func.func @transform_0(%arg0: i32, %arg1: i32, %arg2: i32) -> (i32, i32) {
    %c0_i32 = arith.constant 0 : i32
    return %arg0, %arg2 : i32, i32
  }
  func.func @transform_1(%arg0: i32, %arg1: i32, %arg2: i32) -> (i32, i32) {
    %c0_i32 = arith.constant 0 : i32
    return %arg2, %arg1 : i32, i32
  }
  func.func @transform_2(%arg0: i32, %arg1: i32, %arg2: i32) -> (i32, i32) {
    %c0_i32 = arith.constant 0 : i32
    %c0_i32_0 = arith.constant 0 : i32
    return %c0_i32, %arg1 : i32, i32
  }
  func.func @transform_3(%arg0: i32, %arg1: i32, %arg2: i32) -> (i32, i32) {
    %c0_i32 = arith.constant 0 : i32
    return %arg0, %arg1 : i32, i32
  }
  func.func @transform_4(%arg0: i32, %arg1: i32, %arg2: i32) -> (i32, i32) {
    %c0_i32 = arith.constant 0 : i32
    return %arg0, %arg1 : i32, i32
  }
}

module attributes {stable_mosaic.version = 11 : i64} {
  func.func @_ln_mlp_kernel(%arg0: i32, %arg1: memref<32x128xf32, #tpu.memory_space<vmem>>, %arg2: memref<1x128xf32, #tpu.memory_space<vmem>>, %arg3: memref<1x128xf32, #tpu.memory_space<vmem>>, %arg4: memref<128x128xbf16, #tpu.memory_space<vmem>>, %arg5: memref<1x128xf32, #tpu.memory_space<vmem>>, %arg6: memref<128x128xbf16, #tpu.memory_space<vmem>>, %arg7: memref<1x128xf32, #tpu.memory_space<vmem>>, %arg8: memref<32x128xf32, #tpu.memory_space<vmem>>) attributes {dimension_semantics = [#tpu.dimension_semantics<parallel>], iteration_bounds = array<i64: 1>, scalar_prefetch = 0 : i64, scratch_operands = 0 : i64, tpu.core_type = #tpu.core_type<tc>, window_params = [{transform_indices = @transform_0, window_bounds = array<i64: 32, 128>}, {pipeline_mode = #tpu.pipeline_mode<synchronous>, transform_indices = @transform_1, window_bounds = array<i64: 1, 128>}, {pipeline_mode = #tpu.pipeline_mode<synchronous>, transform_indices = @transform_2, window_bounds = array<i64: 1, 128>}, {pipeline_mode = #tpu.pipeline_mode<synchronous>, transform_indices = @transform_3, window_bounds = array<i64: 128, 128>}, {pipeline_mode = #tpu.pipeline_mode<synchronous>, transform_indices = @transform_4, window_bounds = array<i64: 1, 128>}, {pipeline_mode = #tpu.pipeline_mode<synchronous>, transform_indices = @transform_5, window_bounds = array<i64: 128, 128>}, {pipeline_mode = #tpu.pipeline_mode<synchronous>, transform_indices = @transform_6, window_bounds = array<i64: 1, 128>}, {transform_indices = @transform_7, window_bounds = array<i64: 32, 128>}]} {
    %c0 = arith.constant 0 : index
    %c0_0 = arith.constant 0 : index
    %0 = vector.load %arg1[%c0, %c0_0] : memref<32x128xf32, #tpu.memory_space<vmem>>, vector<32x128xf32>
    %cst = arith.constant dense<0.000000e+00> : vector<32xf32>
    %1 = vector.multi_reduction <add>, %0, %cst [1] : vector<32x128xf32> to vector<32xf32>
    %2 = vector.shape_cast %1 : vector<32xf32> to vector<32x1xf32>
    %cst_1 = arith.constant 3.125000e-02 : f32
    %3 = vector.broadcast %cst_1 : f32 to vector<32x1xf32>
    %4 = arith.mulf %2, %3 : vector<32x1xf32>
    %5 = vector.broadcast %4 : vector<32x1xf32> to vector<32x128xf32>
    %6 = arith.subf %0, %5 : vector<32x128xf32>
    %7 = arith.mulf %6, %6 : vector<32x128xf32>
    %cst_2 = arith.constant dense<0.000000e+00> : vector<32xf32>
    %8 = vector.multi_reduction <add>, %7, %cst_2 [1] : vector<32x128xf32> to vector<32xf32>
    %9 = vector.shape_cast %8 : vector<32xf32> to vector<32x1xf32>
    %cst_3 = arith.constant 9.600000e+01 : f32
    %10 = vector.broadcast %cst_3 : f32 to vector<32x1xf32>
    %11 = arith.mulf %10, %4 : vector<32x1xf32>
    %12 = arith.mulf %11, %4 : vector<32x1xf32>
    %13 = arith.subf %9, %12 : vector<32x1xf32>
    %cst_4 = arith.constant 3.125000e-02 : f32
    %14 = vector.broadcast %cst_4 : f32 to vector<32x1xf32>
    %15 = arith.mulf %13, %14 : vector<32x1xf32>
    %cst_5 = arith.constant 0.000000e+00 : f32
    %16 = vector.broadcast %cst_5 : f32 to vector<32x1xf32>
    %17 = arith.maximumf %15, %16 : vector<32x1xf32>
    %cst_6 = arith.constant 9.99999974E-6 : f32
    %18 = vector.broadcast %cst_6 : f32 to vector<32x1xf32>
    %19 = arith.addf %17, %18 : vector<32x1xf32>
    %20 = math.rsqrt %19 : vector<32x1xf32>
    %21 = vector.broadcast %20 : vector<32x1xf32> to vector<32x128xf32>
    %22 = arith.mulf %6, %21 : vector<32x128xf32>
    %c0_7 = arith.constant 0 : index
    %c0_8 = arith.constant 0 : index
    %23 = vector.load %arg2[%c0_7, %c0_8] : memref<1x128xf32, #tpu.memory_space<vmem>>, vector<1x128xf32>
    %24 = vector.broadcast %23 : vector<1x128xf32> to vector<32x128xf32>
    %25 = arith.mulf %22, %24 : vector<32x128xf32>
    %c0_9 = arith.constant 0 : index
    %c0_10 = arith.constant 0 : index
    %26 = vector.load %arg3[%c0_9, %c0_10] : memref<1x128xf32, #tpu.memory_space<vmem>>, vector<1x128xf32>
    %27 = vector.broadcast %26 : vector<1x128xf32> to vector<32x128xf32>
    %28 = arith.addf %25, %27 : vector<32x128xf32>
    %29 = arith.truncf %28 : vector<32x128xf32> to vector<32x128xbf16>
    %c0_11 = arith.constant 0 : index
    %c0_12 = arith.constant 0 : index
    %30 = vector.load %arg4[%c0_11, %c0_12] : memref<128x128xbf16, #tpu.memory_space<vmem>>, vector<128x128xbf16>
    %cst_13 = arith.constant dense<0.000000e+00> : vector<32x128xf32>
    %31 = tpu.matmul %29, %30, %cst_13 {dimension_numbers = #tpu.dot_dimension_numbers<[1], [0], [0], [1], [0, 0, 1, 1], [], []>} : vector<32x128xbf16>, vector<128x128xbf16>, vector<32x128xf32> -> vector<32x128xf32>
    %c0_14 = arith.constant 0 : index
    %c0_15 = arith.constant 0 : index
    %32 = vector.load %arg5[%c0_14, %c0_15] : memref<1x128xf32, #tpu.memory_space<vmem>>, vector<1x128xf32>
    %33 = vector.broadcast %32 : vector<1x128xf32> to vector<32x128xf32>
    %34 = arith.addf %31, %33 : vector<32x128xf32>
    %35 = arith.mulf %34, %34 : vector<32x128xf32>
    %36 = arith.mulf %34, %35 : vector<32x128xf32>
    %cst_16 = arith.constant 4.471500e-02 : f32
    %37 = vector.broadcast %cst_16 : f32 to vector<32x128xf32>
    %38 = arith.mulf %37, %36 : vector<32x128xf32>
    %39 = arith.addf %34, %38 : vector<32x128xf32>
    %cst_17 = arith.constant 0.797884583 : f32
    %40 = vector.broadcast %cst_17 : f32 to vector<32x128xf32>
    %41 = arith.mulf %40, %39 : vector<32x128xf32>
    %42 = math.tanh %41 : vector<32x128xf32>
    %cst_18 = arith.constant 1.000000e+00 : f32
    %43 = vector.broadcast %cst_18 : f32 to vector<32x128xf32>
    %44 = arith.addf %43, %42 : vector<32x128xf32>
    %cst_19 = arith.constant 5.000000e-01 : f32
    %45 = vector.broadcast %cst_19 : f32 to vector<32x128xf32>
    %46 = arith.mulf %45, %44 : vector<32x128xf32>
    %47 = arith.mulf %34, %46 : vector<32x128xf32>
    %48 = arith.truncf %47 : vector<32x128xf32> to vector<32x128xbf16>
    %c0_20 = arith.constant 0 : index
    %c0_21 = arith.constant 0 : index
    %49 = vector.load %arg6[%c0_20, %c0_21] : memref<128x128xbf16, #tpu.memory_space<vmem>>, vector<128x128xbf16>
    %cst_22 = arith.constant dense<0.000000e+00> : vector<32x128xf32>
    %50 = tpu.matmul %48, %49, %cst_22 {dimension_numbers = #tpu.dot_dimension_numbers<[1], [0], [0], [1], [0, 0, 1, 1], [], []>} : vector<32x128xbf16>, vector<128x128xbf16>, vector<32x128xf32> -> vector<32x128xf32>
    %c0_23 = arith.constant 0 : index
    %c0_24 = arith.constant 0 : index
    %51 = vector.load %arg7[%c0_23, %c0_24] : memref<1x128xf32, #tpu.memory_space<vmem>>, vector<1x128xf32>
    %52 = vector.broadcast %51 : vector<1x128xf32> to vector<32x128xf32>
    %53 = arith.addf %50, %52 : vector<32x128xf32>
    %54 = arith.addf %53, %0 : vector<32x128xf32>
    %c0_25 = arith.constant 0 : index
    %c0_26 = arith.constant 0 : index
    %55 = vector.load %arg8[%c0_25, %c0_26] : memref<32x128xf32, #tpu.memory_space<vmem>>, vector<32x128xf32>
    tpu.vector_store %arg8[%c0_25, %c0_26], %54 {strides = array<i32>} : memref<32x128xf32, #tpu.memory_space<vmem>>, vector<32x128xf32>,
    return
  }
  func.func @transform_0(%arg0: i32) -> (i32, i32) {
    %c0_i32 = arith.constant 0 : i32
    %c0_i32_0 = arith.constant 0 : i32
    return %arg0, %c0_i32 : i32, i32
  }
  func.func @transform_1(%arg0: i32) -> (i32, i32) {
    %c0_i32 = arith.constant 0 : i32
    %c0_i32_0 = arith.constant 0 : i32
    %c0_i32_1 = arith.constant 0 : i32
    return %c0_i32, %c0_i32_0 : i32, i32
  }
  func.func @transform_2(%arg0: i32) -> (i32, i32) {
    %c0_i32 = arith.constant 0 : i32
    %c0_i32_0 = arith.constant 0 : i32
    %c0_i32_1 = arith.constant 0 : i32
    return %c0_i32, %c0_i32_0 : i32, i32
  }
  func.func @transform_3(%arg0: i32) -> (i32, i32) {
    %c0_i32 = arith.constant 0 : i32
    %c0_i32_0 = arith.constant 0 : i32
    %c0_i32_1 = arith.constant 0 : i32
    return %c0_i32, %c0_i32_0 : i32, i32
  }
  func.func @transform_4(%arg0: i32) -> (i32, i32) {
    %c0_i32 = arith.constant 0 : i32
    %c0_i32_0 = arith.constant 0 : i32
    %c0_i32_1 = arith.constant 0 : i32
    return %c0_i32, %c0_i32_0 : i32, i32
  }
  func.func @transform_5(%arg0: i32) -> (i32, i32) {
    %c0_i32 = arith.constant 0 : i32
    %c0_i32_0 = arith.constant 0 : i32
    %c0_i32_1 = arith.constant 0 : i32
    return %c0_i32, %c0_i32_0 : i32, i32
  }
  func.func @transform_6(%arg0: i32) -> (i32, i32) {
    %c0_i32 = arith.constant 0 : i32
    %c0_i32_0 = arith.constant 0 : i32
    %c0_i32_1 = arith.constant 0 : i32
    return %c0_i32, %c0_i32_0 : i32, i32
  }
  func.func @transform_7(%arg0: i32) -> (i32, i32) {
    %c0_i32 = arith.constant 0 : i32
    %c0_i32_0 = arith.constant 0 : i32
    return %arg0, %c0_i32 : i32, i32
  }
}

</mosaic_0001>

<llo_original>
// kernel: _lambda_.23
$region0: #{_lambda_.23}
  #allocation0 [shape = 'u32[]', space=smem, size = 0x4, offset = 0x4, fixed_abs, tag = 'smem constant byte address 0x4 - core index']
  #allocation1 [shape = 'u32[144,128]{1,0:T(1,128)}', space=vmem, size = 0x12000, scoped, tag = 'internal scratch']
  %s0 = inlined_call_operand.vmem [shape: f32[32,128], index: 0, kind: input, shape index: {}]
  %s1 = inlined_call_operand.vmem [shape: f32[1,128], index: 1, kind: input, shape index: {}]
  %s2 = inlined_call_operand.vmem [shape: f32[1,128], index: 2, kind: input, shape index: {}]
  %s3 = inlined_call_operand.vmem [shape: bf16[128,128], index: 3, kind: input, shape index: {}]
  %s4 = inlined_call_operand.vmem [shape: f32[1,128], index: 4, kind: input, shape index: {}]
  %s5 = inlined_call_operand.vmem [shape: f32[32,128], index: 5, kind: output, shape index: {}]
  %s6 = sld [smem:[#allocation0]]
  $region30: #{_lambda_.23} parent=0
    _
  %s8 = ssub.s32 1, %s6
  %s9 = scalar_select 0, %s8, %s6
  // Predicated region
  $region2: #{_lambda_.23} parent=0 // pred_check
    _
  $region3: #{_lambda_.23} parent=0 // pred_check_branch
    %11 = sbr.rel (0) target = $region5
  $region4: #{_lambda_.23} parent=0 // pred_region
    _
  $region5: #{_lambda_.23} parent=0 // pred_fallthru
    _
  // Predicated region
  $region6: #{_lambda_.23} parent=0 // pred_check
    _
  $region7: #{_lambda_.23} parent=0 // pred_check_branch
    %13 = sbr.rel (0) target = $region9
  $region8: #{_lambda_.23} parent=0 // pred_region
    _
  $region9: #{_lambda_.23} parent=0 // pred_fallthru
    _
  // Predicated region
  $region10: #{_lambda_.23} parent=0 // pred_check
    _
  $region11: #{_lambda_.23} parent=0 // pred_check_branch
    %15 = sbr.rel (0) target = $region13
  $region12: #{_lambda_.23} parent=0 // pred_region
    _
  $region13: #{_lambda_.23} parent=0 // pred_fallthru
    _
  // Predicated region
  $region14: #{_lambda_.23} parent=0 // pred_check
    _
  $region15: #{_lambda_.23} parent=0 // pred_check_branch
    %17 = sbr.rel (0) target = $region17
  $region16: #{_lambda_.23} parent=0 // pred_region
    _
  $region17: #{_lambda_.23} parent=0 // pred_fallthru
    _
  // Predicated region
  $region18: #{_lambda_.23} parent=0 // pred_check
    _
  $region19: #{_lambda_.23} parent=0 // pred_check_branch
    %19 = sbr.rel (0) target = $region21
  $region20: #{_lambda_.23} parent=0 // pred_region
    _
  $region21: #{_lambda_.23} parent=0 // pred_fallthru
    _
  %v21 = vld [vmem:[%s0] sm:$0xff]
  %v22 = vld [vmem:[%s0 + $0x8] sm:$0xff]
  %v23 = vld [vmem:[%s0 + $0x10] sm:$0xff]
  %v24 = vld [vmem:[%s0 + $0x18] sm:$0xff]
  %25 = vadd.xlane.f32.xlu0 %v21
  %v26 = vpop.xlane.xlu0 %25
  %27 = vadd.xlane.f32.xlu0 %v22
  %v28 = vpop.xlane.xlu0 %27
  %29 = vadd.xlane.f32.xlu0 %v23
  %v30 = vpop.xlane.xlu0 %29
  %31 = vadd.xlane.f32.xlu0 %v24
  %v32 = vpop.xlane.xlu0 %31
  %v33 = vmul.f32 %v26, 0.03125
  %v34 = vmul.f32 %v28, 0.03125
  %v35 = vmul.f32 %v30, 0.03125
  %v36 = vmul.f32 %v32, 0.03125
  %v37 = vsub.f32 %v21, %v33
  %v38 = vsub.f32 %v22, %v34
  %v39 = vsub.f32 %v23, %v35
  %v40 = vsub.f32 %v24, %v36
  %v41 = vmul.f32 %v37, %v37
  %v42 = vmul.f32 %v38, %v38
  %v43 = vmul.f32 %v39, %v39
  %v44 = vmul.f32 %v40, %v40
  %45 = vadd.xlane.f32.xlu0 %v41
  %v46 = vpop.xlane.xlu0 %45
  %47 = vadd.xlane.f32.xlu0 %v42
  %v48 = vpop.xlane.xlu0 %47
  %49 = vadd.xlane.f32.xlu0 %v43
  %v50 = vpop.xlane.xlu0 %49
  %51 = vadd.xlane.f32.xlu0 %v44
  %v52 = vpop.xlane.xlu0 %51
  %v53 = vmul.f32 %v33, 96.0
  %v54 = vmul.f32 %v34, 96.0
  %v55 = vmul.f32 %v35, 96.0
  %v56 = vmul.f32 %v36, 96.0
  %v57 = vmul.f32 %v53, %v33
  %v58 = vmul.f32 %v54, %v34
  %v59 = vmul.f32 %v55, %v35
  %v60 = vmul.f32 %v56, %v36
  %v61 = vsub.f32 %v46, %v57
  %v62 = vsub.f32 %v48, %v58
  %v63 = vsub.f32 %v50, %v59
  %v64 = vsub.f32 %v52, %v60
  %v65 = vmul.f32 %v61, 0.03125
  %v66 = vmul.f32 %v62, 0.03125
  %v67 = vmul.f32 %v63, 0.03125
  %v68 = vmul.f32 %v64, 0.03125
  %v69 = vmax.f32 %v65, 0.0
  %v70 = vmax.f32 %v66, 0.0
  %v71 = vmax.f32 %v67, 0.0
  %v72 = vmax.f32 %v68, 0.0
  %v73 = vadd.f32 %v69, 1e-05
  %v74 = vadd.f32 %v70, 1e-05
  %v75 = vadd.f32 %v71, 1e-05
  %v76 = vadd.f32 %v72, 1e-05
  %v77 = vrsqrt.pop %v73
  %v78 = vrsqrt.pop %v74
  %v79 = vrsqrt.pop %v75
  %v80 = vrsqrt.pop %v76
  %v81 = vmul.f32 %v37, %v77
  %v82 = vmul.f32 %v38, %v78
  %v83 = vmul.f32 %v39, %v79
  %v84 = vmul.f32 %v40, %v80
  %v85 = vld [vmem:[%s1] sm:$0x1]
  %v87 = vlaneseq
  %v88 = vshrl.u32 %v87, 7
  %v89 = vsub.s32 0, %v88
  %v90 = vrot.slane %v85, %v89
  %v92 = vmul.f32 %v81, %v90
  %v93 = vmul.f32 %v82, %v90
  %v94 = vmul.f32 %v83, %v90
  %v95 = vmul.f32 %v84, %v90
  %v96 = vld [vmem:[%s2] sm:$0x1]
  %v98 = vlaneseq
  %v99 = vshrl.u32 %v98, 7
  %v100 = vsub.s32 0, %v99
  %v101 = vrot.slane %v96, %v100
  %v103 = vadd.f32 %v92, %v101
  %v104 = vadd.f32 %v93, %v101
  %v105 = vadd.f32 %v94, %v101
  %v106 = vadd.f32 %v95, %v101
  %v107 = vpack.c.bf16 %v104, %v103
  %v108 = vpack.c.bf16 %v106, %v105
  %v109 = vld [vmem:[%s3] sm:$0xf]
  %v110 = vld [vmem:[%s3 + $0x4] sm:$0xf]
  %v111 = vld [vmem:[%s3 + $0x8] sm:$0xf]
  %v112 = vld [vmem:[%s3 + $0xc] sm:$0xf]
  %v113 = vld [vmem:[%s3 + $0x10] sm:$0xf]
  %v114 = vld [vmem:[%s3 + $0x14] sm:$0xf]
  %v115 = vld [vmem:[%s3 + $0x18] sm:$0xf]
  %v116 = vld [vmem:[%s3 + $0x1c] sm:$0xf]
  %v117 = vld [vmem:[%s3 + $0x20] sm:$0xf]
  %v118 = vld [vmem:[%s3 + $0x24] sm:$0xf]
  %v119 = vld [vmem:[%s3 + $0x28] sm:$0xf]
  %v120 = vld [vmem:[%s3 + $0x2c] sm:$0xf]
  %v121 = vld [vmem:[%s3 + $0x30] sm:$0xf]
  %v122 = vld [vmem:[%s3 + $0x34] sm:$0xf]
  %v123 = vld [vmem:[%s3 + $0x38] sm:$0xf]
  %v124 = vld [vmem:[%s3 + $0x3c] sm:$0xf]
  %v125 = vld [vmem:[%s4] sm:$0x1]
  %v127 = vlaneseq
  %v128 = vshrl.u32 %v127, 7
  %v129 = vsub.s32 0, %v128
  %v130 = vrot.slane %v125, %v129
  %v148 = vunpack.c.l.b16 %v109
  %v149 = vunpack.c.l.b16 %v110
  %v150 = vunpack.c.l.b16 %v111
  %v151 = vunpack.c.l.b16 %v112
  %v152 = vunpack.c.l.b16 %v113
  %v153 = vunpack.c.l.b16 %v114
  %v154 = vunpack.c.l.b16 %v115
  %v155 = vunpack.c.l.b16 %v116
  %v156 = vunpack.c.l.b16 %v117
  %v157 = vunpack.c.l.b16 %v118
  %v158 = vunpack.c.l.b16 %v119
  %v159 = vunpack.c.l.b16 %v120
  %v160 = vunpack.c.l.b16 %v121
  %v161 = vunpack.c.l.b16 %v122
  %v162 = vunpack.c.l.b16 %v123
  %v163 = vunpack.c.l.b16 %v124
  %v164 = vpack.c.b16 %v149, %v148
  %v165 = vpack.c.b16 %v151, %v150
  %v166 = vpack.c.b16 %v153, %v152
  %v167 = vpack.c.b16 %v155, %v154
  %v168 = vpack.c.b16 %v157, %v156
  %v169 = vpack.c.b16 %v159, %v158
  %v170 = vpack.c.b16 %v161, %v160
  %v171 = vpack.c.b16 %v163, %v162
  %180 = vmatprep.subr.bf16.mxu0 0
  %181 = vmatpush1.bf16.msra.mxu0 %v171
  %182 = vmatprep.subr.bf16.mxu0 0
  %183 = vmatpush1.bf16.msra.mxu0 %v170
  %184 = vmatprep.subr.bf16.mxu0 0
  %185 = vmatpush1.bf16.msra.mxu0 %v169
  %186 = vmatprep.subr.bf16.mxu0 0
  %187 = vmatpush1.bf16.msra.mxu0 %v168
  %188 = vmatprep.subr.bf16.mxu0 0
  %189 = vmatpush1.bf16.msra.mxu0 %v167
  %190 = vmatprep.subr.bf16.mxu0 0
  %191 = vmatpush1.bf16.msra.mxu0 %v166
  %192 = vmatprep.subr.bf16.mxu0 0
  %193 = vmatpush1.bf16.msra.mxu0 %v165
  %194 = vmatprep.subr.bf16.mxu0 0
  %195 = vmatpush1.bf16.msra.mxu0 %v164
  %196 = vmatprep.subr.bf16.mxu0 0
  %197 = vmatpush2.bf16.msra.mxu0 0
  %198 = vmatprep.subr.bf16.mxu0 0
  %199 = vmatpush2.bf16.msra.mxu0 0
  %200 = vmatprep.subr.bf16.mxu0 0
  %201 = vmatpush2.bf16.msra.mxu0 0
  %202 = vmatprep.subr.bf16.mxu0 0
  %203 = vmatpush2.bf16.msra.mxu0 0
  %204 = vmatprep.subr.bf16.mxu0 0
  %205 = vmatpush2.bf16.msra.mxu0 0
  %206 = vmatprep.subr.bf16.mxu0 0
  %207 = vmatpush2.bf16.msra.mxu0 0
  %208 = vmatprep.subr.bf16.mxu0 0
  %209 = vmatpush2.bf16.msra.mxu0 0
  %210 = vmatprep.subr.bf16.mxu0 0
  %211 = vmatpush2.bf16.msra.mxu0 0
  %212 = vmatprep.mubr.bf16.mxu0 0
  %213 = vmatmul.mubr.bf16.gmra.mxu0 %v107
  %v214 = vpop.f32.mrf.mxu0
  %v215 = vadd.f32 %v130, %v214
  %v216 = vpop.f32.mrf.mxu0
  %v217 = vpop.f32.mrf.mxu0
  %v218 = vadd.f32 %v130, %v217
  %v219 = vpop.f32.mrf.mxu0
  %220 = vmatprep.mubr.bf16.mxu0 0
  %221 = vmatmul.mubr.bf16.gmra.mxu0 %v108
  %v222 = vpop.f32.mrf.mxu0
  %v223 = vadd.f32 %v130, %v222
  %v224 = vpop.f32.mrf.mxu0
  %v225 = vpop.f32.mrf.mxu0
  %v226 = vadd.f32 %v130, %v225
  %v227 = vpop.f32.mrf.mxu0
  %228 = vdwg.mxu0
  %229 = vst [vmem:[%s5] sm:$0xff] %v215
  %230 = vst [vmem:[%s5 + $0x8] sm:$0xff] %v218
  %231 = vst [vmem:[%s5 + $0x10] sm:$0xff] %v223
  %232 = vst [vmem:[%s5 + $0x18] sm:$0xff] %v226
  // Predicated region
  $region22: #{_lambda_.23} parent=0 // pred_check
    _
  $region23: #{_lambda_.23} parent=0 // pred_check_branch
    %234 = sbr.rel (0) target = $region25
  $region24: #{_lambda_.23} parent=0 // pred_region
    _
  $region25: #{_lambda_.23} parent=0 // pred_fallthru
    _
  // Predicated region
  $region26: #{_lambda_.23} parent=0 // pred_check
    _
  $region27: #{_lambda_.23} parent=0 // pred_check_branch
    %236 = sbr.rel (0) target = $region29
  $region28: #{_lambda_.23} parent=0 // pred_region
    _
  $region29: #{_lambda_.23} parent=0 // pred_fallthru
    _

// kernel: _lambda_.22
$region0: #{_lambda_.22}
  #allocation0 [shape = 'u32[]', space=smem, size = 0x4, offset = 0x4, fixed_abs, tag = 'smem constant byte address 0x4 - core index']
  #allocation1 [shape = 'u32[144,128]{1,0:T(1,128)}', space=vmem, size = 0x12000, scoped, tag = 'internal scratch']
  #allocation2 [shape = 'f32[32,128]{1,0:T(8,128)}', space=vmem, size = 0x4000, scoped, tag = 'scratch operand']
  %s0 = inlined_call_operand.vmem [shape: bf16[32,512], index: 0, kind: input, shape index: {}]
  %s1 = inlined_call_operand.vmem [shape: bf16[512,128], index: 1, kind: input, shape index: {}]
  %s2 = inlined_call_operand.vmem [shape: f32[1,128], index: 2, kind: input, shape index: {}]
  %s3 = inlined_call_operand.vmem [shape: f32[32,128], index: 3, kind: output, shape index: {}]
  %s4 = sld [smem:[#allocation0]]
  $region30: #{_lambda_.22} parent=0
    _
  %s6 = ssub.s32 1, %s4
  %s7 = scalar_select 0, %s6, %s4
  // Predicated region
  $region2: #{_lambda_.22} parent=0 // pred_check
    _
  $region3: #{_lambda_.22} parent=0 // pred_check_branch
    %9 = sbr.rel (0) target = $region5
  $region4: #{_lambda_.22} parent=0 // pred_region
    _
  $region5: #{_lambda_.22} parent=0 // pred_fallthru
    _
  // Predicated region
  $region6: #{_lambda_.22} parent=0 // pred_check
    _
  $region7: #{_lambda_.22} parent=0 // pred_check_branch
    %11 = sbr.rel (0) target = $region9
  $region8: #{_lambda_.22} parent=0 // pred_region
    _
  $region9: #{_lambda_.22} parent=0 // pred_fallthru
    _
  // Predicated region
  $region10: #{_lambda_.22} parent=0 // pred_check
    _
  $region11: #{_lambda_.22} parent=0 // pred_check_branch
    %13 = sbr.rel (0) target = $region13
  $region12: #{_lambda_.22} parent=0 // pred_region
    _
  $region13: #{_lambda_.22} parent=0 // pred_fallthru
    _
  %p15 = scmp.eq.s32.totalorder 0, 0
  // Predicated region
  $region14: #{_lambda_.22} parent=0 // pred_check
    %p16 = pneg %p15
  $region15: #{_lambda_.22} parent=0 // pred_check_branch
    %18 = sbr.rel (%p16) target = $region17
  $region16: #{_lambda_.22} parent=0 // pred_region
    %19 = vst [vmem:[#allocation2] sm:$0xff] 0.0
    %20 = vst [vmem:[#allocation2 + $0x8] sm:$0xff] 0.0
    %21 = vst [vmem:[#allocation2 + $0x10] sm:$0xff] 0.0
    %22 = vst [vmem:[#allocation2 + $0x18] sm:$0xff] 0.0
  $region17: #{_lambda_.22} parent=0 // pred_fallthru
    _
  %v23 = vld [vmem:[#allocation2] sm:$0xff]
  %v24 = vld [vmem:[#allocation2 + $0x8] sm:$0xff]
  %v25 = vld [vmem:[#allocation2 + $0x10] sm:$0xff]
  %v26 = vld [vmem:[#allocation2 + $0x18] sm:$0xff]
  %v27 = vld [vmem:[%s0] sm:$0xff]
  %v28 = vld [vmem:[%s0 + $0x8] sm:$0xff]
  %v29 = vld [vmem:[%s0 + $0x10] sm:$0xff]
  %v30 = vld [vmem:[%s0 + $0x18] sm:$0xff]
  %v31 = vld [vmem:[%s0 + $0x20] sm:$0xff]
  %v32 = vld [vmem:[%s0 + $0x28] sm:$0xff]
  %v33 = vld [vmem:[%s0 + $0x30] sm:$0xff]
  %v34 = vld [vmem:[%s0 + $0x38] sm:$0xff]
  %v35 = vld [vmem:[%s1] sm:$0xf]
  %v36 = vld [vmem:[%s1 + $0x4] sm:$0xf]
  %v37 = vld [vmem:[%s1 + $0x8] sm:$0xf]
  %v38 = vld [vmem:[%s1 + $0xc] sm:$0xf]
  %v39 = vld [vmem:[%s1 + $0x10] sm:$0xf]
  %v40 = vld [vmem:[%s1 + $0x14] sm:$0xf]
  %v41 = vld [vmem:[%s1 + $0x18] sm:$0xf]
  %v42 = vld [vmem:[%s1 + $0x1c] sm:$0xf]
  %v43 = vld [vmem:[%s1 + $0x20] sm:$0xf]
  %v44 = vld [vmem:[%s1 + $0x24] sm:$0xf]
  %v45 = vld [vmem:[%s1 + $0x28] sm:$0xf]
  %v46 = vld [vmem:[%s1 + $0x2c] sm:$0xf]
  %v47 = vld [vmem:[%s1 + $0x30] sm:$0xf]
  %v48 = vld [vmem:[%s1 + $0x34] sm:$0xf]
  %v49 = vld [vmem:[%s1 + $0x38] sm:$0xf]
  %v50 = vld [vmem:[%s1 + $0x3c] sm:$0xf]
  %v51 = vld [vmem:[%s1 + $0x40] sm:$0xf]
  %v52 = vld [vmem:[%s1 + $0x44] sm:$0xf]
  %v53 = vld [vmem:[%s1 + $0x48] sm:$0xf]
  %v54 = vld [vmem:[%s1 + $0x4c] sm:$0xf]
  %v55 = vld [vmem:[%s1 + $0x50] sm:$0xf]
  %v56 = vld [vmem:[%s1 + $0x54] sm:$0xf]
  %v57 = vld [vmem:[%s1 + $0x58] sm:$0xf]
  %v58 = vld [vmem:[%s1 + $0x5c] sm:$0xf]
  %v59 = vld [vmem:[%s1 + $0x60] sm:$0xf]
  %v60 = vld [vmem:[%s1 + $0x64] sm:$0xf]
  %v61 = vld [vmem:[%s1 + $0x68] sm:$0xf]
  %v62 = vld [vmem:[%s1 + $0x6c] sm:$0xf]
  %v63 = vld [vmem:[%s1 + $0x70] sm:$0xf]
  %v64 = vld [vmem:[%s1 + $0x74] sm:$0xf]
  %v65 = vld [vmem:[%s1 + $0x78] sm:$0xf]
  %v66 = vld [vmem:[%s1 + $0x7c] sm:$0xf]
  %v67 = vld [vmem:[%s1 + $0x80] sm:$0xf]
  %v68 = vld [vmem:[%s1 + $0x84] sm:$0xf]
  %v69 = vld [vmem:[%s1 + $0x88] sm:$0xf]
  %v70 = vld [vmem:[%s1 + $0x8c] sm:$0xf]
  %v71 = vld [vmem:[%s1 + $0x90] sm:$0xf]
  %v72 = vld [vmem:[%s1 + $0x94] sm:$0xf]
  %v73 = vld [vmem:[%s1 + $0x98] sm:$0xf]
  %v74 = vld [vmem:[%s1 + $0x9c] sm:$0xf]
  %v75 = vld [vmem:[%s1 + $0xa0] sm:$0xf]
  %v76 = vld [vmem:[%s1 + $0xa4] sm:$0xf]
  %v77 = vld [vmem:[%s1 + $0xa8] sm:$0xf]
  %v78 = vld [vmem:[%s1 + $0xac] sm:$0xf]
  %v79 = vld [vmem:[%s1 + $0xb0] sm:$0xf]
  %v80 = vld [vmem:[%s1 + $0xb4] sm:$0xf]
  %v81 = vld [vmem:[%s1 + $0xb8] sm:$0xf]
  %v82 = vld [vmem:[%s1 + $0xbc] sm:$0xf]
  %v83 = vld [vmem:[%s1 + $0xc0] sm:$0xf]
  %v84 = vld [vmem:[%s1 + $0xc4] sm:$0xf]
  %v85 = vld [vmem:[%s1 + $0xc8] sm:$0xf]
  %v86 = vld [vmem:[%s1 + $0xcc] sm:$0xf]
  %v87 = vld [vmem:[%s1 + $0xd0] sm:$0xf]
  %v88 = vld [vmem:[%s1 + $0xd4] sm:$0xf]
  %v89 = vld [vmem:[%s1 + $0xd8] sm:$0xf]
  %v90 = vld [vmem:[%s1 + $0xdc] sm:$0xf]
  %v91 = vld [vmem:[%s1 + $0xe0] sm:$0xf]
  %v92 = vld [vmem:[%s1 + $0xe4] sm:$0xf]
  %v93 = vld [vmem:[%s1 + $0xe8] sm:$0xf]
  %v94 = vld [vmem:[%s1 + $0xec] sm:$0xf]
  %v95 = vld [vmem:[%s1 + $0xf0] sm:$0xf]
  %v96 = vld [vmem:[%s1 + $0xf4] sm:$0xf]
  %v97 = vld [vmem:[%s1 + $0xf8] sm:$0xf]
  %v98 = vld [vmem:[%s1 + $0xfc] sm:$0xf]
  %v107 = vunpack.c.l.b16 %v27
  %v108 = vunpack.c.h.b16 %v27
  %v109 = vunpack.c.l.b16 %v28
  %v110 = vunpack.c.h.b16 %v28
  %v111 = vunpack.c.l.b16 %v29
  %v112 = vunpack.c.h.b16 %v29
  %v113 = vunpack.c.l.b16 %v30
  %v114 = vunpack.c.h.b16 %v30
  %v115 = vunpack.c.l.b16 %v31
  %v116 = vunpack.c.h.b16 %v31
  %v117 = vunpack.c.l.b16 %v32
  %v118 = vunpack.c.h.b16 %v32
  %v119 = vunpack.c.l.b16 %v33
  %v120 = vunpack.c.h.b16 %v33
  %v121 = vunpack.c.l.b16 %v34
  %v122 = vunpack.c.h.b16 %v34
  %v123 = vpack.c.b16 %v111, %v107
  %v124 = vpack.c.b16 %v112, %v108
  %v125 = vpack.c.b16 %v113, %v109
  %v126 = vpack.c.b16 %v114, %v110
  %v127 = vpack.c.b16 %v119, %v115
  %v128 = vpack.c.b16 %v120, %v116
  %v129 = vpack.c.b16 %v121, %v117
  %v130 = vpack.c.b16 %v122, %v118
  %v203 = vunpack.c.l.b16 %v35
  %v204 = vunpack.c.l.b16 %v36
  %v205 = vunpack.c.l.b16 %v37
  %v206 = vunpack.c.l.b16 %v38
  %v207 = vunpack.c.l.b16 %v39
  %v208 = vunpack.c.l.b16 %v40
  %v209 = vunpack.c.l.b16 %v41
  %v210 = vunpack.c.l.b16 %v42
  %v211 = vunpack.c.l.b16 %v43
  %v212 = vunpack.c.l.b16 %v44
  %v213 = vunpack.c.l.b16 %v45
  %v214 = vunpack.c.l.b16 %v46
  %v215 = vunpack.c.l.b16 %v47
  %v216 = vunpack.c.l.b16 %v48
  %v217 = vunpack.c.l.b16 %v49
  %v218 = vunpack.c.l.b16 %v50
  %v219 = vunpack.c.l.b16 %v51
  %v220 = vunpack.c.l.b16 %v52
  %v221 = vunpack.c.l.b16 %v53
  %v222 = vunpack.c.l.b16 %v54
  %v223 = vunpack.c.l.b16 %v55
  %v224 = vunpack.c.l.b16 %v56
  %v225 = vunpack.c.l.b16 %v57
  %v226 = vunpack.c.l.b16 %v58
  %v227 = vunpack.c.l.b16 %v59
  %v228 = vunpack.c.l.b16 %v60
  %v229 = vunpack.c.l.b16 %v61
  %v230 = vunpack.c.l.b16 %v62
  %v231 = vunpack.c.l.b16 %v63
  %v232 = vunpack.c.l.b16 %v64
  %v233 = vunpack.c.l.b16 %v65
  %v234 = vunpack.c.l.b16 %v66
  %v235 = vunpack.c.l.b16 %v67
  %v236 = vunpack.c.l.b16 %v68
  %v237 = vunpack.c.l.b16 %v69
  %v238 = vunpack.c.l.b16 %v70
  %v239 = vunpack.c.l.b16 %v71
  %v240 = vunpack.c.l.b16 %v72
  %v241 = vunpack.c.l.b16 %v73
  %v242 = vunpack.c.l.b16 %v74
  %v243 = vunpack.c.l.b16 %v75
  %v244 = vunpack.c.l.b16 %v76
  %v245 = vunpack.c.l.b16 %v77
  %v246 = vunpack.c.l.b16 %v78
  %v247 = vunpack.c.l.b16 %v79
  %v248 = vunpack.c.l.b16 %v80
  %v249 = vunpack.c.l.b16 %v81
  %v250 = vunpack.c.l.b16 %v82
  %v251 = vunpack.c.l.b16 %v83
  %v252 = vunpack.c.l.b16 %v84
  %v253 = vunpack.c.l.b16 %v85
  %v254 = vunpack.c.l.b16 %v86
  %v255 = vunpack.c.l.b16 %v87
  %v256 = vunpack.c.l.b16 %v88
  %v257 = vunpack.c.l.b16 %v89
  %v258 = vunpack.c.l.b16 %v90
  %v259 = vunpack.c.l.b16 %v91
  %v260 = vunpack.c.l.b16 %v92
  %v261 = vunpack.c.l.b16 %v93
  %v262 = vunpack.c.l.b16 %v94
  %v263 = vunpack.c.l.b16 %v95
  %v264 = vunpack.c.l.b16 %v96
  %v265 = vunpack.c.l.b16 %v97
  %v266 = vunpack.c.l.b16 %v98
  %v267 = vpack.c.b16 %v204, %v203
  %v268 = vpack.c.b16 %v206, %v205
  %v269 = vpack.c.b16 %v208, %v207
  %v270 = vpack.c.b16 %v210, %v209
  %v271 = vpack.c.b16 %v212, %v211
  %v272 = vpack.c.b16 %v214, %v213
  %v273 = vpack.c.b16 %v216, %v215
  %v274 = vpack.c.b16 %v218, %v217
  %v275 = vpack.c.b16 %v220, %v219
  %v276 = vpack.c.b16 %v222, %v221
  %v277 = vpack.c.b16 %v224, %v223
  %v278 = vpack.c.b16 %v226, %v225
  %v279 = vpack.c.b16 %v228, %v227
  %v280 = vpack.c.b16 %v230, %v229
  %v281 = vpack.c.b16 %v232, %v231
  %v282 = vpack.c.b16 %v234, %v233
  %v283 = vpack.c.b16 %v236, %v235
  %v284 = vpack.c.b16 %v238, %v237
  %v285 = vpack.c.b16 %v240, %v239
  %v286 = vpack.c.b16 %v242, %v241
  %v287 = vpack.c.b16 %v244, %v243
  %v288 = vpack.c.b16 %v246, %v245
  %v289 = vpack.c.b16 %v248, %v247
  %v290 = vpack.c.b16 %v250, %v249
  %v291 = vpack.c.b16 %v252, %v251
  %v292 = vpack.c.b16 %v254, %v253
  %v293 = vpack.c.b16 %v256, %v255
  %v294 = vpack.c.b16 %v258, %v257
  %v295 = vpack.c.b16 %v260, %v259
  %v296 = vpack.c.b16 %v262, %v261
  %v297 = vpack.c.b16 %v264, %v263
  %v298 = vpack.c.b16 %v266, %v265
  %331 = vmatprep.subr.bf16.mxu0 0
  %332 = vmatpush1.bf16.msra.mxu0 %v274
  %333 = vmatprep.subr.bf16.mxu0 0
  %334 = vmatpush1.bf16.msra.mxu0 %v273
  %335 = vmatprep.subr.bf16.mxu0 0
  %336 = vmatpush1.bf16.msra.mxu0 %v272
  %337 = vmatprep.subr.bf16.mxu0 0
  %338 = vmatpush1.bf16.msra.mxu0 %v271
  %339 = vmatprep.subr.bf16.mxu0 0
  %340 = vmatpush1.bf16.msra.mxu0 %v270
  %341 = vmatprep.subr.bf16.mxu0 0
  %342 = vmatpush1.bf16.msra.mxu0 %v269
  %343 = vmatprep.subr.bf16.mxu0 0
  %344 = vmatpush1.bf16.msra.mxu0 %v268
  %345 = vmatprep.subr.bf16.mxu0 0
  %346 = vmatpush1.bf16.msra.mxu0 %v267
  %347 = vmatprep.subr.bf16.mxu0 0
  %348 = vmatpush2.bf16.msra.mxu0 %v282
  %349 = vmatprep.subr.bf16.mxu0 0
  %350 = vmatpush2.bf16.msra.mxu0 %v281
  %351 = vmatprep.subr.bf16.mxu0 0
  %352 = vmatpush2.bf16.msra.mxu0 %v280
  %353 = vmatprep.subr.bf16.mxu0 0
  %354 = vmatpush2.bf16.msra.mxu0 %v279
  %355 = vmatprep.subr.bf16.mxu0 0
  %356 = vmatpush2.bf16.msra.mxu0 %v278
  %357 = vmatprep.subr.bf16.mxu0 0
  %358 = vmatpush2.bf16.msra.mxu0 %v277
  %359 = vmatprep.subr.bf16.mxu0 0
  %360 = vmatpush2.bf16.msra.mxu0 %v276
  %361 = vmatprep.subr.bf16.mxu0 0
  %362 = vmatpush2.bf16.msra.mxu0 %v275
  %363 = vmatprep.mubr.bf16.mxu0 %v124
  %364 = vmatmul.mubr.bf16.gmra.mxu0 %v123
  %v365 = vpop.f32.mrf.mxu0
  %v366 = vadd.f32 0.0, %v365
  %v367 = vpop.f32.mrf.mxu0
  %v368 = vpop.f32.mrf.mxu0
  %v369 = vadd.f32 0.0, %v368
  %v370 = vpop.f32.mrf.mxu0
  %371 = vmatprep.mubr.bf16.mxu0 %v128
  %372 = vmatmul.mubr.bf16.gmra.mxu0 %v127
  %v373 = vpop.f32.mrf.mxu0
  %v374 = vadd.f32 0.0, %v373
  %v375 = vpop.f32.mrf.mxu0
  %v376 = vpop.f32.mrf.mxu0
  %v377 = vadd.f32 0.0, %v376
  %v378 = vpop.f32.mrf.mxu0
  %379 = vdwg.mxu0
  %380 = vmatprep.subr.bf16.mxu0 0
  %381 = vmatpush1.bf16.msra.mxu0 %v290
  %382 = vmatprep.subr.bf16.mxu0 0
  %383 = vmatpush1.bf16.msra.mxu0 %v289
  %384 = vmatprep.subr.bf16.mxu0 0
  %385 = vmatpush1.bf16.msra.mxu0 %v288
  %386 = vmatprep.subr.bf16.mxu0 0
  %387 = vmatpush1.bf16.msra.mxu0 %v287
  %388 = vmatprep.subr.bf16.mxu0 0
  %389 = vmatpush1.bf16.msra.mxu0 %v286
  %390 = vmatprep.subr.bf16.mxu0 0
  %391 = vmatpush1.bf16.msra.mxu0 %v285
  %392 = vmatprep.subr.bf16.mxu0 0
  %393 = vmatpush1.bf16.msra.mxu0 %v284
  %394 = vmatprep.subr.bf16.mxu0 0
  %395 = vmatpush1.bf16.msra.mxu0 %v283
  %396 = vmatprep.subr.bf16.mxu0 0
  %397 = vmatpush2.bf16.msra.mxu0 %v298
  %398 = vmatprep.subr.bf16.mxu0 0
  %399 = vmatpush2.bf16.msra.mxu0 %v297
  %400 = vmatprep.subr.bf16.mxu0 0
  %401 = vmatpush2.bf16.msra.mxu0 %v296
  %402 = vmatprep.subr.bf16.mxu0 0
  %403 = vmatpush2.bf16.msra.mxu0 %v295
  %404 = vmatprep.subr.bf16.mxu0 0
  %405 = vmatpush2.bf16.msra.mxu0 %v294
  %406 = vmatprep.subr.bf16.mxu0 0
  %407 = vmatpush2.bf16.msra.mxu0 %v293
  %408 = vmatprep.subr.bf16.mxu0 0
  %409 = vmatpush2.bf16.msra.mxu0 %v292
  %410 = vmatprep.subr.bf16.mxu0 0
  %411 = vmatpush2.bf16.msra.mxu0 %v291
  %412 = vmatprep.mubr.bf16.mxu0 %v126
  %413 = vmatmul.mubr.bf16.gmra.mxu0 %v125
  %v414 = vpop.f32.mrf.mxu0
  %v415 = vadd.f32 %v366, %v414
  %v416 = vpop.f32.mrf.mxu0
  %v417 = vpop.f32.mrf.mxu0
  %v418 = vadd.f32 %v369, %v417
  %v419 = vpop.f32.mrf.mxu0
  %420 = vmatprep.mubr.bf16.mxu0 %v130
  %421 = vmatmul.mubr.bf16.gmra.mxu0 %v129
  %v422 = vpop.f32.mrf.mxu0
  %v423 = vadd.f32 %v374, %v422
  %v424 = vpop.f32.mrf.mxu0
  %v425 = vpop.f32.mrf.mxu0
  %v426 = vadd.f32 %v377, %v425
  %v427 = vpop.f32.mrf.mxu0
  %428 = vdwg.mxu0
  %v429 = vadd.f32 %v23, %v415
  %v430 = vadd.f32 %v24, %v418
  %v431 = vadd.f32 %v25, %v423
  %v432 = vadd.f32 %v26, %v426
  %433 = vst [vmem:[#allocation2] sm:$0xff] %v429
  %434 = vst [vmem:[#allocation2 + $0x8] sm:$0xff] %v430
  %435 = vst [vmem:[#allocation2 + $0x10] sm:$0xff] %v431
  %436 = vst [vmem:[#allocation2 + $0x18] sm:$0xff] %v432
  // Predicated region
  $region18: #{_lambda_.22} parent=0 // pred_check
    %p437 = pneg %p15
  $region19: #{_lambda_.22} parent=0 // pred_check_branch
    %439 = sbr.rel (%p437) target = $region21
  $region20: #{_lambda_.22} parent=0 // pred_region
    %v440 = vld [vmem:[#allocation2] sm:$0xff]
    %v441 = vld [vmem:[#allocation2 + $0x8] sm:$0xff]
    %v442 = vld [vmem:[#allocation2 + $0x10] sm:$0xff]
    %v443 = vld [vmem:[#allocation2 + $0x18] sm:$0xff]
    %v444 = vld [vmem:[%s2] sm:$0x1]
    %v446 = vlaneseq
    %v447 = vshrl.u32 %v446, 7
    %v448 = vsub.s32 0, %v447
    %v449 = vrot.slane %v444, %v448
    %v451 = vadd.f32 %v440, %v449
    %v452 = vadd.f32 %v441, %v449
    %v453 = vadd.f32 %v442, %v449
    %v454 = vadd.f32 %v443, %v449
    %v455 = vmul.f32 %v451, %v451
    %v456 = vmul.f32 %v452, %v452
    %v457 = vmul.f32 %v453, %v453
    %v458 = vmul.f32 %v454, %v454
    %v459 = vmul.f32 %v451, %v455
    %v460 = vmul.f32 %v452, %v456
    %v461 = vmul.f32 %v453, %v457
    %v462 = vmul.f32 %v454, %v458
    %v463 = vmul.f32 %v459, 0.044715
    %v464 = vmul.f32 %v460, 0.044715
    %v465 = vmul.f32 %v461, 0.044715
    %v466 = vmul.f32 %v462, 0.044715
    %v467 = vadd.f32 %v451, %v463
    %v468 = vadd.f32 %v452, %v464
    %v469 = vadd.f32 %v453, %v465
    %v470 = vadd.f32 %v454, %v466
    %v471 = vmul.f32 %v467, 0.7978846
    %v472 = vmul.f32 %v468, 0.7978846
    %v473 = vmul.f32 %v469, 0.7978846
    %v474 = vmul.f32 %v470, 0.7978846
    %v475 = vtanh.pop %v471
    %v476 = vtanh.pop %v472
    %v477 = vtanh.pop %v473
    %v478 = vtanh.pop %v474
    %v479 = vadd.f32 %v475, 1.0
    %v480 = vadd.f32 %v476, 1.0
    %v481 = vadd.f32 %v477, 1.0
    %v482 = vadd.f32 %v478, 1.0
    %v483 = vmul.f32 %v479, 0.5
    %v484 = vmul.f32 %v480, 0.5
    %v485 = vmul.f32 %v481, 0.5
    %v486 = vmul.f32 %v482, 0.5
    %v487 = vmul.f32 %v451, %v483
    %v488 = vmul.f32 %v452, %v484
    %v489 = vmul.f32 %v453, %v485
    %v490 = vmul.f32 %v454, %v486
    %491 = vst [vmem:[%s3] sm:$0xff] %v487
    %492 = vst [vmem:[%s3 + $0x8] sm:$0xff] %v488
    %493 = vst [vmem:[%s3 + $0x10] sm:$0xff] %v489
    %494 = vst [vmem:[%s3 + $0x18] sm:$0xff] %v490
  $region21: #{_lambda_.22} parent=0 // pred_fallthru
    _
  // Predicated region
  $region22: #{_lambda_.22} parent=0 // pred_check
    _
  $region23: #{_lambda_.22} parent=0 // pred_check_branch
    %496 = sbr.rel (0) target = $region25
  $region24: #{_lambda_.22} parent=0 // pred_region
    _
  $region25: #{_lambda_.22} parent=0 // pred_fallthru
    _
  // Predicated region
  $region26: #{_lambda_.22} parent=0 // pred_check
    _
  $region27: #{_lambda_.22} parent=0 // pred_check_branch
    %498 = sbr.rel (0) target = $region29
  $region28: #{_lambda_.22} parent=0 // pred_region
    _
  $region29: #{_lambda_.22} parent=0 // pred_fallthru
    _

// kernel: _lambda_.24
$region0: #{_lambda_.24}
  #allocation0 [shape = 'u32[]', space=smem, size = 0x4, offset = 0x4, fixed_abs, tag = 'smem constant byte address 0x4 - core index']
  #allocation1 [shape = 'u32[144,128]{1,0:T(1,128)}', space=vmem, size = 0x12000, scoped, tag = 'internal scratch']
  %s0 = inlined_call_operand.vmem [shape: f32[2,16,128], index: 0, kind: input, shape index: {}, may-alias: {0,1}]
  %s1 = inlined_call_operand.vmem [shape: f32[2,16,128], index: 1, kind: input, shape index: {}, may-alias: {0,1}]
  %s2 = inlined_call_operand.vmem [shape: f32[2,16,128], index: 2, kind: output, shape index: {}]
  %s3 = sld [smem:[#allocation0]]
  $region41: #{_lambda_.24} parent=0
    _
  %s5 = ssub.s32 1, %s3
  %s6 = scalar_select 0, %s5, %s3
  loop: start=0, step=1, limit=4
  $region2: #{_lambda_.24} parent=0 // loop_pre_header
    _
  $region3: #{_lambda_.24} parent=0 // loop_header
    %s8 = sphi 0, %s12
    %p9 = scmp.ge.s32.totalorder %s8, 4
    %s15 = sphi 0, %s27
    %s16 = sphi 0, %s23
    %s17 = sphi 0, %s15
    %s18 = sphi 0, %s16
    %s19 = sphi 0, %s17
    %s20 = sphi 0, %s18
    %s32 = sphi 0, %s34
    %s35 = sphi 0, %s32
    %s36 = sphi 0, %s35
    %s52 = sphi 0, %s36
    %s58 = sphi 0, %s60
    %s61 = sphi 0, %s58
    %s62 = sphi 0, %s61
    %s78 = sphi 0, %s62
    %s86 = sphi 0, %s88
    %s89 = sphi 0, %s86
    %s90 = sphi 0, %s89
    %s106 = sphi 0, %s90
  $region4: #{_lambda_.24} parent=0 // loop_header_branch
    %11 = sbr.rel (%p9) target = $region8
  $region5: #{_lambda_.24} parent=0 // loop_body
    %s13 = ssub.s32 %s8, 1
    %s14 = ssub.s32 %s8, 2
    %s21 = sadd.s32 1, %s16
    %p22 = scmp.ge.s32.totalorder %s21, 1
    %s23 = scalar_select %p22, 0, %s21
    %s24 = sadd.s32 1, %s15
    %s25 = scalar_select %p22, %s24, %s15
    %p26 = scmp.ge.s32.totalorder %s25, 2
    %s27 = scalar_select %p26, 0, %s25
    %s28 = ssub.s32 %s15, %s27
    %s29 = ssub.s32 %s16, %s23
    %s30 = sor.u32 %s28, %s29
    %p31 = scmp.eq.s32.totalorder %s30, 0
    %s33 = sadd.s32 %s32, 1
    %s34 = scalar_select %p31, %s32, %s33
    %p37 = pneg %p31
    %p38 = scmp.eq.s32.totalorder %s8, 1
    %p39 = por %p37, %p38
    %p40 = scmp.ne.s32.totalorder %s32, %s35
    %p41 = scmp.eq.s32.totalorder %s8, 0
    %p42 = por %p40, %p41
    %p43 = scmp.ne.s32.totalorder %s32, %s35
    %p44 = scmp.eq.s32.totalorder %s13, 1
    %p45 = por %p43, %p44
    %p46 = scmp.ne.s32.totalorder %s35, %s36
    %p47 = scmp.eq.s32.totalorder %s13, 0
    %p48 = por %p46, %p47
    %p49 = scmp.ne.s32.totalorder %s35, %s36
    %p50 = scmp.eq.s32.totalorder %s14, 1
    %p51 = por %p49, %p50
    %p53 = scmp.ne.s32.totalorder %s36, %s52
    %p54 = scmp.eq.s32.totalorder %s14, 0
    %p55 = por %p53, %p54
    %s56 = ssub.s32 %s15, %s27
    %p57 = scmp.eq.s32.totalorder %s56, 0
    %s59 = sadd.s32 %s58, 1
    %s60 = scalar_select %p57, %s58, %s59
    %p63 = pneg %p57
    %p64 = scmp.eq.s32.totalorder %s8, 1
    %p65 = por %p63, %p64
    %p66 = scmp.ne.s32.totalorder %s58, %s61
    %p67 = scmp.eq.s32.totalorder %s8, 0
    %p68 = por %p66, %p67
    %p69 = scmp.ne.s32.totalorder %s58, %s61
    %p70 = scmp.eq.s32.totalorder %s13, 1
    %p71 = por %p69, %p70
    %p72 = scmp.ne.s32.totalorder %s61, %s62
    %p73 = scmp.eq.s32.totalorder %s13, 0
    %p74 = por %p72, %p73
    %p75 = scmp.ne.s32.totalorder %s61, %s62
    %p76 = scmp.eq.s32.totalorder %s14, 1
    %p77 = por %p75, %p76
    %p79 = scmp.ne.s32.totalorder %s62, %s78
    %p80 = scmp.eq.s32.totalorder %s14, 0
    %p81 = por %p79, %p80
    %s82 = ssub.s32 %s15, %s27
    %s83 = ssub.s32 %s16, %s23
    %s84 = sor.u32 %s82, %s83
    %p85 = scmp.eq.s32.totalorder %s84, 0
    %s87 = sadd.s32 %s86, 1
    %s88 = scalar_select %p85, %s86, %s87
    %p91 = pneg %p85
    %p92 = scmp.eq.s32.totalorder %s8, 1
    %p93 = por %p91, %p92
    %p94 = scmp.ne.s32.totalorder %s86, %s89
    %p95 = scmp.eq.s32.totalorder %s8, 0
    %p96 = por %p94, %p95
    %p97 = scmp.ne.s32.totalorder %s86, %s89
    %p98 = scmp.eq.s32.totalorder %s13, 1
    %p99 = por %p97, %p98
    %p100 = scmp.ne.s32.totalorder %s89, %s90
    %p101 = scmp.eq.s32.totalorder %s13, 0
    %p102 = por %p100, %p101
    %p103 = scmp.ne.s32.totalorder %s89, %s90
    %p104 = scmp.eq.s32.totalorder %s14, 1
    %p105 = por %p103, %p104
    %p107 = scmp.ne.s32.totalorder %s90, %s106
    %p108 = scmp.eq.s32.totalorder %s14, 0
    %p109 = por %p107, %p108
    %p110 = scmp.le.s32.totalorder 1, %s8
    %p111 = scmp.lt.s32.totalorder %s8, 3
    %p112 = pnand %p110, %p111
    %p113 = pneg %p112
    // Predicated region
    $region9: #{_lambda_.24} parent=5 // pred_check
      _
    $region10: #{_lambda_.24} parent=5 // pred_check_branch
      %115 = sbr.rel (%p112) target = $region12
    $region11: #{_lambda_.24} parent=5 // pred_region
      %s116 = ssub.s32 %s8, 1
    $region12: #{_lambda_.24} parent=5 // pred_fallthru
      _
    %p117 = scmp.lt.s32.totalorder %s8, 2
    // Predicated region
    $region13: #{_lambda_.24} parent=5 // pred_check
      %p118 = pneg %p117
    $region14: #{_lambda_.24} parent=5 // pred_check_branch
      %120 = sbr.rel (%p118) target = $region16
    $region15: #{_lambda_.24} parent=5 // pred_region
      // Predicated region
      $region17: #{_lambda_.24} parent=15 // pred_check
        %p121 = pneg %p42
      $region18: #{_lambda_.24} parent=15 // pred_check_branch
        %123 = sbr.rel (%p121) target = $region20
      $region19: #{_lambda_.24} parent=15 // pred_region
        %s124 = smul.u32 2, %s16
        %p125 = scmp.lt.s32.totalorder %s15, 1
        %s126 = scalar_select %p125, %s15, 1
        %p127 = scmp.lt.s32.totalorder %s124, 1
        %s128 = scalar_select %p127, %s124, 1
        %s129 = smul.addr %s126, 2
        %s130 = sadd.s32 %s128, %s129
        %s131 = smul.addr %s130, 8
        %s132 = scalar_lea.vmem %s0, %s131
        %s133 = smul.u32 2, %s16
      $region20: #{_lambda_.24} parent=15 // pred_fallthru
        _
      // Predicated region
      $region21: #{_lambda_.24} parent=15 // pred_check
        %p134 = pneg %p68
      $region22: #{_lambda_.24} parent=15 // pred_check_branch
        %136 = sbr.rel (%p134) target = $region24
      $region23: #{_lambda_.24} parent=15 // pred_region
        %p137 = scmp.lt.s32.totalorder %s15, 1
        %s138 = scalar_select %p137, %s15, 1
        %s139 = smul.addr %s138, 2
        %s140 = smul.addr %s139, 8
        %s141 = scalar_lea.vmem %s1, %s140
      $region24: #{_lambda_.24} parent=15 // pred_fallthru
        _
    $region16: #{_lambda_.24} parent=5 // pred_fallthru
      _
    %p142 = scmp.le.s32.totalorder 1, %s8
    %p143 = scmp.lt.s32.totalorder %s8, 3
    %p144 = pnand %p142, %p143
    %p145 = pneg %p144
    // Predicated region
    $region25: #{_lambda_.24} parent=5 // pred_check
      _
    $region26: #{_lambda_.24} parent=5 // pred_check_branch
      %147 = sbr.rel (%p144) target = $region28
    $region27: #{_lambda_.24} parent=5 // pred_region
      %s148 = ssub.s32 %s8, 1
      %s149 = smul.u32 2, %s18
      %p150 = scmp.lt.s32.totalorder %s17, 1
      %s151 = scalar_select %p150, %s17, 1
      %p152 = scmp.lt.s32.totalorder %s149, 1
      %s153 = scalar_select %p152, %s149, 1
      %s154 = smul.addr %s151, 2
      %s155 = sadd.s32 %s153, %s154
      %s156 = smul.addr %s155, 8
      %s157 = scalar_lea.vmem %s0, %s156
      %p158 = pneg %p48
      %p159 = pneg %p45
      %p160 = scmp.lt.s32.totalorder %s17, 1
      %s161 = scalar_select %p160, %s17, 1
      %s162 = smul.addr %s161, 2
      %s163 = smul.addr %s162, 8
      %s164 = scalar_lea.vmem %s1, %s163
      %p165 = pneg %p74
      %p166 = pneg %p71
      %p167 = pneg %p102
      %p168 = pneg %p99
      %s169 = smul.u32 2, %s18
      %p170 = scmp.lt.s32.totalorder %s17, 1
      %s171 = scalar_select %p170, %s17, 1
      %p172 = scmp.lt.s32.totalorder %s169, 1
      %s173 = scalar_select %p172, %s169, 1
      %s174 = smul.addr %s171, 2
      %s175 = sadd.s32 %s173, %s174
      %s176 = smul.addr %s175, 8
      %s177 = scalar_lea.vmem %s2, %s176
      %s178 = smul.u32 2, %s18
      %p179 = scmp.lt.s32.totalorder %s17, 1
      %s180 = scalar_select %p179, %s17, 1
      %p181 = scmp.lt.s32.totalorder %s178, 1
      %s182 = scalar_select %p181, %s178, 1
      %s183 = smul.addr %s180, 2
      %s184 = sadd.s32 %s182, %s183
      %s185 = smul.addr %s184, 8
      %s186 = scalar_lea.vmem %s0, %s185
      %s187 = smul.u32 2, %s18
      %p188 = scmp.lt.s32.totalorder %s17, 1
      %s189 = scalar_select %p188, %s17, 1
      %s190 = smul.addr %s189, 2
      %s191 = smul.addr %s190, 8
      %s192 = scalar_lea.vmem %s1, %s191
      %s193 = smul.u32 2, %s18
      %p194 = scmp.lt.s32.totalorder %s17, 1
      %s195 = scalar_select %p194, %s17, 1
      %p196 = scmp.lt.s32.totalorder %s193, 1
      %s197 = scalar_select %p196, %s193, 1
      %s198 = smul.addr %s195, 2
      %s199 = sadd.s32 %s197, %s198
      %s200 = smul.addr %s199, 8
      %s201 = scalar_lea.vmem %s2, %s200
      %s202 = smul.u32 2, %s18
      %v204 = vld [vmem:[%s186] sm:$0xff]
      %v205 = vld [vmem:[%s186 + $0x8] sm:$0xff]
      %v206 = vld [vmem:[%s192] sm:$0xff]
      %v207 = vld [vmem:[%s192 + $0x8] sm:$0xff]
      %v208 = vpack.c.bf16 %v207, %v206
      %v209 = vmul.f32 %v204, 0.17677669
      %v210 = vmul.f32 %v205, 0.17677669
      %v211 = vpack.c.bf16 %v210, %v209
      %213 = vrot.lane.b32.xlu0 %v208, 96
      %v214 = vpop.permute.xlu0 %213
      %vm215 = vcmask 261120
      %v217 = vsel %vm215, %v211, 0
      %v220 = vsel %vm215, %v214, 0
      %222 = vmatprep.subr.bf16.mxu0 0
      %223 = vmatpush1.bf16.xpose.msra.mxu0 0
      %224 = vmatprep.subr.bf16.mxu0 0
      %225 = vmatpush1.bf16.xpose.msra.mxu0 0
      %226 = vmatprep.subr.bf16.mxu0 0
      %227 = vmatpush1.bf16.xpose.msra.mxu0 0
      %228 = vmatprep.subr.bf16.mxu0 0
      %229 = vmatpush1.bf16.xpose.msra.mxu0 0
      %230 = vmatprep.subr.bf16.mxu0 0
      %231 = vmatpush1.bf16.xpose.msra.mxu0 0
      %232 = vmatprep.subr.bf16.mxu0 0
      %233 = vmatpush1.bf16.xpose.msra.mxu0 0
      %234 = vmatprep.subr.bf16.mxu0 0
      %235 = vmatpush1.bf16.xpose.msra.mxu0 0
      %236 = vmatprep.subr.bf16.mxu0 0
      %237 = vmatpush1.bf16.xpose.msra.mxu0 %v220
      %238 = vmatprep.subr.bf16.mxu0 0
      %239 = vmatpush2.bf16.xpose.msra.mxu0 0
      %240 = vmatprep.subr.bf16.mxu0 0
      %241 = vmatpush2.bf16.xpose.msra.mxu0 0
      %242 = vmatprep.subr.bf16.mxu0 0
      %243 = vmatpush2.bf16.xpose.msra.mxu0 0
      %244 = vmatprep.subr.bf16.mxu0 0
      %245 = vmatpush2.bf16.xpose.msra.mxu0 0
      %246 = vmatprep.subr.bf16.mxu0 0
      %247 = vmatpush2.bf16.xpose.msra.mxu0 0
      %248 = vmatprep.subr.bf16.mxu0 0
      %249 = vmatpush2.bf16.xpose.msra.mxu0 0
      %250 = vmatprep.subr.bf16.mxu0 0
      %251 = vmatpush2.bf16.xpose.msra.mxu0 0
      %252 = vmatprep.subr.bf16.mxu0 0
      %253 = vmatpush2.bf16.xpose.msra.mxu0 0
      %254 = vmatprep.mubr.bf16.mxu0 0
      %255 = vmatmul.mubr.bf16.gmra.mxu0 %v217
      %v256 = vpop.f32.mrf.mxu0
      %v257 = vadd.f32 0.0, %v256
      %v258 = vpop.f32.mrf.mxu0
      %v259 = vpop.f32.mrf.mxu0
      %v260 = vadd.f32 0.0, %v259
      %v261 = vpop.f32.mrf.mxu0
      %262 = vdwg.mxu0
      %vm263 = vcmask 130048
      %v264 = vsel %vm263, %v257, -inf
      %265 = vmax.xlane.f32.xlu0 %v264
      %v266 = vpop.xlane.xlu0 %265
      %v267 = vsel %vm263, %v260, -inf
      %268 = vmax.xlane.f32.xlu0 %v267
      %v269 = vpop.xlane.xlu0 %268
      %v270 = vsub.f32 %v257, %v266
      %v271 = vsub.f32 %v260, %v269
      %v272 = vmul.f32 %v270, 1.442695
      %v273 = vpow.pop %v272
      %v274 = vmul.f32 %v271, 1.442695
      %v275 = vpow.pop %v274
      %v276 = vsel %vm263, %v273, 0.0
      %277 = vadd.xlane.f32.xlu0 %v276
      %v278 = vpop.xlane.xlu0 %277
      %v279 = vsel %vm263, %v275, 0.0
      %280 = vadd.xlane.f32.xlu0 %v279
      %v281 = vpop.xlane.xlu0 %280
      %v282 = vrcp.pop %v278
      %v283 = vrcp.pop %v281
      %v284 = vmul.f32 %v273, %v282
      %v285 = vmul.f32 %v275, %v283
      %v286 = vpack.c.bf16 %v285, %v284
      %287 = vrot.lane.b32.xlu0 %v208, 64
      %v288 = vpop.permute.xlu0 %287
      %v291 = vsel %vm263, %v286, 0
      %293 = vmatprep.subr.bf16.mxu0 0
      %294 = vmatpush1.bf16.msra.mxu0 0
      %295 = vmatprep.subr.bf16.mxu0 0
      %296 = vmatpush1.bf16.msra.mxu0 0
      %297 = vmatprep.subr.bf16.mxu0 0
      %298 = vmatpush1.bf16.msra.mxu0 0
      %299 = vmatprep.subr.bf16.mxu0 0
      %300 = vmatpush1.bf16.msra.mxu0 0
      %301 = vmatprep.subr.bf16.mxu0 0
      %302 = vmatpush1.bf16.msra.mxu0 0
      %303 = vmatprep.subr.bf16.mxu0 0
      %304 = vmatpush1.bf16.msra.mxu0 0
      %305 = vmatprep.subr.bf16.mxu0 0
      %306 = vmatpush1.bf16.msra.mxu0 0
      %307 = vmatprep.subr.bf16.mxu0 0
      %308 = vmatpush1.bf16.msra.mxu0 %v288
      %309 = vmatprep.subr.bf16.mxu0 0
      %310 = vmatpush2.bf16.msra.mxu0 0
      %311 = vmatprep.subr.bf16.mxu0 0
      %312 = vmatpush2.bf16.msra.mxu0 0
      %313 = vmatprep.subr.bf16.mxu0 0
      %314 = vmatpush2.bf16.msra.mxu0 0
      %315 = vmatprep.subr.bf16.mxu0 0
      %316 = vmatpush2.bf16.msra.mxu0 0
      %317 = vmatprep.subr.bf16.mxu0 0
      %318 = vmatpush2.bf16.msra.mxu0 0
      %319 = vmatprep.subr.bf16.mxu0 0
      %320 = vmatpush2.bf16.msra.mxu0 0
      %321 = vmatprep.subr.bf16.mxu0 0
      %322 = vmatpush2.bf16.msra.mxu0 0
      %323 = vmatprep.subr.bf16.mxu0 0
      %324 = vmatpush2.bf16.msra.mxu0 0
      %325 = vmatprep.mubr.bf16.mxu0 0
      %326 = vmatmul.mubr.bf16.gmra.mxu0 %v291
      %v327 = vpop.f32.mrf.mxu0
      %v328 = vadd.f32 0.0, %v327
      %v329 = vpop.f32.mrf.mxu0
      %v330 = vpop.f32.mrf.mxu0
      %v331 = vadd.f32 0.0, %v330
      %v332 = vpop.f32.mrf.mxu0
      %333 = vdwg.mxu0
      %v334 = vsel %vm215, %v328, 0.0
      %v335 = vsel %vm215, %v331, 0.0
      %336 = vst [vmem:[%s201] sm:$0xff] %v334
      %337 = vst [vmem:[%s201 + $0x8] sm:$0xff] %v335
      %s338 = smul.u32 2, %s18
      %p339 = scmp.lt.s32.totalorder %s17, 1
      %s340 = scalar_select %p339, %s17, 1
      %p341 = scmp.lt.s32.totalorder %s338, 1
      %s342 = scalar_select %p341, %s338, 1
      %s343 = smul.addr %s340, 2
      %s344 = sadd.s32 %s342, %s343
      %s345 = smul.addr %s344, 8
      %s346 = scalar_lea.vmem %s2, %s345
      // Predicated region
      $region29: #{_lambda_.24} parent=27 // pred_check
        %p347 = pneg %p99
      $region30: #{_lambda_.24} parent=27 // pred_check_branch
        %349 = sbr.rel (%p347) target = $region32
      $region31: #{_lambda_.24} parent=27 // pred_region
        %s350 = smul.u32 2, %s18
      $region32: #{_lambda_.24} parent=27 // pred_fallthru
        _
    $region28: #{_lambda_.24} parent=5 // pred_fallthru
      _
    %p351 = scmp.le.s32.totalorder 2, %s8
    // Predicated region
    $region33: #{_lambda_.24} parent=5 // pred_check
      %p352 = pneg %p351
    $region34: #{_lambda_.24} parent=5 // pred_check_branch
      %354 = sbr.rel (%p352) target = $region36
    $region35: #{_lambda_.24} parent=5 // pred_region
      %s355 = ssub.s32 %s8, 2
      // Predicated region
      $region37: #{_lambda_.24} parent=35 // pred_check
        %p356 = pneg %p105
      $region38: #{_lambda_.24} parent=35 // pred_check_branch
        %358 = sbr.rel (%p356) target = $region40
      $region39: #{_lambda_.24} parent=35 // pred_region
        %s359 = smul.u32 2, %s20
        %p360 = scmp.lt.s32.totalorder %s19, 1
        %s361 = scalar_select %p360, %s19, 1
        %p362 = scmp.lt.s32.totalorder %s359, 1
        %s363 = scalar_select %p362, %s359, 1
        %s364 = smul.addr %s361, 2
        %s365 = sadd.s32 %s363, %s364
        %s366 = smul.addr %s365, 8
        %s367 = scalar_lea.vmem %s2, %s366
      $region40: #{_lambda_.24} parent=35 // pred_fallthru
        _
    $region36: #{_lambda_.24} parent=5 // pred_fallthru
      _
  $region6: #{_lambda_.24} parent=0 // loop_footer
    %s12 = sadd.s32 1, %s8
  $region7: #{_lambda_.24} parent=0 // loop_footer_branch
    %7 = sbr.rel target = $region3
  $region8: #{_lambda_.24} parent=0 // loop_exit
    _

// kernel: _lambda_.25
$region0: #{_lambda_.25}
  #allocation0 [shape = 'u32[]', space=smem, size = 0x4, offset = 0x4, fixed_abs, tag = 'smem constant byte address 0x4 - core index']
  #allocation1 [shape = 'u32[144,128]{1,0:T(1,128)}', space=vmem, size = 0x12000, scoped, tag = 'internal scratch']
  #allocation2 [shape = 'f32[128,128]{1,0:T(8,128)}', space=vmem, size = 0x10000, scoped, tag = 'scratch operand']
  %s0 = inlined_call_operand.vmem [shape: bf16[128,128], index: 0, kind: input, shape index: {}]
  %s1 = inlined_call_operand.vmem [shape: bf16[128,128], index: 1, kind: input, shape index: {}]
  %s2 = inlined_call_operand.vmem [shape: f32[1,128], index: 2, kind: input, shape index: {}]
  %s3 = inlined_call_operand.vmem [shape: f32[128,128], index: 3, kind: output, shape index: {}]
  %s4 = sld [smem:[#allocation0]]
  $region30: #{_lambda_.25} parent=0
    _
  %s6 = ssub.s32 1, %s4
  %s7 = scalar_select 0, %s6, %s4
  // Predicated region
  $region2: #{_lambda_.25} parent=0 // pred_check
    _
  $region3: #{_lambda_.25} parent=0 // pred_check_branch
    %9 = sbr.rel (0) target = $region5
  $region4: #{_lambda_.25} parent=0 // pred_region
    _
  $region5: #{_lambda_.25} parent=0 // pred_fallthru
    _
  // Predicated region
  $region6: #{_lambda_.25} parent=0 // pred_check
    _
  $region7: #{_lambda_.25} parent=0 // pred_check_branch
    %11 = sbr.rel (0) target = $region9
  $region8: #{_lambda_.25} parent=0 // pred_region
    _
  $region9: #{_lambda_.25} parent=0 // pred_fallthru
    _
  // Predicated region
  $region10: #{_lambda_.25} parent=0 // pred_check
    _
  $region11: #{_lambda_.25} parent=0 // pred_check_branch
    %13 = sbr.rel (0) target = $region13
  $region12: #{_lambda_.25} parent=0 // pred_region
    _
  $region13: #{_lambda_.25} parent=0 // pred_fallthru
    _
  %p15 = scmp.eq.s32.totalorder 0, 0
  // Predicated region
  $region14: #{_lambda_.25} parent=0 // pred_check
    %p16 = pneg %p15
  $region15: #{_lambda_.25} parent=0 // pred_check_branch
    %18 = sbr.rel (%p16) target = $region17
  $region16: #{_lambda_.25} parent=0 // pred_region
    %19 = vst [vmem:[#allocation2] sm:$0xff] 0.0
    %20 = vst [vmem:[#allocation2 + $0x8] sm:$0xff] 0.0
    %21 = vst [vmem:[#allocation2 + $0x10] sm:$0xff] 0.0
    %22 = vst [vmem:[#allocation2 + $0x18] sm:$0xff] 0.0
    %23 = vst [vmem:[#allocation2 + $0x20] sm:$0xff] 0.0
    %24 = vst [vmem:[#allocation2 + $0x28] sm:$0xff] 0.0
    %25 = vst [vmem:[#allocation2 + $0x30] sm:$0xff] 0.0
    %26 = vst [vmem:[#allocation2 + $0x38] sm:$0xff] 0.0
    %27 = vst [vmem:[#allocation2 + $0x40] sm:$0xff] 0.0
    %28 = vst [vmem:[#allocation2 + $0x48] sm:$0xff] 0.0
    %29 = vst [vmem:[#allocation2 + $0x50] sm:$0xff] 0.0
    %30 = vst [vmem:[#allocation2 + $0x58] sm:$0xff] 0.0
    %31 = vst [vmem:[#allocation2 + $0x60] sm:$0xff] 0.0
    %32 = vst [vmem:[#allocation2 + $0x68] sm:$0xff] 0.0
    %33 = vst [vmem:[#allocation2 + $0x70] sm:$0xff] 0.0
    %34 = vst [vmem:[#allocation2 + $0x78] sm:$0xff] 0.0
  $region17: #{_lambda_.25} parent=0 // pred_fallthru
    _
  %v35 = vld [vmem:[#allocation2] sm:$0xff]
  %v36 = vld [vmem:[#allocation2 + $0x8] sm:$0xff]
  %v37 = vld [vmem:[#allocation2 + $0x10] sm:$0xff]
  %v38 = vld [vmem:[#allocation2 + $0x18] sm:$0xff]
  %v39 = vld [vmem:[#allocation2 + $0x20] sm:$0xff]
  %v40 = vld [vmem:[#allocation2 + $0x28] sm:$0xff]
  %v41 = vld [vmem:[#allocation2 + $0x30] sm:$0xff]
  %v42 = vld [vmem:[#allocation2 + $0x38] sm:$0xff]
  %v43 = vld [vmem:[#allocation2 + $0x40] sm:$0xff]
  %v44 = vld [vmem:[#allocation2 + $0x48] sm:$0xff]
  %v45 = vld [vmem:[#allocation2 + $0x50] sm:$0xff]
  %v46 = vld [vmem:[#allocation2 + $0x58] sm:$0xff]
  %v47 = vld [vmem:[#allocation2 + $0x60] sm:$0xff]
  %v48 = vld [vmem:[#allocation2 + $0x68] sm:$0xff]
  %v49 = vld [vmem:[#allocation2 + $0x70] sm:$0xff]
  %v50 = vld [vmem:[#allocation2 + $0x78] sm:$0xff]
  %v51 = vld [vmem:[%s0] sm:$0xf]
  %v52 = vld [vmem:[%s0 + $0x4] sm:$0xf]
  %v53 = vld [vmem:[%s0 + $0x8] sm:$0xf]
  %v54 = vld [vmem:[%s0 + $0xc] sm:$0xf]
  %v55 = vld [vmem:[%s0 + $0x10] sm:$0xf]
  %v56 = vld [vmem:[%s0 + $0x14] sm:$0xf]
  %v57 = vld [vmem:[%s0 + $0x18] sm:$0xf]
  %v58 = vld [vmem:[%s0 + $0x1c] sm:$0xf]
  %v59 = vld [vmem:[%s0 + $0x20] sm:$0xf]
  %v60 = vld [vmem:[%s0 + $0x24] sm:$0xf]
  %v61 = vld [vmem:[%s0 + $0x28] sm:$0xf]
  %v62 = vld [vmem:[%s0 + $0x2c] sm:$0xf]
  %v63 = vld [vmem:[%s0 + $0x30] sm:$0xf]
  %v64 = vld [vmem:[%s0 + $0x34] sm:$0xf]
  %v65 = vld [vmem:[%s0 + $0x38] sm:$0xf]
  %v66 = vld [vmem:[%s0 + $0x3c] sm:$0xf]
  %v67 = vld [vmem:[%s1] sm:$0xf]
  %v68 = vld [vmem:[%s1 + $0x4] sm:$0xf]
  %v69 = vld [vmem:[%s1 + $0x8] sm:$0xf]
  %v70 = vld [vmem:[%s1 + $0xc] sm:$0xf]
  %v71 = vld [vmem:[%s1 + $0x10] sm:$0xf]
  %v72 = vld [vmem:[%s1 + $0x14] sm:$0xf]
  %v73 = vld [vmem:[%s1 + $0x18] sm:$0xf]
  %v74 = vld [vmem:[%s1 + $0x1c] sm:$0xf]
  %v75 = vld [vmem:[%s1 + $0x20] sm:$0xf]
  %v76 = vld [vmem:[%s1 + $0x24] sm:$0xf]
  %v77 = vld [vmem:[%s1 + $0x28] sm:$0xf]
  %v78 = vld [vmem:[%s1 + $0x2c] sm:$0xf]
  %v79 = vld [vmem:[%s1 + $0x30] sm:$0xf]
  %v80 = vld [vmem:[%s1 + $0x34] sm:$0xf]
  %v81 = vld [vmem:[%s1 + $0x38] sm:$0xf]
  %v82 = vld [vmem:[%s1 + $0x3c] sm:$0xf]
  %v99 = vunpack.c.l.b16 %v51
  %v100 = vunpack.c.l.b16 %v52
  %v101 = vunpack.c.l.b16 %v53
  %v102 = vunpack.c.l.b16 %v54
  %v103 = vunpack.c.l.b16 %v55
  %v104 = vunpack.c.l.b16 %v56
  %v105 = vunpack.c.l.b16 %v57
  %v106 = vunpack.c.l.b16 %v58
  %v107 = vunpack.c.l.b16 %v59
  %v108 = vunpack.c.l.b16 %v60
  %v109 = vunpack.c.l.b16 %v61
  %v110 = vunpack.c.l.b16 %v62
  %v111 = vunpack.c.l.b16 %v63
  %v112 = vunpack.c.l.b16 %v64
  %v113 = vunpack.c.l.b16 %v65
  %v114 = vunpack.c.l.b16 %v66
  %v115 = vpack.c.b16 %v100, %v99
  %v116 = vpack.c.b16 %v102, %v101
  %v117 = vpack.c.b16 %v104, %v103
  %v118 = vpack.c.b16 %v106, %v105
  %v119 = vpack.c.b16 %v108, %v107
  %v120 = vpack.c.b16 %v110, %v109
  %v121 = vpack.c.b16 %v112, %v111
  %v122 = vpack.c.b16 %v114, %v113
  %v147 = vunpack.c.l.b16 %v67
  %v148 = vunpack.c.l.b16 %v68
  %v149 = vunpack.c.l.b16 %v69
  %v150 = vunpack.c.l.b16 %v70
  %v151 = vunpack.c.l.b16 %v71
  %v152 = vunpack.c.l.b16 %v72
  %v153 = vunpack.c.l.b16 %v73
  %v154 = vunpack.c.l.b16 %v74
  %v155 = vunpack.c.l.b16 %v75
  %v156 = vunpack.c.l.b16 %v76
  %v157 = vunpack.c.l.b16 %v77
  %v158 = vunpack.c.l.b16 %v78
  %v159 = vunpack.c.l.b16 %v79
  %v160 = vunpack.c.l.b16 %v80
  %v161 = vunpack.c.l.b16 %v81
  %v162 = vunpack.c.l.b16 %v82
  %v163 = vpack.c.b16 %v148, %v147
  %v164 = vpack.c.b16 %v150, %v149
  %v165 = vpack.c.b16 %v152, %v151
  %v166 = vpack.c.b16 %v154, %v153
  %v167 = vpack.c.b16 %v156, %v155
  %v168 = vpack.c.b16 %v158, %v157
  %v169 = vpack.c.b16 %v160, %v159
  %v170 = vpack.c.b16 %v162, %v161
  %179 = vmatprep.subr.bf16.mxu0 0
  %180 = vmatpush1.bf16.msra.mxu0 %v170
  %181 = vmatprep.subr.bf16.mxu0 0
  %182 = vmatpush1.bf16.msra.mxu0 %v169
  %183 = vmatprep.subr.bf16.mxu0 0
  %184 = vmatpush1.bf16.msra.mxu0 %v168
  %185 = vmatprep.subr.bf16.mxu0 0
  %186 = vmatpush1.bf16.msra.mxu0 %v167
  %187 = vmatprep.subr.bf16.mxu0 0
  %188 = vmatpush1.bf16.msra.mxu0 %v166
  %189 = vmatprep.subr.bf16.mxu0 0
  %190 = vmatpush1.bf16.msra.mxu0 %v165
  %191 = vmatprep.subr.bf16.mxu0 0
  %192 = vmatpush1.bf16.msra.mxu0 %v164
  %193 = vmatprep.subr.bf16.mxu0 0
  %194 = vmatpush1.bf16.msra.mxu0 %v163
  %195 = vmatprep.subr.bf16.mxu0 0
  %196 = vmatpush2.bf16.msra.mxu0 0
  %197 = vmatprep.subr.bf16.mxu0 0
  %198 = vmatpush2.bf16.msra.mxu0 0
  %199 = vmatprep.subr.bf16.mxu0 0
  %200 = vmatpush2.bf16.msra.mxu0 0
  %201 = vmatprep.subr.bf16.mxu0 0
  %202 = vmatpush2.bf16.msra.mxu0 0
  %203 = vmatprep.subr.bf16.mxu0 0
  %204 = vmatpush2.bf16.msra.mxu0 0
  %205 = vmatprep.subr.bf16.mxu0 0
  %206 = vmatpush2.bf16.msra.mxu0 0
  %207 = vmatprep.subr.bf16.mxu0 0
  %208 = vmatpush2.bf16.msra.mxu0 0
  %209 = vmatprep.subr.bf16.mxu0 0
  %210 = vmatpush2.bf16.msra.mxu0 0
  %211 = vmatprep.mubr.bf16.mxu0 0
  %212 = vmatmul.mubr.bf16.gmra.mxu0 %v115
  %v213 = vpop.f32.mrf.mxu0
  %v214 = vadd.f32 0.0, %v213
  %v215 = vpop.f32.mrf.mxu0
  %v216 = vpop.f32.mrf.mxu0
  %v217 = vadd.f32 0.0, %v216
  %v218 = vpop.f32.mrf.mxu0
  %219 = vmatprep.mubr.bf16.mxu0 0
  %220 = vmatmul.mubr.bf16.gmra.mxu0 %v116
  %v221 = vpop.f32.mrf.mxu0
  %v222 = vadd.f32 0.0, %v221
  %v223 = vpop.f32.mrf.mxu0
  %v224 = vpop.f32.mrf.mxu0
  %v225 = vadd.f32 0.0, %v224
  %v226 = vpop.f32.mrf.mxu0
  %227 = vmatprep.mubr.bf16.mxu0 0
  %228 = vmatmul.mubr.bf16.gmra.mxu0 %v117
  %v229 = vpop.f32.mrf.mxu0
  %v230 = vadd.f32 0.0, %v229
  %v231 = vpop.f32.mrf.mxu0
  %v232 = vpop.f32.mrf.mxu0
  %v233 = vadd.f32 0.0, %v232
  %v234 = vpop.f32.mrf.mxu0
  %235 = vmatprep.mubr.bf16.mxu0 0
  %236 = vmatmul.mubr.bf16.gmra.mxu0 %v118
  %v237 = vpop.f32.mrf.mxu0
  %v238 = vadd.f32 0.0, %v237
  %v239 = vpop.f32.mrf.mxu0
  %v240 = vpop.f32.mrf.mxu0
  %v241 = vadd.f32 0.0, %v240
  %v242 = vpop.f32.mrf.mxu0
  %243 = vmatprep.mubr.bf16.mxu0 0
  %244 = vmatmul.mubr.bf16.gmra.mxu0 %v119
  %v245 = vpop.f32.mrf.mxu0
  %v246 = vadd.f32 0.0, %v245
  %v247 = vpop.f32.mrf.mxu0
  %v248 = vpop.f32.mrf.mxu0
  %v249 = vadd.f32 0.0, %v248
  %v250 = vpop.f32.mrf.mxu0
  %251 = vmatprep.mubr.bf16.mxu0 0
  %252 = vmatmul.mubr.bf16.gmra.mxu0 %v120
  %v253 = vpop.f32.mrf.mxu0
  %v254 = vadd.f32 0.0, %v253
  %v255 = vpop.f32.mrf.mxu0
  %v256 = vpop.f32.mrf.mxu0
  %v257 = vadd.f32 0.0, %v256
  %v258 = vpop.f32.mrf.mxu0
  %259 = vmatprep.mubr.bf16.mxu0 0
  %260 = vmatmul.mubr.bf16.gmra.mxu0 %v121
  %v261 = vpop.f32.mrf.mxu0
  %v262 = vadd.f32 0.0, %v261
  %v263 = vpop.f32.mrf.mxu0
  %v264 = vpop.f32.mrf.mxu0
  %v265 = vadd.f32 0.0, %v264
  %v266 = vpop.f32.mrf.mxu0
  %267 = vmatprep.mubr.bf16.mxu0 0
  %268 = vmatmul.mubr.bf16.gmra.mxu0 %v122
  %v269 = vpop.f32.mrf.mxu0
  %v270 = vadd.f32 0.0, %v269
  %v271 = vpop.f32.mrf.mxu0
  %v272 = vpop.f32.mrf.mxu0
  %v273 = vadd.f32 0.0, %v272
  %v274 = vpop.f32.mrf.mxu0
  %275 = vdwg.mxu0
  %v276 = vadd.f32 %v35, %v214
  %v277 = vadd.f32 %v36, %v217
  %v278 = vadd.f32 %v37, %v222
  %v279 = vadd.f32 %v38, %v225
  %v280 = vadd.f32 %v39, %v230
  %v281 = vadd.f32 %v40, %v233
  %v282 = vadd.f32 %v41, %v238
  %v283 = vadd.f32 %v42, %v241
  %v284 = vadd.f32 %v43, %v246
  %v285 = vadd.f32 %v44, %v249
  %v286 = vadd.f32 %v45, %v254
  %v287 = vadd.f32 %v46, %v257
  %v288 = vadd.f32 %v47, %v262
  %v289 = vadd.f32 %v48, %v265
  %v290 = vadd.f32 %v49, %v270
  %v291 = vadd.f32 %v50, %v273
  %292 = vst [vmem:[#allocation2] sm:$0xff] %v276
  %293 = vst [vmem:[#allocation2 + $0x8] sm:$0xff] %v277
  %294 = vst [vmem:[#allocation2 + $0x10] sm:$0xff] %v278
  %295 = vst [vmem:[#allocation2 + $0x18] sm:$0xff] %v279
  %296 = vst [vmem:[#allocation2 + $0x20] sm:$0xff] %v280
  %297 = vst [vmem:[#allocation2 + $0x28] sm:$0xff] %v281
  %298 = vst [vmem:[#allocation2 + $0x30] sm:$0xff] %v282
  %299 = vst [vmem:[#allocation2 + $0x38] sm:$0xff] %v283
  %300 = vst [vmem:[#allocation2 + $0x40] sm:$0xff] %v284
  %301 = vst [vmem:[#allocation2 + $0x48] sm:$0xff] %v285
  %302 = vst [vmem:[#allocation2 + $0x50] sm:$0xff] %v286
  %303 = vst [vmem:[#allocation2 + $0x58] sm:$0xff] %v287
  %304 = vst [vmem:[#allocation2 + $0x60] sm:$0xff] %v288
  %305 = vst [vmem:[#allocation2 + $0x68] sm:$0xff] %v289
  %306 = vst [vmem:[#allocation2 + $0x70] sm:$0xff] %v290
  %307 = vst [vmem:[#allocation2 + $0x78] sm:$0xff] %v291
  // Predicated region
  $region18: #{_lambda_.25} parent=0 // pred_check
    %p308 = pneg %p15
  $region19: #{_lambda_.25} parent=0 // pred_check_branch
    %310 = sbr.rel (%p308) target = $region21
  $region20: #{_lambda_.25} parent=0 // pred_region
    %v311 = vld [vmem:[#allocation2] sm:$0xff]
    %v312 = vld [vmem:[#allocation2 + $0x8] sm:$0xff]
    %v313 = vld [vmem:[#allocation2 + $0x10] sm:$0xff]
    %v314 = vld [vmem:[#allocation2 + $0x18] sm:$0xff]
    %v315 = vld [vmem:[#allocation2 + $0x20] sm:$0xff]
    %v316 = vld [vmem:[#allocation2 + $0x28] sm:$0xff]
    %v317 = vld [vmem:[#allocation2 + $0x30] sm:$0xff]
    %v318 = vld [vmem:[#allocation2 + $0x38] sm:$0xff]
    %v319 = vld [vmem:[#allocation2 + $0x40] sm:$0xff]
    %v320 = vld [vmem:[#allocation2 + $0x48] sm:$0xff]
    %v321 = vld [vmem:[#allocation2 + $0x50] sm:$0xff]
    %v322 = vld [vmem:[#allocation2 + $0x58] sm:$0xff]
    %v323 = vld [vmem:[#allocation2 + $0x60] sm:$0xff]
    %v324 = vld [vmem:[#allocation2 + $0x68] sm:$0xff]
    %v325 = vld [vmem:[#allocation2 + $0x70] sm:$0xff]
    %v326 = vld [vmem:[#allocation2 + $0x78] sm:$0xff]
    %v327 = vld [vmem:[%s2] sm:$0x1]
    %v329 = vlaneseq
    %v330 = vshrl.u32 %v329, 7
    %v331 = vsub.s32 0, %v330
    %v332 = vrot.slane %v327, %v331
    %v334 = vadd.f32 %v311, %v332
    %v335 = vadd.f32 %v312, %v332
    %v336 = vadd.f32 %v313, %v332
    %v337 = vadd.f32 %v314, %v332
    %v338 = vadd.f32 %v315, %v332
    %v339 = vadd.f32 %v316, %v332
    %v340 = vadd.f32 %v317, %v332
    %v341 = vadd.f32 %v318, %v332
    %v342 = vadd.f32 %v319, %v332
    %v343 = vadd.f32 %v320, %v332
    %v344 = vadd.f32 %v321, %v332
    %v345 = vadd.f32 %v322, %v332
    %v346 = vadd.f32 %v323, %v332
    %v347 = vadd.f32 %v324, %v332
    %v348 = vadd.f32 %v325, %v332
    %v349 = vadd.f32 %v326, %v332
    %v350 = vxor.u32 %v334, 2147483648
    %v351 = vxor.u32 %v335, 2147483648
    %v352 = vxor.u32 %v336, 2147483648
    %v353 = vxor.u32 %v337, 2147483648
    %v354 = vxor.u32 %v338, 2147483648
    %v355 = vxor.u32 %v339, 2147483648
    %v356 = vxor.u32 %v340, 2147483648
    %v357 = vxor.u32 %v341, 2147483648
    %v358 = vxor.u32 %v342, 2147483648
    %v359 = vxor.u32 %v343, 2147483648
    %v360 = vxor.u32 %v344, 2147483648
    %v361 = vxor.u32 %v345, 2147483648
    %v362 = vxor.u32 %v346, 2147483648
    %v363 = vxor.u32 %v347, 2147483648
    %v364 = vxor.u32 %v348, 2147483648
    %v365 = vxor.u32 %v349, 2147483648
    %v366 = vmul.f32 %v350, 1.442695
    %v367 = vpow.pop %v366
    %v368 = vmul.f32 %v351, 1.442695
    %v369 = vpow.pop %v368
    %v370 = vmul.f32 %v352, 1.442695
    %v371 = vpow.pop %v370
    %v372 = vmul.f32 %v353, 1.442695
    %v373 = vpow.pop %v372
    %v374 = vmul.f32 %v354, 1.442695
    %v375 = vpow.pop %v374
    %v376 = vmul.f32 %v355, 1.442695
    %v377 = vpow.pop %v376
    %v378 = vmul.f32 %v356, 1.442695
    %v379 = vpow.pop %v378
    %v380 = vmul.f32 %v357, 1.442695
    %v381 = vpow.pop %v380
    %v382 = vmul.f32 %v358, 1.442695
    %v383 = vpow.pop %v382
    %v384 = vmul.f32 %v359, 1.442695
    %v385 = vpow.pop %v384
    %v386 = vmul.f32 %v360, 1.442695
    %v387 = vpow.pop %v386
    %v388 = vmul.f32 %v361, 1.442695
    %v389 = vpow.pop %v388
    %v390 = vmul.f32 %v362, 1.442695
    %v391 = vpow.pop %v390
    %v392 = vmul.f32 %v363, 1.442695
    %v393 = vpow.pop %v392
    %v394 = vmul.f32 %v364, 1.442695
    %v395 = vpow.pop %v394
    %v396 = vmul.f32 %v365, 1.442695
    %v397 = vpow.pop %v396
    %v398 = vadd.f32 %v367, 1.0
    %v399 = vadd.f32 %v369, 1.0
    %v400 = vadd.f32 %v371, 1.0
    %v401 = vadd.f32 %v373, 1.0
    %v402 = vadd.f32 %v375, 1.0
    %v403 = vadd.f32 %v377, 1.0
    %v404 = vadd.f32 %v379, 1.0
    %v405 = vadd.f32 %v381, 1.0
    %v406 = vadd.f32 %v383, 1.0
    %v407 = vadd.f32 %v385, 1.0
    %v408 = vadd.f32 %v387, 1.0
    %v409 = vadd.f32 %v389, 1.0
    %v410 = vadd.f32 %v391, 1.0
    %v411 = vadd.f32 %v393, 1.0
    %v412 = vadd.f32 %v395, 1.0
    %v413 = vadd.f32 %v397, 1.0
    %v414 = vrcp.pop %v398
    %v415 = vmul.f32 1.0, %v414
    %v416 = vrcp.pop %v399
    %v417 = vmul.f32 1.0, %v416
    %v418 = vrcp.pop %v400
    %v419 = vmul.f32 1.0, %v418
    %v420 = vrcp.pop %v401
    %v421 = vmul.f32 1.0, %v420
    %v422 = vrcp.pop %v402
    %v423 = vmul.f32 1.0, %v422
    %v424 = vrcp.pop %v403
    %v425 = vmul.f32 1.0, %v424
    %v426 = vrcp.pop %v404
    %v427 = vmul.f32 1.0, %v426
    %v428 = vrcp.pop %v405
    %v429 = vmul.f32 1.0, %v428
    %v430 = vrcp.pop %v406
    %v431 = vmul.f32 1.0, %v430
    %v432 = vrcp.pop %v407
    %v433 = vmul.f32 1.0, %v432
    %v434 = vrcp.pop %v408
    %v435 = vmul.f32 1.0, %v434
    %v436 = vrcp.pop %v409
    %v437 = vmul.f32 1.0, %v436
    %v438 = vrcp.pop %v410
    %v439 = vmul.f32 1.0, %v438
    %v440 = vrcp.pop %v411
    %v441 = vmul.f32 1.0, %v440
    %v442 = vrcp.pop %v412
    %v443 = vmul.f32 1.0, %v442
    %v444 = vrcp.pop %v413
    %v445 = vmul.f32 1.0, %v444
    %v446 = vmul.f32 %v334, %v415
    %v447 = vmul.f32 %v335, %v417
    %v448 = vmul.f32 %v336, %v419
    %v449 = vmul.f32 %v337, %v421
    %v450 = vmul.f32 %v338, %v423
    %v451 = vmul.f32 %v339, %v425
    %v452 = vmul.f32 %v340, %v427
    %v453 = vmul.f32 %v341, %v429
    %v454 = vmul.f32 %v342, %v431
    %v455 = vmul.f32 %v343, %v433
    %v456 = vmul.f32 %v344, %v435
    %v457 = vmul.f32 %v345, %v437
    %v458 = vmul.f32 %v346, %v439
    %v459 = vmul.f32 %v347, %v441
    %v460 = vmul.f32 %v348, %v443
    %v461 = vmul.f32 %v349, %v445
    %462 = vst [vmem:[%s3] sm:$0xff] %v446
    %463 = vst [vmem:[%s3 + $0x8] sm:$0xff] %v447
    %464 = vst [vmem:[%s3 + $0x10] sm:$0xff] %v448
    %465 = vst [vmem:[%s3 + $0x18] sm:$0xff] %v449
    %466 = vst [vmem:[%s3 + $0x20] sm:$0xff] %v450
    %467 = vst [vmem:[%s3 + $0x28] sm:$0xff] %v451
    %468 = vst [vmem:[%s3 + $0x30] sm:$0xff] %v452
    %469 = vst [vmem:[%s3 + $0x38] sm:$0xff] %v453
    %470 = vst [vmem:[%s3 + $0x40] sm:$0xff] %v454
    %471 = vst [vmem:[%s3 + $0x48] sm:$0xff] %v455
    %472 = vst [vmem:[%s3 + $0x50] sm:$0xff] %v456
    %473 = vst [vmem:[%s3 + $0x58] sm:$0xff] %v457
    %474 = vst [vmem:[%s3 + $0x60] sm:$0xff] %v458
    %475 = vst [vmem:[%s3 + $0x68] sm:$0xff] %v459
    %476 = vst [vmem:[%s3 + $0x70] sm:$0xff] %v460
    %477 = vst [vmem:[%s3 + $0x78] sm:$0xff] %v461
  $region21: #{_lambda_.25} parent=0 // pred_fallthru
    _
  // Predicated region
  $region22: #{_lambda_.25} parent=0 // pred_check
    _
  $region23: #{_lambda_.25} parent=0 // pred_check_branch
    %479 = sbr.rel (0) target = $region25
  $region24: #{_lambda_.25} parent=0 // pred_region
    _
  $region25: #{_lambda_.25} parent=0 // pred_fallthru
    _
  // Predicated region
  $region26: #{_lambda_.25} parent=0 // pred_check
    _
  $region27: #{_lambda_.25} parent=0 // pred_check_branch
    %481 = sbr.rel (0) target = $region29
  $region28: #{_lambda_.25} parent=0 // pred_region
    _
  $region29: #{_lambda_.25} parent=0 // pred_fallthru
    _

// kernel: _lambda_.26
$region0: #{_lambda_.26}
  #allocation0 [shape = 'u32[]', space=smem, size = 0x4, offset = 0x4, fixed_abs, tag = 'smem constant byte address 0x4 - core index']
  #allocation1 [shape = 'u32[144,128]{1,0:T(1,128)}', space=vmem, size = 0x12000, scoped, tag = 'internal scratch']
  #allocation2 [shape = 'f32[32,128]{1,0:T(8,128)}', space=vmem, size = 0x4000, scoped, tag = 'scratch operand']
  %s0 = inlined_call_operand.vmem [shape: bf16[32,256], index: 0, kind: input, shape index: {}]
  %s1 = inlined_call_operand.vmem [shape: bf16[256,128], index: 1, kind: input, shape index: {}]
  %s2 = inlined_call_operand.vmem [shape: f32[1,128], index: 2, kind: input, shape index: {}]
  %s3 = inlined_call_operand.vmem [shape: f32[32,128], index: 3, kind: output, shape index: {}]
  %s4 = sld [smem:[#allocation0]]
  $region30: #{_lambda_.26} parent=0
    _
  %s6 = ssub.s32 1, %s4
  %s7 = scalar_select 0, %s6, %s4
  // Predicated region
  $region2: #{_lambda_.26} parent=0 // pred_check
    _
  $region3: #{_lambda_.26} parent=0 // pred_check_branch
    %9 = sbr.rel (0) target = $region5
  $region4: #{_lambda_.26} parent=0 // pred_region
    _
  $region5: #{_lambda_.26} parent=0 // pred_fallthru
    _
  // Predicated region
  $region6: #{_lambda_.26} parent=0 // pred_check
    _
  $region7: #{_lambda_.26} parent=0 // pred_check_branch
    %11 = sbr.rel (0) target = $region9
  $region8: #{_lambda_.26} parent=0 // pred_region
    _
  $region9: #{_lambda_.26} parent=0 // pred_fallthru
    _
  // Predicated region
  $region10: #{_lambda_.26} parent=0 // pred_check
    _
  $region11: #{_lambda_.26} parent=0 // pred_check_branch
    %13 = sbr.rel (0) target = $region13
  $region12: #{_lambda_.26} parent=0 // pred_region
    _
  $region13: #{_lambda_.26} parent=0 // pred_fallthru
    _
  %p15 = scmp.eq.s32.totalorder 0, 0
  // Predicated region
  $region14: #{_lambda_.26} parent=0 // pred_check
    %p16 = pneg %p15
  $region15: #{_lambda_.26} parent=0 // pred_check_branch
    %18 = sbr.rel (%p16) target = $region17
  $region16: #{_lambda_.26} parent=0 // pred_region
    %19 = vst [vmem:[#allocation2] sm:$0xff] 0.0
    %20 = vst [vmem:[#allocation2 + $0x8] sm:$0xff] 0.0
    %21 = vst [vmem:[#allocation2 + $0x10] sm:$0xff] 0.0
    %22 = vst [vmem:[#allocation2 + $0x18] sm:$0xff] 0.0
  $region17: #{_lambda_.26} parent=0 // pred_fallthru
    _
  %v23 = vld [vmem:[#allocation2] sm:$0xff]
  %v24 = vld [vmem:[#allocation2 + $0x8] sm:$0xff]
  %v25 = vld [vmem:[#allocation2 + $0x10] sm:$0xff]
  %v26 = vld [vmem:[#allocation2 + $0x18] sm:$0xff]
  %v27 = vld [vmem:[%s0] sm:$0xff]
  %v28 = vld [vmem:[%s0 + $0x8] sm:$0xff]
  %v29 = vld [vmem:[%s0 + $0x10] sm:$0xff]
  %v30 = vld [vmem:[%s0 + $0x18] sm:$0xff]
  %v31 = vld [vmem:[%s1] sm:$0xf]
  %v32 = vld [vmem:[%s1 + $0x4] sm:$0xf]
  %v33 = vld [vmem:[%s1 + $0x8] sm:$0xf]
  %v34 = vld [vmem:[%s1 + $0xc] sm:$0xf]
  %v35 = vld [vmem:[%s1 + $0x10] sm:$0xf]
  %v36 = vld [vmem:[%s1 + $0x14] sm:$0xf]
  %v37 = vld [vmem:[%s1 + $0x18] sm:$0xf]
  %v38 = vld [vmem:[%s1 + $0x1c] sm:$0xf]
  %v39 = vld [vmem:[%s1 + $0x20] sm:$0xf]
  %v40 = vld [vmem:[%s1 + $0x24] sm:$0xf]
  %v41 = vld [vmem:[%s1 + $0x28] sm:$0xf]
  %v42 = vld [vmem:[%s1 + $0x2c] sm:$0xf]
  %v43 = vld [vmem:[%s1 + $0x30] sm:$0xf]
  %v44 = vld [vmem:[%s1 + $0x34] sm:$0xf]
  %v45 = vld [vmem:[%s1 + $0x38] sm:$0xf]
  %v46 = vld [vmem:[%s1 + $0x3c] sm:$0xf]
  %v47 = vld [vmem:[%s1 + $0x40] sm:$0xf]
  %v48 = vld [vmem:[%s1 + $0x44] sm:$0xf]
  %v49 = vld [vmem:[%s1 + $0x48] sm:$0xf]
  %v50 = vld [vmem:[%s1 + $0x4c] sm:$0xf]
  %v51 = vld [vmem:[%s1 + $0x50] sm:$0xf]
  %v52 = vld [vmem:[%s1 + $0x54] sm:$0xf]
  %v53 = vld [vmem:[%s1 + $0x58] sm:$0xf]
  %v54 = vld [vmem:[%s1 + $0x5c] sm:$0xf]
  %v55 = vld [vmem:[%s1 + $0x60] sm:$0xf]
  %v56 = vld [vmem:[%s1 + $0x64] sm:$0xf]
  %v57 = vld [vmem:[%s1 + $0x68] sm:$0xf]
  %v58 = vld [vmem:[%s1 + $0x6c] sm:$0xf]
  %v59 = vld [vmem:[%s1 + $0x70] sm:$0xf]
  %v60 = vld [vmem:[%s1 + $0x74] sm:$0xf]
  %v61 = vld [vmem:[%s1 + $0x78] sm:$0xf]
  %v62 = vld [vmem:[%s1 + $0x7c] sm:$0xf]
  %v67 = vunpack.c.l.b16 %v27
  %v68 = vunpack.c.h.b16 %v27
  %v69 = vunpack.c.l.b16 %v28
  %v70 = vunpack.c.h.b16 %v28
  %v71 = vunpack.c.l.b16 %v29
  %v72 = vunpack.c.h.b16 %v29
  %v73 = vunpack.c.l.b16 %v30
  %v74 = vunpack.c.h.b16 %v30
  %v75 = vpack.c.b16 %v69, %v67
  %v76 = vpack.c.b16 %v70, %v68
  %v77 = vpack.c.b16 %v73, %v71
  %v78 = vpack.c.b16 %v74, %v72
  %v115 = vunpack.c.l.b16 %v31
  %v116 = vunpack.c.l.b16 %v32
  %v117 = vunpack.c.l.b16 %v33
  %v118 = vunpack.c.l.b16 %v34
  %v119 = vunpack.c.l.b16 %v35
  %v120 = vunpack.c.l.b16 %v36
  %v121 = vunpack.c.l.b16 %v37
  %v122 = vunpack.c.l.b16 %v38
  %v123 = vunpack.c.l.b16 %v39
  %v124 = vunpack.c.l.b16 %v40
  %v125 = vunpack.c.l.b16 %v41
  %v126 = vunpack.c.l.b16 %v42
  %v127 = vunpack.c.l.b16 %v43
  %v128 = vunpack.c.l.b16 %v44
  %v129 = vunpack.c.l.b16 %v45
  %v130 = vunpack.c.l.b16 %v46
  %v131 = vunpack.c.l.b16 %v47
  %v132 = vunpack.c.l.b16 %v48
  %v133 = vunpack.c.l.b16 %v49
  %v134 = vunpack.c.l.b16 %v50
  %v135 = vunpack.c.l.b16 %v51
  %v136 = vunpack.c.l.b16 %v52
  %v137 = vunpack.c.l.b16 %v53
  %v138 = vunpack.c.l.b16 %v54
  %v139 = vunpack.c.l.b16 %v55
  %v140 = vunpack.c.l.b16 %v56
  %v141 = vunpack.c.l.b16 %v57
  %v142 = vunpack.c.l.b16 %v58
  %v143 = vunpack.c.l.b16 %v59
  %v144 = vunpack.c.l.b16 %v60
  %v145 = vunpack.c.l.b16 %v61
  %v146 = vunpack.c.l.b16 %v62
  %v147 = vpack.c.b16 %v116, %v115
  %v148 = vpack.c.b16 %v118, %v117
  %v149 = vpack.c.b16 %v120, %v119
  %v150 = vpack.c.b16 %v122, %v121
  %v151 = vpack.c.b16 %v124, %v123
  %v152 = vpack.c.b16 %v126, %v125
  %v153 = vpack.c.b16 %v128, %v127
  %v154 = vpack.c.b16 %v130, %v129
  %v155 = vpack.c.b16 %v132, %v131
  %v156 = vpack.c.b16 %v134, %v133
  %v157 = vpack.c.b16 %v136, %v135
  %v158 = vpack.c.b16 %v138, %v137
  %v159 = vpack.c.b16 %v140, %v139
  %v160 = vpack.c.b16 %v142, %v141
  %v161 = vpack.c.b16 %v144, %v143
  %v162 = vpack.c.b16 %v146, %v145
  %179 = vmatprep.subr.bf16.mxu0 0
  %180 = vmatpush1.bf16.msra.mxu0 %v154
  %181 = vmatprep.subr.bf16.mxu0 0
  %182 = vmatpush1.bf16.msra.mxu0 %v153
  %183 = vmatprep.subr.bf16.mxu0 0
  %184 = vmatpush1.bf16.msra.mxu0 %v152
  %185 = vmatprep.subr.bf16.mxu0 0
  %186 = vmatpush1.bf16.msra.mxu0 %v151
  %187 = vmatprep.subr.bf16.mxu0 0
  %188 = vmatpush1.bf16.msra.mxu0 %v150
  %189 = vmatprep.subr.bf16.mxu0 0
  %190 = vmatpush1.bf16.msra.mxu0 %v149
  %191 = vmatprep.subr.bf16.mxu0 0
  %192 = vmatpush1.bf16.msra.mxu0 %v148
  %193 = vmatprep.subr.bf16.mxu0 0
  %194 = vmatpush1.bf16.msra.mxu0 %v147
  %195 = vmatprep.subr.bf16.mxu0 0
  %196 = vmatpush2.bf16.msra.mxu0 %v162
  %197 = vmatprep.subr.bf16.mxu0 0
  %198 = vmatpush2.bf16.msra.mxu0 %v161
  %199 = vmatprep.subr.bf16.mxu0 0
  %200 = vmatpush2.bf16.msra.mxu0 %v160
  %201 = vmatprep.subr.bf16.mxu0 0
  %202 = vmatpush2.bf16.msra.mxu0 %v159
  %203 = vmatprep.subr.bf16.mxu0 0
  %204 = vmatpush2.bf16.msra.mxu0 %v158
  %205 = vmatprep.subr.bf16.mxu0 0
  %206 = vmatpush2.bf16.msra.mxu0 %v157
  %207 = vmatprep.subr.bf16.mxu0 0
  %208 = vmatpush2.bf16.msra.mxu0 %v156
  %209 = vmatprep.subr.bf16.mxu0 0
  %210 = vmatpush2.bf16.msra.mxu0 %v155
  %211 = vmatprep.mubr.bf16.mxu0 %v76
  %212 = vmatmul.mubr.bf16.gmra.mxu0 %v75
  %v213 = vpop.f32.mrf.mxu0
  %v214 = vadd.f32 0.0, %v213
  %v215 = vpop.f32.mrf.mxu0
  %v216 = vpop.f32.mrf.mxu0
  %v217 = vadd.f32 0.0, %v216
  %v218 = vpop.f32.mrf.mxu0
  %219 = vmatprep.mubr.bf16.mxu0 %v78
  %220 = vmatmul.mubr.bf16.gmra.mxu0 %v77
  %v221 = vpop.f32.mrf.mxu0
  %v222 = vadd.f32 0.0, %v221
  %v223 = vpop.f32.mrf.mxu0
  %v224 = vpop.f32.mrf.mxu0
  %v225 = vadd.f32 0.0, %v224
  %v226 = vpop.f32.mrf.mxu0
  %227 = vdwg.mxu0
  %v228 = vadd.f32 %v23, %v214
  %v229 = vadd.f32 %v24, %v217
  %v230 = vadd.f32 %v25, %v222
  %v231 = vadd.f32 %v26, %v225
  %232 = vst [vmem:[#allocation2] sm:$0xff] %v228
  %233 = vst [vmem:[#allocation2 + $0x8] sm:$0xff] %v229
  %234 = vst [vmem:[#allocation2 + $0x10] sm:$0xff] %v230
  %235 = vst [vmem:[#allocation2 + $0x18] sm:$0xff] %v231
  // Predicated region
  $region18: #{_lambda_.26} parent=0 // pred_check
    %p236 = pneg %p15
  $region19: #{_lambda_.26} parent=0 // pred_check_branch
    %238 = sbr.rel (%p236) target = $region21
  $region20: #{_lambda_.26} parent=0 // pred_region
    %v239 = vld [vmem:[#allocation2] sm:$0xff]
    %v240 = vld [vmem:[#allocation2 + $0x8] sm:$0xff]
    %v241 = vld [vmem:[#allocation2 + $0x10] sm:$0xff]
    %v242 = vld [vmem:[#allocation2 + $0x18] sm:$0xff]
    %v243 = vld [vmem:[%s2] sm:$0x1]
    %v245 = vlaneseq
    %v246 = vshrl.u32 %v245, 7
    %v247 = vsub.s32 0, %v246
    %v248 = vrot.slane %v243, %v247
    %v250 = vadd.f32 %v239, %v248
    %v251 = vadd.f32 %v240, %v248
    %v252 = vadd.f32 %v241, %v248
    %v253 = vadd.f32 %v242, %v248
    %v254 = vxor.u32 %v250, 2147483648
    %v255 = vxor.u32 %v251, 2147483648
    %v256 = vxor.u32 %v252, 2147483648
    %v257 = vxor.u32 %v253, 2147483648
    %v258 = vmul.f32 %v254, 1.442695
    %v259 = vpow.pop %v258
    %v260 = vmul.f32 %v255, 1.442695
    %v261 = vpow.pop %v260
    %v262 = vmul.f32 %v256, 1.442695
    %v263 = vpow.pop %v262
    %v264 = vmul.f32 %v257, 1.442695
    %v265 = vpow.pop %v264
    %v266 = vadd.f32 %v259, 1.0
    %v267 = vadd.f32 %v261, 1.0
    %v268 = vadd.f32 %v263, 1.0
    %v269 = vadd.f32 %v265, 1.0
    %v270 = vrcp.pop %v266
    %v271 = vmul.f32 1.0, %v270
    %v272 = vrcp.pop %v267
    %v273 = vmul.f32 1.0, %v272
    %v274 = vrcp.pop %v268
    %v275 = vmul.f32 1.0, %v274
    %v276 = vrcp.pop %v269
    %v277 = vmul.f32 1.0, %v276
    %v278 = vmul.f32 %v250, %v271
    %v279 = vmul.f32 %v251, %v273
    %v280 = vmul.f32 %v252, %v275
    %v281 = vmul.f32 %v253, %v277
    %282 = vst [vmem:[%s3] sm:$0xff] %v278
    %283 = vst [vmem:[%s3 + $0x8] sm:$0xff] %v279
    %284 = vst [vmem:[%s3 + $0x10] sm:$0xff] %v280
    %285 = vst [vmem:[%s3 + $0x18] sm:$0xff] %v281
  $region21: #{_lambda_.26} parent=0 // pred_fallthru
    _
  // Predicated region
  $region22: #{_lambda_.26} parent=0 // pred_check
    _
  $region23: #{_lambda_.26} parent=0 // pred_check_branch
    %287 = sbr.rel (0) target = $region25
  $region24: #{_lambda_.26} parent=0 // pred_region
    _
  $region25: #{_lambda_.26} parent=0 // pred_fallthru
    _
  // Predicated region
  $region26: #{_lambda_.26} parent=0 // pred_check
    _
  $region27: #{_lambda_.26} parent=0 // pred_check_branch
    %289 = sbr.rel (0) target = $region29
  $region28: #{_lambda_.26} parent=0 // pred_region
    _
  $region29: #{_lambda_.26} parent=0 // pred_fallthru
    _

// kernel: _lambda_.27
$region0: #{_lambda_.27}
  #allocation0 [shape = 'u32[]', space=smem, size = 0x4, offset = 0x4, fixed_abs, tag = 'smem constant byte address 0x4 - core index']
  #allocation1 [shape = 'u32[144,128]{1,0:T(1,128)}', space=vmem, size = 0x12000, scoped, tag = 'internal scratch']
  #allocation2 [shape = 'f32[32,128]{1,0:T(8,128)}', space=vmem, size = 0x4000, scoped, tag = 'scratch operand']
  %s0 = inlined_call_operand.vmem [shape: bf16[32,256], index: 0, kind: input, shape index: {}]
  %s1 = inlined_call_operand.vmem [shape: bf16[256,128], index: 1, kind: input, shape index: {}]
  %s2 = inlined_call_operand.vmem [shape: f32[1,128], index: 2, kind: input, shape index: {}]
  %s3 = inlined_call_operand.vmem [shape: f32[32,128], index: 3, kind: output, shape index: {}]
  %s4 = sld [smem:[#allocation0]]
  $region30: #{_lambda_.27} parent=0
    _
  %s6 = ssub.s32 1, %s4
  %s7 = scalar_select 0, %s6, %s4
  // Predicated region
  $region2: #{_lambda_.27} parent=0 // pred_check
    _
  $region3: #{_lambda_.27} parent=0 // pred_check_branch
    %9 = sbr.rel (0) target = $region5
  $region4: #{_lambda_.27} parent=0 // pred_region
    _
  $region5: #{_lambda_.27} parent=0 // pred_fallthru
    _
  // Predicated region
  $region6: #{_lambda_.27} parent=0 // pred_check
    _
  $region7: #{_lambda_.27} parent=0 // pred_check_branch
    %11 = sbr.rel (0) target = $region9
  $region8: #{_lambda_.27} parent=0 // pred_region
    _
  $region9: #{_lambda_.27} parent=0 // pred_fallthru
    _
  // Predicated region
  $region10: #{_lambda_.27} parent=0 // pred_check
    _
  $region11: #{_lambda_.27} parent=0 // pred_check_branch
    %13 = sbr.rel (0) target = $region13
  $region12: #{_lambda_.27} parent=0 // pred_region
    _
  $region13: #{_lambda_.27} parent=0 // pred_fallthru
    _
  %p15 = scmp.eq.s32.totalorder 0, 0
  // Predicated region
  $region14: #{_lambda_.27} parent=0 // pred_check
    %p16 = pneg %p15
  $region15: #{_lambda_.27} parent=0 // pred_check_branch
    %18 = sbr.rel (%p16) target = $region17
  $region16: #{_lambda_.27} parent=0 // pred_region
    %19 = vst [vmem:[#allocation2] sm:$0xff] 0.0
    %20 = vst [vmem:[#allocation2 + $0x8] sm:$0xff] 0.0
    %21 = vst [vmem:[#allocation2 + $0x10] sm:$0xff] 0.0
    %22 = vst [vmem:[#allocation2 + $0x18] sm:$0xff] 0.0
  $region17: #{_lambda_.27} parent=0 // pred_fallthru
    _
  %v23 = vld [vmem:[#allocation2] sm:$0xff]
  %v24 = vld [vmem:[#allocation2 + $0x8] sm:$0xff]
  %v25 = vld [vmem:[#allocation2 + $0x10] sm:$0xff]
  %v26 = vld [vmem:[#allocation2 + $0x18] sm:$0xff]
  %v27 = vld [vmem:[%s0] sm:$0xff]
  %v28 = vld [vmem:[%s0 + $0x8] sm:$0xff]
  %v29 = vld [vmem:[%s0 + $0x10] sm:$0xff]
  %v30 = vld [vmem:[%s0 + $0x18] sm:$0xff]
  %v31 = vld [vmem:[%s1] sm:$0xf]
  %v32 = vld [vmem:[%s1 + $0x4] sm:$0xf]
  %v33 = vld [vmem:[%s1 + $0x8] sm:$0xf]
  %v34 = vld [vmem:[%s1 + $0xc] sm:$0xf]
  %v35 = vld [vmem:[%s1 + $0x10] sm:$0xf]
  %v36 = vld [vmem:[%s1 + $0x14] sm:$0xf]
  %v37 = vld [vmem:[%s1 + $0x18] sm:$0xf]
  %v38 = vld [vmem:[%s1 + $0x1c] sm:$0xf]
  %v39 = vld [vmem:[%s1 + $0x20] sm:$0xf]
  %v40 = vld [vmem:[%s1 + $0x24] sm:$0xf]
  %v41 = vld [vmem:[%s1 + $0x28] sm:$0xf]
  %v42 = vld [vmem:[%s1 + $0x2c] sm:$0xf]
  %v43 = vld [vmem:[%s1 + $0x30] sm:$0xf]
  %v44 = vld [vmem:[%s1 + $0x34] sm:$0xf]
  %v45 = vld [vmem:[%s1 + $0x38] sm:$0xf]
  %v46 = vld [vmem:[%s1 + $0x3c] sm:$0xf]
  %v47 = vld [vmem:[%s1 + $0x40] sm:$0xf]
  %v48 = vld [vmem:[%s1 + $0x44] sm:$0xf]
  %v49 = vld [vmem:[%s1 + $0x48] sm:$0xf]
  %v50 = vld [vmem:[%s1 + $0x4c] sm:$0xf]
  %v51 = vld [vmem:[%s1 + $0x50] sm:$0xf]
  %v52 = vld [vmem:[%s1 + $0x54] sm:$0xf]
  %v53 = vld [vmem:[%s1 + $0x58] sm:$0xf]
  %v54 = vld [vmem:[%s1 + $0x5c] sm:$0xf]
  %v55 = vld [vmem:[%s1 + $0x60] sm:$0xf]
  %v56 = vld [vmem:[%s1 + $0x64] sm:$0xf]
  %v57 = vld [vmem:[%s1 + $0x68] sm:$0xf]
  %v58 = vld [vmem:[%s1 + $0x6c] sm:$0xf]
  %v59 = vld [vmem:[%s1 + $0x70] sm:$0xf]
  %v60 = vld [vmem:[%s1 + $0x74] sm:$0xf]
  %v61 = vld [vmem:[%s1 + $0x78] sm:$0xf]
  %v62 = vld [vmem:[%s1 + $0x7c] sm:$0xf]
  %v67 = vunpack.c.l.b16 %v27
  %v68 = vunpack.c.h.b16 %v27
  %v69 = vunpack.c.l.b16 %v28
  %v70 = vunpack.c.h.b16 %v28
  %v71 = vunpack.c.l.b16 %v29
  %v72 = vunpack.c.h.b16 %v29
  %v73 = vunpack.c.l.b16 %v30
  %v74 = vunpack.c.h.b16 %v30
  %v75 = vpack.c.b16 %v69, %v67
  %v76 = vpack.c.b16 %v70, %v68
  %v77 = vpack.c.b16 %v73, %v71
  %v78 = vpack.c.b16 %v74, %v72
  %v115 = vunpack.c.l.b16 %v31
  %v116 = vunpack.c.l.b16 %v32
  %v117 = vunpack.c.l.b16 %v33
  %v118 = vunpack.c.l.b16 %v34
  %v119 = vunpack.c.l.b16 %v35
  %v120 = vunpack.c.l.b16 %v36
  %v121 = vunpack.c.l.b16 %v37
  %v122 = vunpack.c.l.b16 %v38
  %v123 = vunpack.c.l.b16 %v39
  %v124 = vunpack.c.l.b16 %v40
  %v125 = vunpack.c.l.b16 %v41
  %v126 = vunpack.c.l.b16 %v42
  %v127 = vunpack.c.l.b16 %v43
  %v128 = vunpack.c.l.b16 %v44
  %v129 = vunpack.c.l.b16 %v45
  %v130 = vunpack.c.l.b16 %v46
  %v131 = vunpack.c.l.b16 %v47
  %v132 = vunpack.c.l.b16 %v48
  %v133 = vunpack.c.l.b16 %v49
  %v134 = vunpack.c.l.b16 %v50
  %v135 = vunpack.c.l.b16 %v51
  %v136 = vunpack.c.l.b16 %v52
  %v137 = vunpack.c.l.b16 %v53
  %v138 = vunpack.c.l.b16 %v54
  %v139 = vunpack.c.l.b16 %v55
  %v140 = vunpack.c.l.b16 %v56
  %v141 = vunpack.c.l.b16 %v57
  %v142 = vunpack.c.l.b16 %v58
  %v143 = vunpack.c.l.b16 %v59
  %v144 = vunpack.c.l.b16 %v60
  %v145 = vunpack.c.l.b16 %v61
  %v146 = vunpack.c.l.b16 %v62
  %v147 = vpack.c.b16 %v116, %v115
  %v148 = vpack.c.b16 %v118, %v117
  %v149 = vpack.c.b16 %v120, %v119
  %v150 = vpack.c.b16 %v122, %v121
  %v151 = vpack.c.b16 %v124, %v123
  %v152 = vpack.c.b16 %v126, %v125
  %v153 = vpack.c.b16 %v128, %v127
  %v154 = vpack.c.b16 %v130, %v129
  %v155 = vpack.c.b16 %v132, %v131
  %v156 = vpack.c.b16 %v134, %v133
  %v157 = vpack.c.b16 %v136, %v135
  %v158 = vpack.c.b16 %v138, %v137
  %v159 = vpack.c.b16 %v140, %v139
  %v160 = vpack.c.b16 %v142, %v141
  %v161 = vpack.c.b16 %v144, %v143
  %v162 = vpack.c.b16 %v146, %v145
  %179 = vmatprep.subr.bf16.mxu0 0
  %180 = vmatpush1.bf16.msra.mxu0 %v154
  %181 = vmatprep.subr.bf16.mxu0 0
  %182 = vmatpush1.bf16.msra.mxu0 %v153
  %183 = vmatprep.subr.bf16.mxu0 0
  %184 = vmatpush1.bf16.msra.mxu0 %v152
  %185 = vmatprep.subr.bf16.mxu0 0
  %186 = vmatpush1.bf16.msra.mxu0 %v151
  %187 = vmatprep.subr.bf16.mxu0 0
  %188 = vmatpush1.bf16.msra.mxu0 %v150
  %189 = vmatprep.subr.bf16.mxu0 0
  %190 = vmatpush1.bf16.msra.mxu0 %v149
  %191 = vmatprep.subr.bf16.mxu0 0
  %192 = vmatpush1.bf16.msra.mxu0 %v148
  %193 = vmatprep.subr.bf16.mxu0 0
  %194 = vmatpush1.bf16.msra.mxu0 %v147
  %195 = vmatprep.subr.bf16.mxu0 0
  %196 = vmatpush2.bf16.msra.mxu0 %v162
  %197 = vmatprep.subr.bf16.mxu0 0
  %198 = vmatpush2.bf16.msra.mxu0 %v161
  %199 = vmatprep.subr.bf16.mxu0 0
  %200 = vmatpush2.bf16.msra.mxu0 %v160
  %201 = vmatprep.subr.bf16.mxu0 0
  %202 = vmatpush2.bf16.msra.mxu0 %v159
  %203 = vmatprep.subr.bf16.mxu0 0
  %204 = vmatpush2.bf16.msra.mxu0 %v158
  %205 = vmatprep.subr.bf16.mxu0 0
  %206 = vmatpush2.bf16.msra.mxu0 %v157
  %207 = vmatprep.subr.bf16.mxu0 0
  %208 = vmatpush2.bf16.msra.mxu0 %v156
  %209 = vmatprep.subr.bf16.mxu0 0
  %210 = vmatpush2.bf16.msra.mxu0 %v155
  %211 = vmatprep.mubr.bf16.mxu0 %v76
  %212 = vmatmul.mubr.bf16.gmra.mxu0 %v75
  %v213 = vpop.f32.mrf.mxu0
  %v214 = vadd.f32 0.0, %v213
  %v215 = vpop.f32.mrf.mxu0
  %v216 = vpop.f32.mrf.mxu0
  %v217 = vadd.f32 0.0, %v216
  %v218 = vpop.f32.mrf.mxu0
  %219 = vmatprep.mubr.bf16.mxu0 %v78
  %220 = vmatmul.mubr.bf16.gmra.mxu0 %v77
  %v221 = vpop.f32.mrf.mxu0
  %v222 = vadd.f32 0.0, %v221
  %v223 = vpop.f32.mrf.mxu0
  %v224 = vpop.f32.mrf.mxu0
  %v225 = vadd.f32 0.0, %v224
  %v226 = vpop.f32.mrf.mxu0
  %227 = vdwg.mxu0
  %v228 = vadd.f32 %v23, %v214
  %v229 = vadd.f32 %v24, %v217
  %v230 = vadd.f32 %v25, %v222
  %v231 = vadd.f32 %v26, %v225
  %232 = vst [vmem:[#allocation2] sm:$0xff] %v228
  %233 = vst [vmem:[#allocation2 + $0x8] sm:$0xff] %v229
  %234 = vst [vmem:[#allocation2 + $0x10] sm:$0xff] %v230
  %235 = vst [vmem:[#allocation2 + $0x18] sm:$0xff] %v231
  // Predicated region
  $region18: #{_lambda_.27} parent=0 // pred_check
    %p236 = pneg %p15
  $region19: #{_lambda_.27} parent=0 // pred_check_branch
    %238 = sbr.rel (%p236) target = $region21
  $region20: #{_lambda_.27} parent=0 // pred_region
    %v239 = vld [vmem:[#allocation2] sm:$0xff]
    %v240 = vld [vmem:[#allocation2 + $0x8] sm:$0xff]
    %v241 = vld [vmem:[#allocation2 + $0x10] sm:$0xff]
    %v242 = vld [vmem:[#allocation2 + $0x18] sm:$0xff]
    %v243 = vld [vmem:[%s2] sm:$0x1]
    %v245 = vlaneseq
    %v246 = vshrl.u32 %v245, 7
    %v247 = vsub.s32 0, %v246
    %v248 = vrot.slane %v243, %v247
    %v250 = vadd.f32 %v239, %v248
    %v251 = vadd.f32 %v240, %v248
    %v252 = vadd.f32 %v241, %v248
    %v253 = vadd.f32 %v242, %v248
    %254 = vst [vmem:[%s3] sm:$0xff] %v250
    %255 = vst [vmem:[%s3 + $0x8] sm:$0xff] %v251
    %256 = vst [vmem:[%s3 + $0x10] sm:$0xff] %v252
    %257 = vst [vmem:[%s3 + $0x18] sm:$0xff] %v253
  $region21: #{_lambda_.27} parent=0 // pred_fallthru
    _
  // Predicated region
  $region22: #{_lambda_.27} parent=0 // pred_check
    _
  $region23: #{_lambda_.27} parent=0 // pred_check_branch
    %259 = sbr.rel (0) target = $region25
  $region24: #{_lambda_.27} parent=0 // pred_region
    _
  $region25: #{_lambda_.27} parent=0 // pred_fallthru
    _
  // Predicated region
  $region26: #{_lambda_.27} parent=0 // pred_check
    _
  $region27: #{_lambda_.27} parent=0 // pred_check_branch
    %261 = sbr.rel (0) target = $region29
  $region28: #{_lambda_.27} parent=0 // pred_region
    _
  $region29: #{_lambda_.27} parent=0 // pred_fallthru
    _

// kernel: _lambda_.29
$region0: #{_lambda_.29}
  #allocation0 [shape = 'u32[]', space=smem, size = 0x4, offset = 0x4, fixed_abs, tag = 'smem constant byte address 0x4 - core index']
  #allocation1 [shape = 'u32[144,128]{1,0:T(1,128)}', space=vmem, size = 0x12000, scoped, tag = 'internal scratch']
  %s0 = inlined_call_operand.vmem [shape: f32[32,128], index: 0, kind: input, shape index: {}]
  %s1 = inlined_call_operand.vmem [shape: f32[1,128], index: 1, kind: input, shape index: {}]
  %s2 = inlined_call_operand.vmem [shape: f32[1,128], index: 2, kind: input, shape index: {}]
  %s3 = inlined_call_operand.vmem [shape: bf16[128,128], index: 3, kind: input, shape index: {}]
  %s4 = inlined_call_operand.vmem [shape: f32[1,128], index: 4, kind: input, shape index: {}]
  %s5 = inlined_call_operand.vmem [shape: bf16[128,128], index: 5, kind: input, shape index: {}]
  %s6 = inlined_call_operand.vmem [shape: f32[1,128], index: 6, kind: input, shape index: {}]
  %s7 = inlined_call_operand.vmem [shape: f32[32,128], index: 7, kind: output, shape index: {}]
  %s8 = sld [smem:[#allocation0]]
  $region38: #{_lambda_.29} parent=0
    _
  %s10 = ssub.s32 1, %s8
  %s11 = scalar_select 0, %s10, %s8
  // Predicated region
  $region2: #{_lambda_.29} parent=0 // pred_check
    _
  $region3: #{_lambda_.29} parent=0 // pred_check_branch
    %13 = sbr.rel (0) target = $region5
  $region4: #{_lambda_.29} parent=0 // pred_region
    _
  $region5: #{_lambda_.29} parent=0 // pred_fallthru
    _
  // Predicated region
  $region6: #{_lambda_.29} parent=0 // pred_check
    _
  $region7: #{_lambda_.29} parent=0 // pred_check_branch
    %15 = sbr.rel (0) target = $region9
  $region8: #{_lambda_.29} parent=0 // pred_region
    _
  $region9: #{_lambda_.29} parent=0 // pred_fallthru
    _
  // Predicated region
  $region10: #{_lambda_.29} parent=0 // pred_check
    _
  $region11: #{_lambda_.29} parent=0 // pred_check_branch
    %17 = sbr.rel (0) target = $region13
  $region12: #{_lambda_.29} parent=0 // pred_region
    _
  $region13: #{_lambda_.29} parent=0 // pred_fallthru
    _
  // Predicated region
  $region14: #{_lambda_.29} parent=0 // pred_check
    _
  $region15: #{_lambda_.29} parent=0 // pred_check_branch
    %19 = sbr.rel (0) target = $region17
  $region16: #{_lambda_.29} parent=0 // pred_region
    _
  $region17: #{_lambda_.29} parent=0 // pred_fallthru
    _
  // Predicated region
  $region18: #{_lambda_.29} parent=0 // pred_check
    _
  $region19: #{_lambda_.29} parent=0 // pred_check_branch
    %21 = sbr.rel (0) target = $region21
  $region20: #{_lambda_.29} parent=0 // pred_region
    _
  $region21: #{_lambda_.29} parent=0 // pred_fallthru
    _
  // Predicated region
  $region22: #{_lambda_.29} parent=0 // pred_check
    _
  $region23: #{_lambda_.29} parent=0 // pred_check_branch
    %23 = sbr.rel (0) target = $region25
  $region24: #{_lambda_.29} parent=0 // pred_region
    _
  $region25: #{_lambda_.29} parent=0 // pred_fallthru
    _
  // Predicated region
  $region26: #{_lambda_.29} parent=0 // pred_check
    _
  $region27: #{_lambda_.29} parent=0 // pred_check_branch
    %25 = sbr.rel (0) target = $region29
  $region28: #{_lambda_.29} parent=0 // pred_region
    _
  $region29: #{_lambda_.29} parent=0 // pred_fallthru
    _
  %v27 = vld [vmem:[%s0] sm:$0xff]
  %v28 = vld [vmem:[%s0 + $0x8] sm:$0xff]
  %v29 = vld [vmem:[%s0 + $0x10] sm:$0xff]
  %v30 = vld [vmem:[%s0 + $0x18] sm:$0xff]
  %31 = vadd.xlane.f32.xlu0 %v27
  %v32 = vpop.xlane.xlu0 %31
  %33 = vadd.xlane.f32.xlu0 %v28
  %v34 = vpop.xlane.xlu0 %33
  %35 = vadd.xlane.f32.xlu0 %v29
  %v36 = vpop.xlane.xlu0 %35
  %37 = vadd.xlane.f32.xlu0 %v30
  %v38 = vpop.xlane.xlu0 %37
  %v39 = vmul.f32 %v32, 0.03125
  %v40 = vmul.f32 %v34, 0.03125
  %v41 = vmul.f32 %v36, 0.03125
  %v42 = vmul.f32 %v38, 0.03125
  %v43 = vsub.f32 %v27, %v39
  %v44 = vsub.f32 %v28, %v40
  %v45 = vsub.f32 %v29, %v41
  %v46 = vsub.f32 %v30, %v42
  %v47 = vmul.f32 %v43, %v43
  %v48 = vmul.f32 %v44, %v44
  %v49 = vmul.f32 %v45, %v45
  %v50 = vmul.f32 %v46, %v46
  %51 = vadd.xlane.f32.xlu0 %v47
  %v52 = vpop.xlane.xlu0 %51
  %53 = vadd.xlane.f32.xlu0 %v48
  %v54 = vpop.xlane.xlu0 %53
  %55 = vadd.xlane.f32.xlu0 %v49
  %v56 = vpop.xlane.xlu0 %55
  %57 = vadd.xlane.f32.xlu0 %v50
  %v58 = vpop.xlane.xlu0 %57
  %v59 = vmul.f32 %v39, 96.0
  %v60 = vmul.f32 %v40, 96.0
  %v61 = vmul.f32 %v41, 96.0
  %v62 = vmul.f32 %v42, 96.0
  %v63 = vmul.f32 %v59, %v39
  %v64 = vmul.f32 %v60, %v40
  %v65 = vmul.f32 %v61, %v41
  %v66 = vmul.f32 %v62, %v42
  %v67 = vsub.f32 %v52, %v63
  %v68 = vsub.f32 %v54, %v64
  %v69 = vsub.f32 %v56, %v65
  %v70 = vsub.f32 %v58, %v66
  %v71 = vmul.f32 %v67, 0.03125
  %v72 = vmul.f32 %v68, 0.03125
  %v73 = vmul.f32 %v69, 0.03125
  %v74 = vmul.f32 %v70, 0.03125
  %v75 = vmax.f32 %v71, 0.0
  %v76 = vmax.f32 %v72, 0.0
  %v77 = vmax.f32 %v73, 0.0
  %v78 = vmax.f32 %v74, 0.0
  %v79 = vadd.f32 %v75, 1e-05
  %v80 = vadd.f32 %v76, 1e-05
  %v81 = vadd.f32 %v77, 1e-05
  %v82 = vadd.f32 %v78, 1e-05
  %v83 = vrsqrt.pop %v79
  %v84 = vrsqrt.pop %v80
  %v85 = vrsqrt.pop %v81
  %v86 = vrsqrt.pop %v82
  %v87 = vmul.f32 %v43, %v83
  %v88 = vmul.f32 %v44, %v84
  %v89 = vmul.f32 %v45, %v85
  %v90 = vmul.f32 %v46, %v86
  %v91 = vld [vmem:[%s1] sm:$0x1]
  %v93 = vlaneseq
  %v94 = vshrl.u32 %v93, 7
  %v95 = vsub.s32 0, %v94
  %v96 = vrot.slane %v91, %v95
  %v98 = vmul.f32 %v87, %v96
  %v99 = vmul.f32 %v88, %v96
  %v100 = vmul.f32 %v89, %v96
  %v101 = vmul.f32 %v90, %v96
  %v102 = vld [vmem:[%s2] sm:$0x1]
  %v104 = vlaneseq
  %v105 = vshrl.u32 %v104, 7
  %v106 = vsub.s32 0, %v105
  %v107 = vrot.slane %v102, %v106
  %v109 = vadd.f32 %v98, %v107
  %v110 = vadd.f32 %v99, %v107
  %v111 = vadd.f32 %v100, %v107
  %v112 = vadd.f32 %v101, %v107
  %v113 = vpack.c.bf16 %v110, %v109
  %v114 = vpack.c.bf16 %v112, %v111
  %v115 = vld [vmem:[%s3] sm:$0xf]
  %v116 = vld [vmem:[%s3 + $0x4] sm:$0xf]
  %v117 = vld [vmem:[%s3 + $0x8] sm:$0xf]
  %v118 = vld [vmem:[%s3 + $0xc] sm:$0xf]
  %v119 = vld [vmem:[%s3 + $0x10] sm:$0xf]
  %v120 = vld [vmem:[%s3 + $0x14] sm:$0xf]
  %v121 = vld [vmem:[%s3 + $0x18] sm:$0xf]
  %v122 = vld [vmem:[%s3 + $0x1c] sm:$0xf]
  %v123 = vld [vmem:[%s3 + $0x20] sm:$0xf]
  %v124 = vld [vmem:[%s3 + $0x24] sm:$0xf]
  %v125 = vld [vmem:[%s3 + $0x28] sm:$0xf]
  %v126 = vld [vmem:[%s3 + $0x2c] sm:$0xf]
  %v127 = vld [vmem:[%s3 + $0x30] sm:$0xf]
  %v128 = vld [vmem:[%s3 + $0x34] sm:$0xf]
  %v129 = vld [vmem:[%s3 + $0x38] sm:$0xf]
  %v130 = vld [vmem:[%s3 + $0x3c] sm:$0xf]
  %v131 = vld [vmem:[%s4] sm:$0x1]
  %v133 = vlaneseq
  %v134 = vshrl.u32 %v133, 7
  %v135 = vsub.s32 0, %v134
  %v136 = vrot.slane %v131, %v135
  %v154 = vunpack.c.l.b16 %v115
  %v155 = vunpack.c.l.b16 %v116
  %v156 = vunpack.c.l.b16 %v117
  %v157 = vunpack.c.l.b16 %v118
  %v158 = vunpack.c.l.b16 %v119
  %v159 = vunpack.c.l.b16 %v120
  %v160 = vunpack.c.l.b16 %v121
  %v161 = vunpack.c.l.b16 %v122
  %v162 = vunpack.c.l.b16 %v123
  %v163 = vunpack.c.l.b16 %v124
  %v164 = vunpack.c.l.b16 %v125
  %v165 = vunpack.c.l.b16 %v126
  %v166 = vunpack.c.l.b16 %v127
  %v167 = vunpack.c.l.b16 %v128
  %v168 = vunpack.c.l.b16 %v129
  %v169 = vunpack.c.l.b16 %v130
  %v170 = vpack.c.b16 %v155, %v154
  %v171 = vpack.c.b16 %v157, %v156
  %v172 = vpack.c.b16 %v159, %v158
  %v173 = vpack.c.b16 %v161, %v160
  %v174 = vpack.c.b16 %v163, %v162
  %v175 = vpack.c.b16 %v165, %v164
  %v176 = vpack.c.b16 %v167, %v166
  %v177 = vpack.c.b16 %v169, %v168
  %186 = vmatprep.subr.bf16.mxu0 0
  %187 = vmatpush1.bf16.msra.mxu0 %v177
  %188 = vmatprep.subr.bf16.mxu0 0
  %189 = vmatpush1.bf16.msra.mxu0 %v176
  %190 = vmatprep.subr.bf16.mxu0 0
  %191 = vmatpush1.bf16.msra.mxu0 %v175
  %192 = vmatprep.subr.bf16.mxu0 0
  %193 = vmatpush1.bf16.msra.mxu0 %v174
  %194 = vmatprep.subr.bf16.mxu0 0
  %195 = vmatpush1.bf16.msra.mxu0 %v173
  %196 = vmatprep.subr.bf16.mxu0 0
  %197 = vmatpush1.bf16.msra.mxu0 %v172
  %198 = vmatprep.subr.bf16.mxu0 0
  %199 = vmatpush1.bf16.msra.mxu0 %v171
  %200 = vmatprep.subr.bf16.mxu0 0
  %201 = vmatpush1.bf16.msra.mxu0 %v170
  %202 = vmatprep.subr.bf16.mxu0 0
  %203 = vmatpush2.bf16.msra.mxu0 0
  %204 = vmatprep.subr.bf16.mxu0 0
  %205 = vmatpush2.bf16.msra.mxu0 0
  %206 = vmatprep.subr.bf16.mxu0 0
  %207 = vmatpush2.bf16.msra.mxu0 0
  %208 = vmatprep.subr.bf16.mxu0 0
  %209 = vmatpush2.bf16.msra.mxu0 0
  %210 = vmatprep.subr.bf16.mxu0 0
  %211 = vmatpush2.bf16.msra.mxu0 0
  %212 = vmatprep.subr.bf16.mxu0 0
  %213 = vmatpush2.bf16.msra.mxu0 0
  %214 = vmatprep.subr.bf16.mxu0 0
  %215 = vmatpush2.bf16.msra.mxu0 0
  %216 = vmatprep.subr.bf16.mxu0 0
  %217 = vmatpush2.bf16.msra.mxu0 0
  %218 = vmatprep.mubr.bf16.mxu0 0
  %219 = vmatmul.mubr.bf16.gmra.mxu0 %v113
  %v220 = vpop.f32.mrf.mxu0
  %v221 = vadd.f32 %v136, %v220
  %v222 = vpop.f32.mrf.mxu0
  %v223 = vpop.f32.mrf.mxu0
  %v224 = vadd.f32 %v136, %v223
  %v225 = vpop.f32.mrf.mxu0
  %226 = vmatprep.mubr.bf16.mxu0 0
  %227 = vmatmul.mubr.bf16.gmra.mxu0 %v114
  %v228 = vpop.f32.mrf.mxu0
  %v229 = vadd.f32 %v136, %v228
  %v230 = vpop.f32.mrf.mxu0
  %v231 = vpop.f32.mrf.mxu0
  %v232 = vadd.f32 %v136, %v231
  %v233 = vpop.f32.mrf.mxu0
  %234 = vdwg.mxu0
  %v235 = vmul.f32 %v221, %v221
  %v236 = vmul.f32 %v224, %v224
  %v237 = vmul.f32 %v229, %v229
  %v238 = vmul.f32 %v232, %v232
  %v239 = vmul.f32 %v221, %v235
  %v240 = vmul.f32 %v224, %v236
  %v241 = vmul.f32 %v229, %v237
  %v242 = vmul.f32 %v232, %v238
  %v243 = vmul.f32 %v239, 0.044715
  %v244 = vmul.f32 %v240, 0.044715
  %v245 = vmul.f32 %v241, 0.044715
  %v246 = vmul.f32 %v242, 0.044715
  %v247 = vadd.f32 %v221, %v243
  %v248 = vadd.f32 %v224, %v244
  %v249 = vadd.f32 %v229, %v245
  %v250 = vadd.f32 %v232, %v246
  %v251 = vmul.f32 %v247, 0.7978846
  %v252 = vmul.f32 %v248, 0.7978846
  %v253 = vmul.f32 %v249, 0.7978846
  %v254 = vmul.f32 %v250, 0.7978846
  %v255 = vtanh.pop %v251
  %v256 = vtanh.pop %v252
  %v257 = vtanh.pop %v253
  %v258 = vtanh.pop %v254
  %v259 = vadd.f32 %v255, 1.0
  %v260 = vadd.f32 %v256, 1.0
  %v261 = vadd.f32 %v257, 1.0
  %v262 = vadd.f32 %v258, 1.0
  %v263 = vmul.f32 %v259, 0.5
  %v264 = vmul.f32 %v260, 0.5
  %v265 = vmul.f32 %v261, 0.5
  %v266 = vmul.f32 %v262, 0.5
  %v267 = vmul.f32 %v221, %v263
  %v268 = vmul.f32 %v224, %v264
  %v269 = vmul.f32 %v229, %v265
  %v270 = vmul.f32 %v232, %v266
  %v271 = vpack.c.bf16 %v268, %v267
  %v272 = vpack.c.bf16 %v270, %v269
  %v273 = vld [vmem:[%s5] sm:$0xf]
  %v274 = vld [vmem:[%s5 + $0x4] sm:$0xf]
  %v275 = vld [vmem:[%s5 + $0x8] sm:$0xf]
  %v276 = vld [vmem:[%s5 + $0xc] sm:$0xf]
  %v277 = vld [vmem:[%s5 + $0x10] sm:$0xf]
  %v278 = vld [vmem:[%s5 + $0x14] sm:$0xf]
  %v279 = vld [vmem:[%s5 + $0x18] sm:$0xf]
  %v280 = vld [vmem:[%s5 + $0x1c] sm:$0xf]
  %v281 = vld [vmem:[%s5 + $0x20] sm:$0xf]
  %v282 = vld [vmem:[%s5 + $0x24] sm:$0xf]
  %v283 = vld [vmem:[%s5 + $0x28] sm:$0xf]
  %v284 = vld [vmem:[%s5 + $0x2c] sm:$0xf]
  %v285 = vld [vmem:[%s5 + $0x30] sm:$0xf]
  %v286 = vld [vmem:[%s5 + $0x34] sm:$0xf]
  %v287 = vld [vmem:[%s5 + $0x38] sm:$0xf]
  %v288 = vld [vmem:[%s5 + $0x3c] sm:$0xf]
  %v289 = vld [vmem:[%s6] sm:$0x1]
  %v291 = vlaneseq
  %v292 = vshrl.u32 %v291, 7
  %v293 = vsub.s32 0, %v292
  %v294 = vrot.slane %v289, %v293
  %v312 = vunpack.c.l.b16 %v273
  %v313 = vunpack.c.l.b16 %v274
  %v314 = vunpack.c.l.b16 %v275
  %v315 = vunpack.c.l.b16 %v276
  %v316 = vunpack.c.l.b16 %v277
  %v317 = vunpack.c.l.b16 %v278
  %v318 = vunpack.c.l.b16 %v279
  %v319 = vunpack.c.l.b16 %v280
  %v320 = vunpack.c.l.b16 %v281
  %v321 = vunpack.c.l.b16 %v282
  %v322 = vunpack.c.l.b16 %v283
  %v323 = vunpack.c.l.b16 %v284
  %v324 = vunpack.c.l.b16 %v285
  %v325 = vunpack.c.l.b16 %v286
  %v326 = vunpack.c.l.b16 %v287
  %v327 = vunpack.c.l.b16 %v288
  %v328 = vpack.c.b16 %v313, %v312
  %v329 = vpack.c.b16 %v315, %v314
  %v330 = vpack.c.b16 %v317, %v316
  %v331 = vpack.c.b16 %v319, %v318
  %v332 = vpack.c.b16 %v321, %v320
  %v333 = vpack.c.b16 %v323, %v322
  %v334 = vpack.c.b16 %v325, %v324
  %v335 = vpack.c.b16 %v327, %v326
  %344 = vmatprep.subr.bf16.mxu0 0
  %345 = vmatpush1.bf16.msra.mxu0 %v335
  %346 = vmatprep.subr.bf16.mxu0 0
  %347 = vmatpush1.bf16.msra.mxu0 %v334
  %348 = vmatprep.subr.bf16.mxu0 0
  %349 = vmatpush1.bf16.msra.mxu0 %v333
  %350 = vmatprep.subr.bf16.mxu0 0
  %351 = vmatpush1.bf16.msra.mxu0 %v332
  %352 = vmatprep.subr.bf16.mxu0 0
  %353 = vmatpush1.bf16.msra.mxu0 %v331
  %354 = vmatprep.subr.bf16.mxu0 0
  %355 = vmatpush1.bf16.msra.mxu0 %v330
  %356 = vmatprep.subr.bf16.mxu0 0
  %357 = vmatpush1.bf16.msra.mxu0 %v329
  %358 = vmatprep.subr.bf16.mxu0 0
  %359 = vmatpush1.bf16.msra.mxu0 %v328
  %360 = vmatprep.subr.bf16.mxu0 0
  %361 = vmatpush2.bf16.msra.mxu0 0
  %362 = vmatprep.subr.bf16.mxu0 0
  %363 = vmatpush2.bf16.msra.mxu0 0
  %364 = vmatprep.subr.bf16.mxu0 0
  %365 = vmatpush2.bf16.msra.mxu0 0
  %366 = vmatprep.subr.bf16.mxu0 0
  %367 = vmatpush2.bf16.msra.mxu0 0
  %368 = vmatprep.subr.bf16.mxu0 0
  %369 = vmatpush2.bf16.msra.mxu0 0
  %370 = vmatprep.subr.bf16.mxu0 0
  %371 = vmatpush2.bf16.msra.mxu0 0
  %372 = vmatprep.subr.bf16.mxu0 0
  %373 = vmatpush2.bf16.msra.mxu0 0
  %374 = vmatprep.subr.bf16.mxu0 0
  %375 = vmatpush2.bf16.msra.mxu0 0
  %376 = vmatprep.mubr.bf16.mxu0 0
  %377 = vmatmul.mubr.bf16.gmra.mxu0 %v271
  %v378 = vpop.f32.mrf.mxu0
  %v379 = vadd.f32 %v294, %v378
  %v380 = vpop.f32.mrf.mxu0
  %v381 = vpop.f32.mrf.mxu0
  %v382 = vadd.f32 %v294, %v381
  %v383 = vpop.f32.mrf.mxu0
  %384 = vmatprep.mubr.bf16.mxu0 0
  %385 = vmatmul.mubr.bf16.gmra.mxu0 %v272
  %v386 = vpop.f32.mrf.mxu0
  %v387 = vadd.f32 %v294, %v386
  %v388 = vpop.f32.mrf.mxu0
  %v389 = vpop.f32.mrf.mxu0
  %v390 = vadd.f32 %v294, %v389
  %v391 = vpop.f32.mrf.mxu0
  %392 = vdwg.mxu0
  %v393 = vadd.f32 %v379, %v27
  %v394 = vadd.f32 %v382, %v28
  %v395 = vadd.f32 %v387, %v29
  %v396 = vadd.f32 %v390, %v30
  %397 = vst [vmem:[%s7] sm:$0xff] %v393
  %398 = vst [vmem:[%s7 + $0x8] sm:$0xff] %v394
  %399 = vst [vmem:[%s7 + $0x10] sm:$0xff] %v395
  %400 = vst [vmem:[%s7 + $0x18] sm:$0xff] %v396
  // Predicated region
  $region30: #{_lambda_.29} parent=0 // pred_check
    _
  $region31: #{_lambda_.29} parent=0 // pred_check_branch
    %402 = sbr.rel (0) target = $region33
  $region32: #{_lambda_.29} parent=0 // pred_region
    _
  $region33: #{_lambda_.29} parent=0 // pred_fallthru
    _
  // Predicated region
  $region34: #{_lambda_.29} parent=0 // pred_check
    _
  $region35: #{_lambda_.29} parent=0 // pred_check_branch
    %404 = sbr.rel (0) target = $region37
  $region36: #{_lambda_.29} parent=0 // pred_region
    _
  $region37: #{_lambda_.29} parent=0 // pred_fallthru
    _

// kernel: _lambda_.28
$region0: #{_lambda_.28}
  #allocation0 [shape = 'u32[]', space=smem, size = 0x4, offset = 0x4, fixed_abs, tag = 'smem constant byte address 0x4 - core index']
  #allocation1 [shape = 'u32[144,128]{1,0:T(1,128)}', space=vmem, size = 0x12000, scoped, tag = 'internal scratch']
  #allocation2 [shape = 'f32[32,128]{1,0:T(8,128)}', space=vmem, size = 0x4000, scoped, tag = 'scratch operand']
  %s0 = inlined_call_operand.vmem [shape: bf16[32,128], index: 0, kind: input, shape index: {}]
  %s1 = inlined_call_operand.vmem [shape: bf16[128,128], index: 1, kind: input, shape index: {}]
  %s2 = inlined_call_operand.vmem [shape: f32[1,128], index: 2, kind: input, shape index: {}]
  %s3 = inlined_call_operand.vmem [shape: f32[32,128], index: 3, kind: input, shape index: {}]
  %s4 = inlined_call_operand.vmem [shape: f32[32,128], index: 4, kind: output, shape index: {}]
  %s5 = sld [smem:[#allocation0]]
  $region34: #{_lambda_.28} parent=0
    _
  %s7 = ssub.s32 1, %s5
  %s8 = scalar_select 0, %s7, %s5
  // Predicated region
  $region2: #{_lambda_.28} parent=0 // pred_check
    _
  $region3: #{_lambda_.28} parent=0 // pred_check_branch
    %10 = sbr.rel (0) target = $region5
  $region4: #{_lambda_.28} parent=0 // pred_region
    _
  $region5: #{_lambda_.28} parent=0 // pred_fallthru
    _
  // Predicated region
  $region6: #{_lambda_.28} parent=0 // pred_check
    _
  $region7: #{_lambda_.28} parent=0 // pred_check_branch
    %12 = sbr.rel (0) target = $region9
  $region8: #{_lambda_.28} parent=0 // pred_region
    _
  $region9: #{_lambda_.28} parent=0 // pred_fallthru
    _
  // Predicated region
  $region10: #{_lambda_.28} parent=0 // pred_check
    _
  $region11: #{_lambda_.28} parent=0 // pred_check_branch
    %14 = sbr.rel (0) target = $region13
  $region12: #{_lambda_.28} parent=0 // pred_region
    _
  $region13: #{_lambda_.28} parent=0 // pred_fallthru
    _
  // Predicated region
  $region14: #{_lambda_.28} parent=0 // pred_check
    _
  $region15: #{_lambda_.28} parent=0 // pred_check_branch
    %16 = sbr.rel (0) target = $region17
  $region16: #{_lambda_.28} parent=0 // pred_region
    _
  $region17: #{_lambda_.28} parent=0 // pred_fallthru
    _
  %p18 = scmp.eq.s32.totalorder 0, 0
  // Predicated region
  $region18: #{_lambda_.28} parent=0 // pred_check
    %p19 = pneg %p18
  $region19: #{_lambda_.28} parent=0 // pred_check_branch
    %21 = sbr.rel (%p19) target = $region21
  $region20: #{_lambda_.28} parent=0 // pred_region
    %22 = vst [vmem:[#allocation2] sm:$0xff] 0.0
    %23 = vst [vmem:[#allocation2 + $0x8] sm:$0xff] 0.0
    %24 = vst [vmem:[#allocation2 + $0x10] sm:$0xff] 0.0
    %25 = vst [vmem:[#allocation2 + $0x18] sm:$0xff] 0.0
  $region21: #{_lambda_.28} parent=0 // pred_fallthru
    _
  %v26 = vld [vmem:[#allocation2] sm:$0xff]
  %v27 = vld [vmem:[#allocation2 + $0x8] sm:$0xff]
  %v28 = vld [vmem:[#allocation2 + $0x10] sm:$0xff]
  %v29 = vld [vmem:[#allocation2 + $0x18] sm:$0xff]
  %v30 = vld [vmem:[%s0] sm:$0xf]
  %v31 = vld [vmem:[%s0 + $0x4] sm:$0xf]
  %v32 = vld [vmem:[%s0 + $0x8] sm:$0xf]
  %v33 = vld [vmem:[%s0 + $0xc] sm:$0xf]
  %v34 = vld [vmem:[%s1] sm:$0xf]
  %v35 = vld [vmem:[%s1 + $0x4] sm:$0xf]
  %v36 = vld [vmem:[%s1 + $0x8] sm:$0xf]
  %v37 = vld [vmem:[%s1 + $0xc] sm:$0xf]
  %v38 = vld [vmem:[%s1 + $0x10] sm:$0xf]
  %v39 = vld [vmem:[%s1 + $0x14] sm:$0xf]
  %v40 = vld [vmem:[%s1 + $0x18] sm:$0xf]
  %v41 = vld [vmem:[%s1 + $0x1c] sm:$0xf]
  %v42 = vld [vmem:[%s1 + $0x20] sm:$0xf]
  %v43 = vld [vmem:[%s1 + $0x24] sm:$0xf]
  %v44 = vld [vmem:[%s1 + $0x28] sm:$0xf]
  %v45 = vld [vmem:[%s1 + $0x2c] sm:$0xf]
  %v46 = vld [vmem:[%s1 + $0x30] sm:$0xf]
  %v47 = vld [vmem:[%s1 + $0x34] sm:$0xf]
  %v48 = vld [vmem:[%s1 + $0x38] sm:$0xf]
  %v49 = vld [vmem:[%s1 + $0x3c] sm:$0xf]
  %v54 = vunpack.c.l.b16 %v30
  %v55 = vunpack.c.l.b16 %v31
  %v56 = vunpack.c.l.b16 %v32
  %v57 = vunpack.c.l.b16 %v33
  %v58 = vpack.c.b16 %v55, %v54
  %v59 = vpack.c.b16 %v57, %v56
  %v78 = vunpack.c.l.b16 %v34
  %v79 = vunpack.c.l.b16 %v35
  %v80 = vunpack.c.l.b16 %v36
  %v81 = vunpack.c.l.b16 %v37
  %v82 = vunpack.c.l.b16 %v38
  %v83 = vunpack.c.l.b16 %v39
  %v84 = vunpack.c.l.b16 %v40
  %v85 = vunpack.c.l.b16 %v41
  %v86 = vunpack.c.l.b16 %v42
  %v87 = vunpack.c.l.b16 %v43
  %v88 = vunpack.c.l.b16 %v44
  %v89 = vunpack.c.l.b16 %v45
  %v90 = vunpack.c.l.b16 %v46
  %v91 = vunpack.c.l.b16 %v47
  %v92 = vunpack.c.l.b16 %v48
  %v93 = vunpack.c.l.b16 %v49
  %v94 = vpack.c.b16 %v79, %v78
  %v95 = vpack.c.b16 %v81, %v80
  %v96 = vpack.c.b16 %v83, %v82
  %v97 = vpack.c.b16 %v85, %v84
  %v98 = vpack.c.b16 %v87, %v86
  %v99 = vpack.c.b16 %v89, %v88
  %v100 = vpack.c.b16 %v91, %v90
  %v101 = vpack.c.b16 %v93, %v92
  %110 = vmatprep.subr.bf16.mxu0 0
  %111 = vmatpush1.bf16.msra.mxu0 %v101
  %112 = vmatprep.subr.bf16.mxu0 0
  %113 = vmatpush1.bf16.msra.mxu0 %v100
  %114 = vmatprep.subr.bf16.mxu0 0
  %115 = vmatpush1.bf16.msra.mxu0 %v99
  %116 = vmatprep.subr.bf16.mxu0 0
  %117 = vmatpush1.bf16.msra.mxu0 %v98
  %118 = vmatprep.subr.bf16.mxu0 0
  %119 = vmatpush1.bf16.msra.mxu0 %v97
  %120 = vmatprep.subr.bf16.mxu0 0
  %121 = vmatpush1.bf16.msra.mxu0 %v96
  %122 = vmatprep.subr.bf16.mxu0 0
  %123 = vmatpush1.bf16.msra.mxu0 %v95
  %124 = vmatprep.subr.bf16.mxu0 0
  %125 = vmatpush1.bf16.msra.mxu0 %v94
  %126 = vmatprep.subr.bf16.mxu0 0
  %127 = vmatpush2.bf16.msra.mxu0 0
  %128 = vmatprep.subr.bf16.mxu0 0
  %129 = vmatpush2.bf16.msra.mxu0 0
  %130 = vmatprep.subr.bf16.mxu0 0
  %131 = vmatpush2.bf16.msra.mxu0 0
  %132 = vmatprep.subr.bf16.mxu0 0
  %133 = vmatpush2.bf16.msra.mxu0 0
  %134 = vmatprep.subr.bf16.mxu0 0
  %135 = vmatpush2.bf16.msra.mxu0 0
  %136 = vmatprep.subr.bf16.mxu0 0
  %137 = vmatpush2.bf16.msra.mxu0 0
  %138 = vmatprep.subr.bf16.mxu0 0
  %139 = vmatpush2.bf16.msra.mxu0 0
  %140 = vmatprep.subr.bf16.mxu0 0
  %141 = vmatpush2.bf16.msra.mxu0 0
  %142 = vmatprep.mubr.bf16.mxu0 0
  %143 = vmatmul.mubr.bf16.gmra.mxu0 %v58
  %v144 = vpop.f32.mrf.mxu0
  %v145 = vadd.f32 0.0, %v144
  %v146 = vpop.f32.mrf.mxu0
  %v147 = vpop.f32.mrf.mxu0
  %v148 = vadd.f32 0.0, %v147
  %v149 = vpop.f32.mrf.mxu0
  %150 = vmatprep.mubr.bf16.mxu0 0
  %151 = vmatmul.mubr.bf16.gmra.mxu0 %v59
  %v152 = vpop.f32.mrf.mxu0
  %v153 = vadd.f32 0.0, %v152
  %v154 = vpop.f32.mrf.mxu0
  %v155 = vpop.f32.mrf.mxu0
  %v156 = vadd.f32 0.0, %v155
  %v157 = vpop.f32.mrf.mxu0
  %158 = vdwg.mxu0
  %v159 = vadd.f32 %v26, %v145
  %v160 = vadd.f32 %v27, %v148
  %v161 = vadd.f32 %v28, %v153
  %v162 = vadd.f32 %v29, %v156
  %163 = vst [vmem:[#allocation2] sm:$0xff] %v159
  %164 = vst [vmem:[#allocation2 + $0x8] sm:$0xff] %v160
  %165 = vst [vmem:[#allocation2 + $0x10] sm:$0xff] %v161
  %166 = vst [vmem:[#allocation2 + $0x18] sm:$0xff] %v162
  // Predicated region
  $region22: #{_lambda_.28} parent=0 // pred_check
    %p167 = pneg %p18
  $region23: #{_lambda_.28} parent=0 // pred_check_branch
    %169 = sbr.rel (%p167) target = $region25
  $region24: #{_lambda_.28} parent=0 // pred_region
    %v170 = vld [vmem:[#allocation2] sm:$0xff]
    %v171 = vld [vmem:[#allocation2 + $0x8] sm:$0xff]
    %v172 = vld [vmem:[#allocation2 + $0x10] sm:$0xff]
    %v173 = vld [vmem:[#allocation2 + $0x18] sm:$0xff]
    %v174 = vld [vmem:[%s2] sm:$0x1]
    %v176 = vlaneseq
    %v177 = vshrl.u32 %v176, 7
    %v178 = vsub.s32 0, %v177
    %v179 = vrot.slane %v174, %v178
    %v181 = vadd.f32 %v170, %v179
    %v182 = vadd.f32 %v171, %v179
    %v183 = vadd.f32 %v172, %v179
    %v184 = vadd.f32 %v173, %v179
    %v185 = vld [vmem:[%s3] sm:$0xff]
    %v186 = vld [vmem:[%s3 + $0x8] sm:$0xff]
    %v187 = vld [vmem:[%s3 + $0x10] sm:$0xff]
    %v188 = vld [vmem:[%s3 + $0x18] sm:$0xff]
    %v189 = vadd.f32 %v181, %v185
    %v190 = vadd.f32 %v182, %v186
    %v191 = vadd.f32 %v183, %v187
    %v192 = vadd.f32 %v184, %v188
    %193 = vst [vmem:[%s4] sm:$0xff] %v189
    %194 = vst [vmem:[%s4 + $0x8] sm:$0xff] %v190
    %195 = vst [vmem:[%s4 + $0x10] sm:$0xff] %v191
    %196 = vst [vmem:[%s4 + $0x18] sm:$0xff] %v192
  $region25: #{_lambda_.28} parent=0 // pred_fallthru
    _
  // Predicated region
  $region26: #{_lambda_.28} parent=0 // pred_check
    _
  $region27: #{_lambda_.28} parent=0 // pred_check_branch
    %198 = sbr.rel (0) target = $region29
  $region28: #{_lambda_.28} parent=0 // pred_region
    _
  $region29: #{_lambda_.28} parent=0 // pred_fallthru
    _
  // Predicated region
  $region30: #{_lambda_.28} parent=0 // pred_check
    _
  $region31: #{_lambda_.28} parent=0 // pred_check_branch
    %200 = sbr.rel (0) target = $region33
  $region32: #{_lambda_.28} parent=0 // pred_region
    _
  $region33: #{_lambda_.28} parent=0 // pred_fallthru
    _

// kernel: _lambda_.33
$region0: #{_lambda_.33}
  #allocation0 [shape = 'u32[]', space=smem, size = 0x4, offset = 0x4, fixed_abs, tag = 'smem constant byte address 0x4 - core index']
  #allocation1 [shape = 'u32[144,128]{1,0:T(1,128)}', space=vmem, size = 0x12000, scoped, tag = 'internal scratch']
  #allocation2 [shape = 'f32[32,128]{1,0:T(8,128)}', space=vmem, size = 0x4000, scoped, tag = 'scratch operand']
  %s0 = inlined_call_operand.vmem [shape: bf16[32,384], index: 0, kind: input, shape index: {}]
  %s1 = inlined_call_operand.vmem [shape: bf16[384,128], index: 1, kind: input, shape index: {}]
  %s2 = inlined_call_operand.vmem [shape: f32[1,128], index: 2, kind: input, shape index: {}]
  %s3 = inlined_call_operand.vmem [shape: f32[32,128], index: 3, kind: output, shape index: {}]
  %s4 = sld [smem:[#allocation0]]
  $region30: #{_lambda_.33} parent=0
    _
  %s6 = ssub.s32 1, %s4
  %s7 = scalar_select 0, %s6, %s4
  // Predicated region
  $region2: #{_lambda_.33} parent=0 // pred_check
    _
  $region3: #{_lambda_.33} parent=0 // pred_check_branch
    %9 = sbr.rel (0) target = $region5
  $region4: #{_lambda_.33} parent=0 // pred_region
    _
  $region5: #{_lambda_.33} parent=0 // pred_fallthru
    _
  // Predicated region
  $region6: #{_lambda_.33} parent=0 // pred_check
    _
  $region7: #{_lambda_.33} parent=0 // pred_check_branch
    %11 = sbr.rel (0) target = $region9
  $region8: #{_lambda_.33} parent=0 // pred_region
    _
  $region9: #{_lambda_.33} parent=0 // pred_fallthru
    _
  // Predicated region
  $region10: #{_lambda_.33} parent=0 // pred_check
    _
  $region11: #{_lambda_.33} parent=0 // pred_check_branch
    %13 = sbr.rel (0) target = $region13
  $region12: #{_lambda_.33} parent=0 // pred_region
    _
  $region13: #{_lambda_.33} parent=0 // pred_fallthru
    _
  %p15 = scmp.eq.s32.totalorder 0, 0
  // Predicated region
  $region14: #{_lambda_.33} parent=0 // pred_check
    %p16 = pneg %p15
  $region15: #{_lambda_.33} parent=0 // pred_check_branch
    %18 = sbr.rel (%p16) target = $region17
  $region16: #{_lambda_.33} parent=0 // pred_region
    %19 = vst [vmem:[#allocation2] sm:$0xff] 0.0
    %20 = vst [vmem:[#allocation2 + $0x8] sm:$0xff] 0.0
    %21 = vst [vmem:[#allocation2 + $0x10] sm:$0xff] 0.0
    %22 = vst [vmem:[#allocation2 + $0x18] sm:$0xff] 0.0
  $region17: #{_lambda_.33} parent=0 // pred_fallthru
    _
  %v23 = vld [vmem:[#allocation2] sm:$0xff]
  %v24 = vld [vmem:[#allocation2 + $0x8] sm:$0xff]
  %v25 = vld [vmem:[#allocation2 + $0x10] sm:$0xff]
  %v26 = vld [vmem:[#allocation2 + $0x18] sm:$0xff]
  %v27 = vld [vmem:[%s0] sm:$0xff]
  %v28 = vld [vmem:[%s0 + $0x8] sm:$0xf]
  %v29 = vld [vmem:[%s0 + $0xc] sm:$0xff]
  %v30 = vld [vmem:[%s0 + $0x14] sm:$0xf]
  %v31 = vld [vmem:[%s0 + $0x18] sm:$0xff]
  %v32 = vld [vmem:[%s0 + $0x20] sm:$0xf]
  %v33 = vld [vmem:[%s0 + $0x24] sm:$0xff]
  %v34 = vld [vmem:[%s0 + $0x2c] sm:$0xf]
  %v35 = vld [vmem:[%s1] sm:$0xf]
  %v36 = vld [vmem:[%s1 + $0x4] sm:$0xf]
  %v37 = vld [vmem:[%s1 + $0x8] sm:$0xf]
  %v38 = vld [vmem:[%s1 + $0xc] sm:$0xf]
  %v39 = vld [vmem:[%s1 + $0x10] sm:$0xf]
  %v40 = vld [vmem:[%s1 + $0x14] sm:$0xf]
  %v41 = vld [vmem:[%s1 + $0x18] sm:$0xf]
  %v42 = vld [vmem:[%s1 + $0x1c] sm:$0xf]
  %v43 = vld [vmem:[%s1 + $0x20] sm:$0xf]
  %v44 = vld [vmem:[%s1 + $0x24] sm:$0xf]
  %v45 = vld [vmem:[%s1 + $0x28] sm:$0xf]
  %v46 = vld [vmem:[%s1 + $0x2c] sm:$0xf]
  %v47 = vld [vmem:[%s1 + $0x30] sm:$0xf]
  %v48 = vld [vmem:[%s1 + $0x34] sm:$0xf]
  %v49 = vld [vmem:[%s1 + $0x38] sm:$0xf]
  %v50 = vld [vmem:[%s1 + $0x3c] sm:$0xf]
  %v51 = vld [vmem:[%s1 + $0x40] sm:$0xf]
  %v52 = vld [vmem:[%s1 + $0x44] sm:$0xf]
  %v53 = vld [vmem:[%s1 + $0x48] sm:$0xf]
  %v54 = vld [vmem:[%s1 + $0x4c] sm:$0xf]
  %v55 = vld [vmem:[%s1 + $0x50] sm:$0xf]
  %v56 = vld [vmem:[%s1 + $0x54] sm:$0xf]
  %v57 = vld [vmem:[%s1 + $0x58] sm:$0xf]
  %v58 = vld [vmem:[%s1 + $0x5c] sm:$0xf]
  %v59 = vld [vmem:[%s1 + $0x60] sm:$0xf]
  %v60 = vld [vmem:[%s1 + $0x64] sm:$0xf]
  %v61 = vld [vmem:[%s1 + $0x68] sm:$0xf]
  %v62 = vld [vmem:[%s1 + $0x6c] sm:$0xf]
  %v63 = vld [vmem:[%s1 + $0x70] sm:$0xf]
  %v64 = vld [vmem:[%s1 + $0x74] sm:$0xf]
  %v65 = vld [vmem:[%s1 + $0x78] sm:$0xf]
  %v66 = vld [vmem:[%s1 + $0x7c] sm:$0xf]
  %v67 = vld [vmem:[%s1 + $0x80] sm:$0xf]
  %v68 = vld [vmem:[%s1 + $0x84] sm:$0xf]
  %v69 = vld [vmem:[%s1 + $0x88] sm:$0xf]
  %v70 = vld [vmem:[%s1 + $0x8c] sm:$0xf]
  %v71 = vld [vmem:[%s1 + $0x90] sm:$0xf]
  %v72 = vld [vmem:[%s1 + $0x94] sm:$0xf]
  %v73 = vld [vmem:[%s1 + $0x98] sm:$0xf]
  %v74 = vld [vmem:[%s1 + $0x9c] sm:$0xf]
  %v75 = vld [vmem:[%s1 + $0xa0] sm:$0xf]
  %v76 = vld [vmem:[%s1 + $0xa4] sm:$0xf]
  %v77 = vld [vmem:[%s1 + $0xa8] sm:$0xf]
  %v78 = vld [vmem:[%s1 + $0xac] sm:$0xf]
  %v79 = vld [vmem:[%s1 + $0xb0] sm:$0xf]
  %v80 = vld [vmem:[%s1 + $0xb4] sm:$0xf]
  %v81 = vld [vmem:[%s1 + $0xb8] sm:$0xf]
  %v82 = vld [vmem:[%s1 + $0xbc] sm:$0xf]
  %v91 = vunpack.c.l.b16 %v27
  %v92 = vunpack.c.h.b16 %v27
  %v93 = vunpack.c.l.b16 %v28
  %v94 = vunpack.c.l.b16 %v29
  %v95 = vunpack.c.h.b16 %v29
  %v96 = vunpack.c.l.b16 %v30
  %v97 = vunpack.c.l.b16 %v31
  %v98 = vunpack.c.h.b16 %v31
  %v99 = vunpack.c.l.b16 %v32
  %v100 = vunpack.c.l.b16 %v33
  %v101 = vunpack.c.h.b16 %v33
  %v102 = vunpack.c.l.b16 %v34
  %v103 = vpack.c.b16 %v94, %v91
  %v104 = vpack.c.b16 %v95, %v92
  %v105 = vpack.c.b16 %v96, %v93
  %v106 = vpack.c.b16 %v100, %v97
  %v107 = vpack.c.b16 %v101, %v98
  %v108 = vpack.c.b16 %v102, %v99
  %v163 = vunpack.c.l.b16 %v35
  %v164 = vunpack.c.l.b16 %v36
  %v165 = vunpack.c.l.b16 %v37
  %v166 = vunpack.c.l.b16 %v38
  %v167 = vunpack.c.l.b16 %v39
  %v168 = vunpack.c.l.b16 %v40
  %v169 = vunpack.c.l.b16 %v41
  %v170 = vunpack.c.l.b16 %v42
  %v171 = vunpack.c.l.b16 %v43
  %v172 = vunpack.c.l.b16 %v44
  %v173 = vunpack.c.l.b16 %v45
  %v174 = vunpack.c.l.b16 %v46
  %v175 = vunpack.c.l.b16 %v47
  %v176 = vunpack.c.l.b16 %v48
  %v177 = vunpack.c.l.b16 %v49
  %v178 = vunpack.c.l.b16 %v50
  %v179 = vunpack.c.l.b16 %v51
  %v180 = vunpack.c.l.b16 %v52
  %v181 = vunpack.c.l.b16 %v53
  %v182 = vunpack.c.l.b16 %v54
  %v183 = vunpack.c.l.b16 %v55
  %v184 = vunpack.c.l.b16 %v56
  %v185 = vunpack.c.l.b16 %v57
  %v186 = vunpack.c.l.b16 %v58
  %v187 = vunpack.c.l.b16 %v59
  %v188 = vunpack.c.l.b16 %v60
  %v189 = vunpack.c.l.b16 %v61
  %v190 = vunpack.c.l.b16 %v62
  %v191 = vunpack.c.l.b16 %v63
  %v192 = vunpack.c.l.b16 %v64
  %v193 = vunpack.c.l.b16 %v65
  %v194 = vunpack.c.l.b16 %v66
  %v195 = vunpack.c.l.b16 %v67
  %v196 = vunpack.c.l.b16 %v68
  %v197 = vunpack.c.l.b16 %v69
  %v198 = vunpack.c.l.b16 %v70
  %v199 = vunpack.c.l.b16 %v71
  %v200 = vunpack.c.l.b16 %v72
  %v201 = vunpack.c.l.b16 %v73
  %v202 = vunpack.c.l.b16 %v74
  %v203 = vunpack.c.l.b16 %v75
  %v204 = vunpack.c.l.b16 %v76
  %v205 = vunpack.c.l.b16 %v77
  %v206 = vunpack.c.l.b16 %v78
  %v207 = vunpack.c.l.b16 %v79
  %v208 = vunpack.c.l.b16 %v80
  %v209 = vunpack.c.l.b16 %v81
  %v210 = vunpack.c.l.b16 %v82
  %v211 = vpack.c.b16 %v164, %v163
  %v212 = vpack.c.b16 %v166, %v165
  %v213 = vpack.c.b16 %v168, %v167
  %v214 = vpack.c.b16 %v170, %v169
  %v215 = vpack.c.b16 %v172, %v171
  %v216 = vpack.c.b16 %v174, %v173
  %v217 = vpack.c.b16 %v176, %v175
  %v218 = vpack.c.b16 %v178, %v177
  %v219 = vpack.c.b16 %v180, %v179
  %v220 = vpack.c.b16 %v182, %v181
  %v221 = vpack.c.b16 %v184, %v183
  %v222 = vpack.c.b16 %v186, %v185
  %v223 = vpack.c.b16 %v188, %v187
  %v224 = vpack.c.b16 %v190, %v189
  %v225 = vpack.c.b16 %v192, %v191
  %v226 = vpack.c.b16 %v194, %v193
  %v227 = vpack.c.b16 %v196, %v195
  %v228 = vpack.c.b16 %v198, %v197
  %v229 = vpack.c.b16 %v200, %v199
  %v230 = vpack.c.b16 %v202, %v201
  %v231 = vpack.c.b16 %v204, %v203
  %v232 = vpack.c.b16 %v206, %v205
  %v233 = vpack.c.b16 %v208, %v207
  %v234 = vpack.c.b16 %v210, %v209
  %259 = vmatprep.subr.bf16.mxu0 0
  %260 = vmatpush1.bf16.msra.mxu0 %v218
  %261 = vmatprep.subr.bf16.mxu0 0
  %262 = vmatpush1.bf16.msra.mxu0 %v217
  %263 = vmatprep.subr.bf16.mxu0 0
  %264 = vmatpush1.bf16.msra.mxu0 %v216
  %265 = vmatprep.subr.bf16.mxu0 0
  %266 = vmatpush1.bf16.msra.mxu0 %v215
  %267 = vmatprep.subr.bf16.mxu0 0
  %268 = vmatpush1.bf16.msra.mxu0 %v214
  %269 = vmatprep.subr.bf16.mxu0 0
  %270 = vmatpush1.bf16.msra.mxu0 %v213
  %271 = vmatprep.subr.bf16.mxu0 0
  %272 = vmatpush1.bf16.msra.mxu0 %v212
  %273 = vmatprep.subr.bf16.mxu0 0
  %274 = vmatpush1.bf16.msra.mxu0 %v211
  %275 = vmatprep.subr.bf16.mxu0 0
  %276 = vmatpush2.bf16.msra.mxu0 %v226
  %277 = vmatprep.subr.bf16.mxu0 0
  %278 = vmatpush2.bf16.msra.mxu0 %v225
  %279 = vmatprep.subr.bf16.mxu0 0
  %280 = vmatpush2.bf16.msra.mxu0 %v224
  %281 = vmatprep.subr.bf16.mxu0 0
  %282 = vmatpush2.bf16.msra.mxu0 %v223
  %283 = vmatprep.subr.bf16.mxu0 0
  %284 = vmatpush2.bf16.msra.mxu0 %v222
  %285 = vmatprep.subr.bf16.mxu0 0
  %286 = vmatpush2.bf16.msra.mxu0 %v221
  %287 = vmatprep.subr.bf16.mxu0 0
  %288 = vmatpush2.bf16.msra.mxu0 %v220
  %289 = vmatprep.subr.bf16.mxu0 0
  %290 = vmatpush2.bf16.msra.mxu0 %v219
  %291 = vmatprep.mubr.bf16.mxu0 %v104
  %292 = vmatmul.mubr.bf16.gmra.mxu0 %v103
  %v293 = vpop.f32.mrf.mxu0
  %v294 = vadd.f32 0.0, %v293
  %v295 = vpop.f32.mrf.mxu0
  %v296 = vpop.f32.mrf.mxu0
  %v297 = vadd.f32 0.0, %v296
  %v298 = vpop.f32.mrf.mxu0
  %299 = vmatprep.mubr.bf16.mxu0 %v107
  %300 = vmatmul.mubr.bf16.gmra.mxu0 %v106
  %v301 = vpop.f32.mrf.mxu0
  %v302 = vadd.f32 0.0, %v301
  %v303 = vpop.f32.mrf.mxu0
  %v304 = vpop.f32.mrf.mxu0
  %v305 = vadd.f32 0.0, %v304
  %v306 = vpop.f32.mrf.mxu0
  %307 = vdwg.mxu0
  %308 = vmatprep.subr.bf16.mxu0 0
  %309 = vmatpush1.bf16.msra.mxu0 %v234
  %310 = vmatprep.subr.bf16.mxu0 0
  %311 = vmatpush1.bf16.msra.mxu0 %v233
  %312 = vmatprep.subr.bf16.mxu0 0
  %313 = vmatpush1.bf16.msra.mxu0 %v232
  %314 = vmatprep.subr.bf16.mxu0 0
  %315 = vmatpush1.bf16.msra.mxu0 %v231
  %316 = vmatprep.subr.bf16.mxu0 0
  %317 = vmatpush1.bf16.msra.mxu0 %v230
  %318 = vmatprep.subr.bf16.mxu0 0
  %319 = vmatpush1.bf16.msra.mxu0 %v229
  %320 = vmatprep.subr.bf16.mxu0 0
  %321 = vmatpush1.bf16.msra.mxu0 %v228
  %322 = vmatprep.subr.bf16.mxu0 0
  %323 = vmatpush1.bf16.msra.mxu0 %v227
  %324 = vmatprep.subr.bf16.mxu0 0
  %325 = vmatpush2.bf16.msra.mxu0 0
  %326 = vmatprep.subr.bf16.mxu0 0
  %327 = vmatpush2.bf16.msra.mxu0 0
  %328 = vmatprep.subr.bf16.mxu0 0
  %329 = vmatpush2.bf16.msra.mxu0 0
  %330 = vmatprep.subr.bf16.mxu0 0
  %331 = vmatpush2.bf16.msra.mxu0 0
  %332 = vmatprep.subr.bf16.mxu0 0
  %333 = vmatpush2.bf16.msra.mxu0 0
  %334 = vmatprep.subr.bf16.mxu0 0
  %335 = vmatpush2.bf16.msra.mxu0 0
  %336 = vmatprep.subr.bf16.mxu0 0
  %337 = vmatpush2.bf16.msra.mxu0 0
  %338 = vmatprep.subr.bf16.mxu0 0
  %339 = vmatpush2.bf16.msra.mxu0 0
  %340 = vmatprep.mubr.bf16.mxu0 0
  %341 = vmatmul.mubr.bf16.gmra.mxu0 %v105
  %v342 = vpop.f32.mrf.mxu0
  %v343 = vadd.f32 %v294, %v342
  %v344 = vpop.f32.mrf.mxu0
  %v345 = vpop.f32.mrf.mxu0
  %v346 = vadd.f32 %v297, %v345
  %v347 = vpop.f32.mrf.mxu0
  %348 = vmatprep.mubr.bf16.mxu0 0
  %349 = vmatmul.mubr.bf16.gmra.mxu0 %v108
  %v350 = vpop.f32.mrf.mxu0
  %v351 = vadd.f32 %v302, %v350
  %v352 = vpop.f32.mrf.mxu0
  %v353 = vpop.f32.mrf.mxu0
  %v354 = vadd.f32 %v305, %v353
  %v355 = vpop.f32.mrf.mxu0
  %356 = vdwg.mxu0
  %v357 = vadd.f32 %v23, %v343
  %v358 = vadd.f32 %v24, %v346
  %v359 = vadd.f32 %v25, %v351
  %v360 = vadd.f32 %v26, %v354
  %361 = vst [vmem:[#allocation2] sm:$0xff] %v357
  %362 = vst [vmem:[#allocation2 + $0x8] sm:$0xff] %v358
  %363 = vst [vmem:[#allocation2 + $0x10] sm:$0xff] %v359
  %364 = vst [vmem:[#allocation2 + $0x18] sm:$0xff] %v360
  // Predicated region
  $region18: #{_lambda_.33} parent=0 // pred_check
    %p365 = pneg %p15
  $region19: #{_lambda_.33} parent=0 // pred_check_branch
    %367 = sbr.rel (%p365) target = $region21
  $region20: #{_lambda_.33} parent=0 // pred_region
    %v368 = vld [vmem:[#allocation2] sm:$0xff]
    %v369 = vld [vmem:[#allocation2 + $0x8] sm:$0xff]
    %v370 = vld [vmem:[#allocation2 + $0x10] sm:$0xff]
    %v371 = vld [vmem:[#allocation2 + $0x18] sm:$0xff]
    %v372 = vld [vmem:[%s2] sm:$0x1]
    %v374 = vlaneseq
    %v375 = vshrl.u32 %v374, 7
    %v376 = vsub.s32 0, %v375
    %v377 = vrot.slane %v372, %v376
    %v379 = vadd.f32 %v368, %v377
    %v380 = vadd.f32 %v369, %v377
    %v381 = vadd.f32 %v370, %v377
    %v382 = vadd.f32 %v371, %v377
    %v383 = vxor.u32 %v379, 2147483648
    %v384 = vxor.u32 %v380, 2147483648
    %v385 = vxor.u32 %v381, 2147483648
    %v386 = vxor.u32 %v382, 2147483648
    %v387 = vmul.f32 %v383, 1.442695
    %v388 = vpow.pop %v387
    %v389 = vmul.f32 %v384, 1.442695
    %v390 = vpow.pop %v389
    %v391 = vmul.f32 %v385, 1.442695
    %v392 = vpow.pop %v391
    %v393 = vmul.f32 %v386, 1.442695
    %v394 = vpow.pop %v393
    %v395 = vadd.f32 %v388, 1.0
    %v396 = vadd.f32 %v390, 1.0
    %v397 = vadd.f32 %v392, 1.0
    %v398 = vadd.f32 %v394, 1.0
    %v399 = vrcp.pop %v395
    %v400 = vmul.f32 1.0, %v399
    %v401 = vrcp.pop %v396
    %v402 = vmul.f32 1.0, %v401
    %v403 = vrcp.pop %v397
    %v404 = vmul.f32 1.0, %v403
    %v405 = vrcp.pop %v398
    %v406 = vmul.f32 1.0, %v405
    %v407 = vmul.f32 %v379, %v400
    %v408 = vmul.f32 %v380, %v402
    %v409 = vmul.f32 %v381, %v404
    %v410 = vmul.f32 %v382, %v406
    %411 = vst [vmem:[%s3] sm:$0xff] %v407
    %412 = vst [vmem:[%s3 + $0x8] sm:$0xff] %v408
    %413 = vst [vmem:[%s3 + $0x10] sm:$0xff] %v409
    %414 = vst [vmem:[%s3 + $0x18] sm:$0xff] %v410
  $region21: #{_lambda_.33} parent=0 // pred_fallthru
    _
  // Predicated region
  $region22: #{_lambda_.33} parent=0 // pred_check
    _
  $region23: #{_lambda_.33} parent=0 // pred_check_branch
    %416 = sbr.rel (0) target = $region25
  $region24: #{_lambda_.33} parent=0 // pred_region
    _
  $region25: #{_lambda_.33} parent=0 // pred_fallthru
    _
  // Predicated region
  $region26: #{_lambda_.33} parent=0 // pred_check
    _
  $region27: #{_lambda_.33} parent=0 // pred_check_branch
    %418 = sbr.rel (0) target = $region29
  $region28: #{_lambda_.33} parent=0 // pred_region
    _
  $region29: #{_lambda_.33} parent=0 // pred_fallthru
    _

// kernel: _lambda_.34
$region0: #{_lambda_.34}
  #allocation0 [shape = 'u32[]', space=smem, size = 0x4, offset = 0x4, fixed_abs, tag = 'smem constant byte address 0x4 - core index']
  #allocation1 [shape = 'u32[144,128]{1,0:T(1,128)}', space=vmem, size = 0x12000, scoped, tag = 'internal scratch']
  #allocation2 [shape = 'f32[32,128]{1,0:T(8,128)}', space=vmem, size = 0x4000, scoped, tag = 'scratch operand']
  %s0 = inlined_call_operand.vmem [shape: bf16[32,1536], index: 0, kind: input, shape index: {}]
  %s1 = inlined_call_operand.vmem [shape: bf16[1536,128], index: 1, kind: input, shape index: {}]
  %s2 = inlined_call_operand.vmem [shape: f32[1,128], index: 2, kind: input, shape index: {}]
  %s3 = inlined_call_operand.vmem [shape: f32[32,128], index: 3, kind: output, shape index: {}]
  %s4 = sld [smem:[#allocation0]]
  $region76: #{_lambda_.34} parent=0
    _
  %s6 = ssub.s32 1, %s4
  %s7 = scalar_select 0, %s6, %s4
  $region1: #{_lambda_.34} parent=0
    #allocation3 [shape = 'u8[65536]{0}', space=vmem, size = 0x10000, scoped, tag = 'input window, operand 0']
    loop: start=0, step=1, limit=5
    $region2: #{_lambda_.34} parent=1 // loop_pre_header
      _
    $region3: #{_lambda_.34} parent=1 // loop_header
      %s9 = sphi 0, %s13
      %p10 = scmp.ge.s32.totalorder %s9, 5
      %s16 = sphi 0, %s35
      %s17 = sphi 0, %s31
      %s18 = sphi 0, %s27
      %s19 = sphi 0, %s16
      %s20 = sphi 0, %s17
      %s21 = sphi 0, %s18
      %s22 = sphi 0, %s19
      %s23 = sphi 0, %s20
      %s24 = sphi 0, %s21
      %s40 = sphi 0, %s42
      %s43 = sphi 0, %s40
      %s44 = sphi 0, %s43
      %s60 = sphi 0, %s44
      %s68 = sphi 0, %s70
      %s71 = sphi 0, %s68
      %s72 = sphi 0, %s71
      %s88 = sphi 0, %s72
      %s94 = sphi 0, %s96
      %s97 = sphi 0, %s94
      %s98 = sphi 0, %s97
      %s114 = sphi 0, %s98
      %s122 = sphi 0, %s124
      %s125 = sphi 0, %s122
      %s126 = sphi 0, %s125
      %s142 = sphi 0, %s126
    $region4: #{_lambda_.34} parent=1 // loop_header_branch
      %12 = sbr.rel (%p10) target = $region8
    $region5: #{_lambda_.34} parent=1 // loop_body
      %s14 = ssub.s32 %s9, 1
      %s15 = ssub.s32 %s9, 2
      %s25 = sadd.s32 1, %s18
      %p26 = scmp.ge.s32.totalorder %s25, 3
      %s27 = scalar_select %p26, 0, %s25
      %s28 = sadd.s32 1, %s17
      %s29 = scalar_select %p26, %s28, %s17
      %p30 = scmp.ge.s32.totalorder %s29, 1
      %s31 = scalar_select %p30, 0, %s29
      %s32 = sadd.s32 1, %s16
      %s33 = scalar_select %p30, %s32, %s16
      %p34 = scmp.ge.s32.totalorder %s33, 1
      %s35 = scalar_select %p34, 0, %s33
      %s36 = ssub.s32 %s16, %s35
      %s37 = ssub.s32 %s18, %s27
      %s38 = sor.u32 %s36, %s37
      %p39 = scmp.eq.s32.totalorder %s38, 0
      %s41 = sadd.s32 %s40, 1
      %s42 = scalar_select %p39, %s40, %s41
      %p45 = pneg %p39
      %p46 = scmp.eq.s32.totalorder %s9, 2
      %p47 = por %p45, %p46
      %p48 = scmp.ne.s32.totalorder %s40, %s43
      %p49 = scmp.eq.s32.totalorder %s9, 0
      %p50 = por %p48, %p49
      %p51 = scmp.ne.s32.totalorder %s40, %s43
      %p52 = scmp.eq.s32.totalorder %s14, 2
      %p53 = por %p51, %p52
      %p54 = scmp.ne.s32.totalorder %s43, %s44
      %p55 = scmp.eq.s32.totalorder %s14, 0
      %p56 = por %p54, %p55
      %p57 = scmp.ne.s32.totalorder %s43, %s44
      %p58 = scmp.eq.s32.totalorder %s15, 2
      %p59 = por %p57, %p58
      %p61 = scmp.ne.s32.totalorder %s44, %s60
      %p62 = scmp.eq.s32.totalorder %s15, 0
      %p63 = por %p61, %p62
      %s64 = ssub.s32 %s18, %s27
      %s65 = ssub.s32 %s17, %s31
      %s66 = sor.u32 %s64, %s65
      %p67 = scmp.eq.s32.totalorder %s66, 0
      %s69 = sadd.s32 %s68, 1
      %s70 = scalar_select %p67, %s68, %s69
      %p73 = pneg %p67
      %p74 = scmp.eq.s32.totalorder %s9, 2
      %p75 = por %p73, %p74
      %p76 = scmp.ne.s32.totalorder %s68, %s71
      %p77 = scmp.eq.s32.totalorder %s9, 0
      %p78 = por %p76, %p77
      %p79 = scmp.ne.s32.totalorder %s68, %s71
      %p80 = scmp.eq.s32.totalorder %s14, 2
      %p81 = por %p79, %p80
      %p82 = scmp.ne.s32.totalorder %s71, %s72
      %p83 = scmp.eq.s32.totalorder %s14, 0
      %p84 = por %p82, %p83
      %p85 = scmp.ne.s32.totalorder %s71, %s72
      %p86 = scmp.eq.s32.totalorder %s15, 2
      %p87 = por %p85, %p86
      %p89 = scmp.ne.s32.totalorder %s72, %s88
      %p90 = scmp.eq.s32.totalorder %s15, 0
      %p91 = por %p89, %p90
      %s92 = ssub.s32 %s17, %s31
      %p93 = scmp.eq.s32.totalorder %s92, 0
      %s95 = sadd.s32 %s94, 1
      %s96 = scalar_select %p93, %s94, %s95
      %p99 = pneg %p93
      %p100 = scmp.eq.s32.totalorder %s9, 2
      %p101 = por %p99, %p100
      %p102 = scmp.ne.s32.totalorder %s94, %s97
      %p103 = scmp.eq.s32.totalorder %s9, 0
      %p104 = por %p102, %p103
      %p105 = scmp.ne.s32.totalorder %s94, %s97
      %p106 = scmp.eq.s32.totalorder %s14, 2
      %p107 = por %p105, %p106
      %p108 = scmp.ne.s32.totalorder %s97, %s98
      %p109 = scmp.eq.s32.totalorder %s14, 0
      %p110 = por %p108, %p109
      %p111 = scmp.ne.s32.totalorder %s97, %s98
      %p112 = scmp.eq.s32.totalorder %s15, 2
      %p113 = por %p111, %p112
      %p115 = scmp.ne.s32.totalorder %s98, %s114
      %p116 = scmp.eq.s32.totalorder %s15, 0
      %p117 = por %p115, %p116
      %s118 = ssub.s32 %s16, %s35
      %s119 = ssub.s32 %s17, %s31
      %s120 = sor.u32 %s118, %s119
      %p121 = scmp.eq.s32.totalorder %s120, 0
      %s123 = sadd.s32 %s122, 1
      %s124 = scalar_select %p121, %s122, %s123
      %p127 = pneg %p121
      %p128 = scmp.eq.s32.totalorder %s9, 2
      %p129 = por %p127, %p128
      %p130 = scmp.ne.s32.totalorder %s122, %s125
      %p131 = scmp.eq.s32.totalorder %s9, 0
      %p132 = por %p130, %p131
      %p133 = scmp.ne.s32.totalorder %s122, %s125
      %p134 = scmp.eq.s32.totalorder %s14, 2
      %p135 = por %p133, %p134
      %p136 = scmp.ne.s32.totalorder %s125, %s126
      %p137 = scmp.eq.s32.totalorder %s14, 0
      %p138 = por %p136, %p137
      %p139 = scmp.ne.s32.totalorder %s125, %s126
      %p140 = scmp.eq.s32.totalorder %s15, 2
      %p141 = por %p139, %p140
      %p143 = scmp.ne.s32.totalorder %s126, %s142
      %p144 = scmp.eq.s32.totalorder %s15, 0
      %p145 = por %p143, %p144
      %p146 = scmp.le.s32.totalorder 1, %s9
      %p147 = scmp.lt.s32.totalorder %s9, 4
      %p148 = pnand %p146, %p147
      %p149 = pneg %p148
      // Predicated region
      $region9: #{_lambda_.34} parent=5 // pred_check
        _
      $region10: #{_lambda_.34} parent=5 // pred_check_branch
        %151 = sbr.rel (%p148) target = $region12
      $region11: #{_lambda_.34} parent=5 // pred_region
        %s152 = ssub.s32 %s9, 1
        // Predicated region
        $region13: #{_lambda_.34} parent=11 // pred_check
          %p153 = pneg %p110
        $region14: #{_lambda_.34} parent=11 // pred_check_branch
          %155 = sbr.rel (%p153) target = $region16
        $region15: #{_lambda_.34} parent=11 // pred_region
          %p156 = scmp.lt.s32.totalorder %s20, 0
          %s157 = scalar_select %p156, %s20, 0
          %s158 = scalar_lea.vmem %s2, %s157
        $region16: #{_lambda_.34} parent=11 // pred_fallthru
          _
      $region12: #{_lambda_.34} parent=5 // pred_fallthru
        _
      %p159 = scmp.lt.s32.totalorder %s9, 3
      // Predicated region
      $region17: #{_lambda_.34} parent=5 // pred_check
        %p160 = pneg %p159
      $region18: #{_lambda_.34} parent=5 // pred_check_branch
        %162 = sbr.rel (%p160) target = $region20
      $region19: #{_lambda_.34} parent=5 // pred_region
        // Predicated region
        $region21: #{_lambda_.34} parent=19 // pred_check
          %p163 = pneg %p50
        $region22: #{_lambda_.34} parent=19 // pred_check_branch
          %165 = sbr.rel (%p163) target = $region24
        $region23: #{_lambda_.34} parent=19 // pred_region
          %s166 = sand.u32 %s40, 1
          %s167 = sand.u32 %s40, 1
          %s168 = smul.addr %s167, 64
          %s169 = scalar_lea.vmem [#allocation3], %s168
          %s170 = smul.u32 4, %s16
          %s171 = smul.u32 4, %s18
          %s172 = smul.addr %s170, 12
          %s173 = sadd.s32 %s171, %s172
          %s174 = smul.addr %s173, 4
          %s175 = scalar_lea.vmem %s0, %s174
          // Predicated region
          $region25: #{_lambda_.34} parent=23 // pred_check
            _
          $region26: #{_lambda_.34} parent=23 // pred_check_branch
            %177 = sbr.rel (0) target = $region28
          $region27: #{_lambda_.34} parent=23 // pred_region
            // Predicated region
            $region29: #{_lambda_.34} parent=27 // pred_check
              _
            $region30: #{_lambda_.34} parent=27 // pred_check_branch
              %179 = sbr.rel (0) target = $region32
            $region31: #{_lambda_.34} parent=27 // pred_region
              loop: start=0, step=1, limit=1
              $region33: #{_lambda_.34} parent=31 // loop_pre_header
                _
              $region34: #{_lambda_.34} parent=31 // loop_header
                %s181 = sphi 0, %s185
                %p182 = scmp.ge.s32.totalorder %s181, 1
                %s186 = sphi %s175, %s175
                %s187 = sphi %s169, %s169
              $region35: #{_lambda_.34} parent=31 // loop_header_branch
                %184 = sbr.rel (%p182) target = $region39
              $region36: #{_lambda_.34} parent=31 // loop_body
                %v188 = vld [vmem:[%s186] sm:$0xff]
                %189 = vst [vmem:[%s187] sm:$0xff] %v188
                %v190 = vld [vmem:[%s186 + $0x8] sm:$0xff]
                %191 = vst [vmem:[%s187 + $0x8] sm:$0xff] %v190
                %v192 = vld [vmem:[%s186 + $0x30] sm:$0xff]
                %193 = vst [vmem:[%s187 + $0x10] sm:$0xff] %v192
                %v194 = vld [vmem:[%s186 + $0x38] sm:$0xff]
                %195 = vst [vmem:[%s187 + $0x18] sm:$0xff] %v194
                %v196 = vld [vmem:[%s186 + $0x60] sm:$0xff]
                %197 = vst [vmem:[%s187 + $0x20] sm:$0xff] %v196
                %v198 = vld [vmem:[%s186 + $0x68] sm:$0xff]
                %199 = vst [vmem:[%s187 + $0x28] sm:$0xff] %v198
                %v200 = vld [vmem:[%s186 + $0x90] sm:$0xff]
                %201 = vst [vmem:[%s187 + $0x30] sm:$0xff] %v200
                %v202 = vld [vmem:[%s186 + $0x98] sm:$0xff]
                %203 = vst [vmem:[%s187 + $0x38] sm:$0xff] %v202
              $region37: #{_lambda_.34} parent=31 // loop_footer
                %s185 = sadd.s32 1, %s181
              $region38: #{_lambda_.34} parent=31 // loop_footer_branch
                %180 = sbr.rel target = $region34
              $region39: #{_lambda_.34} parent=31 // loop_exit
                _
            $region32: #{_lambda_.34} parent=27 // pred_fallthru
              _
            // Predicated region
            $region40: #{_lambda_.34} parent=27 // pred_check
              _
            $region41: #{_lambda_.34} parent=27 // pred_check_branch
              %205 = sbr.rel target = $region43
            $region42: #{_lambda_.34} parent=27 // pred_region
              _
            $region43: #{_lambda_.34} parent=27 // pred_fallthru
              _
          $region28: #{_lambda_.34} parent=23 // pred_fallthru
            _
          %206 = vnop
        $region24: #{_lambda_.34} parent=19 // pred_fallthru
          _
        // Predicated region
        $region44: #{_lambda_.34} parent=19 // pred_check
          %p207 = pneg %p78
        $region45: #{_lambda_.34} parent=19 // pred_check_branch
          %209 = sbr.rel (%p207) target = $region47
        $region46: #{_lambda_.34} parent=19 // pred_region
          %s210 = smul.u32 64, %s18
          %p211 = scmp.lt.s32.totalorder %s210, 191
          %s212 = scalar_select %p211, %s210, 191
          %p213 = scmp.lt.s32.totalorder %s17, 0
          %s214 = scalar_select %p213, %s17, 0
          %s215 = sadd.s32 %s214, %s212
          %s216 = smul.addr %s215, 4
          %s217 = scalar_lea.vmem %s1, %s216
          %s218 = smul.u32 64, %s18
        $region47: #{_lambda_.34} parent=19 // pred_fallthru
          _
      $region20: #{_lambda_.34} parent=5 // pred_fallthru
        _
      %p219 = scmp.le.s32.totalorder 1, %s9
      %p220 = scmp.lt.s32.totalorder %s9, 4
      %p221 = pnand %p219, %p220
      %p222 = pneg %p221
      // Predicated region
      $region48: #{_lambda_.34} parent=5 // pred_check
        _
      $region49: #{_lambda_.34} parent=5 // pred_check_branch
        %224 = sbr.rel (%p221) target = $region51
      $region50: #{_lambda_.34} parent=5 // pred_region
        %s225 = ssub.s32 %s9, 1
        %s226 = sand.u32 %s43, 1
        %s227 = sand.u32 %s43, 1
        %s228 = smul.addr %s227, 64
        %s229 = scalar_lea.vmem [#allocation3], %s228
        // Predicated region
        $region52: #{_lambda_.34} parent=50 // pred_check
          %p230 = pneg %p56
        $region53: #{_lambda_.34} parent=50 // pred_check_branch
          %232 = sbr.rel (%p230) target = $region55
        $region54: #{_lambda_.34} parent=50 // pred_region
          _
        $region55: #{_lambda_.34} parent=50 // pred_fallthru
          _
        %s233 = sand.u32 %s43, 1
        %s234 = sand.u32 %s43, 1
        %s235 = smul.addr %s234, 64
        %s236 = scalar_lea.vmem [#allocation3], %s235
        %p237 = pneg %p56
        %p238 = pneg %p53
        %s239 = smul.u32 64, %s21
        %p240 = scmp.lt.s32.totalorder %s239, 191
        %s241 = scalar_select %p240, %s239, 191
        %p242 = scmp.lt.s32.totalorder %s20, 0
        %s243 = scalar_select %p242, %s20, 0
        %s244 = sadd.s32 %s243, %s241
        %s245 = smul.addr %s244, 4
        %s246 = scalar_lea.vmem %s1, %s245
        %p247 = pneg %p84
        %p248 = pneg %p81
        %p249 = scmp.lt.s32.totalorder %s20, 0
        %s250 = scalar_select %p249, %s20, 0
        %s251 = scalar_lea.vmem %s2, %s250
        %p252 = pneg %p110
        %p253 = pneg %p107
        %p254 = pneg %p138
        %p255 = pneg %p135
        %s256 = smul.u32 4, %s19
        %p257 = scmp.lt.s32.totalorder %s256, 3
        %s258 = scalar_select %p257, %s256, 3
        %p259 = scmp.lt.s32.totalorder %s20, 0
        %s260 = scalar_select %p259, %s20, 0
        %s261 = sadd.s32 %s260, %s258
        %s262 = smul.addr %s261, 8
        %s263 = scalar_lea.vmem %s3, %s262
        %s264 = smul.u32 4, %s19
        %s265 = smul.u32 4, %s21
        %s266 = smul.u32 64, %s21
        %p267 = scmp.lt.s32.totalorder %s266, 191
        %s268 = scalar_select %p267, %s266, 191
        %p269 = scmp.lt.s32.totalorder %s20, 0
        %s270 = scalar_select %p269, %s20, 0
        %s271 = sadd.s32 %s270, %s268
        %s272 = smul.addr %s271, 4
        %s273 = scalar_lea.vmem %s1, %s272
        %s274 = smul.u32 64, %s21
        %p275 = scmp.lt.s32.totalorder %s20, 0
        %s276 = scalar_select %p275, %s20, 0
        %s277 = scalar_lea.vmem %s2, %s276
        %s278 = smul.u32 4, %s19
        %p279 = scmp.lt.s32.totalorder %s278, 3
        %s280 = scalar_select %p279, %s278, 3
        %p281 = scmp.lt.s32.totalorder %s20, 0
        %s282 = scalar_select %p281, %s20, 0
        %s283 = sadd.s32 %s282, %s280
        %s284 = smul.addr %s283, 8
        %s285 = scalar_lea.vmem %s3, %s284
        %s286 = smul.u32 4, %s19
        %p288 = scmp.eq.s32.totalorder %s21, 0
        // Predicated region
        $region56: #{_lambda_.34} parent=50 // pred_check
          %p289 = pneg %p288
        $region57: #{_lambda_.34} parent=50 // pred_check_branch
          %291 = sbr.rel (%p289) target = $region59
        $region58: #{_lambda_.34} parent=50 // pred_region
          %292 = vst [vmem:[#allocation2] sm:$0xff] 0.0
          %293 = vst [vmem:[#allocation2 + $0x8] sm:$0xff] 0.0
          %294 = vst [vmem:[#allocation2 + $0x10] sm:$0xff] 0.0
          %295 = vst [vmem:[#allocation2 + $0x18] sm:$0xff] 0.0
        $region59: #{_lambda_.34} parent=50 // pred_fallthru
          _
        %v296 = vld [vmem:[#allocation2] sm:$0xff]
        %v297 = vld [vmem:[#allocation2 + $0x8] sm:$0xff]
        %v298 = vld [vmem:[#allocation2 + $0x10] sm:$0xff]
        %v299 = vld [vmem:[#allocation2 + $0x18] sm:$0xff]
        %v300 = vld [vmem:[%s229] sm:$0xff]
        %v301 = vld [vmem:[%s229 + $0x8] sm:$0xff]
        %v302 = vld [vmem:[%s229 + $0x10] sm:$0xff]
        %v303 = vld [vmem:[%s229 + $0x18] sm:$0xff]
        %v304 = vld [vmem:[%s229 + $0x20] sm:$0xff]
        %v305 = vld [vmem:[%s229 + $0x28] sm:$0xff]
        %v306 = vld [vmem:[%s229 + $0x30] sm:$0xff]
        %v307 = vld [vmem:[%s229 + $0x38] sm:$0xff]
        %v308 = vld [vmem:[%s273] sm:$0xf]
        %v309 = vld [vmem:[%s273 + $0x4] sm:$0xf]
        %v310 = vld [vmem:[%s273 + $0x8] sm:$0xf]
        %v311 = vld [vmem:[%s273 + $0xc] sm:$0xf]
        %v312 = vld [vmem:[%s273 + $0x10] sm:$0xf]
        %v313 = vld [vmem:[%s273 + $0x14] sm:$0xf]
        %v314 = vld [vmem:[%s273 + $0x18] sm:$0xf]
        %v315 = vld [vmem:[%s273 + $0x1c] sm:$0xf]
        %v316 = vld [vmem:[%s273 + $0x20] sm:$0xf]
        %v317 = vld [vmem:[%s273 + $0x24] sm:$0xf]
        %v318 = vld [vmem:[%s273 + $0x28] sm:$0xf]
        %v319 = vld [vmem:[%s273 + $0x2c] sm:$0xf]
        %v320 = vld [vmem:[%s273 + $0x30] sm:$0xf]
        %v321 = vld [vmem:[%s273 + $0x34] sm:$0xf]
        %v322 = vld [vmem:[%s273 + $0x38] sm:$0xf]
        %v323 = vld [vmem:[%s273 + $0x3c] sm:$0xf]
        %v324 = vld [vmem:[%s273 + $0x40] sm:$0xf]
        %v325 = vld [vmem:[%s273 + $0x44] sm:$0xf]
        %v326 = vld [vmem:[%s273 + $0x48] sm:$0xf]
        %v327 = vld [vmem:[%s273 + $0x4c] sm:$0xf]
        %v328 = vld [vmem:[%s273 + $0x50] sm:$0xf]
        %v329 = vld [vmem:[%s273 + $0x54] sm:$0xf]
        %v330 = vld [vmem:[%s273 + $0x58] sm:$0xf]
        %v331 = vld [vmem:[%s273 + $0x5c] sm:$0xf]
        %v332 = vld [vmem:[%s273 + $0x60] sm:$0xf]
        %v333 = vld [vmem:[%s273 + $0x64] sm:$0xf]
        %v334 = vld [vmem:[%s273 + $0x68] sm:$0xf]
        %v335 = vld [vmem:[%s273 + $0x6c] sm:$0xf]
        %v336 = vld [vmem:[%s273 + $0x70] sm:$0xf]
        %v337 = vld [vmem:[%s273 + $0x74] sm:$0xf]
        %v338 = vld [vmem:[%s273 + $0x78] sm:$0xf]
        %v339 = vld [vmem:[%s273 + $0x7c] sm:$0xf]
        %v340 = vld [vmem:[%s273 + $0x80] sm:$0xf]
        %v341 = vld [vmem:[%s273 + $0x84] sm:$0xf]
        %v342 = vld [vmem:[%s273 + $0x88] sm:$0xf]
        %v343 = vld [vmem:[%s273 + $0x8c] sm:$0xf]
        %v344 = vld [vmem:[%s273 + $0x90] sm:$0xf]
        %v345 = vld [vmem:[%s273 + $0x94] sm:$0xf]
        %v346 = vld [vmem:[%s273 + $0x98] sm:$0xf]
        %v347 = vld [vmem:[%s273 + $0x9c] sm:$0xf]
        %v348 = vld [vmem:[%s273 + $0xa0] sm:$0xf]
        %v349 = vld [vmem:[%s273 + $0xa4] sm:$0xf]
        %v350 = vld [vmem:[%s273 + $0xa8] sm:$0xf]
        %v351 = vld [vmem:[%s273 + $0xac] sm:$0xf]
        %v352 = vld [vmem:[%s273 + $0xb0] sm:$0xf]
        %v353 = vld [vmem:[%s273 + $0xb4] sm:$0xf]
        %v354 = vld [vmem:[%s273 + $0xb8] sm:$0xf]
        %v355 = vld [vmem:[%s273 + $0xbc] sm:$0xf]
        %v356 = vld [vmem:[%s273 + $0xc0] sm:$0xf]
        %v357 = vld [vmem:[%s273 + $0xc4] sm:$0xf]
        %v358 = vld [vmem:[%s273 + $0xc8] sm:$0xf]
        %v359 = vld [vmem:[%s273 + $0xcc] sm:$0xf]
        %v360 = vld [vmem:[%s273 + $0xd0] sm:$0xf]
        %v361 = vld [vmem:[%s273 + $0xd4] sm:$0xf]
        %v362 = vld [vmem:[%s273 + $0xd8] sm:$0xf]
        %v363 = vld [vmem:[%s273 + $0xdc] sm:$0xf]
        %v364 = vld [vmem:[%s273 + $0xe0] sm:$0xf]
        %v365 = vld [vmem:[%s273 + $0xe4] sm:$0xf]
        %v366 = vld [vmem:[%s273 + $0xe8] sm:$0xf]
        %v367 = vld [vmem:[%s273 + $0xec] sm:$0xf]
        %v368 = vld [vmem:[%s273 + $0xf0] sm:$0xf]
        %v369 = vld [vmem:[%s273 + $0xf4] sm:$0xf]
        %v370 = vld [vmem:[%s273 + $0xf8] sm:$0xf]
        %v371 = vld [vmem:[%s273 + $0xfc] sm:$0xf]
        %v380 = vunpack.c.l.b16 %v300
        %v381 = vunpack.c.h.b16 %v300
        %v382 = vunpack.c.l.b16 %v301
        %v383 = vunpack.c.h.b16 %v301
        %v384 = vunpack.c.l.b16 %v302
        %v385 = vunpack.c.h.b16 %v302
        %v386 = vunpack.c.l.b16 %v303
        %v387 = vunpack.c.h.b16 %v303
        %v388 = vunpack.c.l.b16 %v304
        %v389 = vunpack.c.h.b16 %v304
        %v390 = vunpack.c.l.b16 %v305
        %v391 = vunpack.c.h.b16 %v305
        %v392 = vunpack.c.l.b16 %v306
        %v393 = vunpack.c.h.b16 %v306
        %v394 = vunpack.c.l.b16 %v307
        %v395 = vunpack.c.h.b16 %v307
        %v396 = vpack.c.b16 %v384, %v380
        %v397 = vpack.c.b16 %v385, %v381
        %v398 = vpack.c.b16 %v386, %v382
        %v399 = vpack.c.b16 %v387, %v383
        %v400 = vpack.c.b16 %v392, %v388
        %v401 = vpack.c.b16 %v393, %v389
        %v402 = vpack.c.b16 %v394, %v390
        %v403 = vpack.c.b16 %v395, %v391
        %v476 = vunpack.c.l.b16 %v308
        %v477 = vunpack.c.l.b16 %v309
        %v478 = vunpack.c.l.b16 %v310
        %v479 = vunpack.c.l.b16 %v311
        %v480 = vunpack.c.l.b16 %v312
        %v481 = vunpack.c.l.b16 %v313
        %v482 = vunpack.c.l.b16 %v314
        %v483 = vunpack.c.l.b16 %v315
        %v484 = vunpack.c.l.b16 %v316
        %v485 = vunpack.c.l.b16 %v317
        %v486 = vunpack.c.l.b16 %v318
        %v487 = vunpack.c.l.b16 %v319
        %v488 = vunpack.c.l.b16 %v320
        %v489 = vunpack.c.l.b16 %v321
        %v490 = vunpack.c.l.b16 %v322
        %v491 = vunpack.c.l.b16 %v323
        %v492 = vunpack.c.l.b16 %v324
        %v493 = vunpack.c.l.b16 %v325
        %v494 = vunpack.c.l.b16 %v326
        %v495 = vunpack.c.l.b16 %v327
        %v496 = vunpack.c.l.b16 %v328
        %v497 = vunpack.c.l.b16 %v329
        %v498 = vunpack.c.l.b16 %v330
        %v499 = vunpack.c.l.b16 %v331
        %v500 = vunpack.c.l.b16 %v332
        %v501 = vunpack.c.l.b16 %v333
        %v502 = vunpack.c.l.b16 %v334
        %v503 = vunpack.c.l.b16 %v335
        %v504 = vunpack.c.l.b16 %v336
        %v505 = vunpack.c.l.b16 %v337
        %v506 = vunpack.c.l.b16 %v338
        %v507 = vunpack.c.l.b16 %v339
        %v508 = vunpack.c.l.b16 %v340
        %v509 = vunpack.c.l.b16 %v341
        %v510 = vunpack.c.l.b16 %v342
        %v511 = vunpack.c.l.b16 %v343
        %v512 = vunpack.c.l.b16 %v344
        %v513 = vunpack.c.l.b16 %v345
        %v514 = vunpack.c.l.b16 %v346
        %v515 = vunpack.c.l.b16 %v347
        %v516 = vunpack.c.l.b16 %v348
        %v517 = vunpack.c.l.b16 %v349
        %v518 = vunpack.c.l.b16 %v350
        %v519 = vunpack.c.l.b16 %v351
        %v520 = vunpack.c.l.b16 %v352
        %v521 = vunpack.c.l.b16 %v353
        %v522 = vunpack.c.l.b16 %v354
        %v523 = vunpack.c.l.b16 %v355
        %v524 = vunpack.c.l.b16 %v356
        %v525 = vunpack.c.l.b16 %v357
        %v526 = vunpack.c.l.b16 %v358
        %v527 = vunpack.c.l.b16 %v359
        %v528 = vunpack.c.l.b16 %v360
        %v529 = vunpack.c.l.b16 %v361
        %v530 = vunpack.c.l.b16 %v362
        %v531 = vunpack.c.l.b16 %v363
        %v532 = vunpack.c.l.b16 %v364
        %v533 = vunpack.c.l.b16 %v365
        %v534 = vunpack.c.l.b16 %v366
        %v535 = vunpack.c.l.b16 %v367
        %v536 = vunpack.c.l.b16 %v368
        %v537 = vunpack.c.l.b16 %v369
        %v538 = vunpack.c.l.b16 %v370
        %v539 = vunpack.c.l.b16 %v371
        %v540 = vpack.c.b16 %v477, %v476
        %v541 = vpack.c.b16 %v479, %v478
        %v542 = vpack.c.b16 %v481, %v480
        %v543 = vpack.c.b16 %v483, %v482
        %v544 = vpack.c.b16 %v485, %v484
        %v545 = vpack.c.b16 %v487, %v486
        %v546 = vpack.c.b16 %v489, %v488
        %v547 = vpack.c.b16 %v491, %v490
        %v548 = vpack.c.b16 %v493, %v492
        %v549 = vpack.c.b16 %v495, %v494
        %v550 = vpack.c.b16 %v497, %v496
        %v551 = vpack.c.b16 %v499, %v498
        %v552 = vpack.c.b16 %v501, %v500
        %v553 = vpack.c.b16 %v503, %v502
        %v554 = vpack.c.b16 %v505, %v504
        %v555 = vpack.c.b16 %v507, %v506
        %v556 = vpack.c.b16 %v509, %v508
        %v557 = vpack.c.b16 %v511, %v510
        %v558 = vpack.c.b16 %v513, %v512
        %v559 = vpack.c.b16 %v515, %v514
        %v560 = vpack.c.b16 %v517, %v516
        %v561 = vpack.c.b16 %v519, %v518
        %v562 = vpack.c.b16 %v521, %v520
        %v563 = vpack.c.b16 %v523, %v522
        %v564 = vpack.c.b16 %v525, %v524
        %v565 = vpack.c.b16 %v527, %v526
        %v566 = vpack.c.b16 %v529, %v528
        %v567 = vpack.c.b16 %v531, %v530
        %v568 = vpack.c.b16 %v533, %v532
        %v569 = vpack.c.b16 %v535, %v534
        %v570 = vpack.c.b16 %v537, %v536
        %v571 = vpack.c.b16 %v539, %v538
        %604 = vmatprep.subr.bf16.mxu0 0
        %605 = vmatpush1.bf16.msra.mxu0 %v547
        %606 = vmatprep.subr.bf16.mxu0 0
        %607 = vmatpush1.bf16.msra.mxu0 %v546
        %608 = vmatprep.subr.bf16.mxu0 0
        %609 = vmatpush1.bf16.msra.mxu0 %v545
        %610 = vmatprep.subr.bf16.mxu0 0
        %611 = vmatpush1.bf16.msra.mxu0 %v544
        %612 = vmatprep.subr.bf16.mxu0 0
        %613 = vmatpush1.bf16.msra.mxu0 %v543
        %614 = vmatprep.subr.bf16.mxu0 0
        %615 = vmatpush1.bf16.msra.mxu0 %v542
        %616 = vmatprep.subr.bf16.mxu0 0
        %617 = vmatpush1.bf16.msra.mxu0 %v541
        %618 = vmatprep.subr.bf16.mxu0 0
        %619 = vmatpush1.bf16.msra.mxu0 %v540
        %620 = vmatprep.subr.bf16.mxu0 0
        %621 = vmatpush2.bf16.msra.mxu0 %v555
        %622 = vmatprep.subr.bf16.mxu0 0
        %623 = vmatpush2.bf16.msra.mxu0 %v554
        %624 = vmatprep.subr.bf16.mxu0 0
        %625 = vmatpush2.bf16.msra.mxu0 %v553
        %626 = vmatprep.subr.bf16.mxu0 0
        %627 = vmatpush2.bf16.msra.mxu0 %v552
        %628 = vmatprep.subr.bf16.mxu0 0
        %629 = vmatpush2.bf16.msra.mxu0 %v551
        %630 = vmatprep.subr.bf16.mxu0 0
        %631 = vmatpush2.bf16.msra.mxu0 %v550
        %632 = vmatprep.subr.bf16.mxu0 0
        %633 = vmatpush2.bf16.msra.mxu0 %v549
        %634 = vmatprep.subr.bf16.mxu0 0
        %635 = vmatpush2.bf16.msra.mxu0 %v548
        %636 = vmatprep.mubr.bf16.mxu0 %v397
        %637 = vmatmul.mubr.bf16.gmra.mxu0 %v396
        %v638 = vpop.f32.mrf.mxu0
        %v639 = vadd.f32 0.0, %v638
        %v640 = vpop.f32.mrf.mxu0
        %v641 = vpop.f32.mrf.mxu0
        %v642 = vadd.f32 0.0, %v641
        %v643 = vpop.f32.mrf.mxu0
        %644 = vmatprep.mubr.bf16.mxu0 %v401
        %645 = vmatmul.mubr.bf16.gmra.mxu0 %v400
        %v646 = vpop.f32.mrf.mxu0
        %v647 = vadd.f32 0.0, %v646
        %v648 = vpop.f32.mrf.mxu0
        %v649 = vpop.f32.mrf.mxu0
        %v650 = vadd.f32 0.0, %v649
        %v651 = vpop.f32.mrf.mxu0
        %652 = vdwg.mxu0
        %653 = vmatprep.subr.bf16.mxu0 0
        %654 = vmatpush1.bf16.msra.mxu0 %v563
        %655 = vmatprep.subr.bf16.mxu0 0
        %656 = vmatpush1.bf16.msra.mxu0 %v562
        %657 = vmatprep.subr.bf16.mxu0 0
        %658 = vmatpush1.bf16.msra.mxu0 %v561
        %659 = vmatprep.subr.bf16.mxu0 0
        %660 = vmatpush1.bf16.msra.mxu0 %v560
        %661 = vmatprep.subr.bf16.mxu0 0
        %662 = vmatpush1.bf16.msra.mxu0 %v559
        %663 = vmatprep.subr.bf16.mxu0 0
        %664 = vmatpush1.bf16.msra.mxu0 %v558
        %665 = vmatprep.subr.bf16.mxu0 0
        %666 = vmatpush1.bf16.msra.mxu0 %v557
        %667 = vmatprep.subr.bf16.mxu0 0
        %668 = vmatpush1.bf16.msra.mxu0 %v556
        %669 = vmatprep.subr.bf16.mxu0 0
        %670 = vmatpush2.bf16.msra.mxu0 %v571
        %671 = vmatprep.subr.bf16.mxu0 0
        %672 = vmatpush2.bf16.msra.mxu0 %v570
        %673 = vmatprep.subr.bf16.mxu0 0
        %674 = vmatpush2.bf16.msra.mxu0 %v569
        %675 = vmatprep.subr.bf16.mxu0 0
        %676 = vmatpush2.bf16.msra.mxu0 %v568
        %677 = vmatprep.subr.bf16.mxu0 0
        %678 = vmatpush2.bf16.msra.mxu0 %v567
        %679 = vmatprep.subr.bf16.mxu0 0
        %680 = vmatpush2.bf16.msra.mxu0 %v566
        %681 = vmatprep.subr.bf16.mxu0 0
        %682 = vmatpush2.bf16.msra.mxu0 %v565
        %683 = vmatprep.subr.bf16.mxu0 0
        %684 = vmatpush2.bf16.msra.mxu0 %v564
        %685 = vmatprep.mubr.bf16.mxu0 %v399
        %686 = vmatmul.mubr.bf16.gmra.mxu0 %v398
        %v687 = vpop.f32.mrf.mxu0
        %v688 = vadd.f32 %v639, %v687
        %v689 = vpop.f32.mrf.mxu0
        %v690 = vpop.f32.mrf.mxu0
        %v691 = vadd.f32 %v642, %v690
        %v692 = vpop.f32.mrf.mxu0
        %693 = vmatprep.mubr.bf16.mxu0 %v403
        %694 = vmatmul.mubr.bf16.gmra.mxu0 %v402
        %v695 = vpop.f32.mrf.mxu0
        %v696 = vadd.f32 %v647, %v695
        %v697 = vpop.f32.mrf.mxu0
        %v698 = vpop.f32.mrf.mxu0
        %v699 = vadd.f32 %v650, %v698
        %v700 = vpop.f32.mrf.mxu0
        %701 = vdwg.mxu0
        %v702 = vadd.f32 %v296, %v688
        %v703 = vadd.f32 %v297, %v691
        %v704 = vadd.f32 %v298, %v696
        %v705 = vadd.f32 %v299, %v699
        %706 = vst [vmem:[#allocation2] sm:$0xff] %v702
        %707 = vst [vmem:[#allocation2 + $0x8] sm:$0xff] %v703
        %708 = vst [vmem:[#allocation2 + $0x10] sm:$0xff] %v704
        %709 = vst [vmem:[#allocation2 + $0x18] sm:$0xff] %v705
        %p710 = scmp.eq.s32.totalorder %s21, 2
        // Predicated region
        $region60: #{_lambda_.34} parent=50 // pred_check
          %p711 = pneg %p710
        $region61: #{_lambda_.34} parent=50 // pred_check_branch
          %713 = sbr.rel (%p711) target = $region63
        $region62: #{_lambda_.34} parent=50 // pred_region
          %v714 = vld [vmem:[#allocation2] sm:$0xff]
          %v715 = vld [vmem:[#allocation2 + $0x8] sm:$0xff]
          %v716 = vld [vmem:[#allocation2 + $0x10] sm:$0xff]
          %v717 = vld [vmem:[#allocation2 + $0x18] sm:$0xff]
          %v718 = vld [vmem:[%s277] sm:$0x1]
          %v720 = vlaneseq
          %v721 = vshrl.u32 %v720, 7
          %v722 = vsub.s32 0, %v721
          %v723 = vrot.slane %v718, %v722
          %v725 = vadd.f32 %v714, %v723
          %v726 = vadd.f32 %v715, %v723
          %v727 = vadd.f32 %v716, %v723
          %v728 = vadd.f32 %v717, %v723
          %v729 = vxor.u32 %v725, 2147483648
          %v730 = vxor.u32 %v726, 2147483648
          %v731 = vxor.u32 %v727, 2147483648
          %v732 = vxor.u32 %v728, 2147483648
          %v733 = vmul.f32 %v729, 1.442695
          %v734 = vpow.pop %v733
          %v735 = vmul.f32 %v730, 1.442695
          %v736 = vpow.pop %v735
          %v737 = vmul.f32 %v731, 1.442695
          %v738 = vpow.pop %v737
          %v739 = vmul.f32 %v732, 1.442695
          %v740 = vpow.pop %v739
          %v741 = vadd.f32 %v734, 1.0
          %v742 = vadd.f32 %v736, 1.0
          %v743 = vadd.f32 %v738, 1.0
          %v744 = vadd.f32 %v740, 1.0
          %v745 = vrcp.pop %v741
          %v746 = vmul.f32 1.0, %v745
          %v747 = vrcp.pop %v742
          %v748 = vmul.f32 1.0, %v747
          %v749 = vrcp.pop %v743
          %v750 = vmul.f32 1.0, %v749
          %v751 = vrcp.pop %v744
          %v752 = vmul.f32 1.0, %v751
          %v753 = vmul.f32 %v725, %v746
          %v754 = vmul.f32 %v726, %v748
          %v755 = vmul.f32 %v727, %v750
          %v756 = vmul.f32 %v728, %v752
          %757 = vst [vmem:[%s285] sm:$0xff] %v753
          %758 = vst [vmem:[%s285 + $0x8] sm:$0xff] %v754
          %759 = vst [vmem:[%s285 + $0x10] sm:$0xff] %v755
          %760 = vst [vmem:[%s285 + $0x18] sm:$0xff] %v756
        $region63: #{_lambda_.34} parent=50 // pred_fallthru
          _
        %s761 = smul.u32 4, %s19
        %p762 = scmp.lt.s32.totalorder %s761, 3
        %s763 = scalar_select %p762, %s761, 3
        %p764 = scmp.lt.s32.totalorder %s20, 0
        %s765 = scalar_select %p764, %s20, 0
        %s766 = sadd.s32 %s765, %s763
        %s767 = smul.addr %s766, 8
        %s768 = scalar_lea.vmem %s3, %s767
        // Predicated region
        $region64: #{_lambda_.34} parent=50 // pred_check
          %p769 = pneg %p135
        $region65: #{_lambda_.34} parent=50 // pred_check_branch
          %771 = sbr.rel (%p769) target = $region67
        $region66: #{_lambda_.34} parent=50 // pred_region
          %s772 = smul.u32 4, %s19
        $region67: #{_lambda_.34} parent=50 // pred_fallthru
          _
        // Predicated region
        $region68: #{_lambda_.34} parent=50 // pred_check
          %p773 = pneg %p135
        $region69: #{_lambda_.34} parent=50 // pred_check_branch
          %775 = sbr.rel (%p773) target = $region71
        $region70: #{_lambda_.34} parent=50 // pred_region
          %s776 = smul.u32 4, %s19
          %p777 = scmp.lt.s32.totalorder %s776, 3
          %s778 = scalar_select %p777, %s776, 3
          %p779 = scmp.lt.s32.totalorder %s20, 0
          %s780 = scalar_select %p779, %s20, 0
          %s781 = sadd.s32 %s780, %s778
          %s782 = smul.addr %s781, 8
          %s783 = scalar_lea.vmem %s3, %s782
        $region71: #{_lambda_.34} parent=50 // pred_fallthru
          _
      $region51: #{_lambda_.34} parent=5 // pred_fallthru
        _
      %p784 = scmp.le.s32.totalorder 2, %s9
      // Predicated region
      $region72: #{_lambda_.34} parent=5 // pred_check
        %p785 = pneg %p784
      $region73: #{_lambda_.34} parent=5 // pred_check_branch
        %787 = sbr.rel (%p785) target = $region75
      $region74: #{_lambda_.34} parent=5 // pred_region
        %s788 = ssub.s32 %s9, 2
      $region75: #{_lambda_.34} parent=5 // pred_fallthru
        _
    $region6: #{_lambda_.34} parent=1 // loop_footer
      %s13 = sadd.s32 1, %s9
    $region7: #{_lambda_.34} parent=1 // loop_footer_branch
      %8 = sbr.rel target = $region3
    $region8: #{_lambda_.34} parent=1 // loop_exit
      _

// kernel: _lambda_.31
$region0: #{_lambda_.31}
  #allocation0 [shape = 'u32[]', space=smem, size = 0x4, offset = 0x4, fixed_abs, tag = 'smem constant byte address 0x4 - core index']
  #allocation1 [shape = 'u32[144,128]{1,0:T(1,128)}', space=vmem, size = 0x12000, scoped, tag = 'internal scratch']
  %s0 = inlined_call_operand.vmem [shape: f32[2,16,128], index: 0, kind: input, shape index: {}, may-alias: {0,1}]
  %s1 = inlined_call_operand.vmem [shape: f32[2,16,128], index: 1, kind: input, shape index: {}, may-alias: {0,1}]
  %s2 = inlined_call_operand.vmem [shape: f32[2,16,128], index: 2, kind: output, shape index: {}]
  %s3 = sld [smem:[#allocation0]]
  $region41: #{_lambda_.31} parent=0
    _
  %s5 = ssub.s32 1, %s3
  %s6 = scalar_select 0, %s5, %s3
  loop: start=0, step=1, limit=4
  $region2: #{_lambda_.31} parent=0 // loop_pre_header
    _
  $region3: #{_lambda_.31} parent=0 // loop_header
    %s8 = sphi 0, %s12
    %p9 = scmp.ge.s32.totalorder %s8, 4
    %s15 = sphi 0, %s27
    %s16 = sphi 0, %s23
    %s17 = sphi 0, %s15
    %s18 = sphi 0, %s16
    %s19 = sphi 0, %s17
    %s20 = sphi 0, %s18
    %s32 = sphi 0, %s34
    %s35 = sphi 0, %s32
    %s36 = sphi 0, %s35
    %s52 = sphi 0, %s36
    %s58 = sphi 0, %s60
    %s61 = sphi 0, %s58
    %s62 = sphi 0, %s61
    %s78 = sphi 0, %s62
    %s86 = sphi 0, %s88
    %s89 = sphi 0, %s86
    %s90 = sphi 0, %s89
    %s106 = sphi 0, %s90
  $region4: #{_lambda_.31} parent=0 // loop_header_branch
    %11 = sbr.rel (%p9) target = $region8
  $region5: #{_lambda_.31} parent=0 // loop_body
    %s13 = ssub.s32 %s8, 1
    %s14 = ssub.s32 %s8, 2
    %s21 = sadd.s32 1, %s16
    %p22 = scmp.ge.s32.totalorder %s21, 1
    %s23 = scalar_select %p22, 0, %s21
    %s24 = sadd.s32 1, %s15
    %s25 = scalar_select %p22, %s24, %s15
    %p26 = scmp.ge.s32.totalorder %s25, 2
    %s27 = scalar_select %p26, 0, %s25
    %s28 = ssub.s32 %s15, %s27
    %s29 = ssub.s32 %s16, %s23
    %s30 = sor.u32 %s28, %s29
    %p31 = scmp.eq.s32.totalorder %s30, 0
    %s33 = sadd.s32 %s32, 1
    %s34 = scalar_select %p31, %s32, %s33
    %p37 = pneg %p31
    %p38 = scmp.eq.s32.totalorder %s8, 1
    %p39 = por %p37, %p38
    %p40 = scmp.ne.s32.totalorder %s32, %s35
    %p41 = scmp.eq.s32.totalorder %s8, 0
    %p42 = por %p40, %p41
    %p43 = scmp.ne.s32.totalorder %s32, %s35
    %p44 = scmp.eq.s32.totalorder %s13, 1
    %p45 = por %p43, %p44
    %p46 = scmp.ne.s32.totalorder %s35, %s36
    %p47 = scmp.eq.s32.totalorder %s13, 0
    %p48 = por %p46, %p47
    %p49 = scmp.ne.s32.totalorder %s35, %s36
    %p50 = scmp.eq.s32.totalorder %s14, 1
    %p51 = por %p49, %p50
    %p53 = scmp.ne.s32.totalorder %s36, %s52
    %p54 = scmp.eq.s32.totalorder %s14, 0
    %p55 = por %p53, %p54
    %s56 = ssub.s32 %s15, %s27
    %p57 = scmp.eq.s32.totalorder %s56, 0
    %s59 = sadd.s32 %s58, 1
    %s60 = scalar_select %p57, %s58, %s59
    %p63 = pneg %p57
    %p64 = scmp.eq.s32.totalorder %s8, 1
    %p65 = por %p63, %p64
    %p66 = scmp.ne.s32.totalorder %s58, %s61
    %p67 = scmp.eq.s32.totalorder %s8, 0
    %p68 = por %p66, %p67
    %p69 = scmp.ne.s32.totalorder %s58, %s61
    %p70 = scmp.eq.s32.totalorder %s13, 1
    %p71 = por %p69, %p70
    %p72 = scmp.ne.s32.totalorder %s61, %s62
    %p73 = scmp.eq.s32.totalorder %s13, 0
    %p74 = por %p72, %p73
    %p75 = scmp.ne.s32.totalorder %s61, %s62
    %p76 = scmp.eq.s32.totalorder %s14, 1
    %p77 = por %p75, %p76
    %p79 = scmp.ne.s32.totalorder %s62, %s78
    %p80 = scmp.eq.s32.totalorder %s14, 0
    %p81 = por %p79, %p80
    %s82 = ssub.s32 %s15, %s27
    %s83 = ssub.s32 %s16, %s23
    %s84 = sor.u32 %s82, %s83
    %p85 = scmp.eq.s32.totalorder %s84, 0
    %s87 = sadd.s32 %s86, 1
    %s88 = scalar_select %p85, %s86, %s87
    %p91 = pneg %p85
    %p92 = scmp.eq.s32.totalorder %s8, 1
    %p93 = por %p91, %p92
    %p94 = scmp.ne.s32.totalorder %s86, %s89
    %p95 = scmp.eq.s32.totalorder %s8, 0
    %p96 = por %p94, %p95
    %p97 = scmp.ne.s32.totalorder %s86, %s89
    %p98 = scmp.eq.s32.totalorder %s13, 1
    %p99 = por %p97, %p98
    %p100 = scmp.ne.s32.totalorder %s89, %s90
    %p101 = scmp.eq.s32.totalorder %s13, 0
    %p102 = por %p100, %p101
    %p103 = scmp.ne.s32.totalorder %s89, %s90
    %p104 = scmp.eq.s32.totalorder %s14, 1
    %p105 = por %p103, %p104
    %p107 = scmp.ne.s32.totalorder %s90, %s106
    %p108 = scmp.eq.s32.totalorder %s14, 0
    %p109 = por %p107, %p108
    %p110 = scmp.le.s32.totalorder 1, %s8
    %p111 = scmp.lt.s32.totalorder %s8, 3
    %p112 = pnand %p110, %p111
    %p113 = pneg %p112
    // Predicated region
    $region9: #{_lambda_.31} parent=5 // pred_check
      _
    $region10: #{_lambda_.31} parent=5 // pred_check_branch
      %115 = sbr.rel (%p112) target = $region12
    $region11: #{_lambda_.31} parent=5 // pred_region
      %s116 = ssub.s32 %s8, 1
    $region12: #{_lambda_.31} parent=5 // pred_fallthru
      _
    %p117 = scmp.lt.s32.totalorder %s8, 2
    // Predicated region
    $region13: #{_lambda_.31} parent=5 // pred_check
      %p118 = pneg %p117
    $region14: #{_lambda_.31} parent=5 // pred_check_branch
      %120 = sbr.rel (%p118) target = $region16
    $region15: #{_lambda_.31} parent=5 // pred_region
      // Predicated region
      $region17: #{_lambda_.31} parent=15 // pred_check
        %p121 = pneg %p42
      $region18: #{_lambda_.31} parent=15 // pred_check_branch
        %123 = sbr.rel (%p121) target = $region20
      $region19: #{_lambda_.31} parent=15 // pred_region
        %s124 = smul.u32 2, %s16
        %p125 = scmp.lt.s32.totalorder %s15, 1
        %s126 = scalar_select %p125, %s15, 1
        %p127 = scmp.lt.s32.totalorder %s124, 1
        %s128 = scalar_select %p127, %s124, 1
        %s129 = smul.addr %s126, 2
        %s130 = sadd.s32 %s128, %s129
        %s131 = smul.addr %s130, 8
        %s132 = scalar_lea.vmem %s0, %s131
        %s133 = smul.u32 2, %s16
      $region20: #{_lambda_.31} parent=15 // pred_fallthru
        _
      // Predicated region
      $region21: #{_lambda_.31} parent=15 // pred_check
        %p134 = pneg %p68
      $region22: #{_lambda_.31} parent=15 // pred_check_branch
        %136 = sbr.rel (%p134) target = $region24
      $region23: #{_lambda_.31} parent=15 // pred_region
        %p137 = scmp.lt.s32.totalorder %s15, 1
        %s138 = scalar_select %p137, %s15, 1
        %s139 = smul.addr %s138, 2
        %s140 = smul.addr %s139, 8
        %s141 = scalar_lea.vmem %s1, %s140
      $region24: #{_lambda_.31} parent=15 // pred_fallthru
        _
    $region16: #{_lambda_.31} parent=5 // pred_fallthru
      _
    %p142 = scmp.le.s32.totalorder 1, %s8
    %p143 = scmp.lt.s32.totalorder %s8, 3
    %p144 = pnand %p142, %p143
    %p145 = pneg %p144
    // Predicated region
    $region25: #{_lambda_.31} parent=5 // pred_check
      _
    $region26: #{_lambda_.31} parent=5 // pred_check_branch
      %147 = sbr.rel (%p144) target = $region28
    $region27: #{_lambda_.31} parent=5 // pred_region
      %s148 = ssub.s32 %s8, 1
      %s149 = smul.u32 2, %s18
      %p150 = scmp.lt.s32.totalorder %s17, 1
      %s151 = scalar_select %p150, %s17, 1
      %p152 = scmp.lt.s32.totalorder %s149, 1
      %s153 = scalar_select %p152, %s149, 1
      %s154 = smul.addr %s151, 2
      %s155 = sadd.s32 %s153, %s154
      %s156 = smul.addr %s155, 8
      %s157 = scalar_lea.vmem %s0, %s156
      %p158 = pneg %p48
      %p159 = pneg %p45
      %p160 = scmp.lt.s32.totalorder %s17, 1
      %s161 = scalar_select %p160, %s17, 1
      %s162 = smul.addr %s161, 2
      %s163 = smul.addr %s162, 8
      %s164 = scalar_lea.vmem %s1, %s163
      %p165 = pneg %p74
      %p166 = pneg %p71
      %p167 = pneg %p102
      %p168 = pneg %p99
      %s169 = smul.u32 2, %s18
      %p170 = scmp.lt.s32.totalorder %s17, 1
      %s171 = scalar_select %p170, %s17, 1
      %p172 = scmp.lt.s32.totalorder %s169, 1
      %s173 = scalar_select %p172, %s169, 1
      %s174 = smul.addr %s171, 2
      %s175 = sadd.s32 %s173, %s174
      %s176 = smul.addr %s175, 8
      %s177 = scalar_lea.vmem %s2, %s176
      %s178 = smul.u32 2, %s18
      %p179 = scmp.lt.s32.totalorder %s17, 1
      %s180 = scalar_select %p179, %s17, 1
      %p181 = scmp.lt.s32.totalorder %s178, 1
      %s182 = scalar_select %p181, %s178, 1
      %s183 = smul.addr %s180, 2
      %s184 = sadd.s32 %s182, %s183
      %s185 = smul.addr %s184, 8
      %s186 = scalar_lea.vmem %s0, %s185
      %s187 = smul.u32 2, %s18
      %p188 = scmp.lt.s32.totalorder %s17, 1
      %s189 = scalar_select %p188, %s17, 1
      %s190 = smul.addr %s189, 2
      %s191 = smul.addr %s190, 8
      %s192 = scalar_lea.vmem %s1, %s191
      %s193 = smul.u32 2, %s18
      %p194 = scmp.lt.s32.totalorder %s17, 1
      %s195 = scalar_select %p194, %s17, 1
      %p196 = scmp.lt.s32.totalorder %s193, 1
      %s197 = scalar_select %p196, %s193, 1
      %s198 = smul.addr %s195, 2
      %s199 = sadd.s32 %s197, %s198
      %s200 = smul.addr %s199, 8
      %s201 = scalar_lea.vmem %s2, %s200
      %s202 = smul.u32 2, %s18
      %v204 = vld [vmem:[%s186] sm:$0xff]
      %v205 = vld [vmem:[%s186 + $0x8] sm:$0xff]
      %v206 = vld [vmem:[%s192] sm:$0xff]
      %v207 = vld [vmem:[%s192 + $0x8] sm:$0xff]
      %v208 = vpack.c.bf16 %v207, %v206
      %v209 = vmul.f32 %v204, 0.35355338
      %v210 = vmul.f32 %v205, 0.35355338
      %v211 = vpack.c.bf16 %v210, %v209
      %213 = vrot.lane.b32.xlu0 %v208, 96
      %v214 = vpop.permute.xlu0 %213
      %vm215 = vcmask 64512
      %v217 = vsel %vm215, %v211, 0
      %v220 = vsel %vm215, %v214, 0
      %222 = vmatprep.subr.bf16.mxu0 0
      %223 = vmatpush1.bf16.xpose.msra.mxu0 0
      %224 = vmatprep.subr.bf16.mxu0 0
      %225 = vmatpush1.bf16.xpose.msra.mxu0 0
      %226 = vmatprep.subr.bf16.mxu0 0
      %227 = vmatpush1.bf16.xpose.msra.mxu0 0
      %228 = vmatprep.subr.bf16.mxu0 0
      %229 = vmatpush1.bf16.xpose.msra.mxu0 0
      %230 = vmatprep.subr.bf16.mxu0 0
      %231 = vmatpush1.bf16.xpose.msra.mxu0 0
      %232 = vmatprep.subr.bf16.mxu0 0
      %233 = vmatpush1.bf16.xpose.msra.mxu0 0
      %234 = vmatprep.subr.bf16.mxu0 0
      %235 = vmatpush1.bf16.xpose.msra.mxu0 0
      %236 = vmatprep.subr.bf16.mxu0 0
      %237 = vmatpush1.bf16.xpose.msra.mxu0 %v220
      %238 = vmatprep.subr.bf16.mxu0 0
      %239 = vmatpush2.bf16.xpose.msra.mxu0 0
      %240 = vmatprep.subr.bf16.mxu0 0
      %241 = vmatpush2.bf16.xpose.msra.mxu0 0
      %242 = vmatprep.subr.bf16.mxu0 0
      %243 = vmatpush2.bf16.xpose.msra.mxu0 0
      %244 = vmatprep.subr.bf16.mxu0 0
      %245 = vmatpush2.bf16.xpose.msra.mxu0 0
      %246 = vmatprep.subr.bf16.mxu0 0
      %247 = vmatpush2.bf16.xpose.msra.mxu0 0
      %248 = vmatprep.subr.bf16.mxu0 0
      %249 = vmatpush2.bf16.xpose.msra.mxu0 0
      %250 = vmatprep.subr.bf16.mxu0 0
      %251 = vmatpush2.bf16.xpose.msra.mxu0 0
      %252 = vmatprep.subr.bf16.mxu0 0
      %253 = vmatpush2.bf16.xpose.msra.mxu0 0
      %254 = vmatprep.mubr.bf16.mxu0 0
      %255 = vmatmul.mubr.bf16.gmra.mxu0 %v217
      %v256 = vpop.f32.mrf.mxu0
      %v257 = vadd.f32 0.0, %v256
      %v258 = vpop.f32.mrf.mxu0
      %v259 = vpop.f32.mrf.mxu0
      %v260 = vadd.f32 0.0, %v259
      %v261 = vpop.f32.mrf.mxu0
      %262 = vdwg.mxu0
      %vm263 = vcmask 130048
      %v264 = vsel %vm263, %v257, -inf
      %265 = vmax.xlane.f32.xlu0 %v264
      %v266 = vpop.xlane.xlu0 %265
      %v267 = vsel %vm263, %v260, -inf
      %268 = vmax.xlane.f32.xlu0 %v267
      %v269 = vpop.xlane.xlu0 %268
      %v270 = vsub.f32 %v257, %v266
      %v271 = vsub.f32 %v260, %v269
      %v272 = vmul.f32 %v270, 1.442695
      %v273 = vpow.pop %v272
      %v274 = vmul.f32 %v271, 1.442695
      %v275 = vpow.pop %v274
      %v276 = vsel %vm263, %v273, 0.0
      %277 = vadd.xlane.f32.xlu0 %v276
      %v278 = vpop.xlane.xlu0 %277
      %v279 = vsel %vm263, %v275, 0.0
      %280 = vadd.xlane.f32.xlu0 %v279
      %v281 = vpop.xlane.xlu0 %280
      %v282 = vrcp.pop %v278
      %v283 = vrcp.pop %v281
      %v284 = vmul.f32 %v273, %v282
      %v285 = vmul.f32 %v275, %v283
      %v286 = vpack.c.bf16 %v285, %v284
      %287 = vrot.lane.b32.xlu0 %v208, 64
      %v288 = vpop.permute.xlu0 %287
      %v291 = vsel %vm263, %v286, 0
      %293 = vmatprep.subr.bf16.mxu0 0
      %294 = vmatpush1.bf16.msra.mxu0 0
      %295 = vmatprep.subr.bf16.mxu0 0
      %296 = vmatpush1.bf16.msra.mxu0 0
      %297 = vmatprep.subr.bf16.mxu0 0
      %298 = vmatpush1.bf16.msra.mxu0 0
      %299 = vmatprep.subr.bf16.mxu0 0
      %300 = vmatpush1.bf16.msra.mxu0 0
      %301 = vmatprep.subr.bf16.mxu0 0
      %302 = vmatpush1.bf16.msra.mxu0 0
      %303 = vmatprep.subr.bf16.mxu0 0
      %304 = vmatpush1.bf16.msra.mxu0 0
      %305 = vmatprep.subr.bf16.mxu0 0
      %306 = vmatpush1.bf16.msra.mxu0 0
      %307 = vmatprep.subr.bf16.mxu0 0
      %308 = vmatpush1.bf16.msra.mxu0 %v288
      %309 = vmatprep.subr.bf16.mxu0 0
      %310 = vmatpush2.bf16.msra.mxu0 0
      %311 = vmatprep.subr.bf16.mxu0 0
      %312 = vmatpush2.bf16.msra.mxu0 0
      %313 = vmatprep.subr.bf16.mxu0 0
      %314 = vmatpush2.bf16.msra.mxu0 0
      %315 = vmatprep.subr.bf16.mxu0 0
      %316 = vmatpush2.bf16.msra.mxu0 0
      %317 = vmatprep.subr.bf16.mxu0 0
      %318 = vmatpush2.bf16.msra.mxu0 0
      %319 = vmatprep.subr.bf16.mxu0 0
      %320 = vmatpush2.bf16.msra.mxu0 0
      %321 = vmatprep.subr.bf16.mxu0 0
      %322 = vmatpush2.bf16.msra.mxu0 0
      %323 = vmatprep.subr.bf16.mxu0 0
      %324 = vmatpush2.bf16.msra.mxu0 0
      %325 = vmatprep.mubr.bf16.mxu0 0
      %326 = vmatmul.mubr.bf16.gmra.mxu0 %v291
      %v327 = vpop.f32.mrf.mxu0
      %v328 = vadd.f32 0.0, %v327
      %v329 = vpop.f32.mrf.mxu0
      %v330 = vpop.f32.mrf.mxu0
      %v331 = vadd.f32 0.0, %v330
      %v332 = vpop.f32.mrf.mxu0
      %333 = vdwg.mxu0
      %335 = vrot.lane.b32.xlu0 %v211, 120
      %v336 = vpop.permute.xlu0 %335
      %337 = vrot.lane.b32.xlu0 %v208, 88
      %v338 = vpop.permute.xlu0 %337
      %v340 = vsel %vm215, %v336, 0
      %v343 = vsel %vm215, %v338, 0
      %345 = vmatprep.subr.bf16.mxu0 0
      %346 = vmatpush1.bf16.xpose.msra.mxu0 0
      %347 = vmatprep.subr.bf16.mxu0 0
      %348 = vmatpush1.bf16.xpose.msra.mxu0 0
      %349 = vmatprep.subr.bf16.mxu0 0
      %350 = vmatpush1.bf16.xpose.msra.mxu0 0
      %351 = vmatprep.subr.bf16.mxu0 0
      %352 = vmatpush1.bf16.xpose.msra.mxu0 0
      %353 = vmatprep.subr.bf16.mxu0 0
      %354 = vmatpush1.bf16.xpose.msra.mxu0 0
      %355 = vmatprep.subr.bf16.mxu0 0
      %356 = vmatpush1.bf16.xpose.msra.mxu0 0
      %357 = vmatprep.subr.bf16.mxu0 0
      %358 = vmatpush1.bf16.xpose.msra.mxu0 0
      %359 = vmatprep.subr.bf16.mxu0 0
      %360 = vmatpush1.bf16.xpose.msra.mxu0 %v343
      %361 = vmatprep.subr.bf16.mxu0 0
      %362 = vmatpush2.bf16.xpose.msra.mxu0 0
      %363 = vmatprep.subr.bf16.mxu0 0
      %364 = vmatpush2.bf16.xpose.msra.mxu0 0
      %365 = vmatprep.subr.bf16.mxu0 0
      %366 = vmatpush2.bf16.xpose.msra.mxu0 0
      %367 = vmatprep.subr.bf16.mxu0 0
      %368 = vmatpush2.bf16.xpose.msra.mxu0 0
      %369 = vmatprep.subr.bf16.mxu0 0
      %370 = vmatpush2.bf16.xpose.msra.mxu0 0
      %371 = vmatprep.subr.bf16.mxu0 0
      %372 = vmatpush2.bf16.xpose.msra.mxu0 0
      %373 = vmatprep.subr.bf16.mxu0 0
      %374 = vmatpush2.bf16.xpose.msra.mxu0 0
      %375 = vmatprep.subr.bf16.mxu0 0
      %376 = vmatpush2.bf16.xpose.msra.mxu0 0
      %377 = vmatprep.mubr.bf16.mxu0 0
      %378 = vmatmul.mubr.bf16.gmra.mxu0 %v340
      %v379 = vpop.f32.mrf.mxu0
      %v380 = vadd.f32 0.0, %v379
      %v381 = vpop.f32.mrf.mxu0
      %v382 = vpop.f32.mrf.mxu0
      %v383 = vadd.f32 0.0, %v382
      %v384 = vpop.f32.mrf.mxu0
      %385 = vdwg.mxu0
      %v386 = vsel %vm263, %v380, -inf
      %387 = vmax.xlane.f32.xlu0 %v386
      %v388 = vpop.xlane.xlu0 %387
      %v389 = vsel %vm263, %v383, -inf
      %390 = vmax.xlane.f32.xlu0 %v389
      %v391 = vpop.xlane.xlu0 %390
      %v392 = vsub.f32 %v380, %v388
      %v393 = vsub.f32 %v383, %v391
      %v394 = vmul.f32 %v392, 1.442695
      %v395 = vpow.pop %v394
      %v396 = vmul.f32 %v393, 1.442695
      %v397 = vpow.pop %v396
      %v398 = vsel %vm263, %v395, 0.0
      %399 = vadd.xlane.f32.xlu0 %v398
      %v400 = vpop.xlane.xlu0 %399
      %v401 = vsel %vm263, %v397, 0.0
      %402 = vadd.xlane.f32.xlu0 %v401
      %v403 = vpop.xlane.xlu0 %402
      %v404 = vrcp.pop %v400
      %v405 = vrcp.pop %v403
      %v406 = vmul.f32 %v395, %v404
      %v407 = vmul.f32 %v397, %v405
      %v408 = vpack.c.bf16 %v407, %v406
      %409 = vrot.lane.b32.xlu0 %v208, 56
      %v410 = vpop.permute.xlu0 %409
      %v413 = vsel %vm263, %v408, 0
      %415 = vmatprep.subr.bf16.mxu0 0
      %416 = vmatpush1.bf16.msra.mxu0 0
      %417 = vmatprep.subr.bf16.mxu0 0
      %418 = vmatpush1.bf16.msra.mxu0 0
      %419 = vmatprep.subr.bf16.mxu0 0
      %420 = vmatpush1.bf16.msra.mxu0 0
      %421 = vmatprep.subr.bf16.mxu0 0
      %422 = vmatpush1.bf16.msra.mxu0 0
      %423 = vmatprep.subr.bf16.mxu0 0
      %424 = vmatpush1.bf16.msra.mxu0 0
      %425 = vmatprep.subr.bf16.mxu0 0
      %426 = vmatpush1.bf16.msra.mxu0 0
      %427 = vmatprep.subr.bf16.mxu0 0
      %428 = vmatpush1.bf16.msra.mxu0 0
      %429 = vmatprep.subr.bf16.mxu0 0
      %430 = vmatpush1.bf16.msra.mxu0 %v410
      %431 = vmatprep.subr.bf16.mxu0 0
      %432 = vmatpush2.bf16.msra.mxu0 0
      %433 = vmatprep.subr.bf16.mxu0 0
      %434 = vmatpush2.bf16.msra.mxu0 0
      %435 = vmatprep.subr.bf16.mxu0 0
      %436 = vmatpush2.bf16.msra.mxu0 0
      %437 = vmatprep.subr.bf16.mxu0 0
      %438 = vmatpush2.bf16.msra.mxu0 0
      %439 = vmatprep.subr.bf16.mxu0 0
      %440 = vmatpush2.bf16.msra.mxu0 0
      %441 = vmatprep.subr.bf16.mxu0 0
      %442 = vmatpush2.bf16.msra.mxu0 0
      %443 = vmatprep.subr.bf16.mxu0 0
      %444 = vmatpush2.bf16.msra.mxu0 0
      %445 = vmatprep.subr.bf16.mxu0 0
      %446 = vmatpush2.bf16.msra.mxu0 0
      %447 = vmatprep.mubr.bf16.mxu0 0
      %448 = vmatmul.mubr.bf16.gmra.mxu0 %v413
      %v449 = vpop.f32.mrf.mxu0
      %v450 = vadd.f32 0.0, %v449
      %v451 = vpop.f32.mrf.mxu0
      %v452 = vpop.f32.mrf.mxu0
      %v453 = vadd.f32 0.0, %v452
      %v454 = vpop.f32.mrf.mxu0
      %455 = vdwg.mxu0
      %456 = vrot.lane.b32.xlu0 %v211, 112
      %v457 = vpop.permute.xlu0 %456
      %458 = vrot.lane.b32.xlu0 %v208, 80
      %v459 = vpop.permute.xlu0 %458
      %v461 = vsel %vm215, %v457, 0
      %v464 = vsel %vm215, %v459, 0
      %466 = vmatprep.subr.bf16.mxu0 0
      %467 = vmatpush1.bf16.xpose.msra.mxu0 0
      %468 = vmatprep.subr.bf16.mxu0 0
      %469 = vmatpush1.bf16.xpose.msra.mxu0 0
      %470 = vmatprep.subr.bf16.mxu0 0
      %471 = vmatpush1.bf16.xpose.msra.mxu0 0
      %472 = vmatprep.subr.bf16.mxu0 0
      %473 = vmatpush1.bf16.xpose.msra.mxu0 0
      %474 = vmatprep.subr.bf16.mxu0 0
      %475 = vmatpush1.bf16.xpose.msra.mxu0 0
      %476 = vmatprep.subr.bf16.mxu0 0
      %477 = vmatpush1.bf16.xpose.msra.mxu0 0
      %478 = vmatprep.subr.bf16.mxu0 0
      %479 = vmatpush1.bf16.xpose.msra.mxu0 0
      %480 = vmatprep.subr.bf16.mxu0 0
      %481 = vmatpush1.bf16.xpose.msra.mxu0 %v464
      %482 = vmatprep.subr.bf16.mxu0 0
      %483 = vmatpush2.bf16.xpose.msra.mxu0 0
      %484 = vmatprep.subr.bf16.mxu0 0
      %485 = vmatpush2.bf16.xpose.msra.mxu0 0
      %486 = vmatprep.subr.bf16.mxu0 0
      %487 = vmatpush2.bf16.xpose.msra.mxu0 0
      %488 = vmatprep.subr.bf16.mxu0 0
      %489 = vmatpush2.bf16.xpose.msra.mxu0 0
      %490 = vmatprep.subr.bf16.mxu0 0
      %491 = vmatpush2.bf16.xpose.msra.mxu0 0
      %492 = vmatprep.subr.bf16.mxu0 0
      %493 = vmatpush2.bf16.xpose.msra.mxu0 0
      %494 = vmatprep.subr.bf16.mxu0 0
      %495 = vmatpush2.bf16.xpose.msra.mxu0 0
      %496 = vmatprep.subr.bf16.mxu0 0
      %497 = vmatpush2.bf16.xpose.msra.mxu0 0
      %498 = vmatprep.mubr.bf16.mxu0 0
      %499 = vmatmul.mubr.bf16.gmra.mxu0 %v461
      %v500 = vpop.f32.mrf.mxu0
      %v501 = vadd.f32 0.0, %v500
      %v502 = vpop.f32.mrf.mxu0
      %v503 = vpop.f32.mrf.mxu0
      %v504 = vadd.f32 0.0, %v503
      %v505 = vpop.f32.mrf.mxu0
      %506 = vdwg.mxu0
      %v507 = vsel %vm263, %v501, -inf
      %508 = vmax.xlane.f32.xlu0 %v507
      %v509 = vpop.xlane.xlu0 %508
      %v510 = vsel %vm263, %v504, -inf
      %511 = vmax.xlane.f32.xlu0 %v510
      %v512 = vpop.xlane.xlu0 %511
      %v513 = vsub.f32 %v501, %v509
      %v514 = vsub.f32 %v504, %v512
      %v515 = vmul.f32 %v513, 1.442695
      %v516 = vpow.pop %v515
      %v517 = vmul.f32 %v514, 1.442695
      %v518 = vpow.pop %v517
      %v519 = vsel %vm263, %v516, 0.0
      %520 = vadd.xlane.f32.xlu0 %v519
      %v521 = vpop.xlane.xlu0 %520
      %v522 = vsel %vm263, %v518, 0.0
      %523 = vadd.xlane.f32.xlu0 %v522
      %v524 = vpop.xlane.xlu0 %523
      %v525 = vrcp.pop %v521
      %v526 = vrcp.pop %v524
      %v527 = vmul.f32 %v516, %v525
      %v528 = vmul.f32 %v518, %v526
      %v529 = vpack.c.bf16 %v528, %v527
      %530 = vrot.lane.b32.xlu0 %v208, 48
      %v531 = vpop.permute.xlu0 %530
      %v534 = vsel %vm263, %v529, 0
      %536 = vmatprep.subr.bf16.mxu0 0
      %537 = vmatpush1.bf16.msra.mxu0 0
      %538 = vmatprep.subr.bf16.mxu0 0
      %539 = vmatpush1.bf16.msra.mxu0 0
      %540 = vmatprep.subr.bf16.mxu0 0
      %541 = vmatpush1.bf16.msra.mxu0 0
      %542 = vmatprep.subr.bf16.mxu0 0
      %543 = vmatpush1.bf16.msra.mxu0 0
      %544 = vmatprep.subr.bf16.mxu0 0
      %545 = vmatpush1.bf16.msra.mxu0 0
      %546 = vmatprep.subr.bf16.mxu0 0
      %547 = vmatpush1.bf16.msra.mxu0 0
      %548 = vmatprep.subr.bf16.mxu0 0
      %549 = vmatpush1.bf16.msra.mxu0 0
      %550 = vmatprep.subr.bf16.mxu0 0
      %551 = vmatpush1.bf16.msra.mxu0 %v531
      %552 = vmatprep.subr.bf16.mxu0 0
      %553 = vmatpush2.bf16.msra.mxu0 0
      %554 = vmatprep.subr.bf16.mxu0 0
      %555 = vmatpush2.bf16.msra.mxu0 0
      %556 = vmatprep.subr.bf16.mxu0 0
      %557 = vmatpush2.bf16.msra.mxu0 0
      %558 = vmatprep.subr.bf16.mxu0 0
      %559 = vmatpush2.bf16.msra.mxu0 0
      %560 = vmatprep.subr.bf16.mxu0 0
      %561 = vmatpush2.bf16.msra.mxu0 0
      %562 = vmatprep.subr.bf16.mxu0 0
      %563 = vmatpush2.bf16.msra.mxu0 0
      %564 = vmatprep.subr.bf16.mxu0 0
      %565 = vmatpush2.bf16.msra.mxu0 0
      %566 = vmatprep.subr.bf16.mxu0 0
      %567 = vmatpush2.bf16.msra.mxu0 0
      %568 = vmatprep.mubr.bf16.mxu0 0
      %569 = vmatmul.mubr.bf16.gmra.mxu0 %v534
      %v570 = vpop.f32.mrf.mxu0
      %v571 = vadd.f32 0.0, %v570
      %v572 = vpop.f32.mrf.mxu0
      %v573 = vpop.f32.mrf.mxu0
      %v574 = vadd.f32 0.0, %v573
      %v575 = vpop.f32.mrf.mxu0
      %576 = vdwg.mxu0
      %577 = vrot.lane.b32.xlu0 %v211, 104
      %v578 = vpop.permute.xlu0 %577
      %579 = vrot.lane.b32.xlu0 %v208, 72
      %v580 = vpop.permute.xlu0 %579
      %v582 = vsel %vm215, %v578, 0
      %v585 = vsel %vm215, %v580, 0
      %587 = vmatprep.subr.bf16.mxu0 0
      %588 = vmatpush1.bf16.xpose.msra.mxu0 0
      %589 = vmatprep.subr.bf16.mxu0 0
      %590 = vmatpush1.bf16.xpose.msra.mxu0 0
      %591 = vmatprep.subr.bf16.mxu0 0
      %592 = vmatpush1.bf16.xpose.msra.mxu0 0
      %593 = vmatprep.subr.bf16.mxu0 0
      %594 = vmatpush1.bf16.xpose.msra.mxu0 0
      %595 = vmatprep.subr.bf16.mxu0 0
      %596 = vmatpush1.bf16.xpose.msra.mxu0 0
      %597 = vmatprep.subr.bf16.mxu0 0
      %598 = vmatpush1.bf16.xpose.msra.mxu0 0
      %599 = vmatprep.subr.bf16.mxu0 0
      %600 = vmatpush1.bf16.xpose.msra.mxu0 0
      %601 = vmatprep.subr.bf16.mxu0 0
      %602 = vmatpush1.bf16.xpose.msra.mxu0 %v585
      %603 = vmatprep.subr.bf16.mxu0 0
      %604 = vmatpush2.bf16.xpose.msra.mxu0 0
      %605 = vmatprep.subr.bf16.mxu0 0
      %606 = vmatpush2.bf16.xpose.msra.mxu0 0
      %607 = vmatprep.subr.bf16.mxu0 0
      %608 = vmatpush2.bf16.xpose.msra.mxu0 0
      %609 = vmatprep.subr.bf16.mxu0 0
      %610 = vmatpush2.bf16.xpose.msra.mxu0 0
      %611 = vmatprep.subr.bf16.mxu0 0
      %612 = vmatpush2.bf16.xpose.msra.mxu0 0
      %613 = vmatprep.subr.bf16.mxu0 0
      %614 = vmatpush2.bf16.xpose.msra.mxu0 0
      %615 = vmatprep.subr.bf16.mxu0 0
      %616 = vmatpush2.bf16.xpose.msra.mxu0 0
      %617 = vmatprep.subr.bf16.mxu0 0
      %618 = vmatpush2.bf16.xpose.msra.mxu0 0
      %619 = vmatprep.mubr.bf16.mxu0 0
      %620 = vmatmul.mubr.bf16.gmra.mxu0 %v582
      %v621 = vpop.f32.mrf.mxu0
      %v622 = vadd.f32 0.0, %v621
      %v623 = vpop.f32.mrf.mxu0
      %v624 = vpop.f32.mrf.mxu0
      %v625 = vadd.f32 0.0, %v624
      %v626 = vpop.f32.mrf.mxu0
      %627 = vdwg.mxu0
      %v628 = vsel %vm263, %v622, -inf
      %629 = vmax.xlane.f32.xlu0 %v628
      %v630 = vpop.xlane.xlu0 %629
      %v631 = vsel %vm263, %v625, -inf
      %632 = vmax.xlane.f32.xlu0 %v631
      %v633 = vpop.xlane.xlu0 %632
      %v634 = vsub.f32 %v622, %v630
      %v635 = vsub.f32 %v625, %v633
      %v636 = vmul.f32 %v634, 1.442695
      %v637 = vpow.pop %v636
      %v638 = vmul.f32 %v635, 1.442695
      %v639 = vpow.pop %v638
      %v640 = vsel %vm263, %v637, 0.0
      %641 = vadd.xlane.f32.xlu0 %v640
      %v642 = vpop.xlane.xlu0 %641
      %v643 = vsel %vm263, %v639, 0.0
      %644 = vadd.xlane.f32.xlu0 %v643
      %v645 = vpop.xlane.xlu0 %644
      %v646 = vrcp.pop %v642
      %v647 = vrcp.pop %v645
      %v648 = vmul.f32 %v637, %v646
      %v649 = vmul.f32 %v639, %v647
      %v650 = vpack.c.bf16 %v649, %v648
      %651 = vrot.lane.b32.xlu0 %v208, 40
      %v652 = vpop.permute.xlu0 %651
      %v655 = vsel %vm263, %v650, 0
      %657 = vmatprep.subr.bf16.mxu0 0
      %658 = vmatpush1.bf16.msra.mxu0 0
      %659 = vmatprep.subr.bf16.mxu0 0
      %660 = vmatpush1.bf16.msra.mxu0 0
      %661 = vmatprep.subr.bf16.mxu0 0
      %662 = vmatpush1.bf16.msra.mxu0 0
      %663 = vmatprep.subr.bf16.mxu0 0
      %664 = vmatpush1.bf16.msra.mxu0 0
      %665 = vmatprep.subr.bf16.mxu0 0
      %666 = vmatpush1.bf16.msra.mxu0 0
      %667 = vmatprep.subr.bf16.mxu0 0
      %668 = vmatpush1.bf16.msra.mxu0 0
      %669 = vmatprep.subr.bf16.mxu0 0
      %670 = vmatpush1.bf16.msra.mxu0 0
      %671 = vmatprep.subr.bf16.mxu0 0
      %672 = vmatpush1.bf16.msra.mxu0 %v652
      %673 = vmatprep.subr.bf16.mxu0 0
      %674 = vmatpush2.bf16.msra.mxu0 0
      %675 = vmatprep.subr.bf16.mxu0 0
      %676 = vmatpush2.bf16.msra.mxu0 0
      %677 = vmatprep.subr.bf16.mxu0 0
      %678 = vmatpush2.bf16.msra.mxu0 0
      %679 = vmatprep.subr.bf16.mxu0 0
      %680 = vmatpush2.bf16.msra.mxu0 0
      %681 = vmatprep.subr.bf16.mxu0 0
      %682 = vmatpush2.bf16.msra.mxu0 0
      %683 = vmatprep.subr.bf16.mxu0 0
      %684 = vmatpush2.bf16.msra.mxu0 0
      %685 = vmatprep.subr.bf16.mxu0 0
      %686 = vmatpush2.bf16.msra.mxu0 0
      %687 = vmatprep.subr.bf16.mxu0 0
      %688 = vmatpush2.bf16.msra.mxu0 0
      %689 = vmatprep.mubr.bf16.mxu0 0
      %690 = vmatmul.mubr.bf16.gmra.mxu0 %v655
      %v691 = vpop.f32.mrf.mxu0
      %v692 = vadd.f32 0.0, %v691
      %v693 = vpop.f32.mrf.mxu0
      %v694 = vpop.f32.mrf.mxu0
      %v695 = vadd.f32 0.0, %v694
      %v696 = vpop.f32.mrf.mxu0
      %697 = vdwg.mxu0
      %700 = vrot.lane.b32.xlu0 %v450, 8
      %v701 = vpop.permute.xlu0 %700
      %702 = vrot.lane.b32.xlu0 %v453, 8
      %v703 = vpop.permute.xlu0 %702
      %708 = vrot.lane.b32.xlu0 %v571, 16
      %v709 = vpop.permute.xlu0 %708
      %710 = vrot.lane.b32.xlu0 %v574, 16
      %v711 = vpop.permute.xlu0 %710
      %716 = vrot.lane.b32.xlu0 %v692, 24
      %v717 = vpop.permute.xlu0 %716
      %718 = vrot.lane.b32.xlu0 %v695, 24
      %v719 = vpop.permute.xlu0 %718
      %v722 = vsel %vm215, %v328, %v701
      %v723 = vsel %vm215, %v331, %v703
      %v724 = vsel %vm263, %v722, %v709
      %v725 = vsel %vm263, %v723, %v711
      %vm726 = vcmask 195584
      %v727 = vsel %vm726, %v724, %v717
      %v728 = vsel %vm726, %v725, %v719
      %vm729 = vcmask 261120
      %v730 = vsel %vm729, %v727, 0.0
      %v731 = vsel %vm729, %v728, 0.0
      %732 = vst [vmem:[%s201] sm:$0xff] %v730
      %733 = vst [vmem:[%s201 + $0x8] sm:$0xff] %v731
      %s734 = smul.u32 2, %s18
      %p735 = scmp.lt.s32.totalorder %s17, 1
      %s736 = scalar_select %p735, %s17, 1
      %p737 = scmp.lt.s32.totalorder %s734, 1
      %s738 = scalar_select %p737, %s734, 1
      %s739 = smul.addr %s736, 2
      %s740 = sadd.s32 %s738, %s739
      %s741 = smul.addr %s740, 8
      %s742 = scalar_lea.vmem %s2, %s741
      // Predicated region
      $region29: #{_lambda_.31} parent=27 // pred_check
        %p743 = pneg %p99
      $region30: #{_lambda_.31} parent=27 // pred_check_branch
        %745 = sbr.rel (%p743) target = $region32
      $region31: #{_lambda_.31} parent=27 // pred_region
        %s746 = smul.u32 2, %s18
      $region32: #{_lambda_.31} parent=27 // pred_fallthru
        _
    $region28: #{_lambda_.31} parent=5 // pred_fallthru
      _
    %p747 = scmp.le.s32.totalorder 2, %s8
    // Predicated region
    $region33: #{_lambda_.31} parent=5 // pred_check
      %p748 = pneg %p747
    $region34: #{_lambda_.31} parent=5 // pred_check_branch
      %750 = sbr.rel (%p748) target = $region36
    $region35: #{_lambda_.31} parent=5 // pred_region
      %s751 = ssub.s32 %s8, 2
      // Predicated region
      $region37: #{_lambda_.31} parent=35 // pred_check
        %p752 = pneg %p105
      $region38: #{_lambda_.31} parent=35 // pred_check_branch
        %754 = sbr.rel (%p752) target = $region40
      $region39: #{_lambda_.31} parent=35 // pred_region
        %s755 = smul.u32 2, %s20
        %p756 = scmp.lt.s32.totalorder %s19, 1
        %s757 = scalar_select %p756, %s19, 1
        %p758 = scmp.lt.s32.totalorder %s755, 1
        %s759 = scalar_select %p758, %s755, 1
        %s760 = smul.addr %s757, 2
        %s761 = sadd.s32 %s759, %s760
        %s762 = smul.addr %s761, 8
        %s763 = scalar_lea.vmem %s2, %s762
      $region40: #{_lambda_.31} parent=35 // pred_fallthru
        _
    $region36: #{_lambda_.31} parent=5 // pred_fallthru
      _
  $region6: #{_lambda_.31} parent=0 // loop_footer
    %s12 = sadd.s32 1, %s8
  $region7: #{_lambda_.31} parent=0 // loop_footer_branch
    %7 = sbr.rel target = $region3
  $region8: #{_lambda_.31} parent=0 // loop_exit
    _

// kernel: _lambda_.35
$region0: #{_lambda_.35}
  #allocation0 [shape = 'u32[]', space=smem, size = 0x4, offset = 0x4, fixed_abs, tag = 'smem constant byte address 0x4 - core index']
  #allocation1 [shape = 'u32[144,128]{1,0:T(1,128)}', space=vmem, size = 0x12000, scoped, tag = 'internal scratch']
  #allocation2 [shape = 'f32[32,128]{1,0:T(8,128)}', space=vmem, size = 0x4000, scoped, tag = 'scratch operand']
  %s0 = inlined_call_operand.vmem [shape: bf16[32,384], index: 0, kind: input, shape index: {}]
  %s1 = inlined_call_operand.vmem [shape: bf16[384,128], index: 1, kind: input, shape index: {}]
  %s2 = inlined_call_operand.vmem [shape: f32[1,128], index: 2, kind: input, shape index: {}]
  %s3 = inlined_call_operand.vmem [shape: f32[32,128], index: 3, kind: input, shape index: {}]
  %s4 = inlined_call_operand.vmem [shape: f32[32,128], index: 4, kind: output, shape index: {}]
  %s5 = sld [smem:[#allocation0]]
  $region34: #{_lambda_.35} parent=0
    _
  %s7 = ssub.s32 1, %s5
  %s8 = scalar_select 0, %s7, %s5
  // Predicated region
  $region2: #{_lambda_.35} parent=0 // pred_check
    _
  $region3: #{_lambda_.35} parent=0 // pred_check_branch
    %10 = sbr.rel (0) target = $region5
  $region4: #{_lambda_.35} parent=0 // pred_region
    _
  $region5: #{_lambda_.35} parent=0 // pred_fallthru
    _
  // Predicated region
  $region6: #{_lambda_.35} parent=0 // pred_check
    _
  $region7: #{_lambda_.35} parent=0 // pred_check_branch
    %12 = sbr.rel (0) target = $region9
  $region8: #{_lambda_.35} parent=0 // pred_region
    _
  $region9: #{_lambda_.35} parent=0 // pred_fallthru
    _
  // Predicated region
  $region10: #{_lambda_.35} parent=0 // pred_check
    _
  $region11: #{_lambda_.35} parent=0 // pred_check_branch
    %14 = sbr.rel (0) target = $region13
  $region12: #{_lambda_.35} parent=0 // pred_region
    _
  $region13: #{_lambda_.35} parent=0 // pred_fallthru
    _
  // Predicated region
  $region14: #{_lambda_.35} parent=0 // pred_check
    _
  $region15: #{_lambda_.35} parent=0 // pred_check_branch
    %16 = sbr.rel (0) target = $region17
  $region16: #{_lambda_.35} parent=0 // pred_region
    _
  $region17: #{_lambda_.35} parent=0 // pred_fallthru
    _
  %p18 = scmp.eq.s32.totalorder 0, 0
  // Predicated region
  $region18: #{_lambda_.35} parent=0 // pred_check
    %p19 = pneg %p18
  $region19: #{_lambda_.35} parent=0 // pred_check_branch
    %21 = sbr.rel (%p19) target = $region21
  $region20: #{_lambda_.35} parent=0 // pred_region
    %22 = vst [vmem:[#allocation2] sm:$0xff] 0.0
    %23 = vst [vmem:[#allocation2 + $0x8] sm:$0xff] 0.0
    %24 = vst [vmem:[#allocation2 + $0x10] sm:$0xff] 0.0
    %25 = vst [vmem:[#allocation2 + $0x18] sm:$0xff] 0.0
  $region21: #{_lambda_.35} parent=0 // pred_fallthru
    _
  %v26 = vld [vmem:[#allocation2] sm:$0xff]
  %v27 = vld [vmem:[#allocation2 + $0x8] sm:$0xff]
  %v28 = vld [vmem:[#allocation2 + $0x10] sm:$0xff]
  %v29 = vld [vmem:[#allocation2 + $0x18] sm:$0xff]
  %v30 = vld [vmem:[%s0] sm:$0xff]
  %v31 = vld [vmem:[%s0 + $0x8] sm:$0xf]
  %v32 = vld [vmem:[%s0 + $0xc] sm:$0xff]
  %v33 = vld [vmem:[%s0 + $0x14] sm:$0xf]
  %v34 = vld [vmem:[%s0 + $0x18] sm:$0xff]
  %v35 = vld [vmem:[%s0 + $0x20] sm:$0xf]
  %v36 = vld [vmem:[%s0 + $0x24] sm:$0xff]
  %v37 = vld [vmem:[%s0 + $0x2c] sm:$0xf]
  %v38 = vld [vmem:[%s1] sm:$0xf]
  %v39 = vld [vmem:[%s1 + $0x4] sm:$0xf]
  %v40 = vld [vmem:[%s1 + $0x8] sm:$0xf]
  %v41 = vld [vmem:[%s1 + $0xc] sm:$0xf]
  %v42 = vld [vmem:[%s1 + $0x10] sm:$0xf]
  %v43 = vld [vmem:[%s1 + $0x14] sm:$0xf]
  %v44 = vld [vmem:[%s1 + $0x18] sm:$0xf]
  %v45 = vld [vmem:[%s1 + $0x1c] sm:$0xf]
  %v46 = vld [vmem:[%s1 + $0x20] sm:$0xf]
  %v47 = vld [vmem:[%s1 + $0x24] sm:$0xf]
  %v48 = vld [vmem:[%s1 + $0x28] sm:$0xf]
  %v49 = vld [vmem:[%s1 + $0x2c] sm:$0xf]
  %v50 = vld [vmem:[%s1 + $0x30] sm:$0xf]
  %v51 = vld [vmem:[%s1 + $0x34] sm:$0xf]
  %v52 = vld [vmem:[%s1 + $0x38] sm:$0xf]
  %v53 = vld [vmem:[%s1 + $0x3c] sm:$0xf]
  %v54 = vld [vmem:[%s1 + $0x40] sm:$0xf]
  %v55 = vld [vmem:[%s1 + $0x44] sm:$0xf]
  %v56 = vld [vmem:[%s1 + $0x48] sm:$0xf]
  %v57 = vld [vmem:[%s1 + $0x4c] sm:$0xf]
  %v58 = vld [vmem:[%s1 + $0x50] sm:$0xf]
  %v59 = vld [vmem:[%s1 + $0x54] sm:$0xf]
  %v60 = vld [vmem:[%s1 + $0x58] sm:$0xf]
  %v61 = vld [vmem:[%s1 + $0x5c] sm:$0xf]
  %v62 = vld [vmem:[%s1 + $0x60] sm:$0xf]
  %v63 = vld [vmem:[%s1 + $0x64] sm:$0xf]
  %v64 = vld [vmem:[%s1 + $0x68] sm:$0xf]
  %v65 = vld [vmem:[%s1 + $0x6c] sm:$0xf]
  %v66 = vld [vmem:[%s1 + $0x70] sm:$0xf]
  %v67 = vld [vmem:[%s1 + $0x74] sm:$0xf]
  %v68 = vld [vmem:[%s1 + $0x78] sm:$0xf]
  %v69 = vld [vmem:[%s1 + $0x7c] sm:$0xf]
  %v70 = vld [vmem:[%s1 + $0x80] sm:$0xf]
  %v71 = vld [vmem:[%s1 + $0x84] sm:$0xf]
  %v72 = vld [vmem:[%s1 + $0x88] sm:$0xf]
  %v73 = vld [vmem:[%s1 + $0x8c] sm:$0xf]
  %v74 = vld [vmem:[%s1 + $0x90] sm:$0xf]
  %v75 = vld [vmem:[%s1 + $0x94] sm:$0xf]
  %v76 = vld [vmem:[%s1 + $0x98] sm:$0xf]
  %v77 = vld [vmem:[%s1 + $0x9c] sm:$0xf]
  %v78 = vld [vmem:[%s1 + $0xa0] sm:$0xf]
  %v79 = vld [vmem:[%s1 + $0xa4] sm:$0xf]
  %v80 = vld [vmem:[%s1 + $0xa8] sm:$0xf]
  %v81 = vld [vmem:[%s1 + $0xac] sm:$0xf]
  %v82 = vld [vmem:[%s1 + $0xb0] sm:$0xf]
  %v83 = vld [vmem:[%s1 + $0xb4] sm:$0xf]
  %v84 = vld [vmem:[%s1 + $0xb8] sm:$0xf]
  %v85 = vld [vmem:[%s1 + $0xbc] sm:$0xf]
  %v94 = vunpack.c.l.b16 %v30
  %v95 = vunpack.c.h.b16 %v30
  %v96 = vunpack.c.l.b16 %v31
  %v97 = vunpack.c.l.b16 %v32
  %v98 = vunpack.c.h.b16 %v32
  %v99 = vunpack.c.l.b16 %v33
  %v100 = vunpack.c.l.b16 %v34
  %v101 = vunpack.c.h.b16 %v34
  %v102 = vunpack.c.l.b16 %v35
  %v103 = vunpack.c.l.b16 %v36
  %v104 = vunpack.c.h.b16 %v36
  %v105 = vunpack.c.l.b16 %v37
  %v106 = vpack.c.b16 %v97, %v94
  %v107 = vpack.c.b16 %v98, %v95
  %v108 = vpack.c.b16 %v99, %v96
  %v109 = vpack.c.b16 %v103, %v100
  %v110 = vpack.c.b16 %v104, %v101
  %v111 = vpack.c.b16 %v105, %v102
  %v166 = vunpack.c.l.b16 %v38
  %v167 = vunpack.c.l.b16 %v39
  %v168 = vunpack.c.l.b16 %v40
  %v169 = vunpack.c.l.b16 %v41
  %v170 = vunpack.c.l.b16 %v42
  %v171 = vunpack.c.l.b16 %v43
  %v172 = vunpack.c.l.b16 %v44
  %v173 = vunpack.c.l.b16 %v45
  %v174 = vunpack.c.l.b16 %v46
  %v175 = vunpack.c.l.b16 %v47
  %v176 = vunpack.c.l.b16 %v48
  %v177 = vunpack.c.l.b16 %v49
  %v178 = vunpack.c.l.b16 %v50
  %v179 = vunpack.c.l.b16 %v51
  %v180 = vunpack.c.l.b16 %v52
  %v181 = vunpack.c.l.b16 %v53
  %v182 = vunpack.c.l.b16 %v54
  %v183 = vunpack.c.l.b16 %v55
  %v184 = vunpack.c.l.b16 %v56
  %v185 = vunpack.c.l.b16 %v57
  %v186 = vunpack.c.l.b16 %v58
  %v187 = vunpack.c.l.b16 %v59
  %v188 = vunpack.c.l.b16 %v60
  %v189 = vunpack.c.l.b16 %v61
  %v190 = vunpack.c.l.b16 %v62
  %v191 = vunpack.c.l.b16 %v63
  %v192 = vunpack.c.l.b16 %v64
  %v193 = vunpack.c.l.b16 %v65
  %v194 = vunpack.c.l.b16 %v66
  %v195 = vunpack.c.l.b16 %v67
  %v196 = vunpack.c.l.b16 %v68
  %v197 = vunpack.c.l.b16 %v69
  %v198 = vunpack.c.l.b16 %v70
  %v199 = vunpack.c.l.b16 %v71
  %v200 = vunpack.c.l.b16 %v72
  %v201 = vunpack.c.l.b16 %v73
  %v202 = vunpack.c.l.b16 %v74
  %v203 = vunpack.c.l.b16 %v75
  %v204 = vunpack.c.l.b16 %v76
  %v205 = vunpack.c.l.b16 %v77
  %v206 = vunpack.c.l.b16 %v78
  %v207 = vunpack.c.l.b16 %v79
  %v208 = vunpack.c.l.b16 %v80
  %v209 = vunpack.c.l.b16 %v81
  %v210 = vunpack.c.l.b16 %v82
  %v211 = vunpack.c.l.b16 %v83
  %v212 = vunpack.c.l.b16 %v84
  %v213 = vunpack.c.l.b16 %v85
  %v214 = vpack.c.b16 %v167, %v166
  %v215 = vpack.c.b16 %v169, %v168
  %v216 = vpack.c.b16 %v171, %v170
  %v217 = vpack.c.b16 %v173, %v172
  %v218 = vpack.c.b16 %v175, %v174
  %v219 = vpack.c.b16 %v177, %v176
  %v220 = vpack.c.b16 %v179, %v178
  %v221 = vpack.c.b16 %v181, %v180
  %v222 = vpack.c.b16 %v183, %v182
  %v223 = vpack.c.b16 %v185, %v184
  %v224 = vpack.c.b16 %v187, %v186
  %v225 = vpack.c.b16 %v189, %v188
  %v226 = vpack.c.b16 %v191, %v190
  %v227 = vpack.c.b16 %v193, %v192
  %v228 = vpack.c.b16 %v195, %v194
  %v229 = vpack.c.b16 %v197, %v196
  %v230 = vpack.c.b16 %v199, %v198
  %v231 = vpack.c.b16 %v201, %v200
  %v232 = vpack.c.b16 %v203, %v202
  %v233 = vpack.c.b16 %v205, %v204
  %v234 = vpack.c.b16 %v207, %v206
  %v235 = vpack.c.b16 %v209, %v208
  %v236 = vpack.c.b16 %v211, %v210
  %v237 = vpack.c.b16 %v213, %v212
  %262 = vmatprep.subr.bf16.mxu0 0
  %263 = vmatpush1.bf16.msra.mxu0 %v221
  %264 = vmatprep.subr.bf16.mxu0 0
  %265 = vmatpush1.bf16.msra.mxu0 %v220
  %266 = vmatprep.subr.bf16.mxu0 0
  %267 = vmatpush1.bf16.msra.mxu0 %v219
  %268 = vmatprep.subr.bf16.mxu0 0
  %269 = vmatpush1.bf16.msra.mxu0 %v218
  %270 = vmatprep.subr.bf16.mxu0 0
  %271 = vmatpush1.bf16.msra.mxu0 %v217
  %272 = vmatprep.subr.bf16.mxu0 0
  %273 = vmatpush1.bf16.msra.mxu0 %v216
  %274 = vmatprep.subr.bf16.mxu0 0
  %275 = vmatpush1.bf16.msra.mxu0 %v215
  %276 = vmatprep.subr.bf16.mxu0 0
  %277 = vmatpush1.bf16.msra.mxu0 %v214
  %278 = vmatprep.subr.bf16.mxu0 0
  %279 = vmatpush2.bf16.msra.mxu0 %v229
  %280 = vmatprep.subr.bf16.mxu0 0
  %281 = vmatpush2.bf16.msra.mxu0 %v228
  %282 = vmatprep.subr.bf16.mxu0 0
  %283 = vmatpush2.bf16.msra.mxu0 %v227
  %284 = vmatprep.subr.bf16.mxu0 0
  %285 = vmatpush2.bf16.msra.mxu0 %v226
  %286 = vmatprep.subr.bf16.mxu0 0
  %287 = vmatpush2.bf16.msra.mxu0 %v225
  %288 = vmatprep.subr.bf16.mxu0 0
  %289 = vmatpush2.bf16.msra.mxu0 %v224
  %290 = vmatprep.subr.bf16.mxu0 0
  %291 = vmatpush2.bf16.msra.mxu0 %v223
  %292 = vmatprep.subr.bf16.mxu0 0
  %293 = vmatpush2.bf16.msra.mxu0 %v222
  %294 = vmatprep.mubr.bf16.mxu0 %v107
  %295 = vmatmul.mubr.bf16.gmra.mxu0 %v106
  %v296 = vpop.f32.mrf.mxu0
  %v297 = vadd.f32 0.0, %v296
  %v298 = vpop.f32.mrf.mxu0
  %v299 = vpop.f32.mrf.mxu0
  %v300 = vadd.f32 0.0, %v299
  %v301 = vpop.f32.mrf.mxu0
  %302 = vmatprep.mubr.bf16.mxu0 %v110
  %303 = vmatmul.mubr.bf16.gmra.mxu0 %v109
  %v304 = vpop.f32.mrf.mxu0
  %v305 = vadd.f32 0.0, %v304
  %v306 = vpop.f32.mrf.mxu0
  %v307 = vpop.f32.mrf.mxu0
  %v308 = vadd.f32 0.0, %v307
  %v309 = vpop.f32.mrf.mxu0
  %310 = vdwg.mxu0
  %311 = vmatprep.subr.bf16.mxu0 0
  %312 = vmatpush1.bf16.msra.mxu0 %v237
  %313 = vmatprep.subr.bf16.mxu0 0
  %314 = vmatpush1.bf16.msra.mxu0 %v236
  %315 = vmatprep.subr.bf16.mxu0 0
  %316 = vmatpush1.bf16.msra.mxu0 %v235
  %317 = vmatprep.subr.bf16.mxu0 0
  %318 = vmatpush1.bf16.msra.mxu0 %v234
  %319 = vmatprep.subr.bf16.mxu0 0
  %320 = vmatpush1.bf16.msra.mxu0 %v233
  %321 = vmatprep.subr.bf16.mxu0 0
  %322 = vmatpush1.bf16.msra.mxu0 %v232
  %323 = vmatprep.subr.bf16.mxu0 0
  %324 = vmatpush1.bf16.msra.mxu0 %v231
  %325 = vmatprep.subr.bf16.mxu0 0
  %326 = vmatpush1.bf16.msra.mxu0 %v230
  %327 = vmatprep.subr.bf16.mxu0 0
  %328 = vmatpush2.bf16.msra.mxu0 0
  %329 = vmatprep.subr.bf16.mxu0 0
  %330 = vmatpush2.bf16.msra.mxu0 0
  %331 = vmatprep.subr.bf16.mxu0 0
  %332 = vmatpush2.bf16.msra.mxu0 0
  %333 = vmatprep.subr.bf16.mxu0 0
  %334 = vmatpush2.bf16.msra.mxu0 0
  %335 = vmatprep.subr.bf16.mxu0 0
  %336 = vmatpush2.bf16.msra.mxu0 0
  %337 = vmatprep.subr.bf16.mxu0 0
  %338 = vmatpush2.bf16.msra.mxu0 0
  %339 = vmatprep.subr.bf16.mxu0 0
  %340 = vmatpush2.bf16.msra.mxu0 0
  %341 = vmatprep.subr.bf16.mxu0 0
  %342 = vmatpush2.bf16.msra.mxu0 0
  %343 = vmatprep.mubr.bf16.mxu0 0
  %344 = vmatmul.mubr.bf16.gmra.mxu0 %v108
  %v345 = vpop.f32.mrf.mxu0
  %v346 = vadd.f32 %v297, %v345
  %v347 = vpop.f32.mrf.mxu0
  %v348 = vpop.f32.mrf.mxu0
  %v349 = vadd.f32 %v300, %v348
  %v350 = vpop.f32.mrf.mxu0
  %351 = vmatprep.mubr.bf16.mxu0 0
  %352 = vmatmul.mubr.bf16.gmra.mxu0 %v111
  %v353 = vpop.f32.mrf.mxu0
  %v354 = vadd.f32 %v305, %v353
  %v355 = vpop.f32.mrf.mxu0
  %v356 = vpop.f32.mrf.mxu0
  %v357 = vadd.f32 %v308, %v356
  %v358 = vpop.f32.mrf.mxu0
  %359 = vdwg.mxu0
  %v360 = vadd.f32 %v26, %v346
  %v361 = vadd.f32 %v27, %v349
  %v362 = vadd.f32 %v28, %v354
  %v363 = vadd.f32 %v29, %v357
  %364 = vst [vmem:[#allocation2] sm:$0xff] %v360
  %365 = vst [vmem:[#allocation2 + $0x8] sm:$0xff] %v361
  %366 = vst [vmem:[#allocation2 + $0x10] sm:$0xff] %v362
  %367 = vst [vmem:[#allocation2 + $0x18] sm:$0xff] %v363
  // Predicated region
  $region22: #{_lambda_.35} parent=0 // pred_check
    %p368 = pneg %p18
  $region23: #{_lambda_.35} parent=0 // pred_check_branch
    %370 = sbr.rel (%p368) target = $region25
  $region24: #{_lambda_.35} parent=0 // pred_region
    %v371 = vld [vmem:[#allocation2] sm:$0xff]
    %v372 = vld [vmem:[#allocation2 + $0x8] sm:$0xff]
    %v373 = vld [vmem:[#allocation2 + $0x10] sm:$0xff]
    %v374 = vld [vmem:[#allocation2 + $0x18] sm:$0xff]
    %v375 = vld [vmem:[%s2] sm:$0x1]
    %v377 = vlaneseq
    %v378 = vshrl.u32 %v377, 7
    %v379 = vsub.s32 0, %v378
    %v380 = vrot.slane %v375, %v379
    %v382 = vadd.f32 %v371, %v380
    %v383 = vadd.f32 %v372, %v380
    %v384 = vadd.f32 %v373, %v380
    %v385 = vadd.f32 %v374, %v380
    %v386 = vxor.u32 %v382, 2147483648
    %v387 = vxor.u32 %v383, 2147483648
    %v388 = vxor.u32 %v384, 2147483648
    %v389 = vxor.u32 %v385, 2147483648
    %v390 = vmul.f32 %v386, 1.442695
    %v391 = vpow.pop %v390
    %v392 = vmul.f32 %v387, 1.442695
    %v393 = vpow.pop %v392
    %v394 = vmul.f32 %v388, 1.442695
    %v395 = vpow.pop %v394
    %v396 = vmul.f32 %v389, 1.442695
    %v397 = vpow.pop %v396
    %v398 = vadd.f32 %v391, 1.0
    %v399 = vadd.f32 %v393, 1.0
    %v400 = vadd.f32 %v395, 1.0
    %v401 = vadd.f32 %v397, 1.0
    %v402 = vrcp.pop %v398
    %v403 = vmul.f32 1.0, %v402
    %v404 = vrcp.pop %v399
    %v405 = vmul.f32 1.0, %v404
    %v406 = vrcp.pop %v400
    %v407 = vmul.f32 1.0, %v406
    %v408 = vrcp.pop %v401
    %v409 = vmul.f32 1.0, %v408
    %v410 = vmul.f32 %v382, %v403
    %v411 = vmul.f32 %v383, %v405
    %v412 = vmul.f32 %v384, %v407
    %v413 = vmul.f32 %v385, %v409
    %v414 = vld [vmem:[%s3] sm:$0xff]
    %v415 = vld [vmem:[%s3 + $0x8] sm:$0xff]
    %v416 = vld [vmem:[%s3 + $0x10] sm:$0xff]
    %v417 = vld [vmem:[%s3 + $0x18] sm:$0xff]
    %v418 = vadd.f32 %v410, %v414
    %v419 = vadd.f32 %v411, %v415
    %v420 = vadd.f32 %v412, %v416
    %v421 = vadd.f32 %v413, %v417
    %422 = vst [vmem:[%s4] sm:$0xff] %v418
    %423 = vst [vmem:[%s4 + $0x8] sm:$0xff] %v419
    %424 = vst [vmem:[%s4 + $0x10] sm:$0xff] %v420
    %425 = vst [vmem:[%s4 + $0x18] sm:$0xff] %v421
  $region25: #{_lambda_.35} parent=0 // pred_fallthru
    _
  // Predicated region
  $region26: #{_lambda_.35} parent=0 // pred_check
    _
  $region27: #{_lambda_.35} parent=0 // pred_check_branch
    %427 = sbr.rel (0) target = $region29
  $region28: #{_lambda_.35} parent=0 // pred_region
    _
  $region29: #{_lambda_.35} parent=0 // pred_fallthru
    _
  // Predicated region
  $region30: #{_lambda_.35} parent=0 // pred_check
    _
  $region31: #{_lambda_.35} parent=0 // pred_check_branch
    %429 = sbr.rel (0) target = $region33
  $region32: #{_lambda_.35} parent=0 // pred_region
    _
  $region33: #{_lambda_.35} parent=0 // pred_fallthru
    _

// kernel: _lambda_.43
$region0: #{_lambda_.43}
  #allocation0 [shape = 'u32[]', space=smem, size = 0x4, offset = 0x4, fixed_abs, tag = 'smem constant byte address 0x4 - core index']
  #allocation1 [shape = 'u32[144,128]{1,0:T(1,128)}', space=vmem, size = 0x12000, scoped, tag = 'internal scratch']
  %s0 = inlined_call_operand.vmem [shape: f32[32,128], index: 0, kind: input, shape index: {}]
  %s1 = inlined_call_operand.vmem [shape: f32[1,128], index: 1, kind: input, shape index: {}]
  %s2 = inlined_call_operand.vmem [shape: f32[1,128], index: 2, kind: input, shape index: {}]
  %s3 = inlined_call_operand.vmem [shape: bf16[128,128], index: 3, kind: input, shape index: {}]
  %s4 = inlined_call_operand.vmem [shape: f32[1,128], index: 4, kind: input, shape index: {}]
  %s5 = inlined_call_operand.vmem [shape: bf16[128,128], index: 5, kind: input, shape index: {}]
  %s6 = inlined_call_operand.vmem [shape: f32[1,128], index: 6, kind: input, shape index: {}]
  %s7 = inlined_call_operand.hbm [shape: f32[32,128], index: 7, kind: output, shape index: {}]
  %s8 = sld [smem:[#allocation0]]
  $region38: #{_lambda_.43} parent=0
    _
  %s10 = ssub.s32 1, %s8
  %s11 = scalar_select 0, %s10, %s8
  $region1: #{_lambda_.43} parent=0
    #allocation2 [shape = 'u8[16384]{0}', space=vmem, size = 0x4000, scoped, tag = 'output window, operand 0, single buffered']
    #allocation3 [shape = 's32[1]{0}', space=sflag, size = 0x4, scoped, tag = 'scoped memory for _lambda_.43']
    %12 = vsyncpa [#allocation3], 0
    // Predicated region
    $region2: #{_lambda_.43} parent=1 // pred_check
      _
    $region3: #{_lambda_.43} parent=1 // pred_check_branch
      %14 = sbr.rel (0) target = $region5
    $region4: #{_lambda_.43} parent=1 // pred_region
      _
    $region5: #{_lambda_.43} parent=1 // pred_fallthru
      _
    // Predicated region
    $region6: #{_lambda_.43} parent=1 // pred_check
      _
    $region7: #{_lambda_.43} parent=1 // pred_check_branch
      %16 = sbr.rel (0) target = $region9
    $region8: #{_lambda_.43} parent=1 // pred_region
      _
    $region9: #{_lambda_.43} parent=1 // pred_fallthru
      _
    // Predicated region
    $region10: #{_lambda_.43} parent=1 // pred_check
      _
    $region11: #{_lambda_.43} parent=1 // pred_check_branch
      %18 = sbr.rel (0) target = $region13
    $region12: #{_lambda_.43} parent=1 // pred_region
      _
    $region13: #{_lambda_.43} parent=1 // pred_fallthru
      _
    // Predicated region
    $region14: #{_lambda_.43} parent=1 // pred_check
      _
    $region15: #{_lambda_.43} parent=1 // pred_check_branch
      %20 = sbr.rel (0) target = $region17
    $region16: #{_lambda_.43} parent=1 // pred_region
      _
    $region17: #{_lambda_.43} parent=1 // pred_fallthru
      _
    // Predicated region
    $region18: #{_lambda_.43} parent=1 // pred_check
      _
    $region19: #{_lambda_.43} parent=1 // pred_check_branch
      %22 = sbr.rel (0) target = $region21
    $region20: #{_lambda_.43} parent=1 // pred_region
      _
    $region21: #{_lambda_.43} parent=1 // pred_fallthru
      _
    // Predicated region
    $region22: #{_lambda_.43} parent=1 // pred_check
      _
    $region23: #{_lambda_.43} parent=1 // pred_check_branch
      %24 = sbr.rel (0) target = $region25
    $region24: #{_lambda_.43} parent=1 // pred_region
      _
    $region25: #{_lambda_.43} parent=1 // pred_fallthru
      _
    // Predicated region
    $region26: #{_lambda_.43} parent=1 // pred_check
      _
    $region27: #{_lambda_.43} parent=1 // pred_check_branch
      %26 = sbr.rel (0) target = $region29
    $region28: #{_lambda_.43} parent=1 // pred_region
      _
    $region29: #{_lambda_.43} parent=1 // pred_fallthru
      _
    %v28 = vld [vmem:[%s0] sm:$0xff]
    %v29 = vld [vmem:[%s0 + $0x8] sm:$0xff]
    %v30 = vld [vmem:[%s0 + $0x10] sm:$0xff]
    %v31 = vld [vmem:[%s0 + $0x18] sm:$0xff]
    %32 = vadd.xlane.f32.xlu0 %v28
    %v33 = vpop.xlane.xlu0 %32
    %34 = vadd.xlane.f32.xlu0 %v29
    %v35 = vpop.xlane.xlu0 %34
    %36 = vadd.xlane.f32.xlu0 %v30
    %v37 = vpop.xlane.xlu0 %36
    %38 = vadd.xlane.f32.xlu0 %v31
    %v39 = vpop.xlane.xlu0 %38
    %v40 = vmul.f32 %v33, 0.03125
    %v41 = vmul.f32 %v35, 0.03125
    %v42 = vmul.f32 %v37, 0.03125
    %v43 = vmul.f32 %v39, 0.03125
    %v44 = vsub.f32 %v28, %v40
    %v45 = vsub.f32 %v29, %v41
    %v46 = vsub.f32 %v30, %v42
    %v47 = vsub.f32 %v31, %v43
    %v48 = vmul.f32 %v44, %v44
    %v49 = vmul.f32 %v45, %v45
    %v50 = vmul.f32 %v46, %v46
    %v51 = vmul.f32 %v47, %v47
    %52 = vadd.xlane.f32.xlu0 %v48
    %v53 = vpop.xlane.xlu0 %52
    %54 = vadd.xlane.f32.xlu0 %v49
    %v55 = vpop.xlane.xlu0 %54
    %56 = vadd.xlane.f32.xlu0 %v50
    %v57 = vpop.xlane.xlu0 %56
    %58 = vadd.xlane.f32.xlu0 %v51
    %v59 = vpop.xlane.xlu0 %58
    %v60 = vmul.f32 %v40, 96.0
    %v61 = vmul.f32 %v41, 96.0
    %v62 = vmul.f32 %v42, 96.0
    %v63 = vmul.f32 %v43, 96.0
    %v64 = vmul.f32 %v60, %v40
    %v65 = vmul.f32 %v61, %v41
    %v66 = vmul.f32 %v62, %v42
    %v67 = vmul.f32 %v63, %v43
    %v68 = vsub.f32 %v53, %v64
    %v69 = vsub.f32 %v55, %v65
    %v70 = vsub.f32 %v57, %v66
    %v71 = vsub.f32 %v59, %v67
    %v72 = vmul.f32 %v68, 0.03125
    %v73 = vmul.f32 %v69, 0.03125
    %v74 = vmul.f32 %v70, 0.03125
    %v75 = vmul.f32 %v71, 0.03125
    %v76 = vmax.f32 %v72, 0.0
    %v77 = vmax.f32 %v73, 0.0
    %v78 = vmax.f32 %v74, 0.0
    %v79 = vmax.f32 %v75, 0.0
    %v80 = vadd.f32 %v76, 1e-05
    %v81 = vadd.f32 %v77, 1e-05
    %v82 = vadd.f32 %v78, 1e-05
    %v83 = vadd.f32 %v79, 1e-05
    %v84 = vrsqrt.pop %v80
    %v85 = vrsqrt.pop %v81
    %v86 = vrsqrt.pop %v82
    %v87 = vrsqrt.pop %v83
    %v88 = vmul.f32 %v44, %v84
    %v89 = vmul.f32 %v45, %v85
    %v90 = vmul.f32 %v46, %v86
    %v91 = vmul.f32 %v47, %v87
    %v92 = vld [vmem:[%s1] sm:$0x1]
    %v94 = vlaneseq
    %v95 = vshrl.u32 %v94, 7
    %v96 = vsub.s32 0, %v95
    %v97 = vrot.slane %v92, %v96
    %v99 = vmul.f32 %v88, %v97
    %v100 = vmul.f32 %v89, %v97
    %v101 = vmul.f32 %v90, %v97
    %v102 = vmul.f32 %v91, %v97
    %v103 = vld [vmem:[%s2] sm:$0x1]
    %v105 = vlaneseq
    %v106 = vshrl.u32 %v105, 7
    %v107 = vsub.s32 0, %v106
    %v108 = vrot.slane %v103, %v107
    %v110 = vadd.f32 %v99, %v108
    %v111 = vadd.f32 %v100, %v108
    %v112 = vadd.f32 %v101, %v108
    %v113 = vadd.f32 %v102, %v108
    %v114 = vpack.c.bf16 %v111, %v110
    %v115 = vpack.c.bf16 %v113, %v112
    %v116 = vld [vmem:[%s3] sm:$0xf]
    %v117 = vld [vmem:[%s3 + $0x4] sm:$0xf]
    %v118 = vld [vmem:[%s3 + $0x8] sm:$0xf]
    %v119 = vld [vmem:[%s3 + $0xc] sm:$0xf]
    %v120 = vld [vmem:[%s3 + $0x10] sm:$0xf]
    %v121 = vld [vmem:[%s3 + $0x14] sm:$0xf]
    %v122 = vld [vmem:[%s3 + $0x18] sm:$0xf]
    %v123 = vld [vmem:[%s3 + $0x1c] sm:$0xf]
    %v124 = vld [vmem:[%s3 + $0x20] sm:$0xf]
    %v125 = vld [vmem:[%s3 + $0x24] sm:$0xf]
    %v126 = vld [vmem:[%s3 + $0x28] sm:$0xf]
    %v127 = vld [vmem:[%s3 + $0x2c] sm:$0xf]
    %v128 = vld [vmem:[%s3 + $0x30] sm:$0xf]
    %v129 = vld [vmem:[%s3 + $0x34] sm:$0xf]
    %v130 = vld [vmem:[%s3 + $0x38] sm:$0xf]
    %v131 = vld [vmem:[%s3 + $0x3c] sm:$0xf]
    %v132 = vld [vmem:[%s4] sm:$0x1]
    %v134 = vlaneseq
    %v135 = vshrl.u32 %v134, 7
    %v136 = vsub.s32 0, %v135
    %v137 = vrot.slane %v132, %v136
    %v155 = vunpack.c.l.b16 %v116
    %v156 = vunpack.c.l.b16 %v117
    %v157 = vunpack.c.l.b16 %v118
    %v158 = vunpack.c.l.b16 %v119
    %v159 = vunpack.c.l.b16 %v120
    %v160 = vunpack.c.l.b16 %v121
    %v161 = vunpack.c.l.b16 %v122
    %v162 = vunpack.c.l.b16 %v123
    %v163 = vunpack.c.l.b16 %v124
    %v164 = vunpack.c.l.b16 %v125
    %v165 = vunpack.c.l.b16 %v126
    %v166 = vunpack.c.l.b16 %v127
    %v167 = vunpack.c.l.b16 %v128
    %v168 = vunpack.c.l.b16 %v129
    %v169 = vunpack.c.l.b16 %v130
    %v170 = vunpack.c.l.b16 %v131
    %v171 = vpack.c.b16 %v156, %v155
    %v172 = vpack.c.b16 %v158, %v157
    %v173 = vpack.c.b16 %v160, %v159
    %v174 = vpack.c.b16 %v162, %v161
    %v175 = vpack.c.b16 %v164, %v163
    %v176 = vpack.c.b16 %v166, %v165
    %v177 = vpack.c.b16 %v168, %v167
    %v178 = vpack.c.b16 %v170, %v169
    %187 = vmatprep.subr.bf16.mxu0 0
    %188 = vmatpush1.bf16.msra.mxu0 %v178
    %189 = vmatprep.subr.bf16.mxu0 0
    %190 = vmatpush1.bf16.msra.mxu0 %v177
    %191 = vmatprep.subr.bf16.mxu0 0
    %192 = vmatpush1.bf16.msra.mxu0 %v176
    %193 = vmatprep.subr.bf16.mxu0 0
    %194 = vmatpush1.bf16.msra.mxu0 %v175
    %195 = vmatprep.subr.bf16.mxu0 0
    %196 = vmatpush1.bf16.msra.mxu0 %v174
    %197 = vmatprep.subr.bf16.mxu0 0
    %198 = vmatpush1.bf16.msra.mxu0 %v173
    %199 = vmatprep.subr.bf16.mxu0 0
    %200 = vmatpush1.bf16.msra.mxu0 %v172
    %201 = vmatprep.subr.bf16.mxu0 0
    %202 = vmatpush1.bf16.msra.mxu0 %v171
    %203 = vmatprep.subr.bf16.mxu0 0
    %204 = vmatpush2.bf16.msra.mxu0 0
    %205 = vmatprep.subr.bf16.mxu0 0
    %206 = vmatpush2.bf16.msra.mxu0 0
    %207 = vmatprep.subr.bf16.mxu0 0
    %208 = vmatpush2.bf16.msra.mxu0 0
    %209 = vmatprep.subr.bf16.mxu0 0
    %210 = vmatpush2.bf16.msra.mxu0 0
    %211 = vmatprep.subr.bf16.mxu0 0
    %212 = vmatpush2.bf16.msra.mxu0 0
    %213 = vmatprep.subr.bf16.mxu0 0
    %214 = vmatpush2.bf16.msra.mxu0 0
    %215 = vmatprep.subr.bf16.mxu0 0
    %216 = vmatpush2.bf16.msra.mxu0 0
    %217 = vmatprep.subr.bf16.mxu0 0
    %218 = vmatpush2.bf16.msra.mxu0 0
    %219 = vmatprep.mubr.bf16.mxu0 0
    %220 = vmatmul.mubr.bf16.gmra.mxu0 %v114
    %v221 = vpop.f32.mrf.mxu0
    %v222 = vadd.f32 %v137, %v221
    %v223 = vpop.f32.mrf.mxu0
    %v224 = vpop.f32.mrf.mxu0
    %v225 = vadd.f32 %v137, %v224
    %v226 = vpop.f32.mrf.mxu0
    %227 = vmatprep.mubr.bf16.mxu0 0
    %228 = vmatmul.mubr.bf16.gmra.mxu0 %v115
    %v229 = vpop.f32.mrf.mxu0
    %v230 = vadd.f32 %v137, %v229
    %v231 = vpop.f32.mrf.mxu0
    %v232 = vpop.f32.mrf.mxu0
    %v233 = vadd.f32 %v137, %v232
    %v234 = vpop.f32.mrf.mxu0
    %235 = vdwg.mxu0
    %v236 = vmul.f32 %v222, %v222
    %v237 = vmul.f32 %v225, %v225
    %v238 = vmul.f32 %v230, %v230
    %v239 = vmul.f32 %v233, %v233
    %v240 = vmul.f32 %v222, %v236
    %v241 = vmul.f32 %v225, %v237
    %v242 = vmul.f32 %v230, %v238
    %v243 = vmul.f32 %v233, %v239
    %v244 = vmul.f32 %v240, 0.044715
    %v245 = vmul.f32 %v241, 0.044715
    %v246 = vmul.f32 %v242, 0.044715
    %v247 = vmul.f32 %v243, 0.044715
    %v248 = vadd.f32 %v222, %v244
    %v249 = vadd.f32 %v225, %v245
    %v250 = vadd.f32 %v230, %v246
    %v251 = vadd.f32 %v233, %v247
    %v252 = vmul.f32 %v248, 0.7978846
    %v253 = vmul.f32 %v249, 0.7978846
    %v254 = vmul.f32 %v250, 0.7978846
    %v255 = vmul.f32 %v251, 0.7978846
    %v256 = vtanh.pop %v252
    %v257 = vtanh.pop %v253
    %v258 = vtanh.pop %v254
    %v259 = vtanh.pop %v255
    %v260 = vadd.f32 %v256, 1.0
    %v261 = vadd.f32 %v257, 1.0
    %v262 = vadd.f32 %v258, 1.0
    %v263 = vadd.f32 %v259, 1.0
    %v264 = vmul.f32 %v260, 0.5
    %v265 = vmul.f32 %v261, 0.5
    %v266 = vmul.f32 %v262, 0.5
    %v267 = vmul.f32 %v263, 0.5
    %v268 = vmul.f32 %v222, %v264
    %v269 = vmul.f32 %v225, %v265
    %v270 = vmul.f32 %v230, %v266
    %v271 = vmul.f32 %v233, %v267
    %v272 = vpack.c.bf16 %v269, %v268
    %v273 = vpack.c.bf16 %v271, %v270
    %v274 = vld [vmem:[%s5] sm:$0xf]
    %v275 = vld [vmem:[%s5 + $0x4] sm:$0xf]
    %v276 = vld [vmem:[%s5 + $0x8] sm:$0xf]
    %v277 = vld [vmem:[%s5 + $0xc] sm:$0xf]
    %v278 = vld [vmem:[%s5 + $0x10] sm:$0xf]
    %v279 = vld [vmem:[%s5 + $0x14] sm:$0xf]
    %v280 = vld [vmem:[%s5 + $0x18] sm:$0xf]
    %v281 = vld [vmem:[%s5 + $0x1c] sm:$0xf]
    %v282 = vld [vmem:[%s5 + $0x20] sm:$0xf]
    %v283 = vld [vmem:[%s5 + $0x24] sm:$0xf]
    %v284 = vld [vmem:[%s5 + $0x28] sm:$0xf]
    %v285 = vld [vmem:[%s5 + $0x2c] sm:$0xf]
    %v286 = vld [vmem:[%s5 + $0x30] sm:$0xf]
    %v287 = vld [vmem:[%s5 + $0x34] sm:$0xf]
    %v288 = vld [vmem:[%s5 + $0x38] sm:$0xf]
    %v289 = vld [vmem:[%s5 + $0x3c] sm:$0xf]
    %v290 = vld [vmem:[%s6] sm:$0x1]
    %v292 = vlaneseq
    %v293 = vshrl.u32 %v292, 7
    %v294 = vsub.s32 0, %v293
    %v295 = vrot.slane %v290, %v294
    %v313 = vunpack.c.l.b16 %v274
    %v314 = vunpack.c.l.b16 %v275
    %v315 = vunpack.c.l.b16 %v276
    %v316 = vunpack.c.l.b16 %v277
    %v317 = vunpack.c.l.b16 %v278
    %v318 = vunpack.c.l.b16 %v279
    %v319 = vunpack.c.l.b16 %v280
    %v320 = vunpack.c.l.b16 %v281
    %v321 = vunpack.c.l.b16 %v282
    %v322 = vunpack.c.l.b16 %v283
    %v323 = vunpack.c.l.b16 %v284
    %v324 = vunpack.c.l.b16 %v285
    %v325 = vunpack.c.l.b16 %v286
    %v326 = vunpack.c.l.b16 %v287
    %v327 = vunpack.c.l.b16 %v288
    %v328 = vunpack.c.l.b16 %v289
    %v329 = vpack.c.b16 %v314, %v313
    %v330 = vpack.c.b16 %v316, %v315
    %v331 = vpack.c.b16 %v318, %v317
    %v332 = vpack.c.b16 %v320, %v319
    %v333 = vpack.c.b16 %v322, %v321
    %v334 = vpack.c.b16 %v324, %v323
    %v335 = vpack.c.b16 %v326, %v325
    %v336 = vpack.c.b16 %v328, %v327
    %345 = vmatprep.subr.bf16.mxu0 0
    %346 = vmatpush1.bf16.msra.mxu0 %v336
    %347 = vmatprep.subr.bf16.mxu0 0
    %348 = vmatpush1.bf16.msra.mxu0 %v335
    %349 = vmatprep.subr.bf16.mxu0 0
    %350 = vmatpush1.bf16.msra.mxu0 %v334
    %351 = vmatprep.subr.bf16.mxu0 0
    %352 = vmatpush1.bf16.msra.mxu0 %v333
    %353 = vmatprep.subr.bf16.mxu0 0
    %354 = vmatpush1.bf16.msra.mxu0 %v332
    %355 = vmatprep.subr.bf16.mxu0 0
    %356 = vmatpush1.bf16.msra.mxu0 %v331
    %357 = vmatprep.subr.bf16.mxu0 0
    %358 = vmatpush1.bf16.msra.mxu0 %v330
    %359 = vmatprep.subr.bf16.mxu0 0
    %360 = vmatpush1.bf16.msra.mxu0 %v329
    %361 = vmatprep.subr.bf16.mxu0 0
    %362 = vmatpush2.bf16.msra.mxu0 0
    %363 = vmatprep.subr.bf16.mxu0 0
    %364 = vmatpush2.bf16.msra.mxu0 0
    %365 = vmatprep.subr.bf16.mxu0 0
    %366 = vmatpush2.bf16.msra.mxu0 0
    %367 = vmatprep.subr.bf16.mxu0 0
    %368 = vmatpush2.bf16.msra.mxu0 0
    %369 = vmatprep.subr.bf16.mxu0 0
    %370 = vmatpush2.bf16.msra.mxu0 0
    %371 = vmatprep.subr.bf16.mxu0 0
    %372 = vmatpush2.bf16.msra.mxu0 0
    %373 = vmatprep.subr.bf16.mxu0 0
    %374 = vmatpush2.bf16.msra.mxu0 0
    %375 = vmatprep.subr.bf16.mxu0 0
    %376 = vmatpush2.bf16.msra.mxu0 0
    %377 = vmatprep.mubr.bf16.mxu0 0
    %378 = vmatmul.mubr.bf16.gmra.mxu0 %v272
    %v379 = vpop.f32.mrf.mxu0
    %v380 = vadd.f32 %v295, %v379
    %v381 = vpop.f32.mrf.mxu0
    %v382 = vpop.f32.mrf.mxu0
    %v383 = vadd.f32 %v295, %v382
    %v384 = vpop.f32.mrf.mxu0
    %385 = vmatprep.mubr.bf16.mxu0 0
    %386 = vmatmul.mubr.bf16.gmra.mxu0 %v273
    %v387 = vpop.f32.mrf.mxu0
    %v388 = vadd.f32 %v295, %v387
    %v389 = vpop.f32.mrf.mxu0
    %v390 = vpop.f32.mrf.mxu0
    %v391 = vadd.f32 %v295, %v390
    %v392 = vpop.f32.mrf.mxu0
    %393 = vdwg.mxu0
    %v394 = vadd.f32 %v380, %v28
    %v395 = vadd.f32 %v383, %v29
    %v396 = vadd.f32 %v388, %v30
    %v397 = vadd.f32 %v391, %v31
    %398 = vst [vmem:[#allocation2] sm:$0xff] %v394
    %399 = vst [vmem:[#allocation2 + $0x8] sm:$0xff] %v395
    %400 = vst [vmem:[#allocation2 + $0x10] sm:$0xff] %v396
    %401 = vst [vmem:[#allocation2 + $0x18] sm:$0xff] %v397
    // Predicated region
    $region30: #{_lambda_.43} parent=1 // pred_check
      _
    $region31: #{_lambda_.43} parent=1 // pred_check_branch
      %403 = sbr.rel (0) target = $region33
    $region32: #{_lambda_.43} parent=1 // pred_region
      %s405 = ssub.s32 512, 512
      %406 = vsyncadd [#allocation3], %s405
      %s407 = sshll.u32 [#allocation2], 4
      %s408 = int_to_ptr.vmem [resolvable:$true] %s407
      %413 = dma.vmem_to_hbm [thread:$0]  %s408, 512, %s7, [#allocation3], 128, 128, 8
    $region33: #{_lambda_.43} parent=1 // pred_fallthru
      _
    // Predicated region
    $region34: #{_lambda_.43} parent=1 // pred_check
      _
    $region35: #{_lambda_.43} parent=1 // pred_check_branch
      %415 = sbr.rel (0) target = $region37
    $region36: #{_lambda_.43} parent=1 // pred_region
      %416 = dma.done [#allocation3], 512
    $region37: #{_lambda_.43} parent=1 // pred_fallthru
      _
    %417 = vsyncpa [#allocation3], 1

</llo_original>
